<compile_context>
chip_gen: v7x
topology: tpu7x:2x2x1
jax: 0.10.0
libtpu: 0.0.40
codegen_flags: <defaults>
</compile_context>

<pallas_src>
import functools
import math

import jax
import jax.numpy as jnp
import numpy as np
from jax import lax
from jax.experimental import pallas as pl
from jax.experimental.pallas import tpu as pltpu

# ----------------------------------------------------------------------------- config
CFG = dict(
    enc_in=4, dec_in=4, c_out=4,
    d_model=32, n_heads=4, d_ff=64,
    e_layers=2, d_layers=1,
    seq_len=16, label_len=8, pred_len=8,
    time_feats=4,              # freq='h' -> 4 features for TimeFeatureEmbedding
    activation="relu",
)

OUT_LANES = 128   # lane-dense output width; real c_out columns live in [:c_out]
ROW_PAD = 8       # every slab entry starts at an 8-row (sublane) aligned offset


# ----------------------------------------------------------------------------- kernel
def _fused_transformer_kernel(x_ref, w_ref, out_ref, *, metas, B, Ls, Ld, D,
                              n_heads, e_layers, d_layers, activation, eps=1e-5):
    """Entire Transformer forward in one Pallas invocation (all operands in VMEM)."""
    f32 = jnp.float32
    dk = D // n_heads
    scale = 1.0 / math.sqrt(dk)
    Ne = B * Ls                                   # rows of encoder stream

    ctr = [0]

    def nxt():
        """Next weight from the packed slab (static slice, order must match packing)."""
        off, r, c = metas[ctr[0]]
        ctr[0] += 1
        return w_ref[off:off + r, :c]

    def act(y):
        if activation == "relu":
            return jnp.maximum(y, 0.0)
        # TODO(synk): PyTorch nn.GELU default is exact erf; tanh approx used here.
        return jax.nn.gelu(y, approximate=True)

    def layer_norm(x, g, b):
        mu = jnp.mean(x, axis=-1, keepdims=True)
        xc = x - mu
        var = jnp.mean(xc * xc, axis=-1, keepdims=True)
        return xc * lax.rsqrt(var + eps) * g + b

    def mha(q2d, k2d, v2d, wo, bo, Lq, Lk, causal):
        """Multi-head attention, batched over B per head.

        q2d: (B*Lq, D), k2d/v2d: (B*Lk, D).  Heads occupy contiguous dk-lane groups.
        Per head: one batched (B, Lq, dk)x(B, Lk, dk) score einsum, one batched softmax,
        one batched p.v einsum.  Head outputs are re-assembled lane-contiguously and the
        output projection is a single (B*Lq, D) @ (D, D) matmul.
        """
        if causal:
            row = lax.broadcasted_iota(jnp.int32, (Lq, Lk), 0)
            col = lax.broadcasted_iota(jnp.int32, (Lq, Lk), 1)
            neg = jnp.where(col > row, f32(-1e30), f32(0.0))
        heads = []
        for h in range(n_heads):
            qh = q2d[:, h * dk:(h + 1) * dk].reshape(B, Lq, dk)
            kh = k2d[:, h * dk:(h + 1) * dk].reshape(B, Lk, dk)
            vh = v2d[:, h * dk:(h + 1) * dk].reshape(B, Lk, dk)
            s = jnp.einsum("bqd,bkd->bqk", qh, kh,
                           preferred_element_type=f32) * scale          # (B, Lq, Lk)
            if causal:
                s = s + neg
            m = jnp.max(s, axis=-1, keepdims=True)
            p = jnp.exp(s - m)
            p = p / jnp.sum(p, axis=-1, keepdims=True)                  # exact softmax
            oh = jnp.einsum("bqk,bkd->bqd", p, vh,
                            preferred_element_type=f32)                 # (B, Lq, dk)
            heads.append(oh.reshape(B * Lq, dk))
        o = jnp.concatenate(heads, axis=-1)                             # (B*Lq, D)
        return jnp.dot(o, wo, preferred_element_type=f32) + bo          # single K=D proj

    # -------------------------------------------------------------- DataEmbedding
    # One stacked matmul: x_ref columns are [enc conv taps | enc time | dec conv | dec time]
    # with zeros in the "other" half per row; emb_w stacks the four embedding weights.
    # Pre-tiled positional encodings are baked into the slab.
    # TODO(synk): dropout omitted (inference / p=0 -> identity)
    emb_w = nxt()                                                        # (2*(3C+F), D)
    pe_all = nxt()                                                       # (B*(Ls+Ld), D)
    x = jnp.dot(x_ref[...], emb_w, preferred_element_type=f32) + pe_all
    enc = x[:Ne, :]                                                      # (B*Ls, D)
    dec = x[Ne:, :]                                                      # (B*Ld, D)

    # ------------------------------------------------------------------- encoder
    for _ in range(e_layers):
        wqkv, bqkv, wo, bo = nxt(), nxt(), nxt(), nxt()
        w1, b1, w2, b2 = nxt(), nxt(), nxt(), nxt()
        n1g, n1b, n2g, n2b = nxt(), nxt(), nxt(), nxt()

        qkv = jnp.dot(enc, wqkv, preferred_element_type=f32) + bqkv      # fused QKV
        q, k, v = qkv[:, :D], qkv[:, D:2 * D], qkv[:, 2 * D:]
        a = mha(q, k, v, wo, bo, Ls, Ls, causal=False)
        x1 = layer_norm(enc + a, n1g, n1b)
        y = act(jnp.dot(x1, w1, preferred_element_type=f32) + b1)
        y = jnp.dot(y, w2, preferred_element_type=f32) + b2
        enc = layer_norm(x1 + y, n2g, n2b)

    eg, eb = nxt(), nxt()
    enc = layer_norm(enc, eg, eb)             # final encoder norm (no residual input)

    # ------------------------------------------------------------------- decoder
    for _ in range(d_layers):
        s_wqkv, s_bqkv, s_wo, s_bo = nxt(), nxt(), nxt(), nxt()
        c_wq, c_bq, c_wkv, c_bkv, c_wo, c_bo = (nxt(), nxt(), nxt(),
                                                nxt(), nxt(), nxt())
        w1, b1, w2, b2 = nxt(), nxt(), nxt(), nxt()
        n1g, n1b, n2g, n2b, n3g, n3b = (nxt(), nxt(), nxt(),
                                        nxt(), nxt(), nxt())

        qkv = jnp.dot(dec, s_wqkv, preferred_element_type=f32) + s_bqkv
        q, k, v = qkv[:, :D], qkv[:, D:2 * D], qkv[:, 2 * D:]
        sa = mha(q, k, v, s_wo, s_bo, Ld, Ld, causal=True)
        xd = layer_norm(dec + sa, n1g, n1b)

        cq = jnp.dot(xd, c_wq, preferred_element_type=f32) + c_bq
        ckv = jnp.dot(enc, c_wkv, preferred_element_type=f32) + c_bkv    # fused KV
        ck, cv = ckv[:, :D], ckv[:, D:]
        ca = mha(cq, ck, cv, c_wo, c_bo, Ld, Ls, causal=False)
        xd = layer_norm(xd + ca, n2g, n2b)

        y = act(jnp.dot(xd, w1, preferred_element_type=f32) + b1)
        y = jnp.dot(y, w2, preferred_element_type=f32) + b2
        dec = layer_norm(xd + y, n3g, n3b)

    dg, db = nxt(), nxt()
    dec = layer_norm(dec, dg, db)             # final decoder norm (no residual input)

    proj_w, proj_b = nxt(), nxt()             # zero-padded to 128 lanes -> dense store
    out = jnp.dot(dec, proj_w, preferred_element_type=f32) + proj_b      # (B*Ld, 128)
    out_ref[...] = out.astype(out_ref.dtype)


# ----------------------------------------------------------------------------- params
def _init_linear(key, fan_in, fan_out, bias=True):
    k1, k2 = jax.random.split(key)
    w = np.asarray(jax.random.normal(k1, (fan_in, fan_out), jnp.float32)) / np.sqrt(fan_in)
    if not bias:
        return w.astype(np.float32)
    b = 0.02 * np.asarray(jax.random.normal(k2, (1, fan_out), jnp.float32))
    return w.astype(np.float32), b.astype(np.float32)


def _make_pe(max_len, d_model):
    position = np.arange(max_len, dtype=np.float32)[:, None]
    div_term = np.exp(np.arange(0, d_model, 2, dtype=np.float32)
                      * -(math.log(10000.0) / d_model))
    pe = np.zeros((max_len, d_model), np.float32)
    pe[:, 0::2] = np.sin(position * div_term)
    pe[:, 1::2] = np.cos(position * div_term)
    return pe


def _pack(arrays):
    """Pack arrays into one (rows, 128) f32 slab; return (slab, ((off, rows, cols),...))."""
    blocks, metas, off = [], [], 0
    for a in arrays:
        a = np.asarray(a, np.float32)
        if a.ndim == 1:
            a = a[None, :]
        r, c = a.shape
        assert c <= OUT_LANES, (r, c)
        rp = (-r) % ROW_PAD
        blocks.append(np.pad(a, ((0, rp), (0, OUT_LANES - c))))
        metas.append((off, r, c))
        off += r + rp
    return jnp.asarray(np.concatenate(blocks, axis=0)), tuple(metas)


def build_params(key, cfg, B):
    """Build the packed weight slab.

    Packing order MUST match the unpack order inside _fused_transformer_kernel:
      [emb_w (e_conv;e_time;d_conv;d_time), pe_all,
       per enc layer: wqkv,bqkv,wo,bo,w1,b1,w2,b2,n1g,n1b,n2g,n2b,
       enc_norm_g, enc_norm_b,
       per dec layer: s_wqkv,s_bqkv,s_wo,s_bo,c_wq,c_bq,c_wkv,c_bkv,c_wo,c_bo,
                      w1,b1,w2,b2,n1g,n1b,n2g,n2b,n3g,n3b,
       dec_norm_g, dec_norm_b, proj_w_pad, proj_b_pad]
    """
    D, dff = cfg["d_model"], cfg["d_ff"]
    C, F = cfg["enc_in"], cfg["time_feats"]
    Ls, Ld = cfg["seq_len"], cfg["label_len"] + cfg["pred_len"]
    keys = jax.random.split(key, 8)
    ones = lambda: np.ones((1, D), np.float32)
    zeros = lambda: np.zeros((1, D), np.float32)

    def self_attn(k):
        k1, k2 = jax.random.split(k)
        wqkv, bqkv = _init_linear(k1, D, 3 * D)          # fused Q,K,V projection
        wo, bo = _init_linear(k2, D, D)
        return [wqkv, bqkv, wo, bo]

    def cross_attn(k):
        k1, k2, k3 = jax.random.split(k, 3)
        wq, bq = _init_linear(k1, D, D)
        wkv, bkv = _init_linear(k2, D, 2 * D)            # fused K,V projection
        wo, bo = _init_linear(k3, D, D)
        return [wq, bq, wkv, bkv, wo, bo]

    arrays = []
    # fused embedding weight (rows match x_all column layout)
    e_conv = _init_linear(keys[0], 3 * C, D, bias=False)              # enc TokenEmb
    e_time = _init_linear(keys[1], F, D, bias=False)                  # enc TimeEmb
    d_conv = _init_linear(keys[2], 3 * cfg["dec_in"], D, bias=False)  # dec TokenEmb
    d_time = _init_linear(keys[3], F, D, bias=False)                  # dec TimeEmb
    arrays.append(np.concatenate([e_conv, e_time, d_conv, d_time], axis=0))
    # positional encodings, pre-tiled for the stacked (enc rows, dec rows) layout
    pe = _make_pe(512, D)
    arrays.append(np.concatenate([np.tile(pe[:Ls], (B, 1)),
                                  np.tile(pe[:Ld], (B, 1))], axis=0))

    for ek in jax.random.split(keys[4], cfg["e_layers"]):
        k1, k2, k3 = jax.random.split(ek, 3)
        arrays += self_attn(k1)
        w1, b1 = _init_linear(k2, D, dff)
        w2, b2 = _init_linear(k3, dff, D)
        arrays += [w1, b1, w2, b2, ones(), zeros(), ones(), zeros()]
    arrays += [ones(), zeros()]                                       # enc final norm

    for dky in jax.random.split(keys[5], cfg["d_layers"]):
        k1, k2, k3, k4 = jax.random.split(dky, 4)
        arrays += self_attn(k1)
        arrays += cross_attn(k2)
        w1, b1 = _init_linear(k3, D, dff)
        w2, b2 = _init_linear(k4, dff, D)
        arrays += [w1, b1, w2, b2, ones(), zeros(), ones(), zeros(), ones(), zeros()]
    arrays += [ones(), zeros()]                                       # dec final norm

    pw, pb = _init_linear(keys[6], D, cfg["c_out"])
    pw_pad = np.zeros((D, OUT_LANES), np.float32); pw_pad[:, :cfg["c_out"]] = pw
    pb_pad = np.zeros((1, OUT_LANES), np.float32); pb_pad[:, :cfg["c_out"]] = pb
    arrays += [pw_pad, pb_pad]

    return _pack(arrays)


# ----------------------------------------------------------------------------- forward
def transformer_forward(slab, batch_x, batch_x_mark, batch_y_mark, *, cfg, metas):
    B, Ls, C = batch_x.shape
    F = batch_x_mark.shape[-1]
    label_len, pred_len = cfg["label_len"], cfg["pred_len"]
    Ld = label_len + pred_len
    D = cfg["d_model"]

    # decoder input: last label_len observed steps followed by zeros for pred_len
    dec_inp = jnp.concatenate(
        [batch_x[:, -label_len:, :],
         jnp.zeros((B, pred_len, C), batch_x.dtype)], axis=1)

    def conv_cat(x):
        # circular conv1d k=3, pad=1: out[l] = W0*x[l-1] + W1*x[l] + W2*x[l+1] (mod L)
        L = x.shape[1]
        return jnp.concatenate(
            [jnp.roll(x, 1, axis=1), x, jnp.roll(x, -1, axis=1)], axis=-1
        ).reshape(B * L, 3 * C).astype(jnp.float32)

    xe = conv_cat(batch_x)                                       # (B*Ls, 3C)
    xd = conv_cat(dec_inp)                                       # (B*Ld, 3C)
    me = batch_x_mark.reshape(B * Ls, F).astype(jnp.float32)     # (B*Ls, F)
    md = batch_y_mark.reshape(B * Ld, F).astype(jnp.float32)     # (B*Ld, F)

    # Stacked embedding input: encoder rows then decoder rows; columns
    # [enc conv taps | enc time | dec conv taps | dec time], zeros in the other half.
    enc_rows = jnp.concatenate(
        [xe, me, jnp.zeros((B * Ls, 3 * C + F), jnp.float32)], axis=-1)
    dec_rows = jnp.concatenate(
        [jnp.zeros((B * Ld, 3 * C + F), jnp.float32), xd, md], axis=-1)
    x_all = jnp.concatenate([enc_rows, dec_rows], axis=0)        # (B*(Ls+Ld), 2*(3C+F))

    kernel = functools.partial(
        _fused_transformer_kernel, metas=metas,
        B=B, Ls=Ls, Ld=Ld, D=D, n_heads=cfg["n_heads"],
        e_layers=cfg["e_layers"], d_layers=cfg["d_layers"],
        activation=cfg["activation"])

    # rough static cost hints for XLA scheduling around the custom call
    n_tokens = B * (Ls + Ld)
    flops = int(2 * n_tokens * D * (4 * D + 2 * cfg["d_ff"])
                * (cfg["e_layers"] + 2 * cfg["d_layers"])
                + 2 * n_tokens * D * (2 * (3 * C + F) + OUT_LANES))
    bytes_accessed = int(4 * (x_all.size + slab.size + B * Ld * OUT_LANES))
    transcendentals = int(B * cfg["n_heads"]
                          * (cfg["e_layers"] * Ls * Ls + cfg["d_layers"] * Ld * (Ld + Ls)))

    out = pl.pallas_call(
        kernel,
        out_shape=jax.ShapeDtypeStruct((B * Ld, OUT_LANES), jnp.float32),
        # Whole operands resident in VMEM; no grid — one launch, two DMAs in, one out.
        in_specs=[pl.BlockSpec(memory_space=pltpu.MemorySpace.VMEM),
                  pl.BlockSpec(memory_space=pltpu.MemorySpace.VMEM)],
        out_specs=pl.BlockSpec(memory_space=pltpu.MemorySpace.VMEM),
        cost_estimate=pl.CostEstimate(flops=flops, transcendentals=transcendentals,
                                      bytes_accessed=bytes_accessed),
    )(x_all, slab)

    return out.reshape(B, Ld, OUT_LANES)[:, -pred_len:, :cfg["c_out"]]


# ----------------------------------------------------------------------------- main
if __name__ == "__main__":
    key = jax.random.PRNGKey(0)
    kp, kx, km1, km2 = jax.random.split(key, 4)

    cfg = CFG
    B = 2
    batch_x = jax.random.normal(kx, (B, cfg["seq_len"], cfg["enc_in"]), jnp.float32)
    batch_x_mark = jax.random.normal(km1, (B, cfg["seq_len"], cfg["time_feats"]), jnp.float32)
    batch_y_mark = jax.random.normal(
        km2, (B, cfg["label_len"] + cfg["pred_len"], cfg["time_feats"]), jnp.float32)

    slab, metas = build_params(kp, cfg, B)

    fwd = jax.jit(functools.partial(transformer_forward, cfg=cfg, metas=metas))
    out = fwd(slab, batch_x, batch_x_mark, batch_y_mark)
    out = jax.block_until_ready(out)

    assert out.shape == (B, cfg["pred_len"], cfg["c_out"]), out.shape
    assert bool(jnp.all(jnp.isfinite(out)))
    print("KERNEL_OK")
</pallas_src>

<mosaic_0001>
module attributes {stable_mosaic.version = 11 : i64} {
  func.func @_fused_transformer_kernel(%arg0: memref<64x32xf32, #tpu.memory_space<vmem>>, %arg1: memref<976x128xf32, #tpu.memory_space<vmem>>, %arg2: memref<32x128xf32, #tpu.memory_space<vmem>>) attributes {dimension_semantics = [], scalar_prefetch = 0 : i64, scratch_operands = 0 : i64, tpu.core_type = #tpu.core_type<tc>} {
    %c0 = arith.constant 0 : index
    %c0_0 = arith.constant 0 : index
    %0 = vector.load %arg1[%c0, %c0_0] : memref<976x128xf32, #tpu.memory_space<vmem>>, vector<32x32xf32>
    %c32 = arith.constant 32 : index
    %c0_1 = arith.constant 0 : index
    %1 = vector.load %arg1[%c32, %c0_1] : memref<976x128xf32, #tpu.memory_space<vmem>>, vector<64x32xf32>
    %c0_2 = arith.constant 0 : index
    %c0_3 = arith.constant 0 : index
    %2 = vector.load %arg0[%c0_2, %c0_3] : memref<64x32xf32, #tpu.memory_space<vmem>>, vector<64x32xf32>
    %cst = arith.constant dense<0.000000e+00> : vector<64x32xf32>
    %3 = tpu.matmul %2, %0, %cst {dimension_numbers = #tpu.dot_dimension_numbers<[1], [0], [0], [1], [0, 0, 1, 1], [], []>} : vector<64x32xf32>, vector<32x32xf32>, vector<64x32xf32> -> vector<64x32xf32>
    %4 = arith.addf %3, %1 : vector<64x32xf32>
    %5 = vector.extract_strided_slice %4 {offsets = [0, 0], sizes = [32, 32], strides = [1, 1]} : vector<64x32xf32> to vector<32x32xf32>
    %6 = vector.extract_strided_slice %4 {offsets = [32, 0], sizes = [32, 32], strides = [1, 1]} : vector<64x32xf32> to vector<32x32xf32>
    %c96 = arith.constant 96 : index
    %c0_4 = arith.constant 0 : index
    %7 = vector.load %arg1[%c96, %c0_4] : memref<976x128xf32, #tpu.memory_space<vmem>>, vector<32x96xf32>
    %c128 = arith.constant 128 : index
    %c0_5 = arith.constant 0 : index
    %8 = vector.load %arg1[%c128, %c0_5] : memref<976x128xf32, #tpu.memory_space<vmem>>, vector<1x96xf32>
    %c136 = arith.constant 136 : index
    %c0_6 = arith.constant 0 : index
    %9 = vector.load %arg1[%c136, %c0_6] : memref<976x128xf32, #tpu.memory_space<vmem>>, vector<32x32xf32>
    %c168 = arith.constant 168 : index
    %c0_7 = arith.constant 0 : index
    %10 = vector.load %arg1[%c168, %c0_7] : memref<976x128xf32, #tpu.memory_space<vmem>>, vector<1x32xf32>
    %c176 = arith.constant 176 : index
    %c0_8 = arith.constant 0 : index
    %11 = vector.load %arg1[%c176, %c0_8] : memref<976x128xf32, #tpu.memory_space<vmem>>, vector<32x64xf32>
    %c208 = arith.constant 208 : index
    %c0_9 = arith.constant 0 : index
    %12 = vector.load %arg1[%c208, %c0_9] : memref<976x128xf32, #tpu.memory_space<vmem>>, vector<1x64xf32>
    %c216 = arith.constant 216 : index
    %c0_10 = arith.constant 0 : index
    %13 = vector.load %arg1[%c216, %c0_10] : memref<976x128xf32, #tpu.memory_space<vmem>>, vector<64x32xf32>
    %c280 = arith.constant 280 : index
    %c0_11 = arith.constant 0 : index
    %14 = vector.load %arg1[%c280, %c0_11] : memref<976x128xf32, #tpu.memory_space<vmem>>, vector<1x32xf32>
    %c288 = arith.constant 288 : index
    %c0_12 = arith.constant 0 : index
    %15 = vector.load %arg1[%c288, %c0_12] : memref<976x128xf32, #tpu.memory_space<vmem>>, vector<1x32xf32>
    %c296 = arith.constant 296 : index
    %c0_13 = arith.constant 0 : index
    %16 = vector.load %arg1[%c296, %c0_13] : memref<976x128xf32, #tpu.memory_space<vmem>>, vector<1x32xf32>
    %c304 = arith.constant 304 : index
    %c0_14 = arith.constant 0 : index
    %17 = vector.load %arg1[%c304, %c0_14] : memref<976x128xf32, #tpu.memory_space<vmem>>, vector<1x32xf32>
    %c312 = arith.constant 312 : index
    %c0_15 = arith.constant 0 : index
    %18 = vector.load %arg1[%c312, %c0_15] : memref<976x128xf32, #tpu.memory_space<vmem>>, vector<1x32xf32>
    %cst_16 = arith.constant dense<0.000000e+00> : vector<32x96xf32>
    %19 = tpu.matmul %5, %7, %cst_16 {dimension_numbers = #tpu.dot_dimension_numbers<[1], [0], [0], [1], [0, 0, 1, 1], [], []>} : vector<32x32xf32>, vector<32x96xf32>, vector<32x96xf32> -> vector<32x96xf32>
    %20 = vector.broadcast %8 : vector<1x96xf32> to vector<32x96xf32>
    %21 = arith.addf %19, %20 : vector<32x96xf32>
    %22 = vector.extract_strided_slice %21 {offsets = [0, 0], sizes = [32, 32], strides = [1, 1]} : vector<32x96xf32> to vector<32x32xf32>
    %23 = vector.extract_strided_slice %21 {offsets = [0, 32], sizes = [32, 32], strides = [1, 1]} : vector<32x96xf32> to vector<32x32xf32>
    %24 = vector.extract_strided_slice %21 {offsets = [0, 64], sizes = [32, 32], strides = [1, 1]} : vector<32x96xf32> to vector<32x32xf32>
    %25 = vector.extract_strided_slice %22 {offsets = [0, 0], sizes = [32, 8], strides = [1, 1]} : vector<32x32xf32> to vector<32x8xf32>
    %26 = vector.shape_cast %25 : vector<32x8xf32> to vector<2x16x8xf32>
    %27 = vector.extract_strided_slice %23 {offsets = [0, 0], sizes = [32, 8], strides = [1, 1]} : vector<32x32xf32> to vector<32x8xf32>
    %28 = vector.shape_cast %27 : vector<32x8xf32> to vector<2x16x8xf32>
    %29 = vector.extract_strided_slice %24 {offsets = [0, 0], sizes = [32, 8], strides = [1, 1]} : vector<32x32xf32> to vector<32x8xf32>
    %30 = vector.shape_cast %29 : vector<32x8xf32> to vector<2x16x8xf32>
    "tpu.trace_start"() <{level = 10 : i32, message = "bqd,bkd->bqk"}> : () -> ()
    %cst_17 = arith.constant dense<0.000000e+00> : vector<2x16x16xf32>
    %31 = tpu.matmul %26, %28, %cst_17 {dimension_numbers = #tpu.dot_dimension_numbers<[2], [2], [1], [1], [0, 0, 0, 1, 1, 1], [0], [0]>} : vector<2x16x8xf32>, vector<2x16x8xf32>, vector<2x16x16xf32> -> vector<2x16x16xf32>
    "tpu.trace_stop"() : () -> ()
    %cst_18 = arith.constant 0.353553385 : f32
    %32 = vector.broadcast %cst_18 : f32 to vector<2x16x16xf32>
    %33 = arith.mulf %31, %32 : vector<2x16x16xf32>
    %cst_19 = arith.constant dense<0xFF800000> : vector<2x16xf32>
    %34 = vector.multi_reduction <maximumf>, %33, %cst_19 [2] : vector<2x16x16xf32> to vector<2x16xf32>
    %35 = vector.shape_cast %34 : vector<2x16xf32> to vector<2x16x1xf32>
    %36 = vector.broadcast %35 : vector<2x16x1xf32> to vector<2x16x16xf32>
    %37 = arith.subf %33, %36 : vector<2x16x16xf32>
    %38 = math.exp %37 : vector<2x16x16xf32>
    %cst_20 = arith.constant dense<0.000000e+00> : vector<2x16xf32>
    %39 = vector.multi_reduction <add>, %38, %cst_20 [2] : vector<2x16x16xf32> to vector<2x16xf32>
    %40 = vector.shape_cast %39 : vector<2x16xf32> to vector<2x16x1xf32>
    %41 = vector.broadcast %40 : vector<2x16x1xf32> to vector<2x16x16xf32>
    %42 = arith.divf %38, %41 : vector<2x16x16xf32>
    "tpu.trace_start"() <{level = 10 : i32, message = "bqk,bkd->bqd"}> : () -> ()
    %cst_21 = arith.constant dense<0.000000e+00> : vector<2x16x8xf32>
    %43 = tpu.matmul %42, %30, %cst_21 {dimension_numbers = #tpu.dot_dimension_numbers<[2], [1], [1], [2], [0, 0, 0, 1, 1, 2], [0], [0]>} : vector<2x16x16xf32>, vector<2x16x8xf32>, vector<2x16x8xf32> -> vector<2x16x8xf32>
    "tpu.trace_stop"() : () -> ()
    %44 = vector.shape_cast %43 : vector<2x16x8xf32> to vector<32x8xf32>
    %45 = vector.extract_strided_slice %22 {offsets = [0, 8], sizes = [32, 8], strides = [1, 1]} : vector<32x32xf32> to vector<32x8xf32>
    %46 = vector.shape_cast %45 : vector<32x8xf32> to vector<2x16x8xf32>
    %47 = vector.extract_strided_slice %23 {offsets = [0, 8], sizes = [32, 8], strides = [1, 1]} : vector<32x32xf32> to vector<32x8xf32>
    %48 = vector.shape_cast %47 : vector<32x8xf32> to vector<2x16x8xf32>
    %49 = vector.extract_strided_slice %24 {offsets = [0, 8], sizes = [32, 8], strides = [1, 1]} : vector<32x32xf32> to vector<32x8xf32>
    %50 = vector.shape_cast %49 : vector<32x8xf32> to vector<2x16x8xf32>
    "tpu.trace_start"() <{level = 10 : i32, message = "bqd,bkd->bqk"}> : () -> ()
    %cst_22 = arith.constant dense<0.000000e+00> : vector<2x16x16xf32>
    %51 = tpu.matmul %46, %48, %cst_22 {dimension_numbers = #tpu.dot_dimension_numbers<[2], [2], [1], [1], [0, 0, 0, 1, 1, 1], [0], [0]>} : vector<2x16x8xf32>, vector<2x16x8xf32>, vector<2x16x16xf32> -> vector<2x16x16xf32>
    "tpu.trace_stop"() : () -> ()
    %cst_23 = arith.constant 0.353553385 : f32
    %52 = vector.broadcast %cst_23 : f32 to vector<2x16x16xf32>
    %53 = arith.mulf %51, %52 : vector<2x16x16xf32>
    %cst_24 = arith.constant dense<0xFF800000> : vector<2x16xf32>
    %54 = vector.multi_reduction <maximumf>, %53, %cst_24 [2] : vector<2x16x16xf32> to vector<2x16xf32>
    %55 = vector.shape_cast %54 : vector<2x16xf32> to vector<2x16x1xf32>
    %56 = vector.broadcast %55 : vector<2x16x1xf32> to vector<2x16x16xf32>
    %57 = arith.subf %53, %56 : vector<2x16x16xf32>
    %58 = math.exp %57 : vector<2x16x16xf32>
    %cst_25 = arith.constant dense<0.000000e+00> : vector<2x16xf32>
    %59 = vector.multi_reduction <add>, %58, %cst_25 [2] : vector<2x16x16xf32> to vector<2x16xf32>
    %60 = vector.shape_cast %59 : vector<2x16xf32> to vector<2x16x1xf32>
    %61 = vector.broadcast %60 : vector<2x16x1xf32> to vector<2x16x16xf32>
    %62 = arith.divf %58, %61 : vector<2x16x16xf32>
    "tpu.trace_start"() <{level = 10 : i32, message = "bqk,bkd->bqd"}> : () -> ()
    %cst_26 = arith.constant dense<0.000000e+00> : vector<2x16x8xf32>
    %63 = tpu.matmul %62, %50, %cst_26 {dimension_numbers = #tpu.dot_dimension_numbers<[2], [1], [1], [2], [0, 0, 0, 1, 1, 2], [0], [0]>} : vector<2x16x16xf32>, vector<2x16x8xf32>, vector<2x16x8xf32> -> vector<2x16x8xf32>
    "tpu.trace_stop"() : () -> ()
    %64 = vector.shape_cast %63 : vector<2x16x8xf32> to vector<32x8xf32>
    %65 = vector.extract_strided_slice %22 {offsets = [0, 16], sizes = [32, 8], strides = [1, 1]} : vector<32x32xf32> to vector<32x8xf32>
    %66 = vector.shape_cast %65 : vector<32x8xf32> to vector<2x16x8xf32>
    %67 = vector.extract_strided_slice %23 {offsets = [0, 16], sizes = [32, 8], strides = [1, 1]} : vector<32x32xf32> to vector<32x8xf32>
    %68 = vector.shape_cast %67 : vector<32x8xf32> to vector<2x16x8xf32>
    %69 = vector.extract_strided_slice %24 {offsets = [0, 16], sizes = [32, 8], strides = [1, 1]} : vector<32x32xf32> to vector<32x8xf32>
    %70 = vector.shape_cast %69 : vector<32x8xf32> to vector<2x16x8xf32>
    "tpu.trace_start"() <{level = 10 : i32, message = "bqd,bkd->bqk"}> : () -> ()
    %cst_27 = arith.constant dense<0.000000e+00> : vector<2x16x16xf32>
    %71 = tpu.matmul %66, %68, %cst_27 {dimension_numbers = #tpu.dot_dimension_numbers<[2], [2], [1], [1], [0, 0, 0, 1, 1, 1], [0], [0]>} : vector<2x16x8xf32>, vector<2x16x8xf32>, vector<2x16x16xf32> -> vector<2x16x16xf32>
    "tpu.trace_stop"() : () -> ()
    %cst_28 = arith.constant 0.353553385 : f32
    %72 = vector.broadcast %cst_28 : f32 to vector<2x16x16xf32>
    %73 = arith.mulf %71, %72 : vector<2x16x16xf32>
    %cst_29 = arith.constant dense<0xFF800000> : vector<2x16xf32>
    %74 = vector.multi_reduction <maximumf>, %73, %cst_29 [2] : vector<2x16x16xf32> to vector<2x16xf32>
    %75 = vector.shape_cast %74 : vector<2x16xf32> to vector<2x16x1xf32>
    %76 = vector.broadcast %75 : vector<2x16x1xf32> to vector<2x16x16xf32>
    %77 = arith.subf %73, %76 : vector<2x16x16xf32>
    %78 = math.exp %77 : vector<2x16x16xf32>
    %cst_30 = arith.constant dense<0.000000e+00> : vector<2x16xf32>
    %79 = vector.multi_reduction <add>, %78, %cst_30 [2] : vector<2x16x16xf32> to vector<2x16xf32>
    %80 = vector.shape_cast %79 : vector<2x16xf32> to vector<2x16x1xf32>
    %81 = vector.broadcast %80 : vector<2x16x1xf32> to vector<2x16x16xf32>
    %82 = arith.divf %78, %81 : vector<2x16x16xf32>
    "tpu.trace_start"() <{level = 10 : i32, message = "bqk,bkd->bqd"}> : () -> ()
    %cst_31 = arith.constant dense<0.000000e+00> : vector<2x16x8xf32>
    %83 = tpu.matmul %82, %70, %cst_31 {dimension_numbers = #tpu.dot_dimension_numbers<[2], [1], [1], [2], [0, 0, 0, 1, 1, 2], [0], [0]>} : vector<2x16x16xf32>, vector<2x16x8xf32>, vector<2x16x8xf32> -> vector<2x16x8xf32>
    "tpu.trace_stop"() : () -> ()
    %84 = vector.shape_cast %83 : vector<2x16x8xf32> to vector<32x8xf32>
    %85 = vector.extract_strided_slice %22 {offsets = [0, 24], sizes = [32, 8], strides = [1, 1]} : vector<32x32xf32> to vector<32x8xf32>
    %86 = vector.shape_cast %85 : vector<32x8xf32> to vector<2x16x8xf32>
    %87 = vector.extract_strided_slice %23 {offsets = [0, 24], sizes = [32, 8], strides = [1, 1]} : vector<32x32xf32> to vector<32x8xf32>
    %88 = vector.shape_cast %87 : vector<32x8xf32> to vector<2x16x8xf32>
    %89 = vector.extract_strided_slice %24 {offsets = [0, 24], sizes = [32, 8], strides = [1, 1]} : vector<32x32xf32> to vector<32x8xf32>
    %90 = vector.shape_cast %89 : vector<32x8xf32> to vector<2x16x8xf32>
    "tpu.trace_start"() <{level = 10 : i32, message = "bqd,bkd->bqk"}> : () -> ()
    %cst_32 = arith.constant dense<0.000000e+00> : vector<2x16x16xf32>
    %91 = tpu.matmul %86, %88, %cst_32 {dimension_numbers = #tpu.dot_dimension_numbers<[2], [2], [1], [1], [0, 0, 0, 1, 1, 1], [0], [0]>} : vector<2x16x8xf32>, vector<2x16x8xf32>, vector<2x16x16xf32> -> vector<2x16x16xf32>
    "tpu.trace_stop"() : () -> ()
    %cst_33 = arith.constant 0.353553385 : f32
    %92 = vector.broadcast %cst_33 : f32 to vector<2x16x16xf32>
    %93 = arith.mulf %91, %92 : vector<2x16x16xf32>
    %cst_34 = arith.constant dense<0xFF800000> : vector<2x16xf32>
    %94 = vector.multi_reduction <maximumf>, %93, %cst_34 [2] : vector<2x16x16xf32> to vector<2x16xf32>
    %95 = vector.shape_cast %94 : vector<2x16xf32> to vector<2x16x1xf32>
    %96 = vector.broadcast %95 : vector<2x16x1xf32> to vector<2x16x16xf32>
    %97 = arith.subf %93, %96 : vector<2x16x16xf32>
    %98 = math.exp %97 : vector<2x16x16xf32>
    %cst_35 = arith.constant dense<0.000000e+00> : vector<2x16xf32>
    %99 = vector.multi_reduction <add>, %98, %cst_35 [2] : vector<2x16x16xf32> to vector<2x16xf32>
    %100 = vector.shape_cast %99 : vector<2x16xf32> to vector<2x16x1xf32>
    %101 = vector.broadcast %100 : vector<2x16x1xf32> to vector<2x16x16xf32>
    %102 = arith.divf %98, %101 : vector<2x16x16xf32>
    "tpu.trace_start"() <{level = 10 : i32, message = "bqk,bkd->bqd"}> : () -> ()
    %cst_36 = arith.constant dense<0.000000e+00> : vector<2x16x8xf32>
    %103 = tpu.matmul %102, %90, %cst_36 {dimension_numbers = #tpu.dot_dimension_numbers<[2], [1], [1], [2], [0, 0, 0, 1, 1, 2], [0], [0]>} : vector<2x16x16xf32>, vector<2x16x8xf32>, vector<2x16x8xf32> -> vector<2x16x8xf32>
    "tpu.trace_stop"() : () -> ()
    %104 = vector.shape_cast %103 : vector<2x16x8xf32> to vector<32x8xf32>
    %105 = tpu.concatenate %44, %64, %84, %104 in 1 : vector<32x8xf32>, vector<32x8xf32>, vector<32x8xf32>, vector<32x8xf32> -> vector<32x32xf32>
    %cst_37 = arith.constant dense<0.000000e+00> : vector<32x32xf32>
    %106 = tpu.matmul %105, %9, %cst_37 {dimension_numbers = #tpu.dot_dimension_numbers<[1], [0], [0], [1], [0, 0, 1, 1], [], []>} : vector<32x32xf32>, vector<32x32xf32>, vector<32x32xf32> -> vector<32x32xf32>
    %107 = vector.broadcast %10 : vector<1x32xf32> to vector<32x32xf32>
    %108 = arith.addf %106, %107 : vector<32x32xf32>
    %109 = arith.addf %5, %108 : vector<32x32xf32>
    %cst_38 = arith.constant dense<0.000000e+00> : vector<32xf32>
    %110 = vector.multi_reduction <add>, %109, %cst_38 [1] : vector<32x32xf32> to vector<32xf32>
    %111 = vector.shape_cast %110 : vector<32xf32> to vector<32x1xf32>
    %cst_39 = arith.constant 3.200000e+01 : f32
    %112 = vector.broadcast %cst_39 : f32 to vector<32x1xf32>
    %113 = arith.divf %111, %112 : vector<32x1xf32>
    %114 = vector.broadcast %113 : vector<32x1xf32> to vector<32x32xf32>
    %115 = arith.subf %109, %114 : vector<32x32xf32>
    %116 = arith.mulf %115, %115 : vector<32x32xf32>
    %cst_40 = arith.constant dense<0.000000e+00> : vector<32xf32>
    %117 = vector.multi_reduction <add>, %116, %cst_40 [1] : vector<32x32xf32> to vector<32xf32>
    %118 = vector.shape_cast %117 : vector<32xf32> to vector<32x1xf32>
    %cst_41 = arith.constant 3.200000e+01 : f32
    %119 = vector.broadcast %cst_41 : f32 to vector<32x1xf32>
    %120 = arith.divf %118, %119 : vector<32x1xf32>
    %cst_42 = arith.constant 9.99999974E-6 : f32
    %121 = vector.broadcast %cst_42 : f32 to vector<32x1xf32>
    %122 = arith.addf %120, %121 : vector<32x1xf32>
    %123 = math.rsqrt %122 : vector<32x1xf32>
    %124 = vector.broadcast %123 : vector<32x1xf32> to vector<32x32xf32>
    %125 = arith.mulf %115, %124 : vector<32x32xf32>
    %126 = vector.broadcast %15 : vector<1x32xf32> to vector<32x32xf32>
    %127 = arith.mulf %125, %126 : vector<32x32xf32>
    %128 = vector.broadcast %16 : vector<1x32xf32> to vector<32x32xf32>
    %129 = arith.addf %127, %128 : vector<32x32xf32>
    %cst_43 = arith.constant dense<0.000000e+00> : vector<32x64xf32>
    %130 = tpu.matmul %129, %11, %cst_43 {dimension_numbers = #tpu.dot_dimension_numbers<[1], [0], [0], [1], [0, 0, 1, 1], [], []>} : vector<32x32xf32>, vector<32x64xf32>, vector<32x64xf32> -> vector<32x64xf32>
    %131 = vector.broadcast %12 : vector<1x64xf32> to vector<32x64xf32>
    %132 = arith.addf %130, %131 : vector<32x64xf32>
    %cst_44 = arith.constant 0.000000e+00 : f32
    %133 = vector.broadcast %cst_44 : f32 to vector<32x64xf32>
    %134 = arith.maximumf %132, %133 : vector<32x64xf32>
    %cst_45 = arith.constant dense<0.000000e+00> : vector<32x32xf32>
    %135 = tpu.matmul %134, %13, %cst_45 {dimension_numbers = #tpu.dot_dimension_numbers<[1], [0], [0], [1], [0, 0, 1, 1], [], []>} : vector<32x64xf32>, vector<64x32xf32>, vector<32x32xf32> -> vector<32x32xf32>
    %136 = vector.broadcast %14 : vector<1x32xf32> to vector<32x32xf32>
    %137 = arith.addf %135, %136 : vector<32x32xf32>
    %138 = arith.addf %129, %137 : vector<32x32xf32>
    %cst_46 = arith.constant dense<0.000000e+00> : vector<32xf32>
    %139 = vector.multi_reduction <add>, %138, %cst_46 [1] : vector<32x32xf32> to vector<32xf32>
    %140 = vector.shape_cast %139 : vector<32xf32> to vector<32x1xf32>
    %cst_47 = arith.constant 3.200000e+01 : f32
    %141 = vector.broadcast %cst_47 : f32 to vector<32x1xf32>
    %142 = arith.divf %140, %141 : vector<32x1xf32>
    %143 = vector.broadcast %142 : vector<32x1xf32> to vector<32x32xf32>
    %144 = arith.subf %138, %143 : vector<32x32xf32>
    %145 = arith.mulf %144, %144 : vector<32x32xf32>
    %cst_48 = arith.constant dense<0.000000e+00> : vector<32xf32>
    %146 = vector.multi_reduction <add>, %145, %cst_48 [1] : vector<32x32xf32> to vector<32xf32>
    %147 = vector.shape_cast %146 : vector<32xf32> to vector<32x1xf32>
    %cst_49 = arith.constant 3.200000e+01 : f32
    %148 = vector.broadcast %cst_49 : f32 to vector<32x1xf32>
    %149 = arith.divf %147, %148 : vector<32x1xf32>
    %cst_50 = arith.constant 9.99999974E-6 : f32
    %150 = vector.broadcast %cst_50 : f32 to vector<32x1xf32>
    %151 = arith.addf %149, %150 : vector<32x1xf32>
    %152 = math.rsqrt %151 : vector<32x1xf32>
    %153 = vector.broadcast %152 : vector<32x1xf32> to vector<32x32xf32>
    %154 = arith.mulf %144, %153 : vector<32x32xf32>
    %155 = vector.broadcast %17 : vector<1x32xf32> to vector<32x32xf32>
    %156 = arith.mulf %154, %155 : vector<32x32xf32>
    %157 = vector.broadcast %18 : vector<1x32xf32> to vector<32x32xf32>
    %158 = arith.addf %156, %157 : vector<32x32xf32>
    %c320 = arith.constant 320 : index
    %c0_51 = arith.constant 0 : index
    %159 = vector.load %arg1[%c320, %c0_51] : memref<976x128xf32, #tpu.memory_space<vmem>>, vector<32x96xf32>
    %c352 = arith.constant 352 : index
    %c0_52 = arith.constant 0 : index
    %160 = vector.load %arg1[%c352, %c0_52] : memref<976x128xf32, #tpu.memory_space<vmem>>, vector<1x96xf32>
    %c360 = arith.constant 360 : index
    %c0_53 = arith.constant 0 : index
    %161 = vector.load %arg1[%c360, %c0_53] : memref<976x128xf32, #tpu.memory_space<vmem>>, vector<32x32xf32>
    %c392 = arith.constant 392 : index
    %c0_54 = arith.constant 0 : index
    %162 = vector.load %arg1[%c392, %c0_54] : memref<976x128xf32, #tpu.memory_space<vmem>>, vector<1x32xf32>
    %c400 = arith.constant 400 : index
    %c0_55 = arith.constant 0 : index
    %163 = vector.load %arg1[%c400, %c0_55] : memref<976x128xf32, #tpu.memory_space<vmem>>, vector<32x64xf32>
    %c432 = arith.constant 432 : index
    %c0_56 = arith.constant 0 : index
    %164 = vector.load %arg1[%c432, %c0_56] : memref<976x128xf32, #tpu.memory_space<vmem>>, vector<1x64xf32>
    %c440 = arith.constant 440 : index
    %c0_57 = arith.constant 0 : index
    %165 = vector.load %arg1[%c440, %c0_57] : memref<976x128xf32, #tpu.memory_space<vmem>>, vector<64x32xf32>
    %c504 = arith.constant 504 : index
    %c0_58 = arith.constant 0 : index
    %166 = vector.load %arg1[%c504, %c0_58] : memref<976x128xf32, #tpu.memory_space<vmem>>, vector<1x32xf32>
    %c512 = arith.constant 512 : index
    %c0_59 = arith.constant 0 : index
    %167 = vector.load %arg1[%c512, %c0_59] : memref<976x128xf32, #tpu.memory_space<vmem>>, vector<1x32xf32>
    %c520 = arith.constant 520 : index
    %c0_60 = arith.constant 0 : index
    %168 = vector.load %arg1[%c520, %c0_60] : memref<976x128xf32, #tpu.memory_space<vmem>>, vector<1x32xf32>
    %c528 = arith.constant 528 : index
    %c0_61 = arith.constant 0 : index
    %169 = vector.load %arg1[%c528, %c0_61] : memref<976x128xf32, #tpu.memory_space<vmem>>, vector<1x32xf32>
    %c536 = arith.constant 536 : index
    %c0_62 = arith.constant 0 : index
    %170 = vector.load %arg1[%c536, %c0_62] : memref<976x128xf32, #tpu.memory_space<vmem>>, vector<1x32xf32>
    %cst_63 = arith.constant dense<0.000000e+00> : vector<32x96xf32>
    %171 = tpu.matmul %158, %159, %cst_63 {dimension_numbers = #tpu.dot_dimension_numbers<[1], [0], [0], [1], [0, 0, 1, 1], [], []>} : vector<32x32xf32>, vector<32x96xf32>, vector<32x96xf32> -> vector<32x96xf32>
    %172 = vector.broadcast %160 : vector<1x96xf32> to vector<32x96xf32>
    %173 = arith.addf %171, %172 : vector<32x96xf32>
    %174 = vector.extract_strided_slice %173 {offsets = [0, 0], sizes = [32, 32], strides = [1, 1]} : vector<32x96xf32> to vector<32x32xf32>
    %175 = vector.extract_strided_slice %173 {offsets = [0, 32], sizes = [32, 32], strides = [1, 1]} : vector<32x96xf32> to vector<32x32xf32>
    %176 = vector.extract_strided_slice %173 {offsets = [0, 64], sizes = [32, 32], strides = [1, 1]} : vector<32x96xf32> to vector<32x32xf32>
    %177 = vector.extract_strided_slice %174 {offsets = [0, 0], sizes = [32, 8], strides = [1, 1]} : vector<32x32xf32> to vector<32x8xf32>
    %178 = vector.shape_cast %177 : vector<32x8xf32> to vector<2x16x8xf32>
    %179 = vector.extract_strided_slice %175 {offsets = [0, 0], sizes = [32, 8], strides = [1, 1]} : vector<32x32xf32> to vector<32x8xf32>
    %180 = vector.shape_cast %179 : vector<32x8xf32> to vector<2x16x8xf32>
    %181 = vector.extract_strided_slice %176 {offsets = [0, 0], sizes = [32, 8], strides = [1, 1]} : vector<32x32xf32> to vector<32x8xf32>
    %182 = vector.shape_cast %181 : vector<32x8xf32> to vector<2x16x8xf32>
    "tpu.trace_start"() <{level = 10 : i32, message = "bqd,bkd->bqk"}> : () -> ()
    %cst_64 = arith.constant dense<0.000000e+00> : vector<2x16x16xf32>
    %183 = tpu.matmul %178, %180, %cst_64 {dimension_numbers = #tpu.dot_dimension_numbers<[2], [2], [1], [1], [0, 0, 0, 1, 1, 1], [0], [0]>} : vector<2x16x8xf32>, vector<2x16x8xf32>, vector<2x16x16xf32> -> vector<2x16x16xf32>
    "tpu.trace_stop"() : () -> ()
    %cst_65 = arith.constant 0.353553385 : f32
    %184 = vector.broadcast %cst_65 : f32 to vector<2x16x16xf32>
    %185 = arith.mulf %183, %184 : vector<2x16x16xf32>
    %cst_66 = arith.constant dense<0xFF800000> : vector<2x16xf32>
    %186 = vector.multi_reduction <maximumf>, %185, %cst_66 [2] : vector<2x16x16xf32> to vector<2x16xf32>
    %187 = vector.shape_cast %186 : vector<2x16xf32> to vector<2x16x1xf32>
    %188 = vector.broadcast %187 : vector<2x16x1xf32> to vector<2x16x16xf32>
    %189 = arith.subf %185, %188 : vector<2x16x16xf32>
    %190 = math.exp %189 : vector<2x16x16xf32>
    %cst_67 = arith.constant dense<0.000000e+00> : vector<2x16xf32>
    %191 = vector.multi_reduction <add>, %190, %cst_67 [2] : vector<2x16x16xf32> to vector<2x16xf32>
    %192 = vector.shape_cast %191 : vector<2x16xf32> to vector<2x16x1xf32>
    %193 = vector.broadcast %192 : vector<2x16x1xf32> to vector<2x16x16xf32>
    %194 = arith.divf %190, %193 : vector<2x16x16xf32>
    "tpu.trace_start"() <{level = 10 : i32, message = "bqk,bkd->bqd"}> : () -> ()
    %cst_68 = arith.constant dense<0.000000e+00> : vector<2x16x8xf32>
    %195 = tpu.matmul %194, %182, %cst_68 {dimension_numbers = #tpu.dot_dimension_numbers<[2], [1], [1], [2], [0, 0, 0, 1, 1, 2], [0], [0]>} : vector<2x16x16xf32>, vector<2x16x8xf32>, vector<2x16x8xf32> -> vector<2x16x8xf32>
    "tpu.trace_stop"() : () -> ()
    %196 = vector.shape_cast %195 : vector<2x16x8xf32> to vector<32x8xf32>
    %197 = vector.extract_strided_slice %174 {offsets = [0, 8], sizes = [32, 8], strides = [1, 1]} : vector<32x32xf32> to vector<32x8xf32>
    %198 = vector.shape_cast %197 : vector<32x8xf32> to vector<2x16x8xf32>
    %199 = vector.extract_strided_slice %175 {offsets = [0, 8], sizes = [32, 8], strides = [1, 1]} : vector<32x32xf32> to vector<32x8xf32>
    %200 = vector.shape_cast %199 : vector<32x8xf32> to vector<2x16x8xf32>
    %201 = vector.extract_strided_slice %176 {offsets = [0, 8], sizes = [32, 8], strides = [1, 1]} : vector<32x32xf32> to vector<32x8xf32>
    %202 = vector.shape_cast %201 : vector<32x8xf32> to vector<2x16x8xf32>
    "tpu.trace_start"() <{level = 10 : i32, message = "bqd,bkd->bqk"}> : () -> ()
    %cst_69 = arith.constant dense<0.000000e+00> : vector<2x16x16xf32>
    %203 = tpu.matmul %198, %200, %cst_69 {dimension_numbers = #tpu.dot_dimension_numbers<[2], [2], [1], [1], [0, 0, 0, 1, 1, 1], [0], [0]>} : vector<2x16x8xf32>, vector<2x16x8xf32>, vector<2x16x16xf32> -> vector<2x16x16xf32>
    "tpu.trace_stop"() : () -> ()
    %cst_70 = arith.constant 0.353553385 : f32
    %204 = vector.broadcast %cst_70 : f32 to vector<2x16x16xf32>
    %205 = arith.mulf %203, %204 : vector<2x16x16xf32>
    %cst_71 = arith.constant dense<0xFF800000> : vector<2x16xf32>
    %206 = vector.multi_reduction <maximumf>, %205, %cst_71 [2] : vector<2x16x16xf32> to vector<2x16xf32>
    %207 = vector.shape_cast %206 : vector<2x16xf32> to vector<2x16x1xf32>
    %208 = vector.broadcast %207 : vector<2x16x1xf32> to vector<2x16x16xf32>
    %209 = arith.subf %205, %208 : vector<2x16x16xf32>
    %210 = math.exp %209 : vector<2x16x16xf32>
    %cst_72 = arith.constant dense<0.000000e+00> : vector<2x16xf32>
    %211 = vector.multi_reduction <add>, %210, %cst_72 [2] : vector<2x16x16xf32> to vector<2x16xf32>
    %212 = vector.shape_cast %211 : vector<2x16xf32> to vector<2x16x1xf32>
    %213 = vector.broadcast %212 : vector<2x16x1xf32> to vector<2x16x16xf32>
    %214 = arith.divf %210, %213 : vector<2x16x16xf32>
    "tpu.trace_start"() <{level = 10 : i32, message = "bqk,bkd->bqd"}> : () -> ()
    %cst_73 = arith.constant dense<0.000000e+00> : vector<2x16x8xf32>
    %215 = tpu.matmul %214, %202, %cst_73 {dimension_numbers = #tpu.dot_dimension_numbers<[2], [1], [1], [2], [0, 0, 0, 1, 1, 2], [0], [0]>} : vector<2x16x16xf32>, vector<2x16x8xf32>, vector<2x16x8xf32> -> vector<2x16x8xf32>
    "tpu.trace_stop"() : () -> ()
    %216 = vector.shape_cast %215 : vector<2x16x8xf32> to vector<32x8xf32>
    %217 = vector.extract_strided_slice %174 {offsets = [0, 16], sizes = [32, 8], strides = [1, 1]} : vector<32x32xf32> to vector<32x8xf32>
    %218 = vector.shape_cast %217 : vector<32x8xf32> to vector<2x16x8xf32>
    %219 = vector.extract_strided_slice %175 {offsets = [0, 16], sizes = [32, 8], strides = [1, 1]} : vector<32x32xf32> to vector<32x8xf32>
    %220 = vector.shape_cast %219 : vector<32x8xf32> to vector<2x16x8xf32>
    %221 = vector.extract_strided_slice %176 {offsets = [0, 16], sizes = [32, 8], strides = [1, 1]} : vector<32x32xf32> to vector<32x8xf32>
    %222 = vector.shape_cast %221 : vector<32x8xf32> to vector<2x16x8xf32>
    "tpu.trace_start"() <{level = 10 : i32, message = "bqd,bkd->bqk"}> : () -> ()
    %cst_74 = arith.constant dense<0.000000e+00> : vector<2x16x16xf32>
    %223 = tpu.matmul %218, %220, %cst_74 {dimension_numbers = #tpu.dot_dimension_numbers<[2], [2], [1], [1], [0, 0, 0, 1, 1, 1], [0], [0]>} : vector<2x16x8xf32>, vector<2x16x8xf32>, vector<2x16x16xf32> -> vector<2x16x16xf32>
    "tpu.trace_stop"() : () -> ()
    %cst_75 = arith.constant 0.353553385 : f32
    %224 = vector.broadcast %cst_75 : f32 to vector<2x16x16xf32>
    %225 = arith.mulf %223, %224 : vector<2x16x16xf32>
    %cst_76 = arith.constant dense<0xFF800000> : vector<2x16xf32>
    %226 = vector.multi_reduction <maximumf>, %225, %cst_76 [2] : vector<2x16x16xf32> to vector<2x16xf32>
    %227 = vector.shape_cast %226 : vector<2x16xf32> to vector<2x16x1xf32>
    %228 = vector.broadcast %227 : vector<2x16x1xf32> to vector<2x16x16xf32>
    %229 = arith.subf %225, %228 : vector<2x16x16xf32>
    %230 = math.exp %229 : vector<2x16x16xf32>
    %cst_77 = arith.constant dense<0.000000e+00> : vector<2x16xf32>
    %231 = vector.multi_reduction <add>, %230, %cst_77 [2] : vector<2x16x16xf32> to vector<2x16xf32>
    %232 = vector.shape_cast %231 : vector<2x16xf32> to vector<2x16x1xf32>
    %233 = vector.broadcast %232 : vector<2x16x1xf32> to vector<2x16x16xf32>
    %234 = arith.divf %230, %233 : vector<2x16x16xf32>
    "tpu.trace_start"() <{level = 10 : i32, message = "bqk,bkd->bqd"}> : () -> ()
    %cst_78 = arith.constant dense<0.000000e+00> : vector<2x16x8xf32>
    %235 = tpu.matmul %234, %222, %cst_78 {dimension_numbers = #tpu.dot_dimension_numbers<[2], [1], [1], [2], [0, 0, 0, 1, 1, 2], [0], [0]>} : vector<2x16x16xf32>, vector<2x16x8xf32>, vector<2x16x8xf32> -> vector<2x16x8xf32>
    "tpu.trace_stop"() : () -> ()
    %236 = vector.shape_cast %235 : vector<2x16x8xf32> to vector<32x8xf32>
    %237 = vector.extract_strided_slice %174 {offsets = [0, 24], sizes = [32, 8], strides = [1, 1]} : vector<32x32xf32> to vector<32x8xf32>
    %238 = vector.shape_cast %237 : vector<32x8xf32> to vector<2x16x8xf32>
    %239 = vector.extract_strided_slice %175 {offsets = [0, 24], sizes = [32, 8], strides = [1, 1]} : vector<32x32xf32> to vector<32x8xf32>
    %240 = vector.shape_cast %239 : vector<32x8xf32> to vector<2x16x8xf32>
    %241 = vector.extract_strided_slice %176 {offsets = [0, 24], sizes = [32, 8], strides = [1, 1]} : vector<32x32xf32> to vector<32x8xf32>
    %242 = vector.shape_cast %241 : vector<32x8xf32> to vector<2x16x8xf32>
    "tpu.trace_start"() <{level = 10 : i32, message = "bqd,bkd->bqk"}> : () -> ()
    %cst_79 = arith.constant dense<0.000000e+00> : vector<2x16x16xf32>
    %243 = tpu.matmul %238, %240, %cst_79 {dimension_numbers = #tpu.dot_dimension_numbers<[2], [2], [1], [1], [0, 0, 0, 1, 1, 1], [0], [0]>} : vector<2x16x8xf32>, vector<2x16x8xf32>, vector<2x16x16xf32> -> vector<2x16x16xf32>
    "tpu.trace_stop"() : () -> ()
    %cst_80 = arith.constant 0.353553385 : f32
    %244 = vector.broadcast %cst_80 : f32 to vector<2x16x16xf32>
    %245 = arith.mulf %243, %244 : vector<2x16x16xf32>
    %cst_81 = arith.constant dense<0xFF800000> : vector<2x16xf32>
    %246 = vector.multi_reduction <maximumf>, %245, %cst_81 [2] : vector<2x16x16xf32> to vector<2x16xf32>
    %247 = vector.shape_cast %246 : vector<2x16xf32> to vector<2x16x1xf32>
    %248 = vector.broadcast %247 : vector<2x16x1xf32> to vector<2x16x16xf32>
    %249 = arith.subf %245, %248 : vector<2x16x16xf32>
    %250 = math.exp %249 : vector<2x16x16xf32>
    %cst_82 = arith.constant dense<0.000000e+00> : vector<2x16xf32>
    %251 = vector.multi_reduction <add>, %250, %cst_82 [2] : vector<2x16x16xf32> to vector<2x16xf32>
    %252 = vector.shape_cast %251 : vector<2x16xf32> to vector<2x16x1xf32>
    %253 = vector.broadcast %252 : vector<2x16x1xf32> to vector<2x16x16xf32>
    %254 = arith.divf %250, %253 : vector<2x16x16xf32>
    "tpu.trace_start"() <{level = 10 : i32, message = "bqk,bkd->bqd"}> : () -> ()
    %cst_83 = arith.constant dense<0.000000e+00> : vector<2x16x8xf32>
    %255 = tpu.matmul %254, %242, %cst_83 {dimension_numbers = #tpu.dot_dimension_numbers<[2], [1], [1], [2], [0, 0, 0, 1, 1, 2], [0], [0]>} : vector<2x16x16xf32>, vector<2x16x8xf32>, vector<2x16x8xf32> -> vector<2x16x8xf32>
    "tpu.trace_stop"() : () -> ()
    %256 = vector.shape_cast %255 : vector<2x16x8xf32> to vector<32x8xf32>
    %257 = tpu.concatenate %196, %216, %236, %256 in 1 : vector<32x8xf32>, vector<32x8xf32>, vector<32x8xf32>, vector<32x8xf32> -> vector<32x32xf32>
    %cst_84 = arith.constant dense<0.000000e+00> : vector<32x32xf32>
    %258 = tpu.matmul %257, %161, %cst_84 {dimension_numbers = #tpu.dot_dimension_numbers<[1], [0], [0], [1], [0, 0, 1, 1], [], []>} : vector<32x32xf32>, vector<32x32xf32>, vector<32x32xf32> -> vector<32x32xf32>
    %259 = vector.broadcast %162 : vector<1x32xf32> to vector<32x32xf32>
    %260 = arith.addf %258, %259 : vector<32x32xf32>
    %261 = arith.addf %158, %260 : vector<32x32xf32>
    %cst_85 = arith.constant dense<0.000000e+00> : vector<32xf32>
    %262 = vector.multi_reduction <add>, %261, %cst_85 [1] : vector<32x32xf32> to vector<32xf32>
    %263 = vector.shape_cast %262 : vector<32xf32> to vector<32x1xf32>
    %cst_86 = arith.constant 3.200000e+01 : f32
    %264 = vector.broadcast %cst_86 : f32 to vector<32x1xf32>
    %265 = arith.divf %263, %264 : vector<32x1xf32>
    %266 = vector.broadcast %265 : vector<32x1xf32> to vector<32x32xf32>
    %267 = arith.subf %261, %266 : vector<32x32xf32>
    %268 = arith.mulf %267, %267 : vector<32x32xf32>
    %cst_87 = arith.constant dense<0.000000e+00> : vector<32xf32>
    %269 = vector.multi_reduction <add>, %268, %cst_87 [1] : vector<32x32xf32> to vector<32xf32>
    %270 = vector.shape_cast %269 : vector<32xf32> to vector<32x1xf32>
    %cst_88 = arith.constant 3.200000e+01 : f32
    %271 = vector.broadcast %cst_88 : f32 to vector<32x1xf32>
    %272 = arith.divf %270, %271 : vector<32x1xf32>
    %cst_89 = arith.constant 9.99999974E-6 : f32
    %273 = vector.broadcast %cst_89 : f32 to vector<32x1xf32>
    %274 = arith.addf %272, %273 : vector<32x1xf32>
    %275 = math.rsqrt %274 : vector<32x1xf32>
    %276 = vector.broadcast %275 : vector<32x1xf32> to vector<32x32xf32>
    %277 = arith.mulf %267, %276 : vector<32x32xf32>
    %278 = vector.broadcast %167 : vector<1x32xf32> to vector<32x32xf32>
    %279 = arith.mulf %277, %278 : vector<32x32xf32>
    %280 = vector.broadcast %168 : vector<1x32xf32> to vector<32x32xf32>
    %281 = arith.addf %279, %280 : vector<32x32xf32>
    %cst_90 = arith.constant dense<0.000000e+00> : vector<32x64xf32>
    %282 = tpu.matmul %281, %163, %cst_90 {dimension_numbers = #tpu.dot_dimension_numbers<[1], [0], [0], [1], [0, 0, 1, 1], [], []>} : vector<32x32xf32>, vector<32x64xf32>, vector<32x64xf32> -> vector<32x64xf32>
    %283 = vector.broadcast %164 : vector<1x64xf32> to vector<32x64xf32>
    %284 = arith.addf %282, %283 : vector<32x64xf32>
    %cst_91 = arith.constant 0.000000e+00 : f32
    %285 = vector.broadcast %cst_91 : f32 to vector<32x64xf32>
    %286 = arith.maximumf %284, %285 : vector<32x64xf32>
    %cst_92 = arith.constant dense<0.000000e+00> : vector<32x32xf32>
    %287 = tpu.matmul %286, %165, %cst_92 {dimension_numbers = #tpu.dot_dimension_numbers<[1], [0], [0], [1], [0, 0, 1, 1], [], []>} : vector<32x64xf32>, vector<64x32xf32>, vector<32x32xf32> -> vector<32x32xf32>
    %288 = vector.broadcast %166 : vector<1x32xf32> to vector<32x32xf32>
    %289 = arith.addf %287, %288 : vector<32x32xf32>
    %290 = arith.addf %281, %289 : vector<32x32xf32>
    %cst_93 = arith.constant dense<0.000000e+00> : vector<32xf32>
    %291 = vector.multi_reduction <add>, %290, %cst_93 [1] : vector<32x32xf32> to vector<32xf32>
    %292 = vector.shape_cast %291 : vector<32xf32> to vector<32x1xf32>
    %cst_94 = arith.constant 3.200000e+01 : f32
    %293 = vector.broadcast %cst_94 : f32 to vector<32x1xf32>
    %294 = arith.divf %292, %293 : vector<32x1xf32>
    %295 = vector.broadcast %294 : vector<32x1xf32> to vector<32x32xf32>
    %296 = arith.subf %290, %295 : vector<32x32xf32>
    %297 = arith.mulf %296, %296 : vector<32x32xf32>
    %cst_95 = arith.constant dense<0.000000e+00> : vector<32xf32>
    %298 = vector.multi_reduction <add>, %297, %cst_95 [1] : vector<32x32xf32> to vector<32xf32>
    %299 = vector.shape_cast %298 : vector<32xf32> to vector<32x1xf32>
    %cst_96 = arith.constant 3.200000e+01 : f32
    %300 = vector.broadcast %cst_96 : f32 to vector<32x1xf32>
    %301 = arith.divf %299, %300 : vector<32x1xf32>
    %cst_97 = arith.constant 9.99999974E-6 : f32
    %302 = vector.broadcast %cst_97 : f32 to vector<32x1xf32>
    %303 = arith.addf %301, %302 : vector<32x1xf32>
    %304 = math.rsqrt %303 : vector<32x1xf32>
    %305 = vector.broadcast %304 : vector<32x1xf32> to vector<32x32xf32>
    %306 = arith.mulf %296, %305 : vector<32x32xf32>
    %307 = vector.broadcast %169 : vector<1x32xf32> to vector<32x32xf32>
    %308 = arith.mulf %306, %307 : vector<32x32xf32>
    %309 = vector.broadcast %170 : vector<1x32xf32> to vector<32x32xf32>
    %310 = arith.addf %308, %309 : vector<32x32xf32>
    %c544 = arith.constant 544 : index
    %c0_98 = arith.constant 0 : index
    %311 = vector.load %arg1[%c544, %c0_98] : memref<976x128xf32, #tpu.memory_space<vmem>>, vector<1x32xf32>
    %c552 = arith.constant 552 : index
    %c0_99 = arith.constant 0 : index
    %312 = vector.load %arg1[%c552, %c0_99] : memref<976x128xf32, #tpu.memory_space<vmem>>, vector<1x32xf32>
    %cst_100 = arith.constant dense<0.000000e+00> : vector<32xf32>
    %313 = vector.multi_reduction <add>, %310, %cst_100 [1] : vector<32x32xf32> to vector<32xf32>
    %314 = vector.shape_cast %313 : vector<32xf32> to vector<32x1xf32>
    %cst_101 = arith.constant 3.200000e+01 : f32
    %315 = vector.broadcast %cst_101 : f32 to vector<32x1xf32>
    %316 = arith.divf %314, %315 : vector<32x1xf32>
    %317 = vector.broadcast %316 : vector<32x1xf32> to vector<32x32xf32>
    %318 = arith.subf %310, %317 : vector<32x32xf32>
    %319 = arith.mulf %318, %318 : vector<32x32xf32>
    %cst_102 = arith.constant dense<0.000000e+00> : vector<32xf32>
    %320 = vector.multi_reduction <add>, %319, %cst_102 [1] : vector<32x32xf32> to vector<32xf32>
    %321 = vector.shape_cast %320 : vector<32xf32> to vector<32x1xf32>
    %cst_103 = arith.constant 3.200000e+01 : f32
    %322 = vector.broadcast %cst_103 : f32 to vector<32x1xf32>
    %323 = arith.divf %321, %322 : vector<32x1xf32>
    %cst_104 = arith.constant 9.99999974E-6 : f32
    %324 = vector.broadcast %cst_104 : f32 to vector<32x1xf32>
    %325 = arith.addf %323, %324 : vector<32x1xf32>
    %326 = math.rsqrt %325 : vector<32x1xf32>
    %327 = vector.broadcast %326 : vector<32x1xf32> to vector<32x32xf32>
    %328 = arith.mulf %318, %327 : vector<32x32xf32>
    %329 = vector.broadcast %311 : vector<1x32xf32> to vector<32x32xf32>
    %330 = arith.mulf %328, %329 : vector<32x32xf32>
    %331 = vector.broadcast %312 : vector<1x32xf32> to vector<32x32xf32>
    %332 = arith.addf %330, %331 : vector<32x32xf32>
    %c560 = arith.constant 560 : index
    %c0_105 = arith.constant 0 : index
    %333 = vector.load %arg1[%c560, %c0_105] : memref<976x128xf32, #tpu.memory_space<vmem>>, vector<32x96xf32>
    %c592 = arith.constant 592 : index
    %c0_106 = arith.constant 0 : index
    %334 = vector.load %arg1[%c592, %c0_106] : memref<976x128xf32, #tpu.memory_space<vmem>>, vector<1x96xf32>
    %c600 = arith.constant 600 : index
    %c0_107 = arith.constant 0 : index
    %335 = vector.load %arg1[%c600, %c0_107] : memref<976x128xf32, #tpu.memory_space<vmem>>, vector<32x32xf32>
    %c632 = arith.constant 632 : index
    %c0_108 = arith.constant 0 : index
    %336 = vector.load %arg1[%c632, %c0_108] : memref<976x128xf32, #tpu.memory_space<vmem>>, vector<1x32xf32>
    %c640 = arith.constant 640 : index
    %c0_109 = arith.constant 0 : index
    %337 = vector.load %arg1[%c640, %c0_109] : memref<976x128xf32, #tpu.memory_space<vmem>>, vector<32x32xf32>
    %c672 = arith.constant 672 : index
    %c0_110 = arith.constant 0 : index
    %338 = vector.load %arg1[%c672, %c0_110] : memref<976x128xf32, #tpu.memory_space<vmem>>, vector<1x32xf32>
    %c680 = arith.constant 680 : index
    %c0_111 = arith.constant 0 : index
    %339 = vector.load %arg1[%c680, %c0_111] : memref<976x128xf32, #tpu.memory_space<vmem>>, vector<32x64xf32>
    %c712 = arith.constant 712 : index
    %c0_112 = arith.constant 0 : index
    %340 = vector.load %arg1[%c712, %c0_112] : memref<976x128xf32, #tpu.memory_space<vmem>>, vector<1x64xf32>
    %c720 = arith.constant 720 : index
    %c0_113 = arith.constant 0 : index
    %341 = vector.load %arg1[%c720, %c0_113] : memref<976x128xf32, #tpu.memory_space<vmem>>, vector<32x32xf32>
    %c752 = arith.constant 752 : index
    %c0_114 = arith.constant 0 : index
    %342 = vector.load %arg1[%c752, %c0_114] : memref<976x128xf32, #tpu.memory_space<vmem>>, vector<1x32xf32>
    %c760 = arith.constant 760 : index
    %c0_115 = arith.constant 0 : index
    %343 = vector.load %arg1[%c760, %c0_115] : memref<976x128xf32, #tpu.memory_space<vmem>>, vector<32x64xf32>
    %c792 = arith.constant 792 : index
    %c0_116 = arith.constant 0 : index
    %344 = vector.load %arg1[%c792, %c0_116] : memref<976x128xf32, #tpu.memory_space<vmem>>, vector<1x64xf32>
    %c800 = arith.constant 800 : index
    %c0_117 = arith.constant 0 : index
    %345 = vector.load %arg1[%c800, %c0_117] : memref<976x128xf32, #tpu.memory_space<vmem>>, vector<64x32xf32>
    %c864 = arith.constant 864 : index
    %c0_118 = arith.constant 0 : index
    %346 = vector.load %arg1[%c864, %c0_118] : memref<976x128xf32, #tpu.memory_space<vmem>>, vector<1x32xf32>
    %c872 = arith.constant 872 : index
    %c0_119 = arith.constant 0 : index
    %347 = vector.load %arg1[%c872, %c0_119] : memref<976x128xf32, #tpu.memory_space<vmem>>, vector<1x32xf32>
    %c880 = arith.constant 880 : index
    %c0_120 = arith.constant 0 : index
    %348 = vector.load %arg1[%c880, %c0_120] : memref<976x128xf32, #tpu.memory_space<vmem>>, vector<1x32xf32>
    %c888 = arith.constant 888 : index
    %c0_121 = arith.constant 0 : index
    %349 = vector.load %arg1[%c888, %c0_121] : memref<976x128xf32, #tpu.memory_space<vmem>>, vector<1x32xf32>
    %c896 = arith.constant 896 : index
    %c0_122 = arith.constant 0 : index
    %350 = vector.load %arg1[%c896, %c0_122] : memref<976x128xf32, #tpu.memory_space<vmem>>, vector<1x32xf32>
    %c904 = arith.constant 904 : index
    %c0_123 = arith.constant 0 : index
    %351 = vector.load %arg1[%c904, %c0_123] : memref<976x128xf32, #tpu.memory_space<vmem>>, vector<1x32xf32>
    %c912 = arith.constant 912 : index
    %c0_124 = arith.constant 0 : index
    %352 = vector.load %arg1[%c912, %c0_124] : memref<976x128xf32, #tpu.memory_space<vmem>>, vector<1x32xf32>
    %cst_125 = arith.constant dense<0.000000e+00> : vector<32x96xf32>
    %353 = tpu.matmul %6, %333, %cst_125 {dimension_numbers = #tpu.dot_dimension_numbers<[1], [0], [0], [1], [0, 0, 1, 1], [], []>} : vector<32x32xf32>, vector<32x96xf32>, vector<32x96xf32> -> vector<32x96xf32>
    %354 = vector.broadcast %334 : vector<1x96xf32> to vector<32x96xf32>
    %355 = arith.addf %353, %354 : vector<32x96xf32>
    %356 = vector.extract_strided_slice %355 {offsets = [0, 0], sizes = [32, 32], strides = [1, 1]} : vector<32x96xf32> to vector<32x32xf32>
    %357 = vector.extract_strided_slice %355 {offsets = [0, 32], sizes = [32, 32], strides = [1, 1]} : vector<32x96xf32> to vector<32x32xf32>
    %358 = vector.extract_strided_slice %355 {offsets = [0, 64], sizes = [32, 32], strides = [1, 1]} : vector<32x96xf32> to vector<32x32xf32>
    %359 = tpu.iota {dimensions = array<i32: 0>} : vector<16x16xi32>
    %360 = tpu.iota {dimensions = array<i32: 1>} : vector<16x16xi32>
    %361 = arith.cmpi sgt, %360, %359 : vector<16x16xi32>
    %cst_126 = arith.constant -1.000000e+30 : f32
    %cst_127 = arith.constant 0.000000e+00 : f32
    %362 = vector.broadcast %cst_126 : f32 to vector<16x16xf32>
    %363 = vector.broadcast %cst_127 : f32 to vector<16x16xf32>
    %364 = arith.select %361, %362, %363 : vector<16x16xi1>, vector<16x16xf32>
    %365 = vector.extract_strided_slice %356 {offsets = [0, 0], sizes = [32, 8], strides = [1, 1]} : vector<32x32xf32> to vector<32x8xf32>
    %366 = vector.shape_cast %365 : vector<32x8xf32> to vector<2x16x8xf32>
    %367 = vector.extract_strided_slice %357 {offsets = [0, 0], sizes = [32, 8], strides = [1, 1]} : vector<32x32xf32> to vector<32x8xf32>
    %368 = vector.shape_cast %367 : vector<32x8xf32> to vector<2x16x8xf32>
    %369 = vector.extract_strided_slice %358 {offsets = [0, 0], sizes = [32, 8], strides = [1, 1]} : vector<32x32xf32> to vector<32x8xf32>
    %370 = vector.shape_cast %369 : vector<32x8xf32> to vector<2x16x8xf32>
    "tpu.trace_start"() <{level = 10 : i32, message = "bqd,bkd->bqk"}> : () -> ()
    %cst_128 = arith.constant dense<0.000000e+00> : vector<2x16x16xf32>
    %371 = tpu.matmul %366, %368, %cst_128 {dimension_numbers = #tpu.dot_dimension_numbers<[2], [2], [1], [1], [0, 0, 0, 1, 1, 1], [0], [0]>} : vector<2x16x8xf32>, vector<2x16x8xf32>, vector<2x16x16xf32> -> vector<2x16x16xf32>
    "tpu.trace_stop"() : () -> ()
    %cst_129 = arith.constant 0.353553385 : f32
    %372 = vector.broadcast %cst_129 : f32 to vector<2x16x16xf32>
    %373 = arith.mulf %371, %372 : vector<2x16x16xf32>
    %374 = vector.shape_cast %364 : vector<16x16xf32> to vector<1x16x16xf32>
    %375 = vector.broadcast %374 : vector<1x16x16xf32> to vector<2x16x16xf32>
    %376 = arith.addf %373, %375 : vector<2x16x16xf32>
    %cst_130 = arith.constant dense<0xFF800000> : vector<2x16xf32>
    %377 = vector.multi_reduction <maximumf>, %376, %cst_130 [2] : vector<2x16x16xf32> to vector<2x16xf32>
    %378 = vector.shape_cast %377 : vector<2x16xf32> to vector<2x16x1xf32>
    %379 = vector.broadcast %378 : vector<2x16x1xf32> to vector<2x16x16xf32>
    %380 = arith.subf %376, %379 : vector<2x16x16xf32>
    %381 = math.exp %380 : vector<2x16x16xf32>
    %cst_131 = arith.constant dense<0.000000e+00> : vector<2x16xf32>
    %382 = vector.multi_reduction <add>, %381, %cst_131 [2] : vector<2x16x16xf32> to vector<2x16xf32>
    %383 = vector.shape_cast %382 : vector<2x16xf32> to vector<2x16x1xf32>
    %384 = vector.broadcast %383 : vector<2x16x1xf32> to vector<2x16x16xf32>
    %385 = arith.divf %381, %384 : vector<2x16x16xf32>
    "tpu.trace_start"() <{level = 10 : i32, message = "bqk,bkd->bqd"}> : () -> ()
    %cst_132 = arith.constant dense<0.000000e+00> : vector<2x16x8xf32>
    %386 = tpu.matmul %385, %370, %cst_132 {dimension_numbers = #tpu.dot_dimension_numbers<[2], [1], [1], [2], [0, 0, 0, 1, 1, 2], [0], [0]>} : vector<2x16x16xf32>, vector<2x16x8xf32>, vector<2x16x8xf32> -> vector<2x16x8xf32>
    "tpu.trace_stop"() : () -> ()
    %387 = vector.shape_cast %386 : vector<2x16x8xf32> to vector<32x8xf32>
    %388 = vector.extract_strided_slice %356 {offsets = [0, 8], sizes = [32, 8], strides = [1, 1]} : vector<32x32xf32> to vector<32x8xf32>
    %389 = vector.shape_cast %388 : vector<32x8xf32> to vector<2x16x8xf32>
    %390 = vector.extract_strided_slice %357 {offsets = [0, 8], sizes = [32, 8], strides = [1, 1]} : vector<32x32xf32> to vector<32x8xf32>
    %391 = vector.shape_cast %390 : vector<32x8xf32> to vector<2x16x8xf32>
    %392 = vector.extract_strided_slice %358 {offsets = [0, 8], sizes = [32, 8], strides = [1, 1]} : vector<32x32xf32> to vector<32x8xf32>
    %393 = vector.shape_cast %392 : vector<32x8xf32> to vector<2x16x8xf32>
    "tpu.trace_start"() <{level = 10 : i32, message = "bqd,bkd->bqk"}> : () -> ()
    %cst_133 = arith.constant dense<0.000000e+00> : vector<2x16x16xf32>
    %394 = tpu.matmul %389, %391, %cst_133 {dimension_numbers = #tpu.dot_dimension_numbers<[2], [2], [1], [1], [0, 0, 0, 1, 1, 1], [0], [0]>} : vector<2x16x8xf32>, vector<2x16x8xf32>, vector<2x16x16xf32> -> vector<2x16x16xf32>
    "tpu.trace_stop"() : () -> ()
    %cst_134 = arith.constant 0.353553385 : f32
    %395 = vector.broadcast %cst_134 : f32 to vector<2x16x16xf32>
    %396 = arith.mulf %394, %395 : vector<2x16x16xf32>
    %397 = vector.shape_cast %364 : vector<16x16xf32> to vector<1x16x16xf32>
    %398 = vector.broadcast %397 : vector<1x16x16xf32> to vector<2x16x16xf32>
    %399 = arith.addf %396, %398 : vector<2x16x16xf32>
    %cst_135 = arith.constant dense<0xFF800000> : vector<2x16xf32>
    %400 = vector.multi_reduction <maximumf>, %399, %cst_135 [2] : vector<2x16x16xf32> to vector<2x16xf32>
    %401 = vector.shape_cast %400 : vector<2x16xf32> to vector<2x16x1xf32>
    %402 = vector.broadcast %401 : vector<2x16x1xf32> to vector<2x16x16xf32>
    %403 = arith.subf %399, %402 : vector<2x16x16xf32>
    %404 = math.exp %403 : vector<2x16x16xf32>
    %cst_136 = arith.constant dense<0.000000e+00> : vector<2x16xf32>
    %405 = vector.multi_reduction <add>, %404, %cst_136 [2] : vector<2x16x16xf32> to vector<2x16xf32>
    %406 = vector.shape_cast %405 : vector<2x16xf32> to vector<2x16x1xf32>
    %407 = vector.broadcast %406 : vector<2x16x1xf32> to vector<2x16x16xf32>
    %408 = arith.divf %404, %407 : vector<2x16x16xf32>
    "tpu.trace_start"() <{level = 10 : i32, message = "bqk,bkd->bqd"}> : () -> ()
    %cst_137 = arith.constant dense<0.000000e+00> : vector<2x16x8xf32>
    %409 = tpu.matmul %408, %393, %cst_137 {dimension_numbers = #tpu.dot_dimension_numbers<[2], [1], [1], [2], [0, 0, 0, 1, 1, 2], [0], [0]>} : vector<2x16x16xf32>, vector<2x16x8xf32>, vector<2x16x8xf32> -> vector<2x16x8xf32>
    "tpu.trace_stop"() : () -> ()
    %410 = vector.shape_cast %409 : vector<2x16x8xf32> to vector<32x8xf32>
    %411 = vector.extract_strided_slice %356 {offsets = [0, 16], sizes = [32, 8], strides = [1, 1]} : vector<32x32xf32> to vector<32x8xf32>
    %412 = vector.shape_cast %411 : vector<32x8xf32> to vector<2x16x8xf32>
    %413 = vector.extract_strided_slice %357 {offsets = [0, 16], sizes = [32, 8], strides = [1, 1]} : vector<32x32xf32> to vector<32x8xf32>
    %414 = vector.shape_cast %413 : vector<32x8xf32> to vector<2x16x8xf32>
    %415 = vector.extract_strided_slice %358 {offsets = [0, 16], sizes = [32, 8], strides = [1, 1]} : vector<32x32xf32> to vector<32x8xf32>
    %416 = vector.shape_cast %415 : vector<32x8xf32> to vector<2x16x8xf32>
    "tpu.trace_start"() <{level = 10 : i32, message = "bqd,bkd->bqk"}> : () -> ()
    %cst_138 = arith.constant dense<0.000000e+00> : vector<2x16x16xf32>
    %417 = tpu.matmul %412, %414, %cst_138 {dimension_numbers = #tpu.dot_dimension_numbers<[2], [2], [1], [1], [0, 0, 0, 1, 1, 1], [0], [0]>} : vector<2x16x8xf32>, vector<2x16x8xf32>, vector<2x16x16xf32> -> vector<2x16x16xf32>
    "tpu.trace_stop"() : () -> ()
    %cst_139 = arith.constant 0.353553385 : f32
    %418 = vector.broadcast %cst_139 : f32 to vector<2x16x16xf32>
    %419 = arith.mulf %417, %418 : vector<2x16x16xf32>
    %420 = vector.shape_cast %364 : vector<16x16xf32> to vector<1x16x16xf32>
    %421 = vector.broadcast %420 : vector<1x16x16xf32> to vector<2x16x16xf32>
    %422 = arith.addf %419, %421 : vector<2x16x16xf32>
    %cst_140 = arith.constant dense<0xFF800000> : vector<2x16xf32>
    %423 = vector.multi_reduction <maximumf>, %422, %cst_140 [2] : vector<2x16x16xf32> to vector<2x16xf32>
    %424 = vector.shape_cast %423 : vector<2x16xf32> to vector<2x16x1xf32>
    %425 = vector.broadcast %424 : vector<2x16x1xf32> to vector<2x16x16xf32>
    %426 = arith.subf %422, %425 : vector<2x16x16xf32>
    %427 = math.exp %426 : vector<2x16x16xf32>
    %cst_141 = arith.constant dense<0.000000e+00> : vector<2x16xf32>
    %428 = vector.multi_reduction <add>, %427, %cst_141 [2] : vector<2x16x16xf32> to vector<2x16xf32>
    %429 = vector.shape_cast %428 : vector<2x16xf32> to vector<2x16x1xf32>
    %430 = vector.broadcast %429 : vector<2x16x1xf32> to vector<2x16x16xf32>
    %431 = arith.divf %427, %430 : vector<2x16x16xf32>
    "tpu.trace_start"() <{level = 10 : i32, message = "bqk,bkd->bqd"}> : () -> ()
    %cst_142 = arith.constant dense<0.000000e+00> : vector<2x16x8xf32>
    %432 = tpu.matmul %431, %416, %cst_142 {dimension_numbers = #tpu.dot_dimension_numbers<[2], [1], [1], [2], [0, 0, 0, 1, 1, 2], [0], [0]>} : vector<2x16x16xf32>, vector<2x16x8xf32>, vector<2x16x8xf32> -> vector<2x16x8xf32>
    "tpu.trace_stop"() : () -> ()
    %433 = vector.shape_cast %432 : vector<2x16x8xf32> to vector<32x8xf32>
    %434 = vector.extract_strided_slice %356 {offsets = [0, 24], sizes = [32, 8], strides = [1, 1]} : vector<32x32xf32> to vector<32x8xf32>
    %435 = vector.shape_cast %434 : vector<32x8xf32> to vector<2x16x8xf32>
    %436 = vector.extract_strided_slice %357 {offsets = [0, 24], sizes = [32, 8], strides = [1, 1]} : vector<32x32xf32> to vector<32x8xf32>
    %437 = vector.shape_cast %436 : vector<32x8xf32> to vector<2x16x8xf32>
    %438 = vector.extract_strided_slice %358 {offsets = [0, 24], sizes = [32, 8], strides = [1, 1]} : vector<32x32xf32> to vector<32x8xf32>
    %439 = vector.shape_cast %438 : vector<32x8xf32> to vector<2x16x8xf32>
    "tpu.trace_start"() <{level = 10 : i32, message = "bqd,bkd->bqk"}> : () -> ()
    %cst_143 = arith.constant dense<0.000000e+00> : vector<2x16x16xf32>
    %440 = tpu.matmul %435, %437, %cst_143 {dimension_numbers = #tpu.dot_dimension_numbers<[2], [2], [1], [1], [0, 0, 0, 1, 1, 1], [0], [0]>} : vector<2x16x8xf32>, vector<2x16x8xf32>, vector<2x16x16xf32> -> vector<2x16x16xf32>
    "tpu.trace_stop"() : () -> ()
    %cst_144 = arith.constant 0.353553385 : f32
    %441 = vector.broadcast %cst_144 : f32 to vector<2x16x16xf32>
    %442 = arith.mulf %440, %441 : vector<2x16x16xf32>
    %443 = vector.shape_cast %364 : vector<16x16xf32> to vector<1x16x16xf32>
    %444 = vector.broadcast %443 : vector<1x16x16xf32> to vector<2x16x16xf32>
    %445 = arith.addf %442, %444 : vector<2x16x16xf32>
    %cst_145 = arith.constant dense<0xFF800000> : vector<2x16xf32>
    %446 = vector.multi_reduction <maximumf>, %445, %cst_145 [2] : vector<2x16x16xf32> to vector<2x16xf32>
    %447 = vector.shape_cast %446 : vector<2x16xf32> to vector<2x16x1xf32>
    %448 = vector.broadcast %447 : vector<2x16x1xf32> to vector<2x16x16xf32>
    %449 = arith.subf %445, %448 : vector<2x16x16xf32>
    %450 = math.exp %449 : vector<2x16x16xf32>
    %cst_146 = arith.constant dense<0.000000e+00> : vector<2x16xf32>
    %451 = vector.multi_reduction <add>, %450, %cst_146 [2] : vector<2x16x16xf32> to vector<2x16xf32>
    %452 = vector.shape_cast %451 : vector<2x16xf32> to vector<2x16x1xf32>
    %453 = vector.broadcast %452 : vector<2x16x1xf32> to vector<2x16x16xf32>
    %454 = arith.divf %450, %453 : vector<2x16x16xf32>
    "tpu.trace_start"() <{level = 10 : i32, message = "bqk,bkd->bqd"}> : () -> ()
    %cst_147 = arith.constant dense<0.000000e+00> : vector<2x16x8xf32>
    %455 = tpu.matmul %454, %439, %cst_147 {dimension_numbers = #tpu.dot_dimension_numbers<[2], [1], [1], [2], [0, 0, 0, 1, 1, 2], [0], [0]>} : vector<2x16x16xf32>, vector<2x16x8xf32>, vector<2x16x8xf32> -> vector<2x16x8xf32>
    "tpu.trace_stop"() : () -> ()
    %456 = vector.shape_cast %455 : vector<2x16x8xf32> to vector<32x8xf32>
    %457 = tpu.concatenate %387, %410, %433, %456 in 1 : vector<32x8xf32>, vector<32x8xf32>, vector<32x8xf32>, vector<32x8xf32> -> vector<32x32xf32>
    %cst_148 = arith.constant dense<0.000000e+00> : vector<32x32xf32>
    %458 = tpu.matmul %457, %335, %cst_148 {dimension_numbers = #tpu.dot_dimension_numbers<[1], [0], [0], [1], [0, 0, 1, 1], [], []>} : vector<32x32xf32>, vector<32x32xf32>, vector<32x32xf32> -> vector<32x32xf32>
    %459 = vector.broadcast %336 : vector<1x32xf32> to vector<32x32xf32>
    %460 = arith.addf %458, %459 : vector<32x32xf32>
    %461 = arith.addf %6, %460 : vector<32x32xf32>
    %cst_149 = arith.constant dense<0.000000e+00> : vector<32xf32>
    %462 = vector.multi_reduction <add>, %461, %cst_149 [1] : vector<32x32xf32> to vector<32xf32>
    %463 = vector.shape_cast %462 : vector<32xf32> to vector<32x1xf32>
    %cst_150 = arith.constant 3.200000e+01 : f32
    %464 = vector.broadcast %cst_150 : f32 to vector<32x1xf32>
    %465 = arith.divf %463, %464 : vector<32x1xf32>
    %466 = vector.broadcast %465 : vector<32x1xf32> to vector<32x32xf32>
    %467 = arith.subf %461, %466 : vector<32x32xf32>
    %468 = arith.mulf %467, %467 : vector<32x32xf32>
    %cst_151 = arith.constant dense<0.000000e+00> : vector<32xf32>
    %469 = vector.multi_reduction <add>, %468, %cst_151 [1] : vector<32x32xf32> to vector<32xf32>
    %470 = vector.shape_cast %469 : vector<32xf32> to vector<32x1xf32>
    %cst_152 = arith.constant 3.200000e+01 : f32
    %471 = vector.broadcast %cst_152 : f32 to vector<32x1xf32>
    %472 = arith.divf %470, %471 : vector<32x1xf32>
    %cst_153 = arith.constant 9.99999974E-6 : f32
    %473 = vector.broadcast %cst_153 : f32 to vector<32x1xf32>
    %474 = arith.addf %472, %473 : vector<32x1xf32>
    %475 = math.rsqrt %474 : vector<32x1xf32>
    %476 = vector.broadcast %475 : vector<32x1xf32> to vector<32x32xf32>
    %477 = arith.mulf %467, %476 : vector<32x32xf32>
    %478 = vector.broadcast %347 : vector<1x32xf32> to vector<32x32xf32>
    %479 = arith.mulf %477, %478 : vector<32x32xf32>
    %480 = vector.broadcast %348 : vector<1x32xf32> to vector<32x32xf32>
    %481 = arith.addf %479, %480 : vector<32x32xf32>
    %cst_154 = arith.constant dense<0.000000e+00> : vector<32x32xf32>
    %482 = tpu.matmul %481, %337, %cst_154 {dimension_numbers = #tpu.dot_dimension_numbers<[1], [0], [0], [1], [0, 0, 1, 1], [], []>} : vector<32x32xf32>, vector<32x32xf32>, vector<32x32xf32> -> vector<32x32xf32>
    %483 = vector.broadcast %338 : vector<1x32xf32> to vector<32x32xf32>
    %484 = arith.addf %482, %483 : vector<32x32xf32>
    %cst_155 = arith.constant dense<0.000000e+00> : vector<32x64xf32>
    %485 = tpu.matmul %332, %339, %cst_155 {dimension_numbers = #tpu.dot_dimension_numbers<[1], [0], [0], [1], [0, 0, 1, 1], [], []>} : vector<32x32xf32>, vector<32x64xf32>, vector<32x64xf32> -> vector<32x64xf32>
    %486 = vector.broadcast %340 : vector<1x64xf32> to vector<32x64xf32>
    %487 = arith.addf %485, %486 : vector<32x64xf32>
    %488 = vector.extract_strided_slice %487 {offsets = [0, 0], sizes = [32, 32], strides = [1, 1]} : vector<32x64xf32> to vector<32x32xf32>
    %489 = vector.extract_strided_slice %487 {offsets = [0, 32], sizes = [32, 32], strides = [1, 1]} : vector<32x64xf32> to vector<32x32xf32>
    %490 = vector.extract_strided_slice %484 {offsets = [0, 0], sizes = [32, 8], strides = [1, 1]} : vector<32x32xf32> to vector<32x8xf32>
    %491 = vector.shape_cast %490 : vector<32x8xf32> to vector<2x16x8xf32>
    %492 = vector.extract_strided_slice %488 {offsets = [0, 0], sizes = [32, 8], strides = [1, 1]} : vector<32x32xf32> to vector<32x8xf32>
    %493 = vector.shape_cast %492 : vector<32x8xf32> to vector<2x16x8xf32>
    %494 = vector.extract_strided_slice %489 {offsets = [0, 0], sizes = [32, 8], strides = [1, 1]} : vector<32x32xf32> to vector<32x8xf32>
    %495 = vector.shape_cast %494 : vector<32x8xf32> to vector<2x16x8xf32>
    "tpu.trace_start"() <{level = 10 : i32, message = "bqd,bkd->bqk"}> : () -> ()
    %cst_156 = arith.constant dense<0.000000e+00> : vector<2x16x16xf32>
    %496 = tpu.matmul %491, %493, %cst_156 {dimension_numbers = #tpu.dot_dimension_numbers<[2], [2], [1], [1], [0, 0, 0, 1, 1, 1], [0], [0]>} : vector<2x16x8xf32>, vector<2x16x8xf32>, vector<2x16x16xf32> -> vector<2x16x16xf32>
    "tpu.trace_stop"() : () -> ()
    %cst_157 = arith.constant 0.353553385 : f32
    %497 = vector.broadcast %cst_157 : f32 to vector<2x16x16xf32>
    %498 = arith.mulf %496, %497 : vector<2x16x16xf32>
    %cst_158 = arith.constant dense<0xFF800000> : vector<2x16xf32>
    %499 = vector.multi_reduction <maximumf>, %498, %cst_158 [2] : vector<2x16x16xf32> to vector<2x16xf32>
    %500 = vector.shape_cast %499 : vector<2x16xf32> to vector<2x16x1xf32>
    %501 = vector.broadcast %500 : vector<2x16x1xf32> to vector<2x16x16xf32>
    %502 = arith.subf %498, %501 : vector<2x16x16xf32>
    %503 = math.exp %502 : vector<2x16x16xf32>
    %cst_159 = arith.constant dense<0.000000e+00> : vector<2x16xf32>
    %504 = vector.multi_reduction <add>, %503, %cst_159 [2] : vector<2x16x16xf32> to vector<2x16xf32>
    %505 = vector.shape_cast %504 : vector<2x16xf32> to vector<2x16x1xf32>
    %506 = vector.broadcast %505 : vector<2x16x1xf32> to vector<2x16x16xf32>
    %507 = arith.divf %503, %506 : vector<2x16x16xf32>
    "tpu.trace_start"() <{level = 10 : i32, message = "bqk,bkd->bqd"}> : () -> ()
    %cst_160 = arith.constant dense<0.000000e+00> : vector<2x16x8xf32>
    %508 = tpu.matmul %507, %495, %cst_160 {dimension_numbers = #tpu.dot_dimension_numbers<[2], [1], [1], [2], [0, 0, 0, 1, 1, 2], [0], [0]>} : vector<2x16x16xf32>, vector<2x16x8xf32>, vector<2x16x8xf32> -> vector<2x16x8xf32>
    "tpu.trace_stop"() : () -> ()
    %509 = vector.shape_cast %508 : vector<2x16x8xf32> to vector<32x8xf32>
    %510 = vector.extract_strided_slice %484 {offsets = [0, 8], sizes = [32, 8], strides = [1, 1]} : vector<32x32xf32> to vector<32x8xf32>
    %511 = vector.shape_cast %510 : vector<32x8xf32> to vector<2x16x8xf32>
    %512 = vector.extract_strided_slice %488 {offsets = [0, 8], sizes = [32, 8], strides = [1, 1]} : vector<32x32xf32> to vector<32x8xf32>
    %513 = vector.shape_cast %512 : vector<32x8xf32> to vector<2x16x8xf32>
    %514 = vector.extract_strided_slice %489 {offsets = [0, 8], sizes = [32, 8], strides = [1, 1]} : vector<32x32xf32> to vector<32x8xf32>
    %515 = vector.shape_cast %514 : vector<32x8xf32> to vector<2x16x8xf32>
    "tpu.trace_start"() <{level = 10 : i32, message = "bqd,bkd->bqk"}> : () -> ()
    %cst_161 = arith.constant dense<0.000000e+00> : vector<2x16x16xf32>
    %516 = tpu.matmul %511, %513, %cst_161 {dimension_numbers = #tpu.dot_dimension_numbers<[2], [2], [1], [1], [0, 0, 0, 1, 1, 1], [0], [0]>} : vector<2x16x8xf32>, vector<2x16x8xf32>, vector<2x16x16xf32> -> vector<2x16x16xf32>
    "tpu.trace_stop"() : () -> ()
    %cst_162 = arith.constant 0.353553385 : f32
    %517 = vector.broadcast %cst_162 : f32 to vector<2x16x16xf32>
    %518 = arith.mulf %516, %517 : vector<2x16x16xf32>
    %cst_163 = arith.constant dense<0xFF800000> : vector<2x16xf32>
    %519 = vector.multi_reduction <maximumf>, %518, %cst_163 [2] : vector<2x16x16xf32> to vector<2x16xf32>
    %520 = vector.shape_cast %519 : vector<2x16xf32> to vector<2x16x1xf32>
    %521 = vector.broadcast %520 : vector<2x16x1xf32> to vector<2x16x16xf32>
    %522 = arith.subf %518, %521 : vector<2x16x16xf32>
    %523 = math.exp %522 : vector<2x16x16xf32>
    %cst_164 = arith.constant dense<0.000000e+00> : vector<2x16xf32>
    %524 = vector.multi_reduction <add>, %523, %cst_164 [2] : vector<2x16x16xf32> to vector<2x16xf32>
    %525 = vector.shape_cast %524 : vector<2x16xf32> to vector<2x16x1xf32>
    %526 = vector.broadcast %525 : vector<2x16x1xf32> to vector<2x16x16xf32>
    %527 = arith.divf %523, %526 : vector<2x16x16xf32>
    "tpu.trace_start"() <{level = 10 : i32, message = "bqk,bkd->bqd"}> : () -> ()
    %cst_165 = arith.constant dense<0.000000e+00> : vector<2x16x8xf32>
    %528 = tpu.matmul %527, %515, %cst_165 {dimension_numbers = #tpu.dot_dimension_numbers<[2], [1], [1], [2], [0, 0, 0, 1, 1, 2], [0], [0]>} : vector<2x16x16xf32>, vector<2x16x8xf32>, vector<2x16x8xf32> -> vector<2x16x8xf32>
    "tpu.trace_stop"() : () -> ()
    %529 = vector.shape_cast %528 : vector<2x16x8xf32> to vector<32x8xf32>
    %530 = vector.extract_strided_slice %484 {offsets = [0, 16], sizes = [32, 8], strides = [1, 1]} : vector<32x32xf32> to vector<32x8xf32>
    %531 = vector.shape_cast %530 : vector<32x8xf32> to vector<2x16x8xf32>
    %532 = vector.extract_strided_slice %488 {offsets = [0, 16], sizes = [32, 8], strides = [1, 1]} : vector<32x32xf32> to vector<32x8xf32>
    %533 = vector.shape_cast %532 : vector<32x8xf32> to vector<2x16x8xf32>
    %534 = vector.extract_strided_slice %489 {offsets = [0, 16], sizes = [32, 8], strides = [1, 1]} : vector<32x32xf32> to vector<32x8xf32>
    %535 = vector.shape_cast %534 : vector<32x8xf32> to vector<2x16x8xf32>
    "tpu.trace_start"() <{level = 10 : i32, message = "bqd,bkd->bqk"}> : () -> ()
    %cst_166 = arith.constant dense<0.000000e+00> : vector<2x16x16xf32>
    %536 = tpu.matmul %531, %533, %cst_166 {dimension_numbers = #tpu.dot_dimension_numbers<[2], [2], [1], [1], [0, 0, 0, 1, 1, 1], [0], [0]>} : vector<2x16x8xf32>, vector<2x16x8xf32>, vector<2x16x16xf32> -> vector<2x16x16xf32>
    "tpu.trace_stop"() : () -> ()
    %cst_167 = arith.constant 0.353553385 : f32
    %537 = vector.broadcast %cst_167 : f32 to vector<2x16x16xf32>
    %538 = arith.mulf %536, %537 : vector<2x16x16xf32>
    %cst_168 = arith.constant dense<0xFF800000> : vector<2x16xf32>
    %539 = vector.multi_reduction <maximumf>, %538, %cst_168 [2] : vector<2x16x16xf32> to vector<2x16xf32>
    %540 = vector.shape_cast %539 : vector<2x16xf32> to vector<2x16x1xf32>
    %541 = vector.broadcast %540 : vector<2x16x1xf32> to vector<2x16x16xf32>
    %542 = arith.subf %538, %541 : vector<2x16x16xf32>
    %543 = math.exp %542 : vector<2x16x16xf32>
    %cst_169 = arith.constant dense<0.000000e+00> : vector<2x16xf32>
    %544 = vector.multi_reduction <add>, %543, %cst_169 [2] : vector<2x16x16xf32> to vector<2x16xf32>
    %545 = vector.shape_cast %544 : vector<2x16xf32> to vector<2x16x1xf32>
    %546 = vector.broadcast %545 : vector<2x16x1xf32> to vector<2x16x16xf32>
    %547 = arith.divf %543, %546 : vector<2x16x16xf32>
    "tpu.trace_start"() <{level = 10 : i32, message = "bqk,bkd->bqd"}> : () -> ()
    %cst_170 = arith.constant dense<0.000000e+00> : vector<2x16x8xf32>
    %548 = tpu.matmul %547, %535, %cst_170 {dimension_numbers = #tpu.dot_dimension_numbers<[2], [1], [1], [2], [0, 0, 0, 1, 1, 2], [0], [0]>} : vector<2x16x16xf32>, vector<2x16x8xf32>, vector<2x16x8xf32> -> vector<2x16x8xf32>
    "tpu.trace_stop"() : () -> ()
    %549 = vector.shape_cast %548 : vector<2x16x8xf32> to vector<32x8xf32>
    %550 = vector.extract_strided_slice %484 {offsets = [0, 24], sizes = [32, 8], strides = [1, 1]} : vector<32x32xf32> to vector<32x8xf32>
    %551 = vector.shape_cast %550 : vector<32x8xf32> to vector<2x16x8xf32>
    %552 = vector.extract_strided_slice %488 {offsets = [0, 24], sizes = [32, 8], strides = [1, 1]} : vector<32x32xf32> to vector<32x8xf32>
    %553 = vector.shape_cast %552 : vector<32x8xf32> to vector<2x16x8xf32>
    %554 = vector.extract_strided_slice %489 {offsets = [0, 24], sizes = [32, 8], strides = [1, 1]} : vector<32x32xf32> to vector<32x8xf32>
    %555 = vector.shape_cast %554 : vector<32x8xf32> to vector<2x16x8xf32>
    "tpu.trace_start"() <{level = 10 : i32, message = "bqd,bkd->bqk"}> : () -> ()
    %cst_171 = arith.constant dense<0.000000e+00> : vector<2x16x16xf32>
    %556 = tpu.matmul %551, %553, %cst_171 {dimension_numbers = #tpu.dot_dimension_numbers<[2], [2], [1], [1], [0, 0, 0, 1, 1, 1], [0], [0]>} : vector<2x16x8xf32>, vector<2x16x8xf32>, vector<2x16x16xf32> -> vector<2x16x16xf32>
    "tpu.trace_stop"() : () -> ()
    %cst_172 = arith.constant 0.353553385 : f32
    %557 = vector.broadcast %cst_172 : f32 to vector<2x16x16xf32>
    %558 = arith.mulf %556, %557 : vector<2x16x16xf32>
    %cst_173 = arith.constant dense<0xFF800000> : vector<2x16xf32>
    %559 = vector.multi_reduction <maximumf>, %558, %cst_173 [2] : vector<2x16x16xf32> to vector<2x16xf32>
    %560 = vector.shape_cast %559 : vector<2x16xf32> to vector<2x16x1xf32>
    %561 = vector.broadcast %560 : vector<2x16x1xf32> to vector<2x16x16xf32>
    %562 = arith.subf %558, %561 : vector<2x16x16xf32>
    %563 = math.exp %562 : vector<2x16x16xf32>
    %cst_174 = arith.constant dense<0.000000e+00> : vector<2x16xf32>
    %564 = vector.multi_reduction <add>, %563, %cst_174 [2] : vector<2x16x16xf32> to vector<2x16xf32>
    %565 = vector.shape_cast %564 : vector<2x16xf32> to vector<2x16x1xf32>
    %566 = vector.broadcast %565 : vector<2x16x1xf32> to vector<2x16x16xf32>
    %567 = arith.divf %563, %566 : vector<2x16x16xf32>
    "tpu.trace_start"() <{level = 10 : i32, message = "bqk,bkd->bqd"}> : () -> ()
    %cst_175 = arith.constant dense<0.000000e+00> : vector<2x16x8xf32>
    %568 = tpu.matmul %567, %555, %cst_175 {dimension_numbers = #tpu.dot_dimension_numbers<[2], [1], [1], [2], [0, 0, 0, 1, 1, 2], [0], [0]>} : vector<2x16x16xf32>, vector<2x16x8xf32>, vector<2x16x8xf32> -> vector<2x16x8xf32>
    "tpu.trace_stop"() : () -> ()
    %569 = vector.shape_cast %568 : vector<2x16x8xf32> to vector<32x8xf32>
    %570 = tpu.concatenate %509, %529, %549, %569 in 1 : vector<32x8xf32>, vector<32x8xf32>, vector<32x8xf32>, vector<32x8xf32> -> vector<32x32xf32>
    %cst_176 = arith.constant dense<0.000000e+00> : vector<32x32xf32>
    %571 = tpu.matmul %570, %341, %cst_176 {dimension_numbers = #tpu.dot_dimension_numbers<[1], [0], [0], [1], [0, 0, 1, 1], [], []>} : vector<32x32xf32>, vector<32x32xf32>, vector<32x32xf32> -> vector<32x32xf32>
    %572 = vector.broadcast %342 : vector<1x32xf32> to vector<32x32xf32>
    %573 = arith.addf %571, %572 : vector<32x32xf32>
    %574 = arith.addf %481, %573 : vector<32x32xf32>
    %cst_177 = arith.constant dense<0.000000e+00> : vector<32xf32>
    %575 = vector.multi_reduction <add>, %574, %cst_177 [1] : vector<32x32xf32> to vector<32xf32>
    %576 = vector.shape_cast %575 : vector<32xf32> to vector<32x1xf32>
    %cst_178 = arith.constant 3.200000e+01 : f32
    %577 = vector.broadcast %cst_178 : f32 to vector<32x1xf32>
    %578 = arith.divf %576, %577 : vector<32x1xf32>
    %579 = vector.broadcast %578 : vector<32x1xf32> to vector<32x32xf32>
    %580 = arith.subf %574, %579 : vector<32x32xf32>
    %581 = arith.mulf %580, %580 : vector<32x32xf32>
    %cst_179 = arith.constant dense<0.000000e+00> : vector<32xf32>
    %582 = vector.multi_reduction <add>, %581, %cst_179 [1] : vector<32x32xf32> to vector<32xf32>
    %583 = vector.shape_cast %582 : vector<32xf32> to vector<32x1xf32>
    %cst_180 = arith.constant 3.200000e+01 : f32
    %584 = vector.broadcast %cst_180 : f32 to vector<32x1xf32>
    %585 = arith.divf %583, %584 : vector<32x1xf32>
    %cst_181 = arith.constant 9.99999974E-6 : f32
    %586 = vector.broadcast %cst_181 : f32 to vector<32x1xf32>
    %587 = arith.addf %585, %586 : vector<32x1xf32>
    %588 = math.rsqrt %587 : vector<32x1xf32>
    %589 = vector.broadcast %588 : vector<32x1xf32> to vector<32x32xf32>
    %590 = arith.mulf %580, %589 : vector<32x32xf32>
    %591 = vector.broadcast %349 : vector<1x32xf32> to vector<32x32xf32>
    %592 = arith.mulf %590, %591 : vector<32x32xf32>
    %593 = vector.broadcast %350 : vector<1x32xf32> to vector<32x32xf32>
    %594 = arith.addf %592, %593 : vector<32x32xf32>
    %cst_182 = arith.constant dense<0.000000e+00> : vector<32x64xf32>
    %595 = tpu.matmul %594, %343, %cst_182 {dimension_numbers = #tpu.dot_dimension_numbers<[1], [0], [0], [1], [0, 0, 1, 1], [], []>} : vector<32x32xf32>, vector<32x64xf32>, vector<32x64xf32> -> vector<32x64xf32>
    %596 = vector.broadcast %344 : vector<1x64xf32> to vector<32x64xf32>
    %597 = arith.addf %595, %596 : vector<32x64xf32>
    %cst_183 = arith.constant 0.000000e+00 : f32
    %598 = vector.broadcast %cst_183 : f32 to vector<32x64xf32>
    %599 = arith.maximumf %597, %598 : vector<32x64xf32>
    %cst_184 = arith.constant dense<0.000000e+00> : vector<32x32xf32>
    %600 = tpu.matmul %599, %345, %cst_184 {dimension_numbers = #tpu.dot_dimension_numbers<[1], [0], [0], [1], [0, 0, 1, 1], [], []>} : vector<32x64xf32>, vector<64x32xf32>, vector<32x32xf32> -> vector<32x32xf32>
    %601 = vector.broadcast %346 : vector<1x32xf32> to vector<32x32xf32>
    %602 = arith.addf %600, %601 : vector<32x32xf32>
    %603 = arith.addf %594, %602 : vector<32x32xf32>
    %cst_185 = arith.constant dense<0.000000e+00> : vector<32xf32>
    %604 = vector.multi_reduction <add>, %603, %cst_185 [1] : vector<32x32xf32> to vector<32xf32>
    %605 = vector.shape_cast %604 : vector<32xf32> to vector<32x1xf32>
    %cst_186 = arith.constant 3.200000e+01 : f32
    %606 = vector.broadcast %cst_186 : f32 to vector<32x1xf32>
    %607 = arith.divf %605, %606 : vector<32x1xf32>
    %608 = vector.broadcast %607 : vector<32x1xf32> to vector<32x32xf32>
    %609 = arith.subf %603, %608 : vector<32x32xf32>
    %610 = arith.mulf %609, %609 : vector<32x32xf32>
    %cst_187 = arith.constant dense<0.000000e+00> : vector<32xf32>
    %611 = vector.multi_reduction <add>, %610, %cst_187 [1] : vector<32x32xf32> to vector<32xf32>
    %612 = vector.shape_cast %611 : vector<32xf32> to vector<32x1xf32>
    %cst_188 = arith.constant 3.200000e+01 : f32
    %613 = vector.broadcast %cst_188 : f32 to vector<32x1xf32>
    %614 = arith.divf %612, %613 : vector<32x1xf32>
    %cst_189 = arith.constant 9.99999974E-6 : f32
    %615 = vector.broadcast %cst_189 : f32 to vector<32x1xf32>
    %616 = arith.addf %614, %615 : vector<32x1xf32>
    %617 = math.rsqrt %616 : vector<32x1xf32>
    %618 = vector.broadcast %617 : vector<32x1xf32> to vector<32x32xf32>
    %619 = arith.mulf %609, %618 : vector<32x32xf32>
    %620 = vector.broadcast %351 : vector<1x32xf32> to vector<32x32xf32>
    %621 = arith.mulf %619, %620 : vector<32x32xf32>
    %622 = vector.broadcast %352 : vector<1x32xf32> to vector<32x32xf32>
    %623 = arith.addf %621, %622 : vector<32x32xf32>
    %c920 = arith.constant 920 : index
    %c0_190 = arith.constant 0 : index
    %624 = vector.load %arg1[%c920, %c0_190] : memref<976x128xf32, #tpu.memory_space<vmem>>, vector<1x32xf32>
    %c928 = arith.constant 928 : index
    %c0_191 = arith.constant 0 : index
    %625 = vector.load %arg1[%c928, %c0_191] : memref<976x128xf32, #tpu.memory_space<vmem>>, vector<1x32xf32>
    %cst_192 = arith.constant dense<0.000000e+00> : vector<32xf32>
    %626 = vector.multi_reduction <add>, %623, %cst_192 [1] : vector<32x32xf32> to vector<32xf32>
    %627 = vector.shape_cast %626 : vector<32xf32> to vector<32x1xf32>
    %cst_193 = arith.constant 3.200000e+01 : f32
    %628 = vector.broadcast %cst_193 : f32 to vector<32x1xf32>
    %629 = arith.divf %627, %628 : vector<32x1xf32>
    %630 = vector.broadcast %629 : vector<32x1xf32> to vector<32x32xf32>
    %631 = arith.subf %623, %630 : vector<32x32xf32>
    %632 = arith.mulf %631, %631 : vector<32x32xf32>
    %cst_194 = arith.constant dense<0.000000e+00> : vector<32xf32>
    %633 = vector.multi_reduction <add>, %632, %cst_194 [1] : vector<32x32xf32> to vector<32xf32>
    %634 = vector.shape_cast %633 : vector<32xf32> to vector<32x1xf32>
    %cst_195 = arith.constant 3.200000e+01 : f32
    %635 = vector.broadcast %cst_195 : f32 to vector<32x1xf32>
    %636 = arith.divf %634, %635 : vector<32x1xf32>
    %cst_196 = arith.constant 9.99999974E-6 : f32
    %637 = vector.broadcast %cst_196 : f32 to vector<32x1xf32>
    %638 = arith.addf %636, %637 : vector<32x1xf32>
    %639 = math.rsqrt %638 : vector<32x1xf32>
    %640 = vector.broadcast %639 : vector<32x1xf32> to vector<32x32xf32>
    %641 = arith.mulf %631, %640 : vector<32x32xf32>
    %642 = vector.broadcast %624 : vector<1x32xf32> to vector<32x32xf32>
    %643 = arith.mulf %641, %642 : vector<32x32xf32>
    %644 = vector.broadcast %625 : vector<1x32xf32> to vector<32x32xf32>
    %645 = arith.addf %643, %644 : vector<32x32xf32>
    %c936 = arith.constant 936 : index
    %c0_197 = arith.constant 0 : index
    %646 = vector.load %arg1[%c936, %c0_197] : memref<976x128xf32, #tpu.memory_space<vmem>>, vector<32x128xf32>
    %c968 = arith.constant 968 : index
    %c0_198 = arith.constant 0 : index
    %647 = vector.load %arg1[%c968, %c0_198] : memref<976x128xf32, #tpu.memory_space<vmem>>, vector<1x128xf32>
    %cst_199 = arith.constant dense<0.000000e+00> : vector<32x128xf32>
    %648 = tpu.matmul %645, %646, %cst_199 {dimension_numbers = #tpu.dot_dimension_numbers<[1], [0], [0], [1], [0, 0, 1, 1], [], []>} : vector<32x32xf32>, vector<32x128xf32>, vector<32x128xf32> -> vector<32x128xf32>
    %649 = vector.broadcast %647 : vector<1x128xf32> to vector<32x128xf32>
    %650 = arith.addf %648, %649 : vector<32x128xf32>
    %c0_200 = arith.constant 0 : index
    %c0_201 = arith.constant 0 : index
    %651 = vector.load %arg2[%c0_200, %c0_201] : memref<32x128xf32, #tpu.memory_space<vmem>>, vector<32x128xf32>
    tpu.vector_store %arg2[%c0_200, %c0_201], %650 {strides = array<i32>} : memref<32x128xf32, #tpu.memory_space<vmem>>, vector<32x128xf32>,
    return
  }
}

</mosaic_0001>

<llo_original>
// kernel: transformer_forward.1
$region0: #{transformer_forward.1}
  #allocation0 [shape = 'u32[]', space=smem, size = 0x4, offset = 0x4, fixed_abs, tag = 'smem constant byte address 0x4 - core index']
  #allocation1 [shape = 'u32[144,128]{1,0:T(1,128)}', space=vmem, size = 0x12000, scoped, tag = 'internal scratch']
  %s0 = inlined_call_operand.vmem [shape: f32[64,32], index: 0, kind: input, shape index: {}]
  %s1 = inlined_call_operand.hbm [shape: f32[976,128], index: 1, kind: input, shape index: {}]
  %s2 = inlined_call_operand.vmem [shape: f32[32,128], index: 2, kind: output, shape index: {}]
  %s3 = sld [smem:[#allocation0]]
  $region22: #{transformer_forward.1} parent=0
    _
  %s5 = ssub.s32 1, %s3
  %s6 = scalar_select 0, %s5, %s3
  $region1: #{transformer_forward.1} parent=0
    #allocation2 [shape = 'u8[499712]{0}', space=vmem, size = 0x7a000, scoped, tag = 'input window, operand 1, single buffered']
    #allocation3 [shape = 's32[1]{0}', space=sflag, size = 0x4, scoped, tag = 'scoped memory for transformer_forward.1']
    %7 = vsyncpa [#allocation3], 0
    // Predicated region
    $region2: #{transformer_forward.1} parent=1 // pred_check
      _
    $region3: #{transformer_forward.1} parent=1 // pred_check_branch
      %9 = sbr.rel (0) target = $region5
    $region4: #{transformer_forward.1} parent=1 // pred_region
      _
    $region5: #{transformer_forward.1} parent=1 // pred_fallthru
      _
    // Predicated region
    $region6: #{transformer_forward.1} parent=1 // pred_check
      _
    $region7: #{transformer_forward.1} parent=1 // pred_check_branch
      %11 = sbr.rel (0) target = $region9
    $region8: #{transformer_forward.1} parent=1 // pred_region
      %s13 = ssub.s32 15616, 15616
      %14 = vsyncadd [#allocation3], %s13
      %s15 = sshll.u32 [#allocation2], 4
      %s16 = int_to_ptr.vmem [resolvable:$true] %s15
      %21 = dma.hbm_to_vmem [thread:$0]  %s1, 15616, %s16, [#allocation3], 128, 128, 8
    $region9: #{transformer_forward.1} parent=1 // pred_fallthru
      _
    // Predicated region
    $region10: #{transformer_forward.1} parent=1 // pred_check
      _
    $region11: #{transformer_forward.1} parent=1 // pred_check_branch
      %23 = sbr.rel (0) target = $region13
    $region12: #{transformer_forward.1} parent=1 // pred_region
      %24 = dma.done [#allocation3], 15616
    $region13: #{transformer_forward.1} parent=1 // pred_fallthru
      _
    %v25 = vld [vmem:[#allocation2] sm:$0xff]
    %v26 = vld [vmem:[#allocation2 + $0x8] sm:$0xff]
    %v27 = vld [vmem:[#allocation2 + $0x10] sm:$0xff]
    %v28 = vld [vmem:[#allocation2 + $0x18] sm:$0xff]
    %v29 = vld [vmem:[#allocation2 + $0x20] sm:$0xff]
    %v30 = vld [vmem:[#allocation2 + $0x28] sm:$0xff]
    %v31 = vld [vmem:[#allocation2 + $0x30] sm:$0xff]
    %v32 = vld [vmem:[#allocation2 + $0x38] sm:$0xff]
    %v33 = vld [vmem:[#allocation2 + $0x40] sm:$0xff]
    %v34 = vld [vmem:[#allocation2 + $0x48] sm:$0xff]
    %v35 = vld [vmem:[#allocation2 + $0x50] sm:$0xff]
    %v36 = vld [vmem:[#allocation2 + $0x58] sm:$0xff]
    %v37 = vld [vmem:[%s0] sm:$0xff]
    %v38 = vld [vmem:[%s0 + $0x8] sm:$0xff]
    %v39 = vld [vmem:[%s0 + $0x10] sm:$0xff]
    %v40 = vld [vmem:[%s0 + $0x18] sm:$0xff]
    %v41 = vld [vmem:[%s0 + $0x20] sm:$0xff]
    %v42 = vld [vmem:[%s0 + $0x28] sm:$0xff]
    %v43 = vld [vmem:[%s0 + $0x30] sm:$0xff]
    %v44 = vld [vmem:[%s0 + $0x38] sm:$0xff]
    %vm45 = vcmask 261120
    %v47 = vsel %vm45, %v37, 0
    %v50 = vsel %vm45, %v38, 0
    %v53 = vsel %vm45, %v39, 0
    %v56 = vsel %vm45, %v40, 0
    %v59 = vsel %vm45, %v41, 0
    %v62 = vsel %vm45, %v42, 0
    %v65 = vsel %vm45, %v43, 0
    %v68 = vsel %vm45, %v44, 0
    %70 = vmatprep.subr.mxu0 0.0
    %71 = vmatpush1.msra.mxu0 %v25
    %72 = vmatprep.subr.mxu0 0.0
    %73 = vmatpush1.msra.mxu0 %v26
    %74 = vmatprep.subr.mxu0 0.0
    %75 = vmatpush1.msra.mxu0 %v27
    %76 = vmatprep.subr.mxu0 0.0
    %77 = vmatpush1.msra.mxu0 %v28
    %78 = vmatprep.subr.mxu0 0.0
    %79 = vmatpush1.msra.mxu0 0.0
    %80 = vmatprep.subr.mxu0 0.0
    %81 = vmatpush1.msra.mxu0 0.0
    %82 = vmatprep.subr.mxu0 0.0
    %83 = vmatpush1.msra.mxu0 0.0
    %84 = vmatprep.subr.mxu0 0.0
    %85 = vmatpush1.msra.mxu0 0.0
    %86 = vmatprep.subr.mxu0 0.0
    %87 = vmatpush1.msra.mxu0 0.0
    %88 = vmatprep.subr.mxu0 0.0
    %89 = vmatpush1.msra.mxu0 0.0
    %90 = vmatprep.subr.mxu0 0.0
    %91 = vmatpush1.msra.mxu0 0.0
    %92 = vmatprep.subr.mxu0 0.0
    %93 = vmatpush1.msra.mxu0 0.0
    %94 = vmatprep.subr.mxu0 0.0
    %95 = vmatpush1.msra.mxu0 0.0
    %96 = vmatprep.subr.mxu0 0.0
    %97 = vmatpush1.msra.mxu0 0.0
    %98 = vmatprep.subr.mxu0 0.0
    %99 = vmatpush1.msra.mxu0 0.0
    %100 = vmatprep.subr.mxu0 0.0
    %101 = vmatpush1.msra.mxu0 0.0
    %102 = vmatprep.subr.mxu0 0.0
    %103 = vmatpush1.msra.mxu0 0.0
    %104 = vmatprep.subr.mxu0 0.0
    %105 = vmatpush1.msra.mxu0 0.0
    %106 = vmatprep.subr.mxu0 0.0
    %107 = vmatpush1.msra.mxu0 0.0
    %108 = vmatprep.subr.mxu0 0.0
    %109 = vmatpush1.msra.mxu0 0.0
    %110 = vmatprep.subr.mxu0 0.0
    %111 = vmatpush1.msra.mxu0 0.0
    %112 = vmatprep.subr.mxu0 0.0
    %113 = vmatpush1.msra.mxu0 0.0
    %114 = vmatprep.subr.mxu0 0.0
    %115 = vmatpush1.msra.mxu0 0.0
    %116 = vmatprep.subr.mxu0 0.0
    %117 = vmatpush1.msra.mxu0 0.0
    %118 = vmatprep.subr.mxu0 0.0
    %119 = vmatpush1.msra.mxu0 0.0
    %120 = vmatprep.subr.mxu0 0.0
    %121 = vmatpush1.msra.mxu0 0.0
    %122 = vmatprep.subr.mxu0 0.0
    %123 = vmatpush1.msra.mxu0 0.0
    %124 = vmatprep.subr.mxu0 0.0
    %125 = vmatpush1.msra.mxu0 0.0
    %126 = vmatprep.subr.mxu0 0.0
    %127 = vmatpush1.msra.mxu0 0.0
    %128 = vmatprep.subr.mxu0 0.0
    %129 = vmatpush1.msra.mxu0 0.0
    %130 = vmatprep.subr.mxu0 0.0
    %131 = vmatpush1.msra.mxu0 0.0
    %132 = vmatprep.subr.mxu0 0.0
    %133 = vmatpush1.msra.mxu0 0.0
    %134 = vmatprep.mubr.f32.mxu0 0.0
    %135 = vmatmul.mubr.f32.gmra.mrb[0].mxu0 %v47
    %v136 = vpop.f32.mrb[0].mxu0
    %v137 = vadd.f32 %v29, %v136
    %v138 = vpop.f32.mrb[0].mxu0
    %139 = vmatprep.mubr.f32.mxu0 0.0
    %140 = vmatmul.mubr.f32.gmra.mrb[0].mxu0 %v50
    %v141 = vpop.f32.mrb[0].mxu0
    %v142 = vadd.f32 %v30, %v141
    %v143 = vpop.f32.mrb[0].mxu0
    %144 = vmatprep.mubr.f32.mxu0 0.0
    %145 = vmatmul.mubr.f32.gmra.mrb[0].mxu0 %v53
    %v146 = vpop.f32.mrb[0].mxu0
    %v147 = vadd.f32 %v31, %v146
    %v148 = vpop.f32.mrb[0].mxu0
    %149 = vmatprep.mubr.f32.mxu0 0.0
    %150 = vmatmul.mubr.f32.gmra.mrb[0].mxu0 %v56
    %v151 = vpop.f32.mrb[0].mxu0
    %v152 = vadd.f32 %v32, %v151
    %v153 = vpop.f32.mrb[0].mxu0
    %154 = vmatprep.mubr.f32.mxu0 0.0
    %155 = vmatmul.mubr.f32.gmra.mrb[0].mxu0 %v59
    %v156 = vpop.f32.mrb[0].mxu0
    %v157 = vadd.f32 %v33, %v156
    %v158 = vpop.f32.mrb[0].mxu0
    %159 = vmatprep.mubr.f32.mxu0 0.0
    %160 = vmatmul.mubr.f32.gmra.mrb[0].mxu0 %v62
    %v161 = vpop.f32.mrb[0].mxu0
    %v162 = vadd.f32 %v34, %v161
    %v163 = vpop.f32.mrb[0].mxu0
    %164 = vmatprep.mubr.f32.mxu0 0.0
    %165 = vmatmul.mubr.f32.gmra.mrb[0].mxu0 %v65
    %v166 = vpop.f32.mrb[0].mxu0
    %v167 = vadd.f32 %v35, %v166
    %v168 = vpop.f32.mrb[0].mxu0
    %169 = vmatprep.mubr.f32.mxu0 0.0
    %170 = vmatmul.mubr.f32.gmra.mrb[0].mxu0 %v68
    %v171 = vpop.f32.mrb[0].mxu0
    %v172 = vadd.f32 %v36, %v171
    %v173 = vpop.f32.mrb[0].mxu0
    %174 = vdwg.mxu0
    %v175 = vld [vmem:[#allocation2 + $0x60] sm:$0xff]
    %v176 = vld [vmem:[#allocation2 + $0x68] sm:$0xff]
    %v177 = vld [vmem:[#allocation2 + $0x70] sm:$0xff]
    %v178 = vld [vmem:[#allocation2 + $0x78] sm:$0xff]
    %v179 = vld [vmem:[#allocation2 + $0x80] sm:$0x1]
    %v180 = vld [vmem:[#allocation2 + $0x88] sm:$0xff]
    %v181 = vld [vmem:[#allocation2 + $0x90] sm:$0xff]
    %v182 = vld [vmem:[#allocation2 + $0x98] sm:$0xff]
    %v183 = vld [vmem:[#allocation2 + $0xa0] sm:$0xff]
    %v184 = vld [vmem:[#allocation2 + $0xa8] sm:$0x1]
    %v185 = vld [vmem:[#allocation2 + $0xb0] sm:$0xff]
    %v186 = vld [vmem:[#allocation2 + $0xb8] sm:$0xff]
    %v187 = vld [vmem:[#allocation2 + $0xc0] sm:$0xff]
    %v188 = vld [vmem:[#allocation2 + $0xc8] sm:$0xff]
    %v189 = vld [vmem:[#allocation2 + $0xd0] sm:$0x1]
    %v190 = vld [vmem:[#allocation2 + $0xd8] sm:$0xff]
    %v191 = vld [vmem:[#allocation2 + $0xe0] sm:$0xff]
    %v192 = vld [vmem:[#allocation2 + $0xe8] sm:$0xff]
    %v193 = vld [vmem:[#allocation2 + $0xf0] sm:$0xff]
    %v194 = vld [vmem:[#allocation2 + $0xf8] sm:$0xff]
    %v195 = vld [vmem:[#allocation2 + $0x100] sm:$0xff]
    %v196 = vld [vmem:[#allocation2 + $0x108] sm:$0xff]
    %v197 = vld [vmem:[#allocation2 + $0x110] sm:$0xff]
    %v198 = vld [vmem:[#allocation2 + $0x118] sm:$0x1]
    %v199 = vld [vmem:[#allocation2 + $0x120] sm:$0x1]
    %v200 = vld [vmem:[#allocation2 + $0x128] sm:$0x1]
    %v201 = vld [vmem:[#allocation2 + $0x130] sm:$0x1]
    %v202 = vld [vmem:[#allocation2 + $0x138] sm:$0x1]
    %v203 = vlaneseq
    %v204 = vshrl.u32 %v203, 7
    %v205 = vsub.s32 0, %v204
    %v206 = vrot.slane %v179, %v205
    %v208 = vsel %vm45, %v137, 0
    %v211 = vsel %vm45, %v142, 0
    %v214 = vsel %vm45, %v147, 0
    %v217 = vsel %vm45, %v152, 0
    %219 = vmatprep.subr.mxu0 0.0
    %220 = vmatpush1.msra.mxu0 %v175
    %221 = vmatprep.subr.mxu0 0.0
    %222 = vmatpush1.msra.mxu0 %v176
    %223 = vmatprep.subr.mxu0 0.0
    %224 = vmatpush1.msra.mxu0 %v177
    %225 = vmatprep.subr.mxu0 0.0
    %226 = vmatpush1.msra.mxu0 %v178
    %227 = vmatprep.subr.mxu0 0.0
    %228 = vmatpush1.msra.mxu0 0.0
    %229 = vmatprep.subr.mxu0 0.0
    %230 = vmatpush1.msra.mxu0 0.0
    %231 = vmatprep.subr.mxu0 0.0
    %232 = vmatpush1.msra.mxu0 0.0
    %233 = vmatprep.subr.mxu0 0.0
    %234 = vmatpush1.msra.mxu0 0.0
    %235 = vmatprep.subr.mxu0 0.0
    %236 = vmatpush1.msra.mxu0 0.0
    %237 = vmatprep.subr.mxu0 0.0
    %238 = vmatpush1.msra.mxu0 0.0
    %239 = vmatprep.subr.mxu0 0.0
    %240 = vmatpush1.msra.mxu0 0.0
    %241 = vmatprep.subr.mxu0 0.0
    %242 = vmatpush1.msra.mxu0 0.0
    %243 = vmatprep.subr.mxu0 0.0
    %244 = vmatpush1.msra.mxu0 0.0
    %245 = vmatprep.subr.mxu0 0.0
    %246 = vmatpush1.msra.mxu0 0.0
    %247 = vmatprep.subr.mxu0 0.0
    %248 = vmatpush1.msra.mxu0 0.0
    %249 = vmatprep.subr.mxu0 0.0
    %250 = vmatpush1.msra.mxu0 0.0
    %251 = vmatprep.subr.mxu0 0.0
    %252 = vmatpush1.msra.mxu0 0.0
    %253 = vmatprep.subr.mxu0 0.0
    %254 = vmatpush1.msra.mxu0 0.0
    %255 = vmatprep.subr.mxu0 0.0
    %256 = vmatpush1.msra.mxu0 0.0
    %257 = vmatprep.subr.mxu0 0.0
    %258 = vmatpush1.msra.mxu0 0.0
    %259 = vmatprep.subr.mxu0 0.0
    %260 = vmatpush1.msra.mxu0 0.0
    %261 = vmatprep.subr.mxu0 0.0
    %262 = vmatpush1.msra.mxu0 0.0
    %263 = vmatprep.subr.mxu0 0.0
    %264 = vmatpush1.msra.mxu0 0.0
    %265 = vmatprep.subr.mxu0 0.0
    %266 = vmatpush1.msra.mxu0 0.0
    %267 = vmatprep.subr.mxu0 0.0
    %268 = vmatpush1.msra.mxu0 0.0
    %269 = vmatprep.subr.mxu0 0.0
    %270 = vmatpush1.msra.mxu0 0.0
    %271 = vmatprep.subr.mxu0 0.0
    %272 = vmatpush1.msra.mxu0 0.0
    %273 = vmatprep.subr.mxu0 0.0
    %274 = vmatpush1.msra.mxu0 0.0
    %275 = vmatprep.subr.mxu0 0.0
    %276 = vmatpush1.msra.mxu0 0.0
    %277 = vmatprep.subr.mxu0 0.0
    %278 = vmatpush1.msra.mxu0 0.0
    %279 = vmatprep.subr.mxu0 0.0
    %280 = vmatpush1.msra.mxu0 0.0
    %281 = vmatprep.subr.mxu0 0.0
    %282 = vmatpush1.msra.mxu0 0.0
    %283 = vmatprep.mubr.f32.mxu0 0.0
    %284 = vmatmul.mubr.f32.gmra.mrb[0].mxu0 %v208
    %v285 = vpop.f32.mrb[0].mxu0
    %v286 = vadd.f32 %v206, %v285
    %v287 = vpop.f32.mrb[0].mxu0
    %288 = vmatprep.mubr.f32.mxu0 0.0
    %289 = vmatmul.mubr.f32.gmra.mrb[0].mxu0 %v211
    %v290 = vpop.f32.mrb[0].mxu0
    %v291 = vadd.f32 %v206, %v290
    %v292 = vpop.f32.mrb[0].mxu0
    %293 = vmatprep.mubr.f32.mxu0 0.0
    %294 = vmatmul.mubr.f32.gmra.mrb[0].mxu0 %v214
    %v295 = vpop.f32.mrb[0].mxu0
    %v296 = vadd.f32 %v206, %v295
    %v297 = vpop.f32.mrb[0].mxu0
    %298 = vmatprep.mubr.f32.mxu0 0.0
    %299 = vmatmul.mubr.f32.gmra.mrb[0].mxu0 %v217
    %v300 = vpop.f32.mrb[0].mxu0
    %v301 = vadd.f32 %v206, %v300
    %v302 = vpop.f32.mrb[0].mxu0
    %303 = vdwg.mxu0
    %306 = vrot.lane.b32.xlu0 %v286, 96
    %v307 = vpop.permute.xlu0 %306
    %308 = vrot.lane.b32.xlu0 %v291, 96
    %v309 = vpop.permute.xlu0 %308
    %vm310 = vcmask 64512
    %v311 = vsel %vm310, %v286, 0
    %v313 = vsel %vm310, %v291, 0
    %v315 = vsel %vm310, %v307, 0
    %v317 = vsel %vm310, %v309, 0
    %319 = vmatprep.subr.mxu0 0.0
    %320 = vmatpush1.xpose.msra.mxu0 %v315
    %321 = vmatprep.subr.mxu0 0.0
    %322 = vmatpush1.xpose.msra.mxu0 %v317
    %323 = vmatprep.subr.mxu0 0.0
    %324 = vmatpush1.xpose.msra.mxu0 0.0
    %325 = vmatprep.subr.mxu0 0.0
    %326 = vmatpush1.xpose.msra.mxu0 0.0
    %327 = vmatprep.subr.mxu0 0.0
    %328 = vmatpush1.xpose.msra.mxu0 0.0
    %329 = vmatprep.subr.mxu0 0.0
    %330 = vmatpush1.xpose.msra.mxu0 0.0
    %331 = vmatprep.subr.mxu0 0.0
    %332 = vmatpush1.xpose.msra.mxu0 0.0
    %333 = vmatprep.subr.mxu0 0.0
    %334 = vmatpush1.xpose.msra.mxu0 0.0
    %335 = vmatprep.subr.mxu0 0.0
    %336 = vmatpush1.xpose.msra.mxu0 0.0
    %337 = vmatprep.subr.mxu0 0.0
    %338 = vmatpush1.xpose.msra.mxu0 0.0
    %339 = vmatprep.subr.mxu0 0.0
    %340 = vmatpush1.xpose.msra.mxu0 0.0
    %341 = vmatprep.subr.mxu0 0.0
    %342 = vmatpush1.xpose.msra.mxu0 0.0
    %343 = vmatprep.subr.mxu0 0.0
    %344 = vmatpush1.xpose.msra.mxu0 0.0
    %345 = vmatprep.subr.mxu0 0.0
    %346 = vmatpush1.xpose.msra.mxu0 0.0
    %347 = vmatprep.subr.mxu0 0.0
    %348 = vmatpush1.xpose.msra.mxu0 0.0
    %349 = vmatprep.subr.mxu0 0.0
    %350 = vmatpush1.xpose.msra.mxu0 0.0
    %351 = vmatprep.subr.mxu0 0.0
    %352 = vmatpush1.xpose.msra.mxu0 0.0
    %353 = vmatprep.subr.mxu0 0.0
    %354 = vmatpush1.xpose.msra.mxu0 0.0
    %355 = vmatprep.subr.mxu0 0.0
    %356 = vmatpush1.xpose.msra.mxu0 0.0
    %357 = vmatprep.subr.mxu0 0.0
    %358 = vmatpush1.xpose.msra.mxu0 0.0
    %359 = vmatprep.subr.mxu0 0.0
    %360 = vmatpush1.xpose.msra.mxu0 0.0
    %361 = vmatprep.subr.mxu0 0.0
    %362 = vmatpush1.xpose.msra.mxu0 0.0
    %363 = vmatprep.subr.mxu0 0.0
    %364 = vmatpush1.xpose.msra.mxu0 0.0
    %365 = vmatprep.subr.mxu0 0.0
    %366 = vmatpush1.xpose.msra.mxu0 0.0
    %367 = vmatprep.subr.mxu0 0.0
    %368 = vmatpush1.xpose.msra.mxu0 0.0
    %369 = vmatprep.subr.mxu0 0.0
    %370 = vmatpush1.xpose.msra.mxu0 0.0
    %371 = vmatprep.subr.mxu0 0.0
    %372 = vmatpush1.xpose.msra.mxu0 0.0
    %373 = vmatprep.subr.mxu0 0.0
    %374 = vmatpush1.xpose.msra.mxu0 0.0
    %375 = vmatprep.subr.mxu0 0.0
    %376 = vmatpush1.xpose.msra.mxu0 0.0
    %377 = vmatprep.subr.mxu0 0.0
    %378 = vmatpush1.xpose.msra.mxu0 0.0
    %379 = vmatprep.subr.mxu0 0.0
    %380 = vmatpush1.xpose.msra.mxu0 0.0
    %381 = vmatprep.subr.mxu0 0.0
    %382 = vmatpush1.xpose.msra.mxu0 0.0
    %383 = vmatprep.mubr.f32.mxu0 0.0
    %384 = vmatmul.mubr.f32.gmra.mrb[0].mxu0 %v311
    %v385 = vpop.f32.mrb[0].mxu0
    %v386 = vadd.f32 0.0, %v385
    %v387 = vpop.f32.mrb[0].mxu0
    %388 = vmatprep.mubr.f32.mxu0 0.0
    %389 = vmatmul.mubr.f32.gmra.mrb[0].mxu0 %v313
    %v390 = vpop.f32.mrb[0].mxu0
    %v391 = vadd.f32 0.0, %v390
    %v392 = vpop.f32.mrb[0].mxu0
    %393 = vdwg.mxu0
    %396 = vrot.lane.b32.xlu0 %v296, 96
    %v397 = vpop.permute.xlu0 %396
    %398 = vrot.lane.b32.xlu0 %v301, 96
    %v399 = vpop.permute.xlu0 %398
    %v400 = vsel %vm310, %v296, 0
    %v402 = vsel %vm310, %v301, 0
    %v404 = vsel %vm310, %v397, 0
    %v406 = vsel %vm310, %v399, 0
    %408 = vmatprep.subr.mxu0 0.0
    %409 = vmatpush1.xpose.msra.mxu0 %v404
    %410 = vmatprep.subr.mxu0 0.0
    %411 = vmatpush1.xpose.msra.mxu0 %v406
    %412 = vmatprep.subr.mxu0 0.0
    %413 = vmatpush1.xpose.msra.mxu0 0.0
    %414 = vmatprep.subr.mxu0 0.0
    %415 = vmatpush1.xpose.msra.mxu0 0.0
    %416 = vmatprep.subr.mxu0 0.0
    %417 = vmatpush1.xpose.msra.mxu0 0.0
    %418 = vmatprep.subr.mxu0 0.0
    %419 = vmatpush1.xpose.msra.mxu0 0.0
    %420 = vmatprep.subr.mxu0 0.0
    %421 = vmatpush1.xpose.msra.mxu0 0.0
    %422 = vmatprep.subr.mxu0 0.0
    %423 = vmatpush1.xpose.msra.mxu0 0.0
    %424 = vmatprep.subr.mxu0 0.0
    %425 = vmatpush1.xpose.msra.mxu0 0.0
    %426 = vmatprep.subr.mxu0 0.0
    %427 = vmatpush1.xpose.msra.mxu0 0.0
    %428 = vmatprep.subr.mxu0 0.0
    %429 = vmatpush1.xpose.msra.mxu0 0.0
    %430 = vmatprep.subr.mxu0 0.0
    %431 = vmatpush1.xpose.msra.mxu0 0.0
    %432 = vmatprep.subr.mxu0 0.0
    %433 = vmatpush1.xpose.msra.mxu0 0.0
    %434 = vmatprep.subr.mxu0 0.0
    %435 = vmatpush1.xpose.msra.mxu0 0.0
    %436 = vmatprep.subr.mxu0 0.0
    %437 = vmatpush1.xpose.msra.mxu0 0.0
    %438 = vmatprep.subr.mxu0 0.0
    %439 = vmatpush1.xpose.msra.mxu0 0.0
    %440 = vmatprep.subr.mxu0 0.0
    %441 = vmatpush1.xpose.msra.mxu0 0.0
    %442 = vmatprep.subr.mxu0 0.0
    %443 = vmatpush1.xpose.msra.mxu0 0.0
    %444 = vmatprep.subr.mxu0 0.0
    %445 = vmatpush1.xpose.msra.mxu0 0.0
    %446 = vmatprep.subr.mxu0 0.0
    %447 = vmatpush1.xpose.msra.mxu0 0.0
    %448 = vmatprep.subr.mxu0 0.0
    %449 = vmatpush1.xpose.msra.mxu0 0.0
    %450 = vmatprep.subr.mxu0 0.0
    %451 = vmatpush1.xpose.msra.mxu0 0.0
    %452 = vmatprep.subr.mxu0 0.0
    %453 = vmatpush1.xpose.msra.mxu0 0.0
    %454 = vmatprep.subr.mxu0 0.0
    %455 = vmatpush1.xpose.msra.mxu0 0.0
    %456 = vmatprep.subr.mxu0 0.0
    %457 = vmatpush1.xpose.msra.mxu0 0.0
    %458 = vmatprep.subr.mxu0 0.0
    %459 = vmatpush1.xpose.msra.mxu0 0.0
    %460 = vmatprep.subr.mxu0 0.0
    %461 = vmatpush1.xpose.msra.mxu0 0.0
    %462 = vmatprep.subr.mxu0 0.0
    %463 = vmatpush1.xpose.msra.mxu0 0.0
    %464 = vmatprep.subr.mxu0 0.0
    %465 = vmatpush1.xpose.msra.mxu0 0.0
    %466 = vmatprep.subr.mxu0 0.0
    %467 = vmatpush1.xpose.msra.mxu0 0.0
    %468 = vmatprep.subr.mxu0 0.0
    %469 = vmatpush1.xpose.msra.mxu0 0.0
    %470 = vmatprep.subr.mxu0 0.0
    %471 = vmatpush1.xpose.msra.mxu0 0.0
    %472 = vmatprep.mubr.f32.mxu0 0.0
    %473 = vmatmul.mubr.f32.gmra.mrb[0].mxu0 %v400
    %v474 = vpop.f32.mrb[0].mxu0
    %v475 = vadd.f32 0.0, %v474
    %v476 = vpop.f32.mrb[0].mxu0
    %477 = vmatprep.mubr.f32.mxu0 0.0
    %478 = vmatmul.mubr.f32.gmra.mrb[0].mxu0 %v402
    %v479 = vpop.f32.mrb[0].mxu0
    %v480 = vadd.f32 0.0, %v479
    %v481 = vpop.f32.mrb[0].mxu0
    %482 = vdwg.mxu0
    %v483 = vmul.f32 %v386, 0.35355338
    %v484 = vmul.f32 %v391, 0.35355338
    %v485 = vmul.f32 %v475, 0.35355338
    %v486 = vmul.f32 %v480, 0.35355338
    %vm487 = vcmask 130048
    %v488 = vsel %vm487, %v483, -inf
    %489 = vmax.xlane.f32.xlu0 %v488
    %v490 = vpop.xlane.xlu0 %489
    %v491 = vsel %vm487, %v484, -inf
    %492 = vmax.xlane.f32.xlu0 %v491
    %v493 = vpop.xlane.xlu0 %492
    %v494 = vsel %vm487, %v485, -inf
    %495 = vmax.xlane.f32.xlu0 %v494
    %v496 = vpop.xlane.xlu0 %495
    %v497 = vsel %vm487, %v486, -inf
    %498 = vmax.xlane.f32.xlu0 %v497
    %v499 = vpop.xlane.xlu0 %498
    %v500 = vsub.f32 %v483, %v490
    %v501 = vsub.f32 %v484, %v493
    %v502 = vsub.f32 %v485, %v496
    %v503 = vsub.f32 %v486, %v499
    %v504 = vmul.f32 %v500, 1.442695
    %v505 = vpow.pop %v504
    %v506 = vmul.f32 %v501, 1.442695
    %v507 = vpow.pop %v506
    %v508 = vmul.f32 %v502, 1.442695
    %v509 = vpow.pop %v508
    %v510 = vmul.f32 %v503, 1.442695
    %v511 = vpow.pop %v510
    %v512 = vsel %vm487, %v505, 0.0
    %513 = vadd.xlane.f32.xlu0 %v512
    %v514 = vpop.xlane.xlu0 %513
    %v515 = vsel %vm487, %v507, 0.0
    %516 = vadd.xlane.f32.xlu0 %v515
    %v517 = vpop.xlane.xlu0 %516
    %v518 = vsel %vm487, %v509, 0.0
    %519 = vadd.xlane.f32.xlu0 %v518
    %v520 = vpop.xlane.xlu0 %519
    %v521 = vsel %vm487, %v511, 0.0
    %522 = vadd.xlane.f32.xlu0 %v521
    %v523 = vpop.xlane.xlu0 %522
    %v524 = vrcp.pop %v514
    %v525 = vmul.f32 %v505, %v524
    %v526 = vrcp.pop %v517
    %v527 = vmul.f32 %v507, %v526
    %v528 = vrcp.pop %v520
    %v529 = vmul.f32 %v509, %v528
    %v530 = vrcp.pop %v523
    %v531 = vmul.f32 %v511, %v530
    %532 = vrot.lane.b32.xlu0 %v286, 64
    %v533 = vpop.permute.xlu0 %532
    %534 = vrot.lane.b32.xlu0 %v291, 64
    %v535 = vpop.permute.xlu0 %534
    %v539 = vsel %vm487, %v525, 0
    %v542 = vsel %vm487, %v527, 0
    %544 = vmatprep.subr.mxu0 0.0
    %545 = vmatpush1.msra.mxu0 %v533
    %546 = vmatprep.subr.mxu0 0.0
    %547 = vmatpush1.msra.mxu0 %v535
    %548 = vmatprep.subr.mxu0 0.0
    %549 = vmatpush1.msra.mxu0 0.0
    %550 = vmatprep.subr.mxu0 0.0
    %551 = vmatpush1.msra.mxu0 0.0
    %552 = vmatprep.subr.mxu0 0.0
    %553 = vmatpush1.msra.mxu0 0.0
    %554 = vmatprep.subr.mxu0 0.0
    %555 = vmatpush1.msra.mxu0 0.0
    %556 = vmatprep.subr.mxu0 0.0
    %557 = vmatpush1.msra.mxu0 0.0
    %558 = vmatprep.subr.mxu0 0.0
    %559 = vmatpush1.msra.mxu0 0.0
    %560 = vmatprep.subr.mxu0 0.0
    %561 = vmatpush1.msra.mxu0 0.0
    %562 = vmatprep.subr.mxu0 0.0
    %563 = vmatpush1.msra.mxu0 0.0
    %564 = vmatprep.subr.mxu0 0.0
    %565 = vmatpush1.msra.mxu0 0.0
    %566 = vmatprep.subr.mxu0 0.0
    %567 = vmatpush1.msra.mxu0 0.0
    %568 = vmatprep.subr.mxu0 0.0
    %569 = vmatpush1.msra.mxu0 0.0
    %570 = vmatprep.subr.mxu0 0.0
    %571 = vmatpush1.msra.mxu0 0.0
    %572 = vmatprep.subr.mxu0 0.0
    %573 = vmatpush1.msra.mxu0 0.0
    %574 = vmatprep.subr.mxu0 0.0
    %575 = vmatpush1.msra.mxu0 0.0
    %576 = vmatprep.subr.mxu0 0.0
    %577 = vmatpush1.msra.mxu0 0.0
    %578 = vmatprep.subr.mxu0 0.0
    %579 = vmatpush1.msra.mxu0 0.0
    %580 = vmatprep.subr.mxu0 0.0
    %581 = vmatpush1.msra.mxu0 0.0
    %582 = vmatprep.subr.mxu0 0.0
    %583 = vmatpush1.msra.mxu0 0.0
    %584 = vmatprep.subr.mxu0 0.0
    %585 = vmatpush1.msra.mxu0 0.0
    %586 = vmatprep.subr.mxu0 0.0
    %587 = vmatpush1.msra.mxu0 0.0
    %588 = vmatprep.subr.mxu0 0.0
    %589 = vmatpush1.msra.mxu0 0.0
    %590 = vmatprep.subr.mxu0 0.0
    %591 = vmatpush1.msra.mxu0 0.0
    %592 = vmatprep.subr.mxu0 0.0
    %593 = vmatpush1.msra.mxu0 0.0
    %594 = vmatprep.subr.mxu0 0.0
    %595 = vmatpush1.msra.mxu0 0.0
    %596 = vmatprep.subr.mxu0 0.0
    %597 = vmatpush1.msra.mxu0 0.0
    %598 = vmatprep.subr.mxu0 0.0
    %599 = vmatpush1.msra.mxu0 0.0
    %600 = vmatprep.subr.mxu0 0.0
    %601 = vmatpush1.msra.mxu0 0.0
    %602 = vmatprep.subr.mxu0 0.0
    %603 = vmatpush1.msra.mxu0 0.0
    %604 = vmatprep.subr.mxu0 0.0
    %605 = vmatpush1.msra.mxu0 0.0
    %606 = vmatprep.subr.mxu0 0.0
    %607 = vmatpush1.msra.mxu0 0.0
    %608 = vmatprep.mubr.f32.mxu0 0.0
    %609 = vmatmul.mubr.f32.gmra.mrb[0].mxu0 %v539
    %v610 = vpop.f32.mrb[0].mxu0
    %v611 = vadd.f32 0.0, %v610
    %v612 = vpop.f32.mrb[0].mxu0
    %613 = vmatprep.mubr.f32.mxu0 0.0
    %614 = vmatmul.mubr.f32.gmra.mrb[0].mxu0 %v542
    %v615 = vpop.f32.mrb[0].mxu0
    %v616 = vadd.f32 0.0, %v615
    %v617 = vpop.f32.mrb[0].mxu0
    %618 = vdwg.mxu0
    %619 = vrot.lane.b32.xlu0 %v296, 64
    %v620 = vpop.permute.xlu0 %619
    %621 = vrot.lane.b32.xlu0 %v301, 64
    %v622 = vpop.permute.xlu0 %621
    %v626 = vsel %vm487, %v529, 0
    %v629 = vsel %vm487, %v531, 0
    %631 = vmatprep.subr.mxu0 0.0
    %632 = vmatpush1.msra.mxu0 %v620
    %633 = vmatprep.subr.mxu0 0.0
    %634 = vmatpush1.msra.mxu0 %v622
    %635 = vmatprep.subr.mxu0 0.0
    %636 = vmatpush1.msra.mxu0 0.0
    %637 = vmatprep.subr.mxu0 0.0
    %638 = vmatpush1.msra.mxu0 0.0
    %639 = vmatprep.subr.mxu0 0.0
    %640 = vmatpush1.msra.mxu0 0.0
    %641 = vmatprep.subr.mxu0 0.0
    %642 = vmatpush1.msra.mxu0 0.0
    %643 = vmatprep.subr.mxu0 0.0
    %644 = vmatpush1.msra.mxu0 0.0
    %645 = vmatprep.subr.mxu0 0.0
    %646 = vmatpush1.msra.mxu0 0.0
    %647 = vmatprep.subr.mxu0 0.0
    %648 = vmatpush1.msra.mxu0 0.0
    %649 = vmatprep.subr.mxu0 0.0
    %650 = vmatpush1.msra.mxu0 0.0
    %651 = vmatprep.subr.mxu0 0.0
    %652 = vmatpush1.msra.mxu0 0.0
    %653 = vmatprep.subr.mxu0 0.0
    %654 = vmatpush1.msra.mxu0 0.0
    %655 = vmatprep.subr.mxu0 0.0
    %656 = vmatpush1.msra.mxu0 0.0
    %657 = vmatprep.subr.mxu0 0.0
    %658 = vmatpush1.msra.mxu0 0.0
    %659 = vmatprep.subr.mxu0 0.0
    %660 = vmatpush1.msra.mxu0 0.0
    %661 = vmatprep.subr.mxu0 0.0
    %662 = vmatpush1.msra.mxu0 0.0
    %663 = vmatprep.subr.mxu0 0.0
    %664 = vmatpush1.msra.mxu0 0.0
    %665 = vmatprep.subr.mxu0 0.0
    %666 = vmatpush1.msra.mxu0 0.0
    %667 = vmatprep.subr.mxu0 0.0
    %668 = vmatpush1.msra.mxu0 0.0
    %669 = vmatprep.subr.mxu0 0.0
    %670 = vmatpush1.msra.mxu0 0.0
    %671 = vmatprep.subr.mxu0 0.0
    %672 = vmatpush1.msra.mxu0 0.0
    %673 = vmatprep.subr.mxu0 0.0
    %674 = vmatpush1.msra.mxu0 0.0
    %675 = vmatprep.subr.mxu0 0.0
    %676 = vmatpush1.msra.mxu0 0.0
    %677 = vmatprep.subr.mxu0 0.0
    %678 = vmatpush1.msra.mxu0 0.0
    %679 = vmatprep.subr.mxu0 0.0
    %680 = vmatpush1.msra.mxu0 0.0
    %681 = vmatprep.subr.mxu0 0.0
    %682 = vmatpush1.msra.mxu0 0.0
    %683 = vmatprep.subr.mxu0 0.0
    %684 = vmatpush1.msra.mxu0 0.0
    %685 = vmatprep.subr.mxu0 0.0
    %686 = vmatpush1.msra.mxu0 0.0
    %687 = vmatprep.subr.mxu0 0.0
    %688 = vmatpush1.msra.mxu0 0.0
    %689 = vmatprep.subr.mxu0 0.0
    %690 = vmatpush1.msra.mxu0 0.0
    %691 = vmatprep.subr.mxu0 0.0
    %692 = vmatpush1.msra.mxu0 0.0
    %693 = vmatprep.subr.mxu0 0.0
    %694 = vmatpush1.msra.mxu0 0.0
    %695 = vmatprep.mubr.f32.mxu0 0.0
    %696 = vmatmul.mubr.f32.gmra.mrb[0].mxu0 %v626
    %v697 = vpop.f32.mrb[0].mxu0
    %v698 = vadd.f32 0.0, %v697
    %v699 = vpop.f32.mrb[0].mxu0
    %700 = vmatprep.mubr.f32.mxu0 0.0
    %701 = vmatmul.mubr.f32.gmra.mrb[0].mxu0 %v629
    %v702 = vpop.f32.mrb[0].mxu0
    %v703 = vadd.f32 0.0, %v702
    %v704 = vpop.f32.mrb[0].mxu0
    %705 = vdwg.mxu0
    %706 = vrot.lane.b32.xlu0 %v286, 120
    %v707 = vpop.permute.xlu0 %706
    %708 = vrot.lane.b32.xlu0 %v291, 120
    %v709 = vpop.permute.xlu0 %708
    %710 = vrot.lane.b32.xlu0 %v286, 88
    %v711 = vpop.permute.xlu0 %710
    %712 = vrot.lane.b32.xlu0 %v291, 88
    %v713 = vpop.permute.xlu0 %712
    %v714 = vsel %vm310, %v707, 0
    %v716 = vsel %vm310, %v709, 0
    %v718 = vsel %vm310, %v711, 0
    %v720 = vsel %vm310, %v713, 0
    %722 = vmatprep.subr.mxu0 0.0
    %723 = vmatpush1.xpose.msra.mxu0 %v718
    %724 = vmatprep.subr.mxu0 0.0
    %725 = vmatpush1.xpose.msra.mxu0 %v720
    %726 = vmatprep.subr.mxu0 0.0
    %727 = vmatpush1.xpose.msra.mxu0 0.0
    %728 = vmatprep.subr.mxu0 0.0
    %729 = vmatpush1.xpose.msra.mxu0 0.0
    %730 = vmatprep.subr.mxu0 0.0
    %731 = vmatpush1.xpose.msra.mxu0 0.0
    %732 = vmatprep.subr.mxu0 0.0
    %733 = vmatpush1.xpose.msra.mxu0 0.0
    %734 = vmatprep.subr.mxu0 0.0
    %735 = vmatpush1.xpose.msra.mxu0 0.0
    %736 = vmatprep.subr.mxu0 0.0
    %737 = vmatpush1.xpose.msra.mxu0 0.0
    %738 = vmatprep.subr.mxu0 0.0
    %739 = vmatpush1.xpose.msra.mxu0 0.0
    %740 = vmatprep.subr.mxu0 0.0
    %741 = vmatpush1.xpose.msra.mxu0 0.0
    %742 = vmatprep.subr.mxu0 0.0
    %743 = vmatpush1.xpose.msra.mxu0 0.0
    %744 = vmatprep.subr.mxu0 0.0
    %745 = vmatpush1.xpose.msra.mxu0 0.0
    %746 = vmatprep.subr.mxu0 0.0
    %747 = vmatpush1.xpose.msra.mxu0 0.0
    %748 = vmatprep.subr.mxu0 0.0
    %749 = vmatpush1.xpose.msra.mxu0 0.0
    %750 = vmatprep.subr.mxu0 0.0
    %751 = vmatpush1.xpose.msra.mxu0 0.0
    %752 = vmatprep.subr.mxu0 0.0
    %753 = vmatpush1.xpose.msra.mxu0 0.0
    %754 = vmatprep.subr.mxu0 0.0
    %755 = vmatpush1.xpose.msra.mxu0 0.0
    %756 = vmatprep.subr.mxu0 0.0
    %757 = vmatpush1.xpose.msra.mxu0 0.0
    %758 = vmatprep.subr.mxu0 0.0
    %759 = vmatpush1.xpose.msra.mxu0 0.0
    %760 = vmatprep.subr.mxu0 0.0
    %761 = vmatpush1.xpose.msra.mxu0 0.0
    %762 = vmatprep.subr.mxu0 0.0
    %763 = vmatpush1.xpose.msra.mxu0 0.0
    %764 = vmatprep.subr.mxu0 0.0
    %765 = vmatpush1.xpose.msra.mxu0 0.0
    %766 = vmatprep.subr.mxu0 0.0
    %767 = vmatpush1.xpose.msra.mxu0 0.0
    %768 = vmatprep.subr.mxu0 0.0
    %769 = vmatpush1.xpose.msra.mxu0 0.0
    %770 = vmatprep.subr.mxu0 0.0
    %771 = vmatpush1.xpose.msra.mxu0 0.0
    %772 = vmatprep.subr.mxu0 0.0
    %773 = vmatpush1.xpose.msra.mxu0 0.0
    %774 = vmatprep.subr.mxu0 0.0
    %775 = vmatpush1.xpose.msra.mxu0 0.0
    %776 = vmatprep.subr.mxu0 0.0
    %777 = vmatpush1.xpose.msra.mxu0 0.0
    %778 = vmatprep.subr.mxu0 0.0
    %779 = vmatpush1.xpose.msra.mxu0 0.0
    %780 = vmatprep.subr.mxu0 0.0
    %781 = vmatpush1.xpose.msra.mxu0 0.0
    %782 = vmatprep.subr.mxu0 0.0
    %783 = vmatpush1.xpose.msra.mxu0 0.0
    %784 = vmatprep.subr.mxu0 0.0
    %785 = vmatpush1.xpose.msra.mxu0 0.0
    %786 = vmatprep.mubr.f32.mxu0 0.0
    %787 = vmatmul.mubr.f32.gmra.mrb[0].mxu0 %v714
    %v788 = vpop.f32.mrb[0].mxu0
    %v789 = vadd.f32 0.0, %v788
    %v790 = vpop.f32.mrb[0].mxu0
    %791 = vmatprep.mubr.f32.mxu0 0.0
    %792 = vmatmul.mubr.f32.gmra.mrb[0].mxu0 %v716
    %v793 = vpop.f32.mrb[0].mxu0
    %v794 = vadd.f32 0.0, %v793
    %v795 = vpop.f32.mrb[0].mxu0
    %796 = vdwg.mxu0
    %797 = vrot.lane.b32.xlu0 %v296, 120
    %v798 = vpop.permute.xlu0 %797
    %799 = vrot.lane.b32.xlu0 %v301, 120
    %v800 = vpop.permute.xlu0 %799
    %801 = vrot.lane.b32.xlu0 %v296, 88
    %v802 = vpop.permute.xlu0 %801
    %803 = vrot.lane.b32.xlu0 %v301, 88
    %v804 = vpop.permute.xlu0 %803
    %v805 = vsel %vm310, %v798, 0
    %v807 = vsel %vm310, %v800, 0
    %v809 = vsel %vm310, %v802, 0
    %v811 = vsel %vm310, %v804, 0
    %813 = vmatprep.subr.mxu0 0.0
    %814 = vmatpush1.xpose.msra.mxu0 %v809
    %815 = vmatprep.subr.mxu0 0.0
    %816 = vmatpush1.xpose.msra.mxu0 %v811
    %817 = vmatprep.subr.mxu0 0.0
    %818 = vmatpush1.xpose.msra.mxu0 0.0
    %819 = vmatprep.subr.mxu0 0.0
    %820 = vmatpush1.xpose.msra.mxu0 0.0
    %821 = vmatprep.subr.mxu0 0.0
    %822 = vmatpush1.xpose.msra.mxu0 0.0
    %823 = vmatprep.subr.mxu0 0.0
    %824 = vmatpush1.xpose.msra.mxu0 0.0
    %825 = vmatprep.subr.mxu0 0.0
    %826 = vmatpush1.xpose.msra.mxu0 0.0
    %827 = vmatprep.subr.mxu0 0.0
    %828 = vmatpush1.xpose.msra.mxu0 0.0
    %829 = vmatprep.subr.mxu0 0.0
    %830 = vmatpush1.xpose.msra.mxu0 0.0
    %831 = vmatprep.subr.mxu0 0.0
    %832 = vmatpush1.xpose.msra.mxu0 0.0
    %833 = vmatprep.subr.mxu0 0.0
    %834 = vmatpush1.xpose.msra.mxu0 0.0
    %835 = vmatprep.subr.mxu0 0.0
    %836 = vmatpush1.xpose.msra.mxu0 0.0
    %837 = vmatprep.subr.mxu0 0.0
    %838 = vmatpush1.xpose.msra.mxu0 0.0
    %839 = vmatprep.subr.mxu0 0.0
    %840 = vmatpush1.xpose.msra.mxu0 0.0
    %841 = vmatprep.subr.mxu0 0.0
    %842 = vmatpush1.xpose.msra.mxu0 0.0
    %843 = vmatprep.subr.mxu0 0.0
    %844 = vmatpush1.xpose.msra.mxu0 0.0
    %845 = vmatprep.subr.mxu0 0.0
    %846 = vmatpush1.xpose.msra.mxu0 0.0
    %847 = vmatprep.subr.mxu0 0.0
    %848 = vmatpush1.xpose.msra.mxu0 0.0
    %849 = vmatprep.subr.mxu0 0.0
    %850 = vmatpush1.xpose.msra.mxu0 0.0
    %851 = vmatprep.subr.mxu0 0.0
    %852 = vmatpush1.xpose.msra.mxu0 0.0
    %853 = vmatprep.subr.mxu0 0.0
    %854 = vmatpush1.xpose.msra.mxu0 0.0
    %855 = vmatprep.subr.mxu0 0.0
    %856 = vmatpush1.xpose.msra.mxu0 0.0
    %857 = vmatprep.subr.mxu0 0.0
    %858 = vmatpush1.xpose.msra.mxu0 0.0
    %859 = vmatprep.subr.mxu0 0.0
    %860 = vmatpush1.xpose.msra.mxu0 0.0
    %861 = vmatprep.subr.mxu0 0.0
    %862 = vmatpush1.xpose.msra.mxu0 0.0
    %863 = vmatprep.subr.mxu0 0.0
    %864 = vmatpush1.xpose.msra.mxu0 0.0
    %865 = vmatprep.subr.mxu0 0.0
    %866 = vmatpush1.xpose.msra.mxu0 0.0
    %867 = vmatprep.subr.mxu0 0.0
    %868 = vmatpush1.xpose.msra.mxu0 0.0
    %869 = vmatprep.subr.mxu0 0.0
    %870 = vmatpush1.xpose.msra.mxu0 0.0
    %871 = vmatprep.subr.mxu0 0.0
    %872 = vmatpush1.xpose.msra.mxu0 0.0
    %873 = vmatprep.subr.mxu0 0.0
    %874 = vmatpush1.xpose.msra.mxu0 0.0
    %875 = vmatprep.subr.mxu0 0.0
    %876 = vmatpush1.xpose.msra.mxu0 0.0
    %877 = vmatprep.mubr.f32.mxu0 0.0
    %878 = vmatmul.mubr.f32.gmra.mrb[0].mxu0 %v805
    %v879 = vpop.f32.mrb[0].mxu0
    %v880 = vadd.f32 0.0, %v879
    %v881 = vpop.f32.mrb[0].mxu0
    %882 = vmatprep.mubr.f32.mxu0 0.0
    %883 = vmatmul.mubr.f32.gmra.mrb[0].mxu0 %v807
    %v884 = vpop.f32.mrb[0].mxu0
    %v885 = vadd.f32 0.0, %v884
    %v886 = vpop.f32.mrb[0].mxu0
    %887 = vdwg.mxu0
    %v888 = vmul.f32 %v789, 0.35355338
    %v889 = vmul.f32 %v794, 0.35355338
    %v890 = vmul.f32 %v880, 0.35355338
    %v891 = vmul.f32 %v885, 0.35355338
    %v892 = vsel %vm487, %v888, -inf
    %893 = vmax.xlane.f32.xlu0 %v892
    %v894 = vpop.xlane.xlu0 %893
    %v895 = vsel %vm487, %v889, -inf
    %896 = vmax.xlane.f32.xlu0 %v895
    %v897 = vpop.xlane.xlu0 %896
    %v898 = vsel %vm487, %v890, -inf
    %899 = vmax.xlane.f32.xlu0 %v898
    %v900 = vpop.xlane.xlu0 %899
    %v901 = vsel %vm487, %v891, -inf
    %902 = vmax.xlane.f32.xlu0 %v901
    %v903 = vpop.xlane.xlu0 %902
    %v904 = vsub.f32 %v888, %v894
    %v905 = vsub.f32 %v889, %v897
    %v906 = vsub.f32 %v890, %v900
    %v907 = vsub.f32 %v891, %v903
    %v908 = vmul.f32 %v904, 1.442695
    %v909 = vpow.pop %v908
    %v910 = vmul.f32 %v905, 1.442695
    %v911 = vpow.pop %v910
    %v912 = vmul.f32 %v906, 1.442695
    %v913 = vpow.pop %v912
    %v914 = vmul.f32 %v907, 1.442695
    %v915 = vpow.pop %v914
    %v916 = vsel %vm487, %v909, 0.0
    %917 = vadd.xlane.f32.xlu0 %v916
    %v918 = vpop.xlane.xlu0 %917
    %v919 = vsel %vm487, %v911, 0.0
    %920 = vadd.xlane.f32.xlu0 %v919
    %v921 = vpop.xlane.xlu0 %920
    %v922 = vsel %vm487, %v913, 0.0
    %923 = vadd.xlane.f32.xlu0 %v922
    %v924 = vpop.xlane.xlu0 %923
    %v925 = vsel %vm487, %v915, 0.0
    %926 = vadd.xlane.f32.xlu0 %v925
    %v927 = vpop.xlane.xlu0 %926
    %v928 = vrcp.pop %v918
    %v929 = vmul.f32 %v909, %v928
    %v930 = vrcp.pop %v921
    %v931 = vmul.f32 %v911, %v930
    %v932 = vrcp.pop %v924
    %v933 = vmul.f32 %v913, %v932
    %v934 = vrcp.pop %v927
    %v935 = vmul.f32 %v915, %v934
    %936 = vrot.lane.b32.xlu0 %v286, 56
    %v937 = vpop.permute.xlu0 %936
    %938 = vrot.lane.b32.xlu0 %v291, 56
    %v939 = vpop.permute.xlu0 %938
    %v943 = vsel %vm487, %v929, 0
    %v946 = vsel %vm487, %v931, 0
    %948 = vmatprep.subr.mxu0 0.0
    %949 = vmatpush1.msra.mxu0 %v937
    %950 = vmatprep.subr.mxu0 0.0
    %951 = vmatpush1.msra.mxu0 %v939
    %952 = vmatprep.subr.mxu0 0.0
    %953 = vmatpush1.msra.mxu0 0.0
    %954 = vmatprep.subr.mxu0 0.0
    %955 = vmatpush1.msra.mxu0 0.0
    %956 = vmatprep.subr.mxu0 0.0
    %957 = vmatpush1.msra.mxu0 0.0
    %958 = vmatprep.subr.mxu0 0.0
    %959 = vmatpush1.msra.mxu0 0.0
    %960 = vmatprep.subr.mxu0 0.0
    %961 = vmatpush1.msra.mxu0 0.0
    %962 = vmatprep.subr.mxu0 0.0
    %963 = vmatpush1.msra.mxu0 0.0
    %964 = vmatprep.subr.mxu0 0.0
    %965 = vmatpush1.msra.mxu0 0.0
    %966 = vmatprep.subr.mxu0 0.0
    %967 = vmatpush1.msra.mxu0 0.0
    %968 = vmatprep.subr.mxu0 0.0
    %969 = vmatpush1.msra.mxu0 0.0
    %970 = vmatprep.subr.mxu0 0.0
    %971 = vmatpush1.msra.mxu0 0.0
    %972 = vmatprep.subr.mxu0 0.0
    %973 = vmatpush1.msra.mxu0 0.0
    %974 = vmatprep.subr.mxu0 0.0
    %975 = vmatpush1.msra.mxu0 0.0
    %976 = vmatprep.subr.mxu0 0.0
    %977 = vmatpush1.msra.mxu0 0.0
    %978 = vmatprep.subr.mxu0 0.0
    %979 = vmatpush1.msra.mxu0 0.0
    %980 = vmatprep.subr.mxu0 0.0
    %981 = vmatpush1.msra.mxu0 0.0
    %982 = vmatprep.subr.mxu0 0.0
    %983 = vmatpush1.msra.mxu0 0.0
    %984 = vmatprep.subr.mxu0 0.0
    %985 = vmatpush1.msra.mxu0 0.0
    %986 = vmatprep.subr.mxu0 0.0
    %987 = vmatpush1.msra.mxu0 0.0
    %988 = vmatprep.subr.mxu0 0.0
    %989 = vmatpush1.msra.mxu0 0.0
    %990 = vmatprep.subr.mxu0 0.0
    %991 = vmatpush1.msra.mxu0 0.0
    %992 = vmatprep.subr.mxu0 0.0
    %993 = vmatpush1.msra.mxu0 0.0
    %994 = vmatprep.subr.mxu0 0.0
    %995 = vmatpush1.msra.mxu0 0.0
    %996 = vmatprep.subr.mxu0 0.0
    %997 = vmatpush1.msra.mxu0 0.0
    %998 = vmatprep.subr.mxu0 0.0
    %999 = vmatpush1.msra.mxu0 0.0
    %1000 = vmatprep.subr.mxu0 0.0
    %1001 = vmatpush1.msra.mxu0 0.0
    %1002 = vmatprep.subr.mxu0 0.0
    %1003 = vmatpush1.msra.mxu0 0.0
    %1004 = vmatprep.subr.mxu0 0.0
    %1005 = vmatpush1.msra.mxu0 0.0
    %1006 = vmatprep.subr.mxu0 0.0
    %1007 = vmatpush1.msra.mxu0 0.0
    %1008 = vmatprep.subr.mxu0 0.0
    %1009 = vmatpush1.msra.mxu0 0.0
    %1010 = vmatprep.subr.mxu0 0.0
    %1011 = vmatpush1.msra.mxu0 0.0
    %1012 = vmatprep.mubr.f32.mxu0 0.0
    %1013 = vmatmul.mubr.f32.gmra.mrb[0].mxu0 %v943
    %v1014 = vpop.f32.mrb[0].mxu0
    %v1015 = vadd.f32 0.0, %v1014
    %v1016 = vpop.f32.mrb[0].mxu0
    %1017 = vmatprep.mubr.f32.mxu0 0.0
    %1018 = vmatmul.mubr.f32.gmra.mrb[0].mxu0 %v946
    %v1019 = vpop.f32.mrb[0].mxu0
    %v1020 = vadd.f32 0.0, %v1019
    %v1021 = vpop.f32.mrb[0].mxu0
    %1022 = vdwg.mxu0
    %1023 = vrot.lane.b32.xlu0 %v296, 56
    %v1024 = vpop.permute.xlu0 %1023
    %1025 = vrot.lane.b32.xlu0 %v301, 56
    %v1026 = vpop.permute.xlu0 %1025
    %v1030 = vsel %vm487, %v933, 0
    %v1033 = vsel %vm487, %v935, 0
    %1035 = vmatprep.subr.mxu0 0.0
    %1036 = vmatpush1.msra.mxu0 %v1024
    %1037 = vmatprep.subr.mxu0 0.0
    %1038 = vmatpush1.msra.mxu0 %v1026
    %1039 = vmatprep.subr.mxu0 0.0
    %1040 = vmatpush1.msra.mxu0 0.0
    %1041 = vmatprep.subr.mxu0 0.0
    %1042 = vmatpush1.msra.mxu0 0.0
    %1043 = vmatprep.subr.mxu0 0.0
    %1044 = vmatpush1.msra.mxu0 0.0
    %1045 = vmatprep.subr.mxu0 0.0
    %1046 = vmatpush1.msra.mxu0 0.0
    %1047 = vmatprep.subr.mxu0 0.0
    %1048 = vmatpush1.msra.mxu0 0.0
    %1049 = vmatprep.subr.mxu0 0.0
    %1050 = vmatpush1.msra.mxu0 0.0
    %1051 = vmatprep.subr.mxu0 0.0
    %1052 = vmatpush1.msra.mxu0 0.0
    %1053 = vmatprep.subr.mxu0 0.0
    %1054 = vmatpush1.msra.mxu0 0.0
    %1055 = vmatprep.subr.mxu0 0.0
    %1056 = vmatpush1.msra.mxu0 0.0
    %1057 = vmatprep.subr.mxu0 0.0
    %1058 = vmatpush1.msra.mxu0 0.0
    %1059 = vmatprep.subr.mxu0 0.0
    %1060 = vmatpush1.msra.mxu0 0.0
    %1061 = vmatprep.subr.mxu0 0.0
    %1062 = vmatpush1.msra.mxu0 0.0
    %1063 = vmatprep.subr.mxu0 0.0
    %1064 = vmatpush1.msra.mxu0 0.0
    %1065 = vmatprep.subr.mxu0 0.0
    %1066 = vmatpush1.msra.mxu0 0.0
    %1067 = vmatprep.subr.mxu0 0.0
    %1068 = vmatpush1.msra.mxu0 0.0
    %1069 = vmatprep.subr.mxu0 0.0
    %1070 = vmatpush1.msra.mxu0 0.0
    %1071 = vmatprep.subr.mxu0 0.0
    %1072 = vmatpush1.msra.mxu0 0.0
    %1073 = vmatprep.subr.mxu0 0.0
    %1074 = vmatpush1.msra.mxu0 0.0
    %1075 = vmatprep.subr.mxu0 0.0
    %1076 = vmatpush1.msra.mxu0 0.0
    %1077 = vmatprep.subr.mxu0 0.0
    %1078 = vmatpush1.msra.mxu0 0.0
    %1079 = vmatprep.subr.mxu0 0.0
    %1080 = vmatpush1.msra.mxu0 0.0
    %1081 = vmatprep.subr.mxu0 0.0
    %1082 = vmatpush1.msra.mxu0 0.0
    %1083 = vmatprep.subr.mxu0 0.0
    %1084 = vmatpush1.msra.mxu0 0.0
    %1085 = vmatprep.subr.mxu0 0.0
    %1086 = vmatpush1.msra.mxu0 0.0
    %1087 = vmatprep.subr.mxu0 0.0
    %1088 = vmatpush1.msra.mxu0 0.0
    %1089 = vmatprep.subr.mxu0 0.0
    %1090 = vmatpush1.msra.mxu0 0.0
    %1091 = vmatprep.subr.mxu0 0.0
    %1092 = vmatpush1.msra.mxu0 0.0
    %1093 = vmatprep.subr.mxu0 0.0
    %1094 = vmatpush1.msra.mxu0 0.0
    %1095 = vmatprep.subr.mxu0 0.0
    %1096 = vmatpush1.msra.mxu0 0.0
    %1097 = vmatprep.subr.mxu0 0.0
    %1098 = vmatpush1.msra.mxu0 0.0
    %1099 = vmatprep.mubr.f32.mxu0 0.0
    %1100 = vmatmul.mubr.f32.gmra.mrb[0].mxu0 %v1030
    %v1101 = vpop.f32.mrb[0].mxu0
    %v1102 = vadd.f32 0.0, %v1101
    %v1103 = vpop.f32.mrb[0].mxu0
    %1104 = vmatprep.mubr.f32.mxu0 0.0
    %1105 = vmatmul.mubr.f32.gmra.mrb[0].mxu0 %v1033
    %v1106 = vpop.f32.mrb[0].mxu0
    %v1107 = vadd.f32 0.0, %v1106
    %v1108 = vpop.f32.mrb[0].mxu0
    %1109 = vdwg.mxu0
    %1110 = vrot.lane.b32.xlu0 %v286, 112
    %v1111 = vpop.permute.xlu0 %1110
    %1112 = vrot.lane.b32.xlu0 %v291, 112
    %v1113 = vpop.permute.xlu0 %1112
    %1114 = vrot.lane.b32.xlu0 %v286, 80
    %v1115 = vpop.permute.xlu0 %1114
    %1116 = vrot.lane.b32.xlu0 %v291, 80
    %v1117 = vpop.permute.xlu0 %1116
    %v1118 = vsel %vm310, %v1111, 0
    %v1120 = vsel %vm310, %v1113, 0
    %v1122 = vsel %vm310, %v1115, 0
    %v1124 = vsel %vm310, %v1117, 0
    %1126 = vmatprep.subr.mxu0 0.0
    %1127 = vmatpush1.xpose.msra.mxu0 %v1122
    %1128 = vmatprep.subr.mxu0 0.0
    %1129 = vmatpush1.xpose.msra.mxu0 %v1124
    %1130 = vmatprep.subr.mxu0 0.0
    %1131 = vmatpush1.xpose.msra.mxu0 0.0
    %1132 = vmatprep.subr.mxu0 0.0
    %1133 = vmatpush1.xpose.msra.mxu0 0.0
    %1134 = vmatprep.subr.mxu0 0.0
    %1135 = vmatpush1.xpose.msra.mxu0 0.0
    %1136 = vmatprep.subr.mxu0 0.0
    %1137 = vmatpush1.xpose.msra.mxu0 0.0
    %1138 = vmatprep.subr.mxu0 0.0
    %1139 = vmatpush1.xpose.msra.mxu0 0.0
    %1140 = vmatprep.subr.mxu0 0.0
    %1141 = vmatpush1.xpose.msra.mxu0 0.0
    %1142 = vmatprep.subr.mxu0 0.0
    %1143 = vmatpush1.xpose.msra.mxu0 0.0
    %1144 = vmatprep.subr.mxu0 0.0
    %1145 = vmatpush1.xpose.msra.mxu0 0.0
    %1146 = vmatprep.subr.mxu0 0.0
    %1147 = vmatpush1.xpose.msra.mxu0 0.0
    %1148 = vmatprep.subr.mxu0 0.0
    %1149 = vmatpush1.xpose.msra.mxu0 0.0
    %1150 = vmatprep.subr.mxu0 0.0
    %1151 = vmatpush1.xpose.msra.mxu0 0.0
    %1152 = vmatprep.subr.mxu0 0.0
    %1153 = vmatpush1.xpose.msra.mxu0 0.0
    %1154 = vmatprep.subr.mxu0 0.0
    %1155 = vmatpush1.xpose.msra.mxu0 0.0
    %1156 = vmatprep.subr.mxu0 0.0
    %1157 = vmatpush1.xpose.msra.mxu0 0.0
    %1158 = vmatprep.subr.mxu0 0.0
    %1159 = vmatpush1.xpose.msra.mxu0 0.0
    %1160 = vmatprep.subr.mxu0 0.0
    %1161 = vmatpush1.xpose.msra.mxu0 0.0
    %1162 = vmatprep.subr.mxu0 0.0
    %1163 = vmatpush1.xpose.msra.mxu0 0.0
    %1164 = vmatprep.subr.mxu0 0.0
    %1165 = vmatpush1.xpose.msra.mxu0 0.0
    %1166 = vmatprep.subr.mxu0 0.0
    %1167 = vmatpush1.xpose.msra.mxu0 0.0
    %1168 = vmatprep.subr.mxu0 0.0
    %1169 = vmatpush1.xpose.msra.mxu0 0.0
    %1170 = vmatprep.subr.mxu0 0.0
    %1171 = vmatpush1.xpose.msra.mxu0 0.0
    %1172 = vmatprep.subr.mxu0 0.0
    %1173 = vmatpush1.xpose.msra.mxu0 0.0
    %1174 = vmatprep.subr.mxu0 0.0
    %1175 = vmatpush1.xpose.msra.mxu0 0.0
    %1176 = vmatprep.subr.mxu0 0.0
    %1177 = vmatpush1.xpose.msra.mxu0 0.0
    %1178 = vmatprep.subr.mxu0 0.0
    %1179 = vmatpush1.xpose.msra.mxu0 0.0
    %1180 = vmatprep.subr.mxu0 0.0
    %1181 = vmatpush1.xpose.msra.mxu0 0.0
    %1182 = vmatprep.subr.mxu0 0.0
    %1183 = vmatpush1.xpose.msra.mxu0 0.0
    %1184 = vmatprep.subr.mxu0 0.0
    %1185 = vmatpush1.xpose.msra.mxu0 0.0
    %1186 = vmatprep.subr.mxu0 0.0
    %1187 = vmatpush1.xpose.msra.mxu0 0.0
    %1188 = vmatprep.subr.mxu0 0.0
    %1189 = vmatpush1.xpose.msra.mxu0 0.0
    %1190 = vmatprep.mubr.f32.mxu0 0.0
    %1191 = vmatmul.mubr.f32.gmra.mrb[0].mxu0 %v1118
    %v1192 = vpop.f32.mrb[0].mxu0
    %v1193 = vadd.f32 0.0, %v1192
    %v1194 = vpop.f32.mrb[0].mxu0
    %1195 = vmatprep.mubr.f32.mxu0 0.0
    %1196 = vmatmul.mubr.f32.gmra.mrb[0].mxu0 %v1120
    %v1197 = vpop.f32.mrb[0].mxu0
    %v1198 = vadd.f32 0.0, %v1197
    %v1199 = vpop.f32.mrb[0].mxu0
    %1200 = vdwg.mxu0
    %1201 = vrot.lane.b32.xlu0 %v296, 112
    %v1202 = vpop.permute.xlu0 %1201
    %1203 = vrot.lane.b32.xlu0 %v301, 112
    %v1204 = vpop.permute.xlu0 %1203
    %1205 = vrot.lane.b32.xlu0 %v296, 80
    %v1206 = vpop.permute.xlu0 %1205
    %1207 = vrot.lane.b32.xlu0 %v301, 80
    %v1208 = vpop.permute.xlu0 %1207
    %v1209 = vsel %vm310, %v1202, 0
    %v1211 = vsel %vm310, %v1204, 0
    %v1213 = vsel %vm310, %v1206, 0
    %v1215 = vsel %vm310, %v1208, 0
    %1217 = vmatprep.subr.mxu0 0.0
    %1218 = vmatpush1.xpose.msra.mxu0 %v1213
    %1219 = vmatprep.subr.mxu0 0.0
    %1220 = vmatpush1.xpose.msra.mxu0 %v1215
    %1221 = vmatprep.subr.mxu0 0.0
    %1222 = vmatpush1.xpose.msra.mxu0 0.0
    %1223 = vmatprep.subr.mxu0 0.0
    %1224 = vmatpush1.xpose.msra.mxu0 0.0
    %1225 = vmatprep.subr.mxu0 0.0
    %1226 = vmatpush1.xpose.msra.mxu0 0.0
    %1227 = vmatprep.subr.mxu0 0.0
    %1228 = vmatpush1.xpose.msra.mxu0 0.0
    %1229 = vmatprep.subr.mxu0 0.0
    %1230 = vmatpush1.xpose.msra.mxu0 0.0
    %1231 = vmatprep.subr.mxu0 0.0
    %1232 = vmatpush1.xpose.msra.mxu0 0.0
    %1233 = vmatprep.subr.mxu0 0.0
    %1234 = vmatpush1.xpose.msra.mxu0 0.0
    %1235 = vmatprep.subr.mxu0 0.0
    %1236 = vmatpush1.xpose.msra.mxu0 0.0
    %1237 = vmatprep.subr.mxu0 0.0
    %1238 = vmatpush1.xpose.msra.mxu0 0.0
    %1239 = vmatprep.subr.mxu0 0.0
    %1240 = vmatpush1.xpose.msra.mxu0 0.0
    %1241 = vmatprep.subr.mxu0 0.0
    %1242 = vmatpush1.xpose.msra.mxu0 0.0
    %1243 = vmatprep.subr.mxu0 0.0
    %1244 = vmatpush1.xpose.msra.mxu0 0.0
    %1245 = vmatprep.subr.mxu0 0.0
    %1246 = vmatpush1.xpose.msra.mxu0 0.0
    %1247 = vmatprep.subr.mxu0 0.0
    %1248 = vmatpush1.xpose.msra.mxu0 0.0
    %1249 = vmatprep.subr.mxu0 0.0
    %1250 = vmatpush1.xpose.msra.mxu0 0.0
    %1251 = vmatprep.subr.mxu0 0.0
    %1252 = vmatpush1.xpose.msra.mxu0 0.0
    %1253 = vmatprep.subr.mxu0 0.0
    %1254 = vmatpush1.xpose.msra.mxu0 0.0
    %1255 = vmatprep.subr.mxu0 0.0
    %1256 = vmatpush1.xpose.msra.mxu0 0.0
    %1257 = vmatprep.subr.mxu0 0.0
    %1258 = vmatpush1.xpose.msra.mxu0 0.0
    %1259 = vmatprep.subr.mxu0 0.0
    %1260 = vmatpush1.xpose.msra.mxu0 0.0
    %1261 = vmatprep.subr.mxu0 0.0
    %1262 = vmatpush1.xpose.msra.mxu0 0.0
    %1263 = vmatprep.subr.mxu0 0.0
    %1264 = vmatpush1.xpose.msra.mxu0 0.0
    %1265 = vmatprep.subr.mxu0 0.0
    %1266 = vmatpush1.xpose.msra.mxu0 0.0
    %1267 = vmatprep.subr.mxu0 0.0
    %1268 = vmatpush1.xpose.msra.mxu0 0.0
    %1269 = vmatprep.subr.mxu0 0.0
    %1270 = vmatpush1.xpose.msra.mxu0 0.0
    %1271 = vmatprep.subr.mxu0 0.0
    %1272 = vmatpush1.xpose.msra.mxu0 0.0
    %1273 = vmatprep.subr.mxu0 0.0
    %1274 = vmatpush1.xpose.msra.mxu0 0.0
    %1275 = vmatprep.subr.mxu0 0.0
    %1276 = vmatpush1.xpose.msra.mxu0 0.0
    %1277 = vmatprep.subr.mxu0 0.0
    %1278 = vmatpush1.xpose.msra.mxu0 0.0
    %1279 = vmatprep.subr.mxu0 0.0
    %1280 = vmatpush1.xpose.msra.mxu0 0.0
    %1281 = vmatprep.mubr.f32.mxu0 0.0
    %1282 = vmatmul.mubr.f32.gmra.mrb[0].mxu0 %v1209
    %v1283 = vpop.f32.mrb[0].mxu0
    %v1284 = vadd.f32 0.0, %v1283
    %v1285 = vpop.f32.mrb[0].mxu0
    %1286 = vmatprep.mubr.f32.mxu0 0.0
    %1287 = vmatmul.mubr.f32.gmra.mrb[0].mxu0 %v1211
    %v1288 = vpop.f32.mrb[0].mxu0
    %v1289 = vadd.f32 0.0, %v1288
    %v1290 = vpop.f32.mrb[0].mxu0
    %1291 = vdwg.mxu0
    %v1292 = vmul.f32 %v1193, 0.35355338
    %v1293 = vmul.f32 %v1198, 0.35355338
    %v1294 = vmul.f32 %v1284, 0.35355338
    %v1295 = vmul.f32 %v1289, 0.35355338
    %v1296 = vsel %vm487, %v1292, -inf
    %1297 = vmax.xlane.f32.xlu0 %v1296
    %v1298 = vpop.xlane.xlu0 %1297
    %v1299 = vsel %vm487, %v1293, -inf
    %1300 = vmax.xlane.f32.xlu0 %v1299
    %v1301 = vpop.xlane.xlu0 %1300
    %v1302 = vsel %vm487, %v1294, -inf
    %1303 = vmax.xlane.f32.xlu0 %v1302
    %v1304 = vpop.xlane.xlu0 %1303
    %v1305 = vsel %vm487, %v1295, -inf
    %1306 = vmax.xlane.f32.xlu0 %v1305
    %v1307 = vpop.xlane.xlu0 %1306
    %v1308 = vsub.f32 %v1292, %v1298
    %v1309 = vsub.f32 %v1293, %v1301
    %v1310 = vsub.f32 %v1294, %v1304
    %v1311 = vsub.f32 %v1295, %v1307
    %v1312 = vmul.f32 %v1308, 1.442695
    %v1313 = vpow.pop %v1312
    %v1314 = vmul.f32 %v1309, 1.442695
    %v1315 = vpow.pop %v1314
    %v1316 = vmul.f32 %v1310, 1.442695
    %v1317 = vpow.pop %v1316
    %v1318 = vmul.f32 %v1311, 1.442695
    %v1319 = vpow.pop %v1318
    %v1320 = vsel %vm487, %v1313, 0.0
    %1321 = vadd.xlane.f32.xlu0 %v1320
    %v1322 = vpop.xlane.xlu0 %1321
    %v1323 = vsel %vm487, %v1315, 0.0
    %1324 = vadd.xlane.f32.xlu0 %v1323
    %v1325 = vpop.xlane.xlu0 %1324
    %v1326 = vsel %vm487, %v1317, 0.0
    %1327 = vadd.xlane.f32.xlu0 %v1326
    %v1328 = vpop.xlane.xlu0 %1327
    %v1329 = vsel %vm487, %v1319, 0.0
    %1330 = vadd.xlane.f32.xlu0 %v1329
    %v1331 = vpop.xlane.xlu0 %1330
    %v1332 = vrcp.pop %v1322
    %v1333 = vmul.f32 %v1313, %v1332
    %v1334 = vrcp.pop %v1325
    %v1335 = vmul.f32 %v1315, %v1334
    %v1336 = vrcp.pop %v1328
    %v1337 = vmul.f32 %v1317, %v1336
    %v1338 = vrcp.pop %v1331
    %v1339 = vmul.f32 %v1319, %v1338
    %1340 = vrot.lane.b32.xlu0 %v286, 48
    %v1341 = vpop.permute.xlu0 %1340
    %1342 = vrot.lane.b32.xlu0 %v291, 48
    %v1343 = vpop.permute.xlu0 %1342
    %v1347 = vsel %vm487, %v1333, 0
    %v1350 = vsel %vm487, %v1335, 0
    %1352 = vmatprep.subr.mxu0 0.0
    %1353 = vmatpush1.msra.mxu0 %v1341
    %1354 = vmatprep.subr.mxu0 0.0
    %1355 = vmatpush1.msra.mxu0 %v1343
    %1356 = vmatprep.subr.mxu0 0.0
    %1357 = vmatpush1.msra.mxu0 0.0
    %1358 = vmatprep.subr.mxu0 0.0
    %1359 = vmatpush1.msra.mxu0 0.0
    %1360 = vmatprep.subr.mxu0 0.0
    %1361 = vmatpush1.msra.mxu0 0.0
    %1362 = vmatprep.subr.mxu0 0.0
    %1363 = vmatpush1.msra.mxu0 0.0
    %1364 = vmatprep.subr.mxu0 0.0
    %1365 = vmatpush1.msra.mxu0 0.0
    %1366 = vmatprep.subr.mxu0 0.0
    %1367 = vmatpush1.msra.mxu0 0.0
    %1368 = vmatprep.subr.mxu0 0.0
    %1369 = vmatpush1.msra.mxu0 0.0
    %1370 = vmatprep.subr.mxu0 0.0
    %1371 = vmatpush1.msra.mxu0 0.0
    %1372 = vmatprep.subr.mxu0 0.0
    %1373 = vmatpush1.msra.mxu0 0.0
    %1374 = vmatprep.subr.mxu0 0.0
    %1375 = vmatpush1.msra.mxu0 0.0
    %1376 = vmatprep.subr.mxu0 0.0
    %1377 = vmatpush1.msra.mxu0 0.0
    %1378 = vmatprep.subr.mxu0 0.0
    %1379 = vmatpush1.msra.mxu0 0.0
    %1380 = vmatprep.subr.mxu0 0.0
    %1381 = vmatpush1.msra.mxu0 0.0
    %1382 = vmatprep.subr.mxu0 0.0
    %1383 = vmatpush1.msra.mxu0 0.0
    %1384 = vmatprep.subr.mxu0 0.0
    %1385 = vmatpush1.msra.mxu0 0.0
    %1386 = vmatprep.subr.mxu0 0.0
    %1387 = vmatpush1.msra.mxu0 0.0
    %1388 = vmatprep.subr.mxu0 0.0
    %1389 = vmatpush1.msra.mxu0 0.0
    %1390 = vmatprep.subr.mxu0 0.0
    %1391 = vmatpush1.msra.mxu0 0.0
    %1392 = vmatprep.subr.mxu0 0.0
    %1393 = vmatpush1.msra.mxu0 0.0
    %1394 = vmatprep.subr.mxu0 0.0
    %1395 = vmatpush1.msra.mxu0 0.0
    %1396 = vmatprep.subr.mxu0 0.0
    %1397 = vmatpush1.msra.mxu0 0.0
    %1398 = vmatprep.subr.mxu0 0.0
    %1399 = vmatpush1.msra.mxu0 0.0
    %1400 = vmatprep.subr.mxu0 0.0
    %1401 = vmatpush1.msra.mxu0 0.0
    %1402 = vmatprep.subr.mxu0 0.0
    %1403 = vmatpush1.msra.mxu0 0.0
    %1404 = vmatprep.subr.mxu0 0.0
    %1405 = vmatpush1.msra.mxu0 0.0
    %1406 = vmatprep.subr.mxu0 0.0
    %1407 = vmatpush1.msra.mxu0 0.0
    %1408 = vmatprep.subr.mxu0 0.0
    %1409 = vmatpush1.msra.mxu0 0.0
    %1410 = vmatprep.subr.mxu0 0.0
    %1411 = vmatpush1.msra.mxu0 0.0
    %1412 = vmatprep.subr.mxu0 0.0
    %1413 = vmatpush1.msra.mxu0 0.0
    %1414 = vmatprep.subr.mxu0 0.0
    %1415 = vmatpush1.msra.mxu0 0.0
    %1416 = vmatprep.mubr.f32.mxu0 0.0
    %1417 = vmatmul.mubr.f32.gmra.mrb[0].mxu0 %v1347
    %v1418 = vpop.f32.mrb[0].mxu0
    %v1419 = vadd.f32 0.0, %v1418
    %v1420 = vpop.f32.mrb[0].mxu0
    %1421 = vmatprep.mubr.f32.mxu0 0.0
    %1422 = vmatmul.mubr.f32.gmra.mrb[0].mxu0 %v1350
    %v1423 = vpop.f32.mrb[0].mxu0
    %v1424 = vadd.f32 0.0, %v1423
    %v1425 = vpop.f32.mrb[0].mxu0
    %1426 = vdwg.mxu0
    %1427 = vrot.lane.b32.xlu0 %v296, 48
    %v1428 = vpop.permute.xlu0 %1427
    %1429 = vrot.lane.b32.xlu0 %v301, 48
    %v1430 = vpop.permute.xlu0 %1429
    %v1434 = vsel %vm487, %v1337, 0
    %v1437 = vsel %vm487, %v1339, 0
    %1439 = vmatprep.subr.mxu0 0.0
    %1440 = vmatpush1.msra.mxu0 %v1428
    %1441 = vmatprep.subr.mxu0 0.0
    %1442 = vmatpush1.msra.mxu0 %v1430
    %1443 = vmatprep.subr.mxu0 0.0
    %1444 = vmatpush1.msra.mxu0 0.0
    %1445 = vmatprep.subr.mxu0 0.0
    %1446 = vmatpush1.msra.mxu0 0.0
    %1447 = vmatprep.subr.mxu0 0.0
    %1448 = vmatpush1.msra.mxu0 0.0
    %1449 = vmatprep.subr.mxu0 0.0
    %1450 = vmatpush1.msra.mxu0 0.0
    %1451 = vmatprep.subr.mxu0 0.0
    %1452 = vmatpush1.msra.mxu0 0.0
    %1453 = vmatprep.subr.mxu0 0.0
    %1454 = vmatpush1.msra.mxu0 0.0
    %1455 = vmatprep.subr.mxu0 0.0
    %1456 = vmatpush1.msra.mxu0 0.0
    %1457 = vmatprep.subr.mxu0 0.0
    %1458 = vmatpush1.msra.mxu0 0.0
    %1459 = vmatprep.subr.mxu0 0.0
    %1460 = vmatpush1.msra.mxu0 0.0
    %1461 = vmatprep.subr.mxu0 0.0
    %1462 = vmatpush1.msra.mxu0 0.0
    %1463 = vmatprep.subr.mxu0 0.0
    %1464 = vmatpush1.msra.mxu0 0.0
    %1465 = vmatprep.subr.mxu0 0.0
    %1466 = vmatpush1.msra.mxu0 0.0
    %1467 = vmatprep.subr.mxu0 0.0
    %1468 = vmatpush1.msra.mxu0 0.0
    %1469 = vmatprep.subr.mxu0 0.0
    %1470 = vmatpush1.msra.mxu0 0.0
    %1471 = vmatprep.subr.mxu0 0.0
    %1472 = vmatpush1.msra.mxu0 0.0
    %1473 = vmatprep.subr.mxu0 0.0
    %1474 = vmatpush1.msra.mxu0 0.0
    %1475 = vmatprep.subr.mxu0 0.0
    %1476 = vmatpush1.msra.mxu0 0.0
    %1477 = vmatprep.subr.mxu0 0.0
    %1478 = vmatpush1.msra.mxu0 0.0
    %1479 = vmatprep.subr.mxu0 0.0
    %1480 = vmatpush1.msra.mxu0 0.0
    %1481 = vmatprep.subr.mxu0 0.0
    %1482 = vmatpush1.msra.mxu0 0.0
    %1483 = vmatprep.subr.mxu0 0.0
    %1484 = vmatpush1.msra.mxu0 0.0
    %1485 = vmatprep.subr.mxu0 0.0
    %1486 = vmatpush1.msra.mxu0 0.0
    %1487 = vmatprep.subr.mxu0 0.0
    %1488 = vmatpush1.msra.mxu0 0.0
    %1489 = vmatprep.subr.mxu0 0.0
    %1490 = vmatpush1.msra.mxu0 0.0
    %1491 = vmatprep.subr.mxu0 0.0
    %1492 = vmatpush1.msra.mxu0 0.0
    %1493 = vmatprep.subr.mxu0 0.0
    %1494 = vmatpush1.msra.mxu0 0.0
    %1495 = vmatprep.subr.mxu0 0.0
    %1496 = vmatpush1.msra.mxu0 0.0
    %1497 = vmatprep.subr.mxu0 0.0
    %1498 = vmatpush1.msra.mxu0 0.0
    %1499 = vmatprep.subr.mxu0 0.0
    %1500 = vmatpush1.msra.mxu0 0.0
    %1501 = vmatprep.subr.mxu0 0.0
    %1502 = vmatpush1.msra.mxu0 0.0
    %1503 = vmatprep.mubr.f32.mxu0 0.0
    %1504 = vmatmul.mubr.f32.gmra.mrb[0].mxu0 %v1434
    %v1505 = vpop.f32.mrb[0].mxu0
    %v1506 = vadd.f32 0.0, %v1505
    %v1507 = vpop.f32.mrb[0].mxu0
    %1508 = vmatprep.mubr.f32.mxu0 0.0
    %1509 = vmatmul.mubr.f32.gmra.mrb[0].mxu0 %v1437
    %v1510 = vpop.f32.mrb[0].mxu0
    %v1511 = vadd.f32 0.0, %v1510
    %v1512 = vpop.f32.mrb[0].mxu0
    %1513 = vdwg.mxu0
    %1514 = vrot.lane.b32.xlu0 %v286, 104
    %v1515 = vpop.permute.xlu0 %1514
    %1516 = vrot.lane.b32.xlu0 %v291, 104
    %v1517 = vpop.permute.xlu0 %1516
    %1518 = vrot.lane.b32.xlu0 %v286, 72
    %v1519 = vpop.permute.xlu0 %1518
    %1520 = vrot.lane.b32.xlu0 %v291, 72
    %v1521 = vpop.permute.xlu0 %1520
    %v1522 = vsel %vm310, %v1515, 0
    %v1524 = vsel %vm310, %v1517, 0
    %v1526 = vsel %vm310, %v1519, 0
    %v1528 = vsel %vm310, %v1521, 0
    %1530 = vmatprep.subr.mxu0 0.0
    %1531 = vmatpush1.xpose.msra.mxu0 %v1526
    %1532 = vmatprep.subr.mxu0 0.0
    %1533 = vmatpush1.xpose.msra.mxu0 %v1528
    %1534 = vmatprep.subr.mxu0 0.0
    %1535 = vmatpush1.xpose.msra.mxu0 0.0
    %1536 = vmatprep.subr.mxu0 0.0
    %1537 = vmatpush1.xpose.msra.mxu0 0.0
    %1538 = vmatprep.subr.mxu0 0.0
    %1539 = vmatpush1.xpose.msra.mxu0 0.0
    %1540 = vmatprep.subr.mxu0 0.0
    %1541 = vmatpush1.xpose.msra.mxu0 0.0
    %1542 = vmatprep.subr.mxu0 0.0
    %1543 = vmatpush1.xpose.msra.mxu0 0.0
    %1544 = vmatprep.subr.mxu0 0.0
    %1545 = vmatpush1.xpose.msra.mxu0 0.0
    %1546 = vmatprep.subr.mxu0 0.0
    %1547 = vmatpush1.xpose.msra.mxu0 0.0
    %1548 = vmatprep.subr.mxu0 0.0
    %1549 = vmatpush1.xpose.msra.mxu0 0.0
    %1550 = vmatprep.subr.mxu0 0.0
    %1551 = vmatpush1.xpose.msra.mxu0 0.0
    %1552 = vmatprep.subr.mxu0 0.0
    %1553 = vmatpush1.xpose.msra.mxu0 0.0
    %1554 = vmatprep.subr.mxu0 0.0
    %1555 = vmatpush1.xpose.msra.mxu0 0.0
    %1556 = vmatprep.subr.mxu0 0.0
    %1557 = vmatpush1.xpose.msra.mxu0 0.0
    %1558 = vmatprep.subr.mxu0 0.0
    %1559 = vmatpush1.xpose.msra.mxu0 0.0
    %1560 = vmatprep.subr.mxu0 0.0
    %1561 = vmatpush1.xpose.msra.mxu0 0.0
    %1562 = vmatprep.subr.mxu0 0.0
    %1563 = vmatpush1.xpose.msra.mxu0 0.0
    %1564 = vmatprep.subr.mxu0 0.0
    %1565 = vmatpush1.xpose.msra.mxu0 0.0
    %1566 = vmatprep.subr.mxu0 0.0
    %1567 = vmatpush1.xpose.msra.mxu0 0.0
    %1568 = vmatprep.subr.mxu0 0.0
    %1569 = vmatpush1.xpose.msra.mxu0 0.0
    %1570 = vmatprep.subr.mxu0 0.0
    %1571 = vmatpush1.xpose.msra.mxu0 0.0
    %1572 = vmatprep.subr.mxu0 0.0
    %1573 = vmatpush1.xpose.msra.mxu0 0.0
    %1574 = vmatprep.subr.mxu0 0.0
    %1575 = vmatpush1.xpose.msra.mxu0 0.0
    %1576 = vmatprep.subr.mxu0 0.0
    %1577 = vmatpush1.xpose.msra.mxu0 0.0
    %1578 = vmatprep.subr.mxu0 0.0
    %1579 = vmatpush1.xpose.msra.mxu0 0.0
    %1580 = vmatprep.subr.mxu0 0.0
    %1581 = vmatpush1.xpose.msra.mxu0 0.0
    %1582 = vmatprep.subr.mxu0 0.0
    %1583 = vmatpush1.xpose.msra.mxu0 0.0
    %1584 = vmatprep.subr.mxu0 0.0
    %1585 = vmatpush1.xpose.msra.mxu0 0.0
    %1586 = vmatprep.subr.mxu0 0.0
    %1587 = vmatpush1.xpose.msra.mxu0 0.0
    %1588 = vmatprep.subr.mxu0 0.0
    %1589 = vmatpush1.xpose.msra.mxu0 0.0
    %1590 = vmatprep.subr.mxu0 0.0
    %1591 = vmatpush1.xpose.msra.mxu0 0.0
    %1592 = vmatprep.subr.mxu0 0.0
    %1593 = vmatpush1.xpose.msra.mxu0 0.0
    %1594 = vmatprep.mubr.f32.mxu0 0.0
    %1595 = vmatmul.mubr.f32.gmra.mrb[0].mxu0 %v1522
    %v1596 = vpop.f32.mrb[0].mxu0
    %v1597 = vadd.f32 0.0, %v1596
    %v1598 = vpop.f32.mrb[0].mxu0
    %1599 = vmatprep.mubr.f32.mxu0 0.0
    %1600 = vmatmul.mubr.f32.gmra.mrb[0].mxu0 %v1524
    %v1601 = vpop.f32.mrb[0].mxu0
    %v1602 = vadd.f32 0.0, %v1601
    %v1603 = vpop.f32.mrb[0].mxu0
    %1604 = vdwg.mxu0
    %1605 = vrot.lane.b32.xlu0 %v296, 104
    %v1606 = vpop.permute.xlu0 %1605
    %1607 = vrot.lane.b32.xlu0 %v301, 104
    %v1608 = vpop.permute.xlu0 %1607
    %1609 = vrot.lane.b32.xlu0 %v296, 72
    %v1610 = vpop.permute.xlu0 %1609
    %1611 = vrot.lane.b32.xlu0 %v301, 72
    %v1612 = vpop.permute.xlu0 %1611
    %v1613 = vsel %vm310, %v1606, 0
    %v1615 = vsel %vm310, %v1608, 0
    %v1617 = vsel %vm310, %v1610, 0
    %v1619 = vsel %vm310, %v1612, 0
    %1621 = vmatprep.subr.mxu0 0.0
    %1622 = vmatpush1.xpose.msra.mxu0 %v1617
    %1623 = vmatprep.subr.mxu0 0.0
    %1624 = vmatpush1.xpose.msra.mxu0 %v1619
    %1625 = vmatprep.subr.mxu0 0.0
    %1626 = vmatpush1.xpose.msra.mxu0 0.0
    %1627 = vmatprep.subr.mxu0 0.0
    %1628 = vmatpush1.xpose.msra.mxu0 0.0
    %1629 = vmatprep.subr.mxu0 0.0
    %1630 = vmatpush1.xpose.msra.mxu0 0.0
    %1631 = vmatprep.subr.mxu0 0.0
    %1632 = vmatpush1.xpose.msra.mxu0 0.0
    %1633 = vmatprep.subr.mxu0 0.0
    %1634 = vmatpush1.xpose.msra.mxu0 0.0
    %1635 = vmatprep.subr.mxu0 0.0
    %1636 = vmatpush1.xpose.msra.mxu0 0.0
    %1637 = vmatprep.subr.mxu0 0.0
    %1638 = vmatpush1.xpose.msra.mxu0 0.0
    %1639 = vmatprep.subr.mxu0 0.0
    %1640 = vmatpush1.xpose.msra.mxu0 0.0
    %1641 = vmatprep.subr.mxu0 0.0
    %1642 = vmatpush1.xpose.msra.mxu0 0.0
    %1643 = vmatprep.subr.mxu0 0.0
    %1644 = vmatpush1.xpose.msra.mxu0 0.0
    %1645 = vmatprep.subr.mxu0 0.0
    %1646 = vmatpush1.xpose.msra.mxu0 0.0
    %1647 = vmatprep.subr.mxu0 0.0
    %1648 = vmatpush1.xpose.msra.mxu0 0.0
    %1649 = vmatprep.subr.mxu0 0.0
    %1650 = vmatpush1.xpose.msra.mxu0 0.0
    %1651 = vmatprep.subr.mxu0 0.0
    %1652 = vmatpush1.xpose.msra.mxu0 0.0
    %1653 = vmatprep.subr.mxu0 0.0
    %1654 = vmatpush1.xpose.msra.mxu0 0.0
    %1655 = vmatprep.subr.mxu0 0.0
    %1656 = vmatpush1.xpose.msra.mxu0 0.0
    %1657 = vmatprep.subr.mxu0 0.0
    %1658 = vmatpush1.xpose.msra.mxu0 0.0
    %1659 = vmatprep.subr.mxu0 0.0
    %1660 = vmatpush1.xpose.msra.mxu0 0.0
    %1661 = vmatprep.subr.mxu0 0.0
    %1662 = vmatpush1.xpose.msra.mxu0 0.0
    %1663 = vmatprep.subr.mxu0 0.0
    %1664 = vmatpush1.xpose.msra.mxu0 0.0
    %1665 = vmatprep.subr.mxu0 0.0
    %1666 = vmatpush1.xpose.msra.mxu0 0.0
    %1667 = vmatprep.subr.mxu0 0.0
    %1668 = vmatpush1.xpose.msra.mxu0 0.0
    %1669 = vmatprep.subr.mxu0 0.0
    %1670 = vmatpush1.xpose.msra.mxu0 0.0
    %1671 = vmatprep.subr.mxu0 0.0
    %1672 = vmatpush1.xpose.msra.mxu0 0.0
    %1673 = vmatprep.subr.mxu0 0.0
    %1674 = vmatpush1.xpose.msra.mxu0 0.0
    %1675 = vmatprep.subr.mxu0 0.0
    %1676 = vmatpush1.xpose.msra.mxu0 0.0
    %1677 = vmatprep.subr.mxu0 0.0
    %1678 = vmatpush1.xpose.msra.mxu0 0.0
    %1679 = vmatprep.subr.mxu0 0.0
    %1680 = vmatpush1.xpose.msra.mxu0 0.0
    %1681 = vmatprep.subr.mxu0 0.0
    %1682 = vmatpush1.xpose.msra.mxu0 0.0
    %1683 = vmatprep.subr.mxu0 0.0
    %1684 = vmatpush1.xpose.msra.mxu0 0.0
    %1685 = vmatprep.mubr.f32.mxu0 0.0
    %1686 = vmatmul.mubr.f32.gmra.mrb[0].mxu0 %v1613
    %v1687 = vpop.f32.mrb[0].mxu0
    %v1688 = vadd.f32 0.0, %v1687
    %v1689 = vpop.f32.mrb[0].mxu0
    %1690 = vmatprep.mubr.f32.mxu0 0.0
    %1691 = vmatmul.mubr.f32.gmra.mrb[0].mxu0 %v1615
    %v1692 = vpop.f32.mrb[0].mxu0
    %v1693 = vadd.f32 0.0, %v1692
    %v1694 = vpop.f32.mrb[0].mxu0
    %1695 = vdwg.mxu0
    %v1696 = vmul.f32 %v1597, 0.35355338
    %v1697 = vmul.f32 %v1602, 0.35355338
    %v1698 = vmul.f32 %v1688, 0.35355338
    %v1699 = vmul.f32 %v1693, 0.35355338
    %v1700 = vsel %vm487, %v1696, -inf
    %1701 = vmax.xlane.f32.xlu0 %v1700
    %v1702 = vpop.xlane.xlu0 %1701
    %v1703 = vsel %vm487, %v1697, -inf
    %1704 = vmax.xlane.f32.xlu0 %v1703
    %v1705 = vpop.xlane.xlu0 %1704
    %v1706 = vsel %vm487, %v1698, -inf
    %1707 = vmax.xlane.f32.xlu0 %v1706
    %v1708 = vpop.xlane.xlu0 %1707
    %v1709 = vsel %vm487, %v1699, -inf
    %1710 = vmax.xlane.f32.xlu0 %v1709
    %v1711 = vpop.xlane.xlu0 %1710
    %v1712 = vsub.f32 %v1696, %v1702
    %v1713 = vsub.f32 %v1697, %v1705
    %v1714 = vsub.f32 %v1698, %v1708
    %v1715 = vsub.f32 %v1699, %v1711
    %v1716 = vmul.f32 %v1712, 1.442695
    %v1717 = vpow.pop %v1716
    %v1718 = vmul.f32 %v1713, 1.442695
    %v1719 = vpow.pop %v1718
    %v1720 = vmul.f32 %v1714, 1.442695
    %v1721 = vpow.pop %v1720
    %v1722 = vmul.f32 %v1715, 1.442695
    %v1723 = vpow.pop %v1722
    %v1724 = vsel %vm487, %v1717, 0.0
    %1725 = vadd.xlane.f32.xlu0 %v1724
    %v1726 = vpop.xlane.xlu0 %1725
    %v1727 = vsel %vm487, %v1719, 0.0
    %1728 = vadd.xlane.f32.xlu0 %v1727
    %v1729 = vpop.xlane.xlu0 %1728
    %v1730 = vsel %vm487, %v1721, 0.0
    %1731 = vadd.xlane.f32.xlu0 %v1730
    %v1732 = vpop.xlane.xlu0 %1731
    %v1733 = vsel %vm487, %v1723, 0.0
    %1734 = vadd.xlane.f32.xlu0 %v1733
    %v1735 = vpop.xlane.xlu0 %1734
    %v1736 = vrcp.pop %v1726
    %v1737 = vmul.f32 %v1717, %v1736
    %v1738 = vrcp.pop %v1729
    %v1739 = vmul.f32 %v1719, %v1738
    %v1740 = vrcp.pop %v1732
    %v1741 = vmul.f32 %v1721, %v1740
    %v1742 = vrcp.pop %v1735
    %v1743 = vmul.f32 %v1723, %v1742
    %1744 = vrot.lane.b32.xlu0 %v286, 40
    %v1745 = vpop.permute.xlu0 %1744
    %1746 = vrot.lane.b32.xlu0 %v291, 40
    %v1747 = vpop.permute.xlu0 %1746
    %v1751 = vsel %vm487, %v1737, 0
    %v1754 = vsel %vm487, %v1739, 0
    %1756 = vmatprep.subr.mxu0 0.0
    %1757 = vmatpush1.msra.mxu0 %v1745
    %1758 = vmatprep.subr.mxu0 0.0
    %1759 = vmatpush1.msra.mxu0 %v1747
    %1760 = vmatprep.subr.mxu0 0.0
    %1761 = vmatpush1.msra.mxu0 0.0
    %1762 = vmatprep.subr.mxu0 0.0
    %1763 = vmatpush1.msra.mxu0 0.0
    %1764 = vmatprep.subr.mxu0 0.0
    %1765 = vmatpush1.msra.mxu0 0.0
    %1766 = vmatprep.subr.mxu0 0.0
    %1767 = vmatpush1.msra.mxu0 0.0
    %1768 = vmatprep.subr.mxu0 0.0
    %1769 = vmatpush1.msra.mxu0 0.0
    %1770 = vmatprep.subr.mxu0 0.0
    %1771 = vmatpush1.msra.mxu0 0.0
    %1772 = vmatprep.subr.mxu0 0.0
    %1773 = vmatpush1.msra.mxu0 0.0
    %1774 = vmatprep.subr.mxu0 0.0
    %1775 = vmatpush1.msra.mxu0 0.0
    %1776 = vmatprep.subr.mxu0 0.0
    %1777 = vmatpush1.msra.mxu0 0.0
    %1778 = vmatprep.subr.mxu0 0.0
    %1779 = vmatpush1.msra.mxu0 0.0
    %1780 = vmatprep.subr.mxu0 0.0
    %1781 = vmatpush1.msra.mxu0 0.0
    %1782 = vmatprep.subr.mxu0 0.0
    %1783 = vmatpush1.msra.mxu0 0.0
    %1784 = vmatprep.subr.mxu0 0.0
    %1785 = vmatpush1.msra.mxu0 0.0
    %1786 = vmatprep.subr.mxu0 0.0
    %1787 = vmatpush1.msra.mxu0 0.0
    %1788 = vmatprep.subr.mxu0 0.0
    %1789 = vmatpush1.msra.mxu0 0.0
    %1790 = vmatprep.subr.mxu0 0.0
    %1791 = vmatpush1.msra.mxu0 0.0
    %1792 = vmatprep.subr.mxu0 0.0
    %1793 = vmatpush1.msra.mxu0 0.0
    %1794 = vmatprep.subr.mxu0 0.0
    %1795 = vmatpush1.msra.mxu0 0.0
    %1796 = vmatprep.subr.mxu0 0.0
    %1797 = vmatpush1.msra.mxu0 0.0
    %1798 = vmatprep.subr.mxu0 0.0
    %1799 = vmatpush1.msra.mxu0 0.0
    %1800 = vmatprep.subr.mxu0 0.0
    %1801 = vmatpush1.msra.mxu0 0.0
    %1802 = vmatprep.subr.mxu0 0.0
    %1803 = vmatpush1.msra.mxu0 0.0
    %1804 = vmatprep.subr.mxu0 0.0
    %1805 = vmatpush1.msra.mxu0 0.0
    %1806 = vmatprep.subr.mxu0 0.0
    %1807 = vmatpush1.msra.mxu0 0.0
    %1808 = vmatprep.subr.mxu0 0.0
    %1809 = vmatpush1.msra.mxu0 0.0
    %1810 = vmatprep.subr.mxu0 0.0
    %1811 = vmatpush1.msra.mxu0 0.0
    %1812 = vmatprep.subr.mxu0 0.0
    %1813 = vmatpush1.msra.mxu0 0.0
    %1814 = vmatprep.subr.mxu0 0.0
    %1815 = vmatpush1.msra.mxu0 0.0
    %1816 = vmatprep.subr.mxu0 0.0
    %1817 = vmatpush1.msra.mxu0 0.0
    %1818 = vmatprep.subr.mxu0 0.0
    %1819 = vmatpush1.msra.mxu0 0.0
    %1820 = vmatprep.mubr.f32.mxu0 0.0
    %1821 = vmatmul.mubr.f32.gmra.mrb[0].mxu0 %v1751
    %v1822 = vpop.f32.mrb[0].mxu0
    %v1823 = vadd.f32 0.0, %v1822
    %v1824 = vpop.f32.mrb[0].mxu0
    %1825 = vmatprep.mubr.f32.mxu0 0.0
    %1826 = vmatmul.mubr.f32.gmra.mrb[0].mxu0 %v1754
    %v1827 = vpop.f32.mrb[0].mxu0
    %v1828 = vadd.f32 0.0, %v1827
    %v1829 = vpop.f32.mrb[0].mxu0
    %1830 = vdwg.mxu0
    %1831 = vrot.lane.b32.xlu0 %v296, 40
    %v1832 = vpop.permute.xlu0 %1831
    %1833 = vrot.lane.b32.xlu0 %v301, 40
    %v1834 = vpop.permute.xlu0 %1833
    %v1838 = vsel %vm487, %v1741, 0
    %v1841 = vsel %vm487, %v1743, 0
    %1843 = vmatprep.subr.mxu0 0.0
    %1844 = vmatpush1.msra.mxu0 %v1832
    %1845 = vmatprep.subr.mxu0 0.0
    %1846 = vmatpush1.msra.mxu0 %v1834
    %1847 = vmatprep.subr.mxu0 0.0
    %1848 = vmatpush1.msra.mxu0 0.0
    %1849 = vmatprep.subr.mxu0 0.0
    %1850 = vmatpush1.msra.mxu0 0.0
    %1851 = vmatprep.subr.mxu0 0.0
    %1852 = vmatpush1.msra.mxu0 0.0
    %1853 = vmatprep.subr.mxu0 0.0
    %1854 = vmatpush1.msra.mxu0 0.0
    %1855 = vmatprep.subr.mxu0 0.0
    %1856 = vmatpush1.msra.mxu0 0.0
    %1857 = vmatprep.subr.mxu0 0.0
    %1858 = vmatpush1.msra.mxu0 0.0
    %1859 = vmatprep.subr.mxu0 0.0
    %1860 = vmatpush1.msra.mxu0 0.0
    %1861 = vmatprep.subr.mxu0 0.0
    %1862 = vmatpush1.msra.mxu0 0.0
    %1863 = vmatprep.subr.mxu0 0.0
    %1864 = vmatpush1.msra.mxu0 0.0
    %1865 = vmatprep.subr.mxu0 0.0
    %1866 = vmatpush1.msra.mxu0 0.0
    %1867 = vmatprep.subr.mxu0 0.0
    %1868 = vmatpush1.msra.mxu0 0.0
    %1869 = vmatprep.subr.mxu0 0.0
    %1870 = vmatpush1.msra.mxu0 0.0
    %1871 = vmatprep.subr.mxu0 0.0
    %1872 = vmatpush1.msra.mxu0 0.0
    %1873 = vmatprep.subr.mxu0 0.0
    %1874 = vmatpush1.msra.mxu0 0.0
    %1875 = vmatprep.subr.mxu0 0.0
    %1876 = vmatpush1.msra.mxu0 0.0
    %1877 = vmatprep.subr.mxu0 0.0
    %1878 = vmatpush1.msra.mxu0 0.0
    %1879 = vmatprep.subr.mxu0 0.0
    %1880 = vmatpush1.msra.mxu0 0.0
    %1881 = vmatprep.subr.mxu0 0.0
    %1882 = vmatpush1.msra.mxu0 0.0
    %1883 = vmatprep.subr.mxu0 0.0
    %1884 = vmatpush1.msra.mxu0 0.0
    %1885 = vmatprep.subr.mxu0 0.0
    %1886 = vmatpush1.msra.mxu0 0.0
    %1887 = vmatprep.subr.mxu0 0.0
    %1888 = vmatpush1.msra.mxu0 0.0
    %1889 = vmatprep.subr.mxu0 0.0
    %1890 = vmatpush1.msra.mxu0 0.0
    %1891 = vmatprep.subr.mxu0 0.0
    %1892 = vmatpush1.msra.mxu0 0.0
    %1893 = vmatprep.subr.mxu0 0.0
    %1894 = vmatpush1.msra.mxu0 0.0
    %1895 = vmatprep.subr.mxu0 0.0
    %1896 = vmatpush1.msra.mxu0 0.0
    %1897 = vmatprep.subr.mxu0 0.0
    %1898 = vmatpush1.msra.mxu0 0.0
    %1899 = vmatprep.subr.mxu0 0.0
    %1900 = vmatpush1.msra.mxu0 0.0
    %1901 = vmatprep.subr.mxu0 0.0
    %1902 = vmatpush1.msra.mxu0 0.0
    %1903 = vmatprep.subr.mxu0 0.0
    %1904 = vmatpush1.msra.mxu0 0.0
    %1905 = vmatprep.subr.mxu0 0.0
    %1906 = vmatpush1.msra.mxu0 0.0
    %1907 = vmatprep.mubr.f32.mxu0 0.0
    %1908 = vmatmul.mubr.f32.gmra.mrb[0].mxu0 %v1838
    %v1909 = vpop.f32.mrb[0].mxu0
    %v1910 = vadd.f32 0.0, %v1909
    %v1911 = vpop.f32.mrb[0].mxu0
    %1912 = vmatprep.mubr.f32.mxu0 0.0
    %1913 = vmatmul.mubr.f32.gmra.mrb[0].mxu0 %v1841
    %v1914 = vpop.f32.mrb[0].mxu0
    %v1915 = vadd.f32 0.0, %v1914
    %v1916 = vpop.f32.mrb[0].mxu0
    %1917 = vdwg.mxu0
    %1922 = vrot.lane.b32.xlu0 %v1015, 8
    %v1923 = vpop.permute.xlu0 %1922
    %1924 = vrot.lane.b32.xlu0 %v1020, 8
    %v1925 = vpop.permute.xlu0 %1924
    %1926 = vrot.lane.b32.xlu0 %v1102, 8
    %v1927 = vpop.permute.xlu0 %1926
    %1928 = vrot.lane.b32.xlu0 %v1107, 8
    %v1929 = vpop.permute.xlu0 %1928
    %1938 = vrot.lane.b32.xlu0 %v1419, 16
    %v1939 = vpop.permute.xlu0 %1938
    %1940 = vrot.lane.b32.xlu0 %v1424, 16
    %v1941 = vpop.permute.xlu0 %1940
    %1942 = vrot.lane.b32.xlu0 %v1506, 16
    %v1943 = vpop.permute.xlu0 %1942
    %1944 = vrot.lane.b32.xlu0 %v1511, 16
    %v1945 = vpop.permute.xlu0 %1944
    %1954 = vrot.lane.b32.xlu0 %v1823, 24
    %v1955 = vpop.permute.xlu0 %1954
    %1956 = vrot.lane.b32.xlu0 %v1828, 24
    %v1957 = vpop.permute.xlu0 %1956
    %1958 = vrot.lane.b32.xlu0 %v1910, 24
    %v1959 = vpop.permute.xlu0 %1958
    %1960 = vrot.lane.b32.xlu0 %v1915, 24
    %v1961 = vpop.permute.xlu0 %1960
    %v1966 = vsel %vm310, %v611, %v1923
    %v1967 = vsel %vm310, %v616, %v1925
    %v1968 = vsel %vm310, %v698, %v1927
    %v1969 = vsel %vm310, %v703, %v1929
    %v1970 = vsel %vm487, %v1966, %v1939
    %v1971 = vsel %vm487, %v1967, %v1941
    %v1972 = vsel %vm487, %v1968, %v1943
    %v1973 = vsel %vm487, %v1969, %v1945
    %vm1974 = vcmask 195584
    %v1975 = vsel %vm1974, %v1970, %v1955
    %v1976 = vsel %vm1974, %v1971, %v1957
    %v1977 = vsel %vm1974, %v1972, %v1959
    %v1978 = vsel %vm1974, %v1973, %v1961
    %v1979 = vlaneseq
    %v1980 = vshrl.u32 %v1979, 7
    %v1981 = vsub.s32 0, %v1980
    %v1982 = vrot.slane %v184, %v1981
    %v1984 = vsel %vm45, %v1975, 0
    %v1987 = vsel %vm45, %v1976, 0
    %v1990 = vsel %vm45, %v1977, 0
    %v1993 = vsel %vm45, %v1978, 0
    %1995 = vmatprep.subr.mxu0 0.0
    %1996 = vmatpush1.msra.mxu0 %v180
    %1997 = vmatprep.subr.mxu0 0.0
    %1998 = vmatpush1.msra.mxu0 %v181
    %1999 = vmatprep.subr.mxu0 0.0
    %2000 = vmatpush1.msra.mxu0 %v182
    %2001 = vmatprep.subr.mxu0 0.0
    %2002 = vmatpush1.msra.mxu0 %v183
    %2003 = vmatprep.subr.mxu0 0.0
    %2004 = vmatpush1.msra.mxu0 0.0
    %2005 = vmatprep.subr.mxu0 0.0
    %2006 = vmatpush1.msra.mxu0 0.0
    %2007 = vmatprep.subr.mxu0 0.0
    %2008 = vmatpush1.msra.mxu0 0.0
    %2009 = vmatprep.subr.mxu0 0.0
    %2010 = vmatpush1.msra.mxu0 0.0
    %2011 = vmatprep.subr.mxu0 0.0
    %2012 = vmatpush1.msra.mxu0 0.0
    %2013 = vmatprep.subr.mxu0 0.0
    %2014 = vmatpush1.msra.mxu0 0.0
    %2015 = vmatprep.subr.mxu0 0.0
    %2016 = vmatpush1.msra.mxu0 0.0
    %2017 = vmatprep.subr.mxu0 0.0
    %2018 = vmatpush1.msra.mxu0 0.0
    %2019 = vmatprep.subr.mxu0 0.0
    %2020 = vmatpush1.msra.mxu0 0.0
    %2021 = vmatprep.subr.mxu0 0.0
    %2022 = vmatpush1.msra.mxu0 0.0
    %2023 = vmatprep.subr.mxu0 0.0
    %2024 = vmatpush1.msra.mxu0 0.0
    %2025 = vmatprep.subr.mxu0 0.0
    %2026 = vmatpush1.msra.mxu0 0.0
    %2027 = vmatprep.subr.mxu0 0.0
    %2028 = vmatpush1.msra.mxu0 0.0
    %2029 = vmatprep.subr.mxu0 0.0
    %2030 = vmatpush1.msra.mxu0 0.0
    %2031 = vmatprep.subr.mxu0 0.0
    %2032 = vmatpush1.msra.mxu0 0.0
    %2033 = vmatprep.subr.mxu0 0.0
    %2034 = vmatpush1.msra.mxu0 0.0
    %2035 = vmatprep.subr.mxu0 0.0
    %2036 = vmatpush1.msra.mxu0 0.0
    %2037 = vmatprep.subr.mxu0 0.0
    %2038 = vmatpush1.msra.mxu0 0.0
    %2039 = vmatprep.subr.mxu0 0.0
    %2040 = vmatpush1.msra.mxu0 0.0
    %2041 = vmatprep.subr.mxu0 0.0
    %2042 = vmatpush1.msra.mxu0 0.0
    %2043 = vmatprep.subr.mxu0 0.0
    %2044 = vmatpush1.msra.mxu0 0.0
    %2045 = vmatprep.subr.mxu0 0.0
    %2046 = vmatpush1.msra.mxu0 0.0
    %2047 = vmatprep.subr.mxu0 0.0
    %2048 = vmatpush1.msra.mxu0 0.0
    %2049 = vmatprep.subr.mxu0 0.0
    %2050 = vmatpush1.msra.mxu0 0.0
    %2051 = vmatprep.subr.mxu0 0.0
    %2052 = vmatpush1.msra.mxu0 0.0
    %2053 = vmatprep.subr.mxu0 0.0
    %2054 = vmatpush1.msra.mxu0 0.0
    %2055 = vmatprep.subr.mxu0 0.0
    %2056 = vmatpush1.msra.mxu0 0.0
    %2057 = vmatprep.subr.mxu0 0.0
    %2058 = vmatpush1.msra.mxu0 0.0
    %2059 = vmatprep.mubr.f32.mxu0 0.0
    %2060 = vmatmul.mubr.f32.gmra.mrb[0].mxu0 %v1984
    %v2061 = vpop.f32.mrb[0].mxu0
    %v2062 = vadd.f32 %v1982, %v2061
    %v2063 = vpop.f32.mrb[0].mxu0
    %2064 = vmatprep.mubr.f32.mxu0 0.0
    %2065 = vmatmul.mubr.f32.gmra.mrb[0].mxu0 %v1987
    %v2066 = vpop.f32.mrb[0].mxu0
    %v2067 = vadd.f32 %v1982, %v2066
    %v2068 = vpop.f32.mrb[0].mxu0
    %2069 = vmatprep.mubr.f32.mxu0 0.0
    %2070 = vmatmul.mubr.f32.gmra.mrb[0].mxu0 %v1990
    %v2071 = vpop.f32.mrb[0].mxu0
    %v2072 = vadd.f32 %v1982, %v2071
    %v2073 = vpop.f32.mrb[0].mxu0
    %2074 = vmatprep.mubr.f32.mxu0 0.0
    %2075 = vmatmul.mubr.f32.gmra.mrb[0].mxu0 %v1993
    %v2076 = vpop.f32.mrb[0].mxu0
    %v2077 = vadd.f32 %v1982, %v2076
    %v2078 = vpop.f32.mrb[0].mxu0
    %2079 = vdwg.mxu0
    %v2080 = vadd.f32 %v137, %v2062
    %v2081 = vadd.f32 %v142, %v2067
    %v2082 = vadd.f32 %v147, %v2072
    %v2083 = vadd.f32 %v152, %v2077
    %v2084 = vsel %vm45, %v2080, 0.0
    %2085 = vadd.xlane.f32.xlu0 %v2084
    %v2086 = vpop.xlane.xlu0 %2085
    %v2087 = vsel %vm45, %v2081, 0.0
    %2088 = vadd.xlane.f32.xlu0 %v2087
    %v2089 = vpop.xlane.xlu0 %2088
    %v2090 = vsel %vm45, %v2082, 0.0
    %2091 = vadd.xlane.f32.xlu0 %v2090
    %v2092 = vpop.xlane.xlu0 %2091
    %v2093 = vsel %vm45, %v2083, 0.0
    %2094 = vadd.xlane.f32.xlu0 %v2093
    %v2095 = vpop.xlane.xlu0 %2094
    %v2096 = vrcp.pop 32.0
    %v2097 = vmul.f32 %v2086, %v2096
    %v2098 = vmul.f32 %v2089, %v2096
    %v2099 = vmul.f32 %v2092, %v2096
    %v2100 = vmul.f32 %v2095, %v2096
    %v2101 = vsub.f32 %v2080, %v2097
    %v2102 = vsub.f32 %v2081, %v2098
    %v2103 = vsub.f32 %v2082, %v2099
    %v2104 = vsub.f32 %v2083, %v2100
    %v2105 = vmul.f32 %v2101, %v2101
    %v2106 = vmul.f32 %v2102, %v2102
    %v2107 = vmul.f32 %v2103, %v2103
    %v2108 = vmul.f32 %v2104, %v2104
    %v2109 = vsel %vm45, %v2105, 0.0
    %2110 = vadd.xlane.f32.xlu0 %v2109
    %v2111 = vpop.xlane.xlu0 %2110
    %v2112 = vsel %vm45, %v2106, 0.0
    %2113 = vadd.xlane.f32.xlu0 %v2112
    %v2114 = vpop.xlane.xlu0 %2113
    %v2115 = vsel %vm45, %v2107, 0.0
    %2116 = vadd.xlane.f32.xlu0 %v2115
    %v2117 = vpop.xlane.xlu0 %2116
    %v2118 = vsel %vm45, %v2108, 0.0
    %2119 = vadd.xlane.f32.xlu0 %v2118
    %v2120 = vpop.xlane.xlu0 %2119
    %v2121 = vmul.f32 %v2111, %v2096
    %v2122 = vmul.f32 %v2114, %v2096
    %v2123 = vmul.f32 %v2117, %v2096
    %v2124 = vmul.f32 %v2120, %v2096
    %v2125 = vadd.f32 %v2121, 1e-05
    %v2126 = vadd.f32 %v2122, 1e-05
    %v2127 = vadd.f32 %v2123, 1e-05
    %v2128 = vadd.f32 %v2124, 1e-05
    %v2129 = vrsqrt.pop %v2125
    %v2130 = vrsqrt.pop %v2126
    %v2131 = vrsqrt.pop %v2127
    %v2132 = vrsqrt.pop %v2128
    %v2133 = vmul.f32 %v2101, %v2129
    %v2134 = vmul.f32 %v2102, %v2130
    %v2135 = vmul.f32 %v2103, %v2131
    %v2136 = vmul.f32 %v2104, %v2132
    %v2137 = vlaneseq
    %v2138 = vshrl.u32 %v2137, 7
    %v2139 = vsub.s32 0, %v2138
    %v2140 = vrot.slane %v199, %v2139
    %v2141 = vmul.f32 %v2133, %v2140
    %v2142 = vmul.f32 %v2134, %v2140
    %v2143 = vmul.f32 %v2135, %v2140
    %v2144 = vmul.f32 %v2136, %v2140
    %v2145 = vlaneseq
    %v2146 = vshrl.u32 %v2145, 7
    %v2147 = vsub.s32 0, %v2146
    %v2148 = vrot.slane %v200, %v2147
    %v2149 = vadd.f32 %v2141, %v2148
    %v2150 = vadd.f32 %v2142, %v2148
    %v2151 = vadd.f32 %v2143, %v2148
    %v2152 = vadd.f32 %v2144, %v2148
    %v2153 = vlaneseq
    %v2154 = vshrl.u32 %v2153, 7
    %v2155 = vsub.s32 0, %v2154
    %v2156 = vrot.slane %v189, %v2155
    %v2158 = vsel %vm45, %v2149, 0
    %v2161 = vsel %vm45, %v2150, 0
    %v2164 = vsel %vm45, %v2151, 0
    %v2167 = vsel %vm45, %v2152, 0
    %2169 = vmatprep.subr.mxu0 0.0
    %2170 = vmatpush1.msra.mxu0 %v185
    %2171 = vmatprep.subr.mxu0 0.0
    %2172 = vmatpush1.msra.mxu0 %v186
    %2173 = vmatprep.subr.mxu0 0.0
    %2174 = vmatpush1.msra.mxu0 %v187
    %2175 = vmatprep.subr.mxu0 0.0
    %2176 = vmatpush1.msra.mxu0 %v188
    %2177 = vmatprep.subr.mxu0 0.0
    %2178 = vmatpush1.msra.mxu0 0.0
    %2179 = vmatprep.subr.mxu0 0.0
    %2180 = vmatpush1.msra.mxu0 0.0
    %2181 = vmatprep.subr.mxu0 0.0
    %2182 = vmatpush1.msra.mxu0 0.0
    %2183 = vmatprep.subr.mxu0 0.0
    %2184 = vmatpush1.msra.mxu0 0.0
    %2185 = vmatprep.subr.mxu0 0.0
    %2186 = vmatpush1.msra.mxu0 0.0
    %2187 = vmatprep.subr.mxu0 0.0
    %2188 = vmatpush1.msra.mxu0 0.0
    %2189 = vmatprep.subr.mxu0 0.0
    %2190 = vmatpush1.msra.mxu0 0.0
    %2191 = vmatprep.subr.mxu0 0.0
    %2192 = vmatpush1.msra.mxu0 0.0
    %2193 = vmatprep.subr.mxu0 0.0
    %2194 = vmatpush1.msra.mxu0 0.0
    %2195 = vmatprep.subr.mxu0 0.0
    %2196 = vmatpush1.msra.mxu0 0.0
    %2197 = vmatprep.subr.mxu0 0.0
    %2198 = vmatpush1.msra.mxu0 0.0
    %2199 = vmatprep.subr.mxu0 0.0
    %2200 = vmatpush1.msra.mxu0 0.0
    %2201 = vmatprep.subr.mxu0 0.0
    %2202 = vmatpush1.msra.mxu0 0.0
    %2203 = vmatprep.subr.mxu0 0.0
    %2204 = vmatpush1.msra.mxu0 0.0
    %2205 = vmatprep.subr.mxu0 0.0
    %2206 = vmatpush1.msra.mxu0 0.0
    %2207 = vmatprep.subr.mxu0 0.0
    %2208 = vmatpush1.msra.mxu0 0.0
    %2209 = vmatprep.subr.mxu0 0.0
    %2210 = vmatpush1.msra.mxu0 0.0
    %2211 = vmatprep.subr.mxu0 0.0
    %2212 = vmatpush1.msra.mxu0 0.0
    %2213 = vmatprep.subr.mxu0 0.0
    %2214 = vmatpush1.msra.mxu0 0.0
    %2215 = vmatprep.subr.mxu0 0.0
    %2216 = vmatpush1.msra.mxu0 0.0
    %2217 = vmatprep.subr.mxu0 0.0
    %2218 = vmatpush1.msra.mxu0 0.0
    %2219 = vmatprep.subr.mxu0 0.0
    %2220 = vmatpush1.msra.mxu0 0.0
    %2221 = vmatprep.subr.mxu0 0.0
    %2222 = vmatpush1.msra.mxu0 0.0
    %2223 = vmatprep.subr.mxu0 0.0
    %2224 = vmatpush1.msra.mxu0 0.0
    %2225 = vmatprep.subr.mxu0 0.0
    %2226 = vmatpush1.msra.mxu0 0.0
    %2227 = vmatprep.subr.mxu0 0.0
    %2228 = vmatpush1.msra.mxu0 0.0
    %2229 = vmatprep.subr.mxu0 0.0
    %2230 = vmatpush1.msra.mxu0 0.0
    %2231 = vmatprep.subr.mxu0 0.0
    %2232 = vmatpush1.msra.mxu0 0.0
    %2233 = vmatprep.mubr.f32.mxu0 0.0
    %2234 = vmatmul.mubr.f32.gmra.mrb[0].mxu0 %v2158
    %v2235 = vpop.f32.mrb[0].mxu0
    %v2236 = vadd.f32 %v2156, %v2235
    %v2237 = vpop.f32.mrb[0].mxu0
    %2238 = vmatprep.mubr.f32.mxu0 0.0
    %2239 = vmatmul.mubr.f32.gmra.mrb[0].mxu0 %v2161
    %v2240 = vpop.f32.mrb[0].mxu0
    %v2241 = vadd.f32 %v2156, %v2240
    %v2242 = vpop.f32.mrb[0].mxu0
    %2243 = vmatprep.mubr.f32.mxu0 0.0
    %2244 = vmatmul.mubr.f32.gmra.mrb[0].mxu0 %v2164
    %v2245 = vpop.f32.mrb[0].mxu0
    %v2246 = vadd.f32 %v2156, %v2245
    %v2247 = vpop.f32.mrb[0].mxu0
    %2248 = vmatprep.mubr.f32.mxu0 0.0
    %2249 = vmatmul.mubr.f32.gmra.mrb[0].mxu0 %v2167
    %v2250 = vpop.f32.mrb[0].mxu0
    %v2251 = vadd.f32 %v2156, %v2250
    %v2252 = vpop.f32.mrb[0].mxu0
    %2253 = vdwg.mxu0
    %v2254 = vmax.f32 %v2236, 0.0
    %v2255 = vmax.f32 %v2241, 0.0
    %v2256 = vmax.f32 %v2246, 0.0
    %v2257 = vmax.f32 %v2251, 0.0
    %v2258 = vlaneseq
    %v2259 = vshrl.u32 %v2258, 7
    %v2260 = vsub.s32 0, %v2259
    %v2261 = vrot.slane %v198, %v2260
    %vm2262 = vcmask 523264
    %v2264 = vsel %vm2262, %v2254, 0
    %v2267 = vsel %vm2262, %v2255, 0
    %v2270 = vsel %vm2262, %v2256, 0
    %v2273 = vsel %vm2262, %v2257, 0
    %2275 = vmatprep.subr.mxu0 0.0
    %2276 = vmatpush1.msra.mxu0 %v190
    %2277 = vmatprep.subr.mxu0 0.0
    %2278 = vmatpush1.msra.mxu0 %v191
    %2279 = vmatprep.subr.mxu0 0.0
    %2280 = vmatpush1.msra.mxu0 %v192
    %2281 = vmatprep.subr.mxu0 0.0
    %2282 = vmatpush1.msra.mxu0 %v193
    %2283 = vmatprep.subr.mxu0 0.0
    %2284 = vmatpush1.msra.mxu0 %v194
    %2285 = vmatprep.subr.mxu0 0.0
    %2286 = vmatpush1.msra.mxu0 %v195
    %2287 = vmatprep.subr.mxu0 0.0
    %2288 = vmatpush1.msra.mxu0 %v196
    %2289 = vmatprep.subr.mxu0 0.0
    %2290 = vmatpush1.msra.mxu0 %v197
    %2291 = vmatprep.subr.mxu0 0.0
    %2292 = vmatpush1.msra.mxu0 0.0
    %2293 = vmatprep.subr.mxu0 0.0
    %2294 = vmatpush1.msra.mxu0 0.0
    %2295 = vmatprep.subr.mxu0 0.0
    %2296 = vmatpush1.msra.mxu0 0.0
    %2297 = vmatprep.subr.mxu0 0.0
    %2298 = vmatpush1.msra.mxu0 0.0
    %2299 = vmatprep.subr.mxu0 0.0
    %2300 = vmatpush1.msra.mxu0 0.0
    %2301 = vmatprep.subr.mxu0 0.0
    %2302 = vmatpush1.msra.mxu0 0.0
    %2303 = vmatprep.subr.mxu0 0.0
    %2304 = vmatpush1.msra.mxu0 0.0
    %2305 = vmatprep.subr.mxu0 0.0
    %2306 = vmatpush1.msra.mxu0 0.0
    %2307 = vmatprep.subr.mxu0 0.0
    %2308 = vmatpush1.msra.mxu0 0.0
    %2309 = vmatprep.subr.mxu0 0.0
    %2310 = vmatpush1.msra.mxu0 0.0
    %2311 = vmatprep.subr.mxu0 0.0
    %2312 = vmatpush1.msra.mxu0 0.0
    %2313 = vmatprep.subr.mxu0 0.0
    %2314 = vmatpush1.msra.mxu0 0.0
    %2315 = vmatprep.subr.mxu0 0.0
    %2316 = vmatpush1.msra.mxu0 0.0
    %2317 = vmatprep.subr.mxu0 0.0
    %2318 = vmatpush1.msra.mxu0 0.0
    %2319 = vmatprep.subr.mxu0 0.0
    %2320 = vmatpush1.msra.mxu0 0.0
    %2321 = vmatprep.subr.mxu0 0.0
    %2322 = vmatpush1.msra.mxu0 0.0
    %2323 = vmatprep.subr.mxu0 0.0
    %2324 = vmatpush1.msra.mxu0 0.0
    %2325 = vmatprep.subr.mxu0 0.0
    %2326 = vmatpush1.msra.mxu0 0.0
    %2327 = vmatprep.subr.mxu0 0.0
    %2328 = vmatpush1.msra.mxu0 0.0
    %2329 = vmatprep.subr.mxu0 0.0
    %2330 = vmatpush1.msra.mxu0 0.0
    %2331 = vmatprep.subr.mxu0 0.0
    %2332 = vmatpush1.msra.mxu0 0.0
    %2333 = vmatprep.subr.mxu0 0.0
    %2334 = vmatpush1.msra.mxu0 0.0
    %2335 = vmatprep.subr.mxu0 0.0
    %2336 = vmatpush1.msra.mxu0 0.0
    %2337 = vmatprep.subr.mxu0 0.0
    %2338 = vmatpush1.msra.mxu0 0.0
    %2339 = vmatprep.mubr.f32.mxu0 0.0
    %2340 = vmatmul.mubr.f32.gmra.mrb[0].mxu0 %v2264
    %v2341 = vpop.f32.mrb[0].mxu0
    %v2342 = vadd.f32 %v2261, %v2341
    %v2343 = vpop.f32.mrb[0].mxu0
    %2344 = vmatprep.mubr.f32.mxu0 0.0
    %2345 = vmatmul.mubr.f32.gmra.mrb[0].mxu0 %v2267
    %v2346 = vpop.f32.mrb[0].mxu0
    %v2347 = vadd.f32 %v2261, %v2346
    %v2348 = vpop.f32.mrb[0].mxu0
    %2349 = vmatprep.mubr.f32.mxu0 0.0
    %2350 = vmatmul.mubr.f32.gmra.mrb[0].mxu0 %v2270
    %v2351 = vpop.f32.mrb[0].mxu0
    %v2352 = vadd.f32 %v2261, %v2351
    %v2353 = vpop.f32.mrb[0].mxu0
    %2354 = vmatprep.mubr.f32.mxu0 0.0
    %2355 = vmatmul.mubr.f32.gmra.mrb[0].mxu0 %v2273
    %v2356 = vpop.f32.mrb[0].mxu0
    %v2357 = vadd.f32 %v2261, %v2356
    %v2358 = vpop.f32.mrb[0].mxu0
    %2359 = vdwg.mxu0
    %v2360 = vadd.f32 %v2149, %v2342
    %v2361 = vadd.f32 %v2150, %v2347
    %v2362 = vadd.f32 %v2151, %v2352
    %v2363 = vadd.f32 %v2152, %v2357
    %v2364 = vsel %vm45, %v2360, 0.0
    %2365 = vadd.xlane.f32.xlu0 %v2364
    %v2366 = vpop.xlane.xlu0 %2365
    %v2367 = vsel %vm45, %v2361, 0.0
    %2368 = vadd.xlane.f32.xlu0 %v2367
    %v2369 = vpop.xlane.xlu0 %2368
    %v2370 = vsel %vm45, %v2362, 0.0
    %2371 = vadd.xlane.f32.xlu0 %v2370
    %v2372 = vpop.xlane.xlu0 %2371
    %v2373 = vsel %vm45, %v2363, 0.0
    %2374 = vadd.xlane.f32.xlu0 %v2373
    %v2375 = vpop.xlane.xlu0 %2374
    %v2376 = vmul.f32 %v2366, %v2096
    %v2377 = vmul.f32 %v2369, %v2096
    %v2378 = vmul.f32 %v2372, %v2096
    %v2379 = vmul.f32 %v2375, %v2096
    %v2380 = vsub.f32 %v2360, %v2376
    %v2381 = vsub.f32 %v2361, %v2377
    %v2382 = vsub.f32 %v2362, %v2378
    %v2383 = vsub.f32 %v2363, %v2379
    %v2384 = vmul.f32 %v2380, %v2380
    %v2385 = vmul.f32 %v2381, %v2381
    %v2386 = vmul.f32 %v2382, %v2382
    %v2387 = vmul.f32 %v2383, %v2383
    %v2388 = vsel %vm45, %v2384, 0.0
    %2389 = vadd.xlane.f32.xlu0 %v2388
    %v2390 = vpop.xlane.xlu0 %2389
    %v2391 = vsel %vm45, %v2385, 0.0
    %2392 = vadd.xlane.f32.xlu0 %v2391
    %v2393 = vpop.xlane.xlu0 %2392
    %v2394 = vsel %vm45, %v2386, 0.0
    %2395 = vadd.xlane.f32.xlu0 %v2394
    %v2396 = vpop.xlane.xlu0 %2395
    %v2397 = vsel %vm45, %v2387, 0.0
    %2398 = vadd.xlane.f32.xlu0 %v2397
    %v2399 = vpop.xlane.xlu0 %2398
    %v2400 = vmul.f32 %v2390, %v2096
    %v2401 = vmul.f32 %v2393, %v2096
    %v2402 = vmul.f32 %v2396, %v2096
    %v2403 = vmul.f32 %v2399, %v2096
    %v2404 = vadd.f32 %v2400, 1e-05
    %v2405 = vadd.f32 %v2401, 1e-05
    %v2406 = vadd.f32 %v2402, 1e-05
    %v2407 = vadd.f32 %v2403, 1e-05
    %v2408 = vrsqrt.pop %v2404
    %v2409 = vrsqrt.pop %v2405
    %v2410 = vrsqrt.pop %v2406
    %v2411 = vrsqrt.pop %v2407
    %v2412 = vmul.f32 %v2380, %v2408
    %v2413 = vmul.f32 %v2381, %v2409
    %v2414 = vmul.f32 %v2382, %v2410
    %v2415 = vmul.f32 %v2383, %v2411
    %v2416 = vlaneseq
    %v2417 = vshrl.u32 %v2416, 7
    %v2418 = vsub.s32 0, %v2417
    %v2419 = vrot.slane %v201, %v2418
    %v2420 = vmul.f32 %v2412, %v2419
    %v2421 = vmul.f32 %v2413, %v2419
    %v2422 = vmul.f32 %v2414, %v2419
    %v2423 = vmul.f32 %v2415, %v2419
    %v2424 = vlaneseq
    %v2425 = vshrl.u32 %v2424, 7
    %v2426 = vsub.s32 0, %v2425
    %v2427 = vrot.slane %v202, %v2426
    %v2428 = vadd.f32 %v2420, %v2427
    %v2429 = vadd.f32 %v2421, %v2427
    %v2430 = vadd.f32 %v2422, %v2427
    %v2431 = vadd.f32 %v2423, %v2427
    %v2432 = vld [vmem:[#allocation2 + $0x140] sm:$0xff]
    %v2433 = vld [vmem:[#allocation2 + $0x148] sm:$0xff]
    %v2434 = vld [vmem:[#allocation2 + $0x150] sm:$0xff]
    %v2435 = vld [vmem:[#allocation2 + $0x158] sm:$0xff]
    %v2436 = vld [vmem:[#allocation2 + $0x160] sm:$0x1]
    %v2437 = vld [vmem:[#allocation2 + $0x168] sm:$0xff]
    %v2438 = vld [vmem:[#allocation2 + $0x170] sm:$0xff]
    %v2439 = vld [vmem:[#allocation2 + $0x178] sm:$0xff]
    %v2440 = vld [vmem:[#allocation2 + $0x180] sm:$0xff]
    %v2441 = vld [vmem:[#allocation2 + $0x188] sm:$0x1]
    %v2442 = vld [vmem:[#allocation2 + $0x190] sm:$0xff]
    %v2443 = vld [vmem:[#allocation2 + $0x198] sm:$0xff]
    %v2444 = vld [vmem:[#allocation2 + $0x1a0] sm:$0xff]
    %v2445 = vld [vmem:[#allocation2 + $0x1a8] sm:$0xff]
    %v2446 = vld [vmem:[#allocation2 + $0x1b0] sm:$0x1]
    %v2447 = vld [vmem:[#allocation2 + $0x1b8] sm:$0xff]
    %v2448 = vld [vmem:[#allocation2 + $0x1c0] sm:$0xff]
    %v2449 = vld [vmem:[#allocation2 + $0x1c8] sm:$0xff]
    %v2450 = vld [vmem:[#allocation2 + $0x1d0] sm:$0xff]
    %v2451 = vld [vmem:[#allocation2 + $0x1d8] sm:$0xff]
    %v2452 = vld [vmem:[#allocation2 + $0x1e0] sm:$0xff]
    %v2453 = vld [vmem:[#allocation2 + $0x1e8] sm:$0xff]
    %v2454 = vld [vmem:[#allocation2 + $0x1f0] sm:$0xff]
    %v2455 = vld [vmem:[#allocation2 + $0x1f8] sm:$0x1]
    %v2456 = vld [vmem:[#allocation2 + $0x200] sm:$0x1]
    %v2457 = vld [vmem:[#allocation2 + $0x208] sm:$0x1]
    %v2458 = vld [vmem:[#allocation2 + $0x210] sm:$0x1]
    %v2459 = vld [vmem:[#allocation2 + $0x218] sm:$0x1]
    %v2460 = vlaneseq
    %v2461 = vshrl.u32 %v2460, 7
    %v2462 = vsub.s32 0, %v2461
    %v2463 = vrot.slane %v2436, %v2462
    %v2465 = vsel %vm45, %v2428, 0
    %v2468 = vsel %vm45, %v2429, 0
    %v2471 = vsel %vm45, %v2430, 0
    %v2474 = vsel %vm45, %v2431, 0
    %2476 = vmatprep.subr.mxu0 0.0
    %2477 = vmatpush1.msra.mxu0 %v2432
    %2478 = vmatprep.subr.mxu0 0.0
    %2479 = vmatpush1.msra.mxu0 %v2433
    %2480 = vmatprep.subr.mxu0 0.0
    %2481 = vmatpush1.msra.mxu0 %v2434
    %2482 = vmatprep.subr.mxu0 0.0
    %2483 = vmatpush1.msra.mxu0 %v2435
    %2484 = vmatprep.subr.mxu0 0.0
    %2485 = vmatpush1.msra.mxu0 0.0
    %2486 = vmatprep.subr.mxu0 0.0
    %2487 = vmatpush1.msra.mxu0 0.0
    %2488 = vmatprep.subr.mxu0 0.0
    %2489 = vmatpush1.msra.mxu0 0.0
    %2490 = vmatprep.subr.mxu0 0.0
    %2491 = vmatpush1.msra.mxu0 0.0
    %2492 = vmatprep.subr.mxu0 0.0
    %2493 = vmatpush1.msra.mxu0 0.0
    %2494 = vmatprep.subr.mxu0 0.0
    %2495 = vmatpush1.msra.mxu0 0.0
    %2496 = vmatprep.subr.mxu0 0.0
    %2497 = vmatpush1.msra.mxu0 0.0
    %2498 = vmatprep.subr.mxu0 0.0
    %2499 = vmatpush1.msra.mxu0 0.0
    %2500 = vmatprep.subr.mxu0 0.0
    %2501 = vmatpush1.msra.mxu0 0.0
    %2502 = vmatprep.subr.mxu0 0.0
    %2503 = vmatpush1.msra.mxu0 0.0
    %2504 = vmatprep.subr.mxu0 0.0
    %2505 = vmatpush1.msra.mxu0 0.0
    %2506 = vmatprep.subr.mxu0 0.0
    %2507 = vmatpush1.msra.mxu0 0.0
    %2508 = vmatprep.subr.mxu0 0.0
    %2509 = vmatpush1.msra.mxu0 0.0
    %2510 = vmatprep.subr.mxu0 0.0
    %2511 = vmatpush1.msra.mxu0 0.0
    %2512 = vmatprep.subr.mxu0 0.0
    %2513 = vmatpush1.msra.mxu0 0.0
    %2514 = vmatprep.subr.mxu0 0.0
    %2515 = vmatpush1.msra.mxu0 0.0
    %2516 = vmatprep.subr.mxu0 0.0
    %2517 = vmatpush1.msra.mxu0 0.0
    %2518 = vmatprep.subr.mxu0 0.0
    %2519 = vmatpush1.msra.mxu0 0.0
    %2520 = vmatprep.subr.mxu0 0.0
    %2521 = vmatpush1.msra.mxu0 0.0
    %2522 = vmatprep.subr.mxu0 0.0
    %2523 = vmatpush1.msra.mxu0 0.0
    %2524 = vmatprep.subr.mxu0 0.0
    %2525 = vmatpush1.msra.mxu0 0.0
    %2526 = vmatprep.subr.mxu0 0.0
    %2527 = vmatpush1.msra.mxu0 0.0
    %2528 = vmatprep.subr.mxu0 0.0
    %2529 = vmatpush1.msra.mxu0 0.0
    %2530 = vmatprep.subr.mxu0 0.0
    %2531 = vmatpush1.msra.mxu0 0.0
    %2532 = vmatprep.subr.mxu0 0.0
    %2533 = vmatpush1.msra.mxu0 0.0
    %2534 = vmatprep.subr.mxu0 0.0
    %2535 = vmatpush1.msra.mxu0 0.0
    %2536 = vmatprep.subr.mxu0 0.0
    %2537 = vmatpush1.msra.mxu0 0.0
    %2538 = vmatprep.subr.mxu0 0.0
    %2539 = vmatpush1.msra.mxu0 0.0
    %2540 = vmatprep.mubr.f32.mxu0 0.0
    %2541 = vmatmul.mubr.f32.gmra.mrb[0].mxu0 %v2465
    %v2542 = vpop.f32.mrb[0].mxu0
    %v2543 = vadd.f32 %v2463, %v2542
    %v2544 = vpop.f32.mrb[0].mxu0
    %2545 = vmatprep.mubr.f32.mxu0 0.0
    %2546 = vmatmul.mubr.f32.gmra.mrb[0].mxu0 %v2468
    %v2547 = vpop.f32.mrb[0].mxu0
    %v2548 = vadd.f32 %v2463, %v2547
    %v2549 = vpop.f32.mrb[0].mxu0
    %2550 = vmatprep.mubr.f32.mxu0 0.0
    %2551 = vmatmul.mubr.f32.gmra.mrb[0].mxu0 %v2471
    %v2552 = vpop.f32.mrb[0].mxu0
    %v2553 = vadd.f32 %v2463, %v2552
    %v2554 = vpop.f32.mrb[0].mxu0
    %2555 = vmatprep.mubr.f32.mxu0 0.0
    %2556 = vmatmul.mubr.f32.gmra.mrb[0].mxu0 %v2474
    %v2557 = vpop.f32.mrb[0].mxu0
    %v2558 = vadd.f32 %v2463, %v2557
    %v2559 = vpop.f32.mrb[0].mxu0
    %2560 = vdwg.mxu0
    %2563 = vrot.lane.b32.xlu0 %v2543, 96
    %v2564 = vpop.permute.xlu0 %2563
    %2565 = vrot.lane.b32.xlu0 %v2548, 96
    %v2566 = vpop.permute.xlu0 %2565
    %v2567 = vsel %vm310, %v2543, 0
    %v2569 = vsel %vm310, %v2548, 0
    %v2571 = vsel %vm310, %v2564, 0
    %v2573 = vsel %vm310, %v2566, 0
    %2575 = vmatprep.subr.mxu0 0.0
    %2576 = vmatpush1.xpose.msra.mxu0 %v2571
    %2577 = vmatprep.subr.mxu0 0.0
    %2578 = vmatpush1.xpose.msra.mxu0 %v2573
    %2579 = vmatprep.subr.mxu0 0.0
    %2580 = vmatpush1.xpose.msra.mxu0 0.0
    %2581 = vmatprep.subr.mxu0 0.0
    %2582 = vmatpush1.xpose.msra.mxu0 0.0
    %2583 = vmatprep.subr.mxu0 0.0
    %2584 = vmatpush1.xpose.msra.mxu0 0.0
    %2585 = vmatprep.subr.mxu0 0.0
    %2586 = vmatpush1.xpose.msra.mxu0 0.0
    %2587 = vmatprep.subr.mxu0 0.0
    %2588 = vmatpush1.xpose.msra.mxu0 0.0
    %2589 = vmatprep.subr.mxu0 0.0
    %2590 = vmatpush1.xpose.msra.mxu0 0.0
    %2591 = vmatprep.subr.mxu0 0.0
    %2592 = vmatpush1.xpose.msra.mxu0 0.0
    %2593 = vmatprep.subr.mxu0 0.0
    %2594 = vmatpush1.xpose.msra.mxu0 0.0
    %2595 = vmatprep.subr.mxu0 0.0
    %2596 = vmatpush1.xpose.msra.mxu0 0.0
    %2597 = vmatprep.subr.mxu0 0.0
    %2598 = vmatpush1.xpose.msra.mxu0 0.0
    %2599 = vmatprep.subr.mxu0 0.0
    %2600 = vmatpush1.xpose.msra.mxu0 0.0
    %2601 = vmatprep.subr.mxu0 0.0
    %2602 = vmatpush1.xpose.msra.mxu0 0.0
    %2603 = vmatprep.subr.mxu0 0.0
    %2604 = vmatpush1.xpose.msra.mxu0 0.0
    %2605 = vmatprep.subr.mxu0 0.0
    %2606 = vmatpush1.xpose.msra.mxu0 0.0
    %2607 = vmatprep.subr.mxu0 0.0
    %2608 = vmatpush1.xpose.msra.mxu0 0.0
    %2609 = vmatprep.subr.mxu0 0.0
    %2610 = vmatpush1.xpose.msra.mxu0 0.0
    %2611 = vmatprep.subr.mxu0 0.0
    %2612 = vmatpush1.xpose.msra.mxu0 0.0
    %2613 = vmatprep.subr.mxu0 0.0
    %2614 = vmatpush1.xpose.msra.mxu0 0.0
    %2615 = vmatprep.subr.mxu0 0.0
    %2616 = vmatpush1.xpose.msra.mxu0 0.0
    %2617 = vmatprep.subr.mxu0 0.0
    %2618 = vmatpush1.xpose.msra.mxu0 0.0
    %2619 = vmatprep.subr.mxu0 0.0
    %2620 = vmatpush1.xpose.msra.mxu0 0.0
    %2621 = vmatprep.subr.mxu0 0.0
    %2622 = vmatpush1.xpose.msra.mxu0 0.0
    %2623 = vmatprep.subr.mxu0 0.0
    %2624 = vmatpush1.xpose.msra.mxu0 0.0
    %2625 = vmatprep.subr.mxu0 0.0
    %2626 = vmatpush1.xpose.msra.mxu0 0.0
    %2627 = vmatprep.subr.mxu0 0.0
    %2628 = vmatpush1.xpose.msra.mxu0 0.0
    %2629 = vmatprep.subr.mxu0 0.0
    %2630 = vmatpush1.xpose.msra.mxu0 0.0
    %2631 = vmatprep.subr.mxu0 0.0
    %2632 = vmatpush1.xpose.msra.mxu0 0.0
    %2633 = vmatprep.subr.mxu0 0.0
    %2634 = vmatpush1.xpose.msra.mxu0 0.0
    %2635 = vmatprep.subr.mxu0 0.0
    %2636 = vmatpush1.xpose.msra.mxu0 0.0
    %2637 = vmatprep.subr.mxu0 0.0
    %2638 = vmatpush1.xpose.msra.mxu0 0.0
    %2639 = vmatprep.mubr.f32.mxu0 0.0
    %2640 = vmatmul.mubr.f32.gmra.mrb[0].mxu0 %v2567
    %v2641 = vpop.f32.mrb[0].mxu0
    %v2642 = vadd.f32 0.0, %v2641
    %v2643 = vpop.f32.mrb[0].mxu0
    %2644 = vmatprep.mubr.f32.mxu0 0.0
    %2645 = vmatmul.mubr.f32.gmra.mrb[0].mxu0 %v2569
    %v2646 = vpop.f32.mrb[0].mxu0
    %v2647 = vadd.f32 0.0, %v2646
    %v2648 = vpop.f32.mrb[0].mxu0
    %2649 = vdwg.mxu0
    %2652 = vrot.lane.b32.xlu0 %v2553, 96
    %v2653 = vpop.permute.xlu0 %2652
    %2654 = vrot.lane.b32.xlu0 %v2558, 96
    %v2655 = vpop.permute.xlu0 %2654
    %v2656 = vsel %vm310, %v2553, 0
    %v2658 = vsel %vm310, %v2558, 0
    %v2660 = vsel %vm310, %v2653, 0
    %v2662 = vsel %vm310, %v2655, 0
    %2664 = vmatprep.subr.mxu0 0.0
    %2665 = vmatpush1.xpose.msra.mxu0 %v2660
    %2666 = vmatprep.subr.mxu0 0.0
    %2667 = vmatpush1.xpose.msra.mxu0 %v2662
    %2668 = vmatprep.subr.mxu0 0.0
    %2669 = vmatpush1.xpose.msra.mxu0 0.0
    %2670 = vmatprep.subr.mxu0 0.0
    %2671 = vmatpush1.xpose.msra.mxu0 0.0
    %2672 = vmatprep.subr.mxu0 0.0
    %2673 = vmatpush1.xpose.msra.mxu0 0.0
    %2674 = vmatprep.subr.mxu0 0.0
    %2675 = vmatpush1.xpose.msra.mxu0 0.0
    %2676 = vmatprep.subr.mxu0 0.0
    %2677 = vmatpush1.xpose.msra.mxu0 0.0
    %2678 = vmatprep.subr.mxu0 0.0
    %2679 = vmatpush1.xpose.msra.mxu0 0.0
    %2680 = vmatprep.subr.mxu0 0.0
    %2681 = vmatpush1.xpose.msra.mxu0 0.0
    %2682 = vmatprep.subr.mxu0 0.0
    %2683 = vmatpush1.xpose.msra.mxu0 0.0
    %2684 = vmatprep.subr.mxu0 0.0
    %2685 = vmatpush1.xpose.msra.mxu0 0.0
    %2686 = vmatprep.subr.mxu0 0.0
    %2687 = vmatpush1.xpose.msra.mxu0 0.0
    %2688 = vmatprep.subr.mxu0 0.0
    %2689 = vmatpush1.xpose.msra.mxu0 0.0
    %2690 = vmatprep.subr.mxu0 0.0
    %2691 = vmatpush1.xpose.msra.mxu0 0.0
    %2692 = vmatprep.subr.mxu0 0.0
    %2693 = vmatpush1.xpose.msra.mxu0 0.0
    %2694 = vmatprep.subr.mxu0 0.0
    %2695 = vmatpush1.xpose.msra.mxu0 0.0
    %2696 = vmatprep.subr.mxu0 0.0
    %2697 = vmatpush1.xpose.msra.mxu0 0.0
    %2698 = vmatprep.subr.mxu0 0.0
    %2699 = vmatpush1.xpose.msra.mxu0 0.0
    %2700 = vmatprep.subr.mxu0 0.0
    %2701 = vmatpush1.xpose.msra.mxu0 0.0
    %2702 = vmatprep.subr.mxu0 0.0
    %2703 = vmatpush1.xpose.msra.mxu0 0.0
    %2704 = vmatprep.subr.mxu0 0.0
    %2705 = vmatpush1.xpose.msra.mxu0 0.0
    %2706 = vmatprep.subr.mxu0 0.0
    %2707 = vmatpush1.xpose.msra.mxu0 0.0
    %2708 = vmatprep.subr.mxu0 0.0
    %2709 = vmatpush1.xpose.msra.mxu0 0.0
    %2710 = vmatprep.subr.mxu0 0.0
    %2711 = vmatpush1.xpose.msra.mxu0 0.0
    %2712 = vmatprep.subr.mxu0 0.0
    %2713 = vmatpush1.xpose.msra.mxu0 0.0
    %2714 = vmatprep.subr.mxu0 0.0
    %2715 = vmatpush1.xpose.msra.mxu0 0.0
    %2716 = vmatprep.subr.mxu0 0.0
    %2717 = vmatpush1.xpose.msra.mxu0 0.0
    %2718 = vmatprep.subr.mxu0 0.0
    %2719 = vmatpush1.xpose.msra.mxu0 0.0
    %2720 = vmatprep.subr.mxu0 0.0
    %2721 = vmatpush1.xpose.msra.mxu0 0.0
    %2722 = vmatprep.subr.mxu0 0.0
    %2723 = vmatpush1.xpose.msra.mxu0 0.0
    %2724 = vmatprep.subr.mxu0 0.0
    %2725 = vmatpush1.xpose.msra.mxu0 0.0
    %2726 = vmatprep.subr.mxu0 0.0
    %2727 = vmatpush1.xpose.msra.mxu0 0.0
    %2728 = vmatprep.mubr.f32.mxu0 0.0
    %2729 = vmatmul.mubr.f32.gmra.mrb[0].mxu0 %v2656
    %v2730 = vpop.f32.mrb[0].mxu0
    %v2731 = vadd.f32 0.0, %v2730
    %v2732 = vpop.f32.mrb[0].mxu0
    %2733 = vmatprep.mubr.f32.mxu0 0.0
    %2734 = vmatmul.mubr.f32.gmra.mrb[0].mxu0 %v2658
    %v2735 = vpop.f32.mrb[0].mxu0
    %v2736 = vadd.f32 0.0, %v2735
    %v2737 = vpop.f32.mrb[0].mxu0
    %2738 = vdwg.mxu0
    %v2739 = vmul.f32 %v2642, 0.35355338
    %v2740 = vmul.f32 %v2647, 0.35355338
    %v2741 = vmul.f32 %v2731, 0.35355338
    %v2742 = vmul.f32 %v2736, 0.35355338
    %v2743 = vsel %vm487, %v2739, -inf
    %2744 = vmax.xlane.f32.xlu0 %v2743
    %v2745 = vpop.xlane.xlu0 %2744
    %v2746 = vsel %vm487, %v2740, -inf
    %2747 = vmax.xlane.f32.xlu0 %v2746
    %v2748 = vpop.xlane.xlu0 %2747
    %v2749 = vsel %vm487, %v2741, -inf
    %2750 = vmax.xlane.f32.xlu0 %v2749
    %v2751 = vpop.xlane.xlu0 %2750
    %v2752 = vsel %vm487, %v2742, -inf
    %2753 = vmax.xlane.f32.xlu0 %v2752
    %v2754 = vpop.xlane.xlu0 %2753
    %v2755 = vsub.f32 %v2739, %v2745
    %v2756 = vsub.f32 %v2740, %v2748
    %v2757 = vsub.f32 %v2741, %v2751
    %v2758 = vsub.f32 %v2742, %v2754
    %v2759 = vmul.f32 %v2755, 1.442695
    %v2760 = vpow.pop %v2759
    %v2761 = vmul.f32 %v2756, 1.442695
    %v2762 = vpow.pop %v2761
    %v2763 = vmul.f32 %v2757, 1.442695
    %v2764 = vpow.pop %v2763
    %v2765 = vmul.f32 %v2758, 1.442695
    %v2766 = vpow.pop %v2765
    %v2767 = vsel %vm487, %v2760, 0.0
    %2768 = vadd.xlane.f32.xlu0 %v2767
    %v2769 = vpop.xlane.xlu0 %2768
    %v2770 = vsel %vm487, %v2762, 0.0
    %2771 = vadd.xlane.f32.xlu0 %v2770
    %v2772 = vpop.xlane.xlu0 %2771
    %v2773 = vsel %vm487, %v2764, 0.0
    %2774 = vadd.xlane.f32.xlu0 %v2773
    %v2775 = vpop.xlane.xlu0 %2774
    %v2776 = vsel %vm487, %v2766, 0.0
    %2777 = vadd.xlane.f32.xlu0 %v2776
    %v2778 = vpop.xlane.xlu0 %2777
    %v2779 = vrcp.pop %v2769
    %v2780 = vmul.f32 %v2760, %v2779
    %v2781 = vrcp.pop %v2772
    %v2782 = vmul.f32 %v2762, %v2781
    %v2783 = vrcp.pop %v2775
    %v2784 = vmul.f32 %v2764, %v2783
    %v2785 = vrcp.pop %v2778
    %v2786 = vmul.f32 %v2766, %v2785
    %2787 = vrot.lane.b32.xlu0 %v2543, 64
    %v2788 = vpop.permute.xlu0 %2787
    %2789 = vrot.lane.b32.xlu0 %v2548, 64
    %v2790 = vpop.permute.xlu0 %2789
    %v2794 = vsel %vm487, %v2780, 0
    %v2797 = vsel %vm487, %v2782, 0
    %2799 = vmatprep.subr.mxu0 0.0
    %2800 = vmatpush1.msra.mxu0 %v2788
    %2801 = vmatprep.subr.mxu0 0.0
    %2802 = vmatpush1.msra.mxu0 %v2790
    %2803 = vmatprep.subr.mxu0 0.0
    %2804 = vmatpush1.msra.mxu0 0.0
    %2805 = vmatprep.subr.mxu0 0.0
    %2806 = vmatpush1.msra.mxu0 0.0
    %2807 = vmatprep.subr.mxu0 0.0
    %2808 = vmatpush1.msra.mxu0 0.0
    %2809 = vmatprep.subr.mxu0 0.0
    %2810 = vmatpush1.msra.mxu0 0.0
    %2811 = vmatprep.subr.mxu0 0.0
    %2812 = vmatpush1.msra.mxu0 0.0
    %2813 = vmatprep.subr.mxu0 0.0
    %2814 = vmatpush1.msra.mxu0 0.0
    %2815 = vmatprep.subr.mxu0 0.0
    %2816 = vmatpush1.msra.mxu0 0.0
    %2817 = vmatprep.subr.mxu0 0.0
    %2818 = vmatpush1.msra.mxu0 0.0
    %2819 = vmatprep.subr.mxu0 0.0
    %2820 = vmatpush1.msra.mxu0 0.0
    %2821 = vmatprep.subr.mxu0 0.0
    %2822 = vmatpush1.msra.mxu0 0.0
    %2823 = vmatprep.subr.mxu0 0.0
    %2824 = vmatpush1.msra.mxu0 0.0
    %2825 = vmatprep.subr.mxu0 0.0
    %2826 = vmatpush1.msra.mxu0 0.0
    %2827 = vmatprep.subr.mxu0 0.0
    %2828 = vmatpush1.msra.mxu0 0.0
    %2829 = vmatprep.subr.mxu0 0.0
    %2830 = vmatpush1.msra.mxu0 0.0
    %2831 = vmatprep.subr.mxu0 0.0
    %2832 = vmatpush1.msra.mxu0 0.0
    %2833 = vmatprep.subr.mxu0 0.0
    %2834 = vmatpush1.msra.mxu0 0.0
    %2835 = vmatprep.subr.mxu0 0.0
    %2836 = vmatpush1.msra.mxu0 0.0
    %2837 = vmatprep.subr.mxu0 0.0
    %2838 = vmatpush1.msra.mxu0 0.0
    %2839 = vmatprep.subr.mxu0 0.0
    %2840 = vmatpush1.msra.mxu0 0.0
    %2841 = vmatprep.subr.mxu0 0.0
    %2842 = vmatpush1.msra.mxu0 0.0
    %2843 = vmatprep.subr.mxu0 0.0
    %2844 = vmatpush1.msra.mxu0 0.0
    %2845 = vmatprep.subr.mxu0 0.0
    %2846 = vmatpush1.msra.mxu0 0.0
    %2847 = vmatprep.subr.mxu0 0.0
    %2848 = vmatpush1.msra.mxu0 0.0
    %2849 = vmatprep.subr.mxu0 0.0
    %2850 = vmatpush1.msra.mxu0 0.0
    %2851 = vmatprep.subr.mxu0 0.0
    %2852 = vmatpush1.msra.mxu0 0.0
    %2853 = vmatprep.subr.mxu0 0.0
    %2854 = vmatpush1.msra.mxu0 0.0
    %2855 = vmatprep.subr.mxu0 0.0
    %2856 = vmatpush1.msra.mxu0 0.0
    %2857 = vmatprep.subr.mxu0 0.0
    %2858 = vmatpush1.msra.mxu0 0.0
    %2859 = vmatprep.subr.mxu0 0.0
    %2860 = vmatpush1.msra.mxu0 0.0
    %2861 = vmatprep.subr.mxu0 0.0
    %2862 = vmatpush1.msra.mxu0 0.0
    %2863 = vmatprep.mubr.f32.mxu0 0.0
    %2864 = vmatmul.mubr.f32.gmra.mrb[0].mxu0 %v2794
    %v2865 = vpop.f32.mrb[0].mxu0
    %v2866 = vadd.f32 0.0, %v2865
    %v2867 = vpop.f32.mrb[0].mxu0
    %2868 = vmatprep.mubr.f32.mxu0 0.0
    %2869 = vmatmul.mubr.f32.gmra.mrb[0].mxu0 %v2797
    %v2870 = vpop.f32.mrb[0].mxu0
    %v2871 = vadd.f32 0.0, %v2870
    %v2872 = vpop.f32.mrb[0].mxu0
    %2873 = vdwg.mxu0
    %2874 = vrot.lane.b32.xlu0 %v2553, 64
    %v2875 = vpop.permute.xlu0 %2874
    %2876 = vrot.lane.b32.xlu0 %v2558, 64
    %v2877 = vpop.permute.xlu0 %2876
    %v2881 = vsel %vm487, %v2784, 0
    %v2884 = vsel %vm487, %v2786, 0
    %2886 = vmatprep.subr.mxu0 0.0
    %2887 = vmatpush1.msra.mxu0 %v2875
    %2888 = vmatprep.subr.mxu0 0.0
    %2889 = vmatpush1.msra.mxu0 %v2877
    %2890 = vmatprep.subr.mxu0 0.0
    %2891 = vmatpush1.msra.mxu0 0.0
    %2892 = vmatprep.subr.mxu0 0.0
    %2893 = vmatpush1.msra.mxu0 0.0
    %2894 = vmatprep.subr.mxu0 0.0
    %2895 = vmatpush1.msra.mxu0 0.0
    %2896 = vmatprep.subr.mxu0 0.0
    %2897 = vmatpush1.msra.mxu0 0.0
    %2898 = vmatprep.subr.mxu0 0.0
    %2899 = vmatpush1.msra.mxu0 0.0
    %2900 = vmatprep.subr.mxu0 0.0
    %2901 = vmatpush1.msra.mxu0 0.0
    %2902 = vmatprep.subr.mxu0 0.0
    %2903 = vmatpush1.msra.mxu0 0.0
    %2904 = vmatprep.subr.mxu0 0.0
    %2905 = vmatpush1.msra.mxu0 0.0
    %2906 = vmatprep.subr.mxu0 0.0
    %2907 = vmatpush1.msra.mxu0 0.0
    %2908 = vmatprep.subr.mxu0 0.0
    %2909 = vmatpush1.msra.mxu0 0.0
    %2910 = vmatprep.subr.mxu0 0.0
    %2911 = vmatpush1.msra.mxu0 0.0
    %2912 = vmatprep.subr.mxu0 0.0
    %2913 = vmatpush1.msra.mxu0 0.0
    %2914 = vmatprep.subr.mxu0 0.0
    %2915 = vmatpush1.msra.mxu0 0.0
    %2916 = vmatprep.subr.mxu0 0.0
    %2917 = vmatpush1.msra.mxu0 0.0
    %2918 = vmatprep.subr.mxu0 0.0
    %2919 = vmatpush1.msra.mxu0 0.0
    %2920 = vmatprep.subr.mxu0 0.0
    %2921 = vmatpush1.msra.mxu0 0.0
    %2922 = vmatprep.subr.mxu0 0.0
    %2923 = vmatpush1.msra.mxu0 0.0
    %2924 = vmatprep.subr.mxu0 0.0
    %2925 = vmatpush1.msra.mxu0 0.0
    %2926 = vmatprep.subr.mxu0 0.0
    %2927 = vmatpush1.msra.mxu0 0.0
    %2928 = vmatprep.subr.mxu0 0.0
    %2929 = vmatpush1.msra.mxu0 0.0
    %2930 = vmatprep.subr.mxu0 0.0
    %2931 = vmatpush1.msra.mxu0 0.0
    %2932 = vmatprep.subr.mxu0 0.0
    %2933 = vmatpush1.msra.mxu0 0.0
    %2934 = vmatprep.subr.mxu0 0.0
    %2935 = vmatpush1.msra.mxu0 0.0
    %2936 = vmatprep.subr.mxu0 0.0
    %2937 = vmatpush1.msra.mxu0 0.0
    %2938 = vmatprep.subr.mxu0 0.0
    %2939 = vmatpush1.msra.mxu0 0.0
    %2940 = vmatprep.subr.mxu0 0.0
    %2941 = vmatpush1.msra.mxu0 0.0
    %2942 = vmatprep.subr.mxu0 0.0
    %2943 = vmatpush1.msra.mxu0 0.0
    %2944 = vmatprep.subr.mxu0 0.0
    %2945 = vmatpush1.msra.mxu0 0.0
    %2946 = vmatprep.subr.mxu0 0.0
    %2947 = vmatpush1.msra.mxu0 0.0
    %2948 = vmatprep.subr.mxu0 0.0
    %2949 = vmatpush1.msra.mxu0 0.0
    %2950 = vmatprep.mubr.f32.mxu0 0.0
    %2951 = vmatmul.mubr.f32.gmra.mrb[0].mxu0 %v2881
    %v2952 = vpop.f32.mrb[0].mxu0
    %v2953 = vadd.f32 0.0, %v2952
    %v2954 = vpop.f32.mrb[0].mxu0
    %2955 = vmatprep.mubr.f32.mxu0 0.0
    %2956 = vmatmul.mubr.f32.gmra.mrb[0].mxu0 %v2884
    %v2957 = vpop.f32.mrb[0].mxu0
    %v2958 = vadd.f32 0.0, %v2957
    %v2959 = vpop.f32.mrb[0].mxu0
    %2960 = vdwg.mxu0
    %2961 = vrot.lane.b32.xlu0 %v2543, 120
    %v2962 = vpop.permute.xlu0 %2961
    %2963 = vrot.lane.b32.xlu0 %v2548, 120
    %v2964 = vpop.permute.xlu0 %2963
    %2965 = vrot.lane.b32.xlu0 %v2543, 88
    %v2966 = vpop.permute.xlu0 %2965
    %2967 = vrot.lane.b32.xlu0 %v2548, 88
    %v2968 = vpop.permute.xlu0 %2967
    %v2969 = vsel %vm310, %v2962, 0
    %v2971 = vsel %vm310, %v2964, 0
    %v2973 = vsel %vm310, %v2966, 0
    %v2975 = vsel %vm310, %v2968, 0
    %2977 = vmatprep.subr.mxu0 0.0
    %2978 = vmatpush1.xpose.msra.mxu0 %v2973
    %2979 = vmatprep.subr.mxu0 0.0
    %2980 = vmatpush1.xpose.msra.mxu0 %v2975
    %2981 = vmatprep.subr.mxu0 0.0
    %2982 = vmatpush1.xpose.msra.mxu0 0.0
    %2983 = vmatprep.subr.mxu0 0.0
    %2984 = vmatpush1.xpose.msra.mxu0 0.0
    %2985 = vmatprep.subr.mxu0 0.0
    %2986 = vmatpush1.xpose.msra.mxu0 0.0
    %2987 = vmatprep.subr.mxu0 0.0
    %2988 = vmatpush1.xpose.msra.mxu0 0.0
    %2989 = vmatprep.subr.mxu0 0.0
    %2990 = vmatpush1.xpose.msra.mxu0 0.0
    %2991 = vmatprep.subr.mxu0 0.0
    %2992 = vmatpush1.xpose.msra.mxu0 0.0
    %2993 = vmatprep.subr.mxu0 0.0
    %2994 = vmatpush1.xpose.msra.mxu0 0.0
    %2995 = vmatprep.subr.mxu0 0.0
    %2996 = vmatpush1.xpose.msra.mxu0 0.0
    %2997 = vmatprep.subr.mxu0 0.0
    %2998 = vmatpush1.xpose.msra.mxu0 0.0
    %2999 = vmatprep.subr.mxu0 0.0
    %3000 = vmatpush1.xpose.msra.mxu0 0.0
    %3001 = vmatprep.subr.mxu0 0.0
    %3002 = vmatpush1.xpose.msra.mxu0 0.0
    %3003 = vmatprep.subr.mxu0 0.0
    %3004 = vmatpush1.xpose.msra.mxu0 0.0
    %3005 = vmatprep.subr.mxu0 0.0
    %3006 = vmatpush1.xpose.msra.mxu0 0.0
    %3007 = vmatprep.subr.mxu0 0.0
    %3008 = vmatpush1.xpose.msra.mxu0 0.0
    %3009 = vmatprep.subr.mxu0 0.0
    %3010 = vmatpush1.xpose.msra.mxu0 0.0
    %3011 = vmatprep.subr.mxu0 0.0
    %3012 = vmatpush1.xpose.msra.mxu0 0.0
    %3013 = vmatprep.subr.mxu0 0.0
    %3014 = vmatpush1.xpose.msra.mxu0 0.0
    %3015 = vmatprep.subr.mxu0 0.0
    %3016 = vmatpush1.xpose.msra.mxu0 0.0
    %3017 = vmatprep.subr.mxu0 0.0
    %3018 = vmatpush1.xpose.msra.mxu0 0.0
    %3019 = vmatprep.subr.mxu0 0.0
    %3020 = vmatpush1.xpose.msra.mxu0 0.0
    %3021 = vmatprep.subr.mxu0 0.0
    %3022 = vmatpush1.xpose.msra.mxu0 0.0
    %3023 = vmatprep.subr.mxu0 0.0
    %3024 = vmatpush1.xpose.msra.mxu0 0.0
    %3025 = vmatprep.subr.mxu0 0.0
    %3026 = vmatpush1.xpose.msra.mxu0 0.0
    %3027 = vmatprep.subr.mxu0 0.0
    %3028 = vmatpush1.xpose.msra.mxu0 0.0
    %3029 = vmatprep.subr.mxu0 0.0
    %3030 = vmatpush1.xpose.msra.mxu0 0.0
    %3031 = vmatprep.subr.mxu0 0.0
    %3032 = vmatpush1.xpose.msra.mxu0 0.0
    %3033 = vmatprep.subr.mxu0 0.0
    %3034 = vmatpush1.xpose.msra.mxu0 0.0
    %3035 = vmatprep.subr.mxu0 0.0
    %3036 = vmatpush1.xpose.msra.mxu0 0.0
    %3037 = vmatprep.subr.mxu0 0.0
    %3038 = vmatpush1.xpose.msra.mxu0 0.0
    %3039 = vmatprep.subr.mxu0 0.0
    %3040 = vmatpush1.xpose.msra.mxu0 0.0
    %3041 = vmatprep.mubr.f32.mxu0 0.0
    %3042 = vmatmul.mubr.f32.gmra.mrb[0].mxu0 %v2969
    %v3043 = vpop.f32.mrb[0].mxu0
    %v3044 = vadd.f32 0.0, %v3043
    %v3045 = vpop.f32.mrb[0].mxu0
    %3046 = vmatprep.mubr.f32.mxu0 0.0
    %3047 = vmatmul.mubr.f32.gmra.mrb[0].mxu0 %v2971
    %v3048 = vpop.f32.mrb[0].mxu0
    %v3049 = vadd.f32 0.0, %v3048
    %v3050 = vpop.f32.mrb[0].mxu0
    %3051 = vdwg.mxu0
    %3052 = vrot.lane.b32.xlu0 %v2553, 120
    %v3053 = vpop.permute.xlu0 %3052
    %3054 = vrot.lane.b32.xlu0 %v2558, 120
    %v3055 = vpop.permute.xlu0 %3054
    %3056 = vrot.lane.b32.xlu0 %v2553, 88
    %v3057 = vpop.permute.xlu0 %3056
    %3058 = vrot.lane.b32.xlu0 %v2558, 88
    %v3059 = vpop.permute.xlu0 %3058
    %v3060 = vsel %vm310, %v3053, 0
    %v3062 = vsel %vm310, %v3055, 0
    %v3064 = vsel %vm310, %v3057, 0
    %v3066 = vsel %vm310, %v3059, 0
    %3068 = vmatprep.subr.mxu0 0.0
    %3069 = vmatpush1.xpose.msra.mxu0 %v3064
    %3070 = vmatprep.subr.mxu0 0.0
    %3071 = vmatpush1.xpose.msra.mxu0 %v3066
    %3072 = vmatprep.subr.mxu0 0.0
    %3073 = vmatpush1.xpose.msra.mxu0 0.0
    %3074 = vmatprep.subr.mxu0 0.0
    %3075 = vmatpush1.xpose.msra.mxu0 0.0
    %3076 = vmatprep.subr.mxu0 0.0
    %3077 = vmatpush1.xpose.msra.mxu0 0.0
    %3078 = vmatprep.subr.mxu0 0.0
    %3079 = vmatpush1.xpose.msra.mxu0 0.0
    %3080 = vmatprep.subr.mxu0 0.0
    %3081 = vmatpush1.xpose.msra.mxu0 0.0
    %3082 = vmatprep.subr.mxu0 0.0
    %3083 = vmatpush1.xpose.msra.mxu0 0.0
    %3084 = vmatprep.subr.mxu0 0.0
    %3085 = vmatpush1.xpose.msra.mxu0 0.0
    %3086 = vmatprep.subr.mxu0 0.0
    %3087 = vmatpush1.xpose.msra.mxu0 0.0
    %3088 = vmatprep.subr.mxu0 0.0
    %3089 = vmatpush1.xpose.msra.mxu0 0.0
    %3090 = vmatprep.subr.mxu0 0.0
    %3091 = vmatpush1.xpose.msra.mxu0 0.0
    %3092 = vmatprep.subr.mxu0 0.0
    %3093 = vmatpush1.xpose.msra.mxu0 0.0
    %3094 = vmatprep.subr.mxu0 0.0
    %3095 = vmatpush1.xpose.msra.mxu0 0.0
    %3096 = vmatprep.subr.mxu0 0.0
    %3097 = vmatpush1.xpose.msra.mxu0 0.0
    %3098 = vmatprep.subr.mxu0 0.0
    %3099 = vmatpush1.xpose.msra.mxu0 0.0
    %3100 = vmatprep.subr.mxu0 0.0
    %3101 = vmatpush1.xpose.msra.mxu0 0.0
    %3102 = vmatprep.subr.mxu0 0.0
    %3103 = vmatpush1.xpose.msra.mxu0 0.0
    %3104 = vmatprep.subr.mxu0 0.0
    %3105 = vmatpush1.xpose.msra.mxu0 0.0
    %3106 = vmatprep.subr.mxu0 0.0
    %3107 = vmatpush1.xpose.msra.mxu0 0.0
    %3108 = vmatprep.subr.mxu0 0.0
    %3109 = vmatpush1.xpose.msra.mxu0 0.0
    %3110 = vmatprep.subr.mxu0 0.0
    %3111 = vmatpush1.xpose.msra.mxu0 0.0
    %3112 = vmatprep.subr.mxu0 0.0
    %3113 = vmatpush1.xpose.msra.mxu0 0.0
    %3114 = vmatprep.subr.mxu0 0.0
    %3115 = vmatpush1.xpose.msra.mxu0 0.0
    %3116 = vmatprep.subr.mxu0 0.0
    %3117 = vmatpush1.xpose.msra.mxu0 0.0
    %3118 = vmatprep.subr.mxu0 0.0
    %3119 = vmatpush1.xpose.msra.mxu0 0.0
    %3120 = vmatprep.subr.mxu0 0.0
    %3121 = vmatpush1.xpose.msra.mxu0 0.0
    %3122 = vmatprep.subr.mxu0 0.0
    %3123 = vmatpush1.xpose.msra.mxu0 0.0
    %3124 = vmatprep.subr.mxu0 0.0
    %3125 = vmatpush1.xpose.msra.mxu0 0.0
    %3126 = vmatprep.subr.mxu0 0.0
    %3127 = vmatpush1.xpose.msra.mxu0 0.0
    %3128 = vmatprep.subr.mxu0 0.0
    %3129 = vmatpush1.xpose.msra.mxu0 0.0
    %3130 = vmatprep.subr.mxu0 0.0
    %3131 = vmatpush1.xpose.msra.mxu0 0.0
    %3132 = vmatprep.mubr.f32.mxu0 0.0
    %3133 = vmatmul.mubr.f32.gmra.mrb[0].mxu0 %v3060
    %v3134 = vpop.f32.mrb[0].mxu0
    %v3135 = vadd.f32 0.0, %v3134
    %v3136 = vpop.f32.mrb[0].mxu0
    %3137 = vmatprep.mubr.f32.mxu0 0.0
    %3138 = vmatmul.mubr.f32.gmra.mrb[0].mxu0 %v3062
    %v3139 = vpop.f32.mrb[0].mxu0
    %v3140 = vadd.f32 0.0, %v3139
    %v3141 = vpop.f32.mrb[0].mxu0
    %3142 = vdwg.mxu0
    %v3143 = vmul.f32 %v3044, 0.35355338
    %v3144 = vmul.f32 %v3049, 0.35355338
    %v3145 = vmul.f32 %v3135, 0.35355338
    %v3146 = vmul.f32 %v3140, 0.35355338
    %v3147 = vsel %vm487, %v3143, -inf
    %3148 = vmax.xlane.f32.xlu0 %v3147
    %v3149 = vpop.xlane.xlu0 %3148
    %v3150 = vsel %vm487, %v3144, -inf
    %3151 = vmax.xlane.f32.xlu0 %v3150
    %v3152 = vpop.xlane.xlu0 %3151
    %v3153 = vsel %vm487, %v3145, -inf
    %3154 = vmax.xlane.f32.xlu0 %v3153
    %v3155 = vpop.xlane.xlu0 %3154
    %v3156 = vsel %vm487, %v3146, -inf
    %3157 = vmax.xlane.f32.xlu0 %v3156
    %v3158 = vpop.xlane.xlu0 %3157
    %v3159 = vsub.f32 %v3143, %v3149
    %v3160 = vsub.f32 %v3144, %v3152
    %v3161 = vsub.f32 %v3145, %v3155
    %v3162 = vsub.f32 %v3146, %v3158
    %v3163 = vmul.f32 %v3159, 1.442695
    %v3164 = vpow.pop %v3163
    %v3165 = vmul.f32 %v3160, 1.442695
    %v3166 = vpow.pop %v3165
    %v3167 = vmul.f32 %v3161, 1.442695
    %v3168 = vpow.pop %v3167
    %v3169 = vmul.f32 %v3162, 1.442695
    %v3170 = vpow.pop %v3169
    %v3171 = vsel %vm487, %v3164, 0.0
    %3172 = vadd.xlane.f32.xlu0 %v3171
    %v3173 = vpop.xlane.xlu0 %3172
    %v3174 = vsel %vm487, %v3166, 0.0
    %3175 = vadd.xlane.f32.xlu0 %v3174
    %v3176 = vpop.xlane.xlu0 %3175
    %v3177 = vsel %vm487, %v3168, 0.0
    %3178 = vadd.xlane.f32.xlu0 %v3177
    %v3179 = vpop.xlane.xlu0 %3178
    %v3180 = vsel %vm487, %v3170, 0.0
    %3181 = vadd.xlane.f32.xlu0 %v3180
    %v3182 = vpop.xlane.xlu0 %3181
    %v3183 = vrcp.pop %v3173
    %v3184 = vmul.f32 %v3164, %v3183
    %v3185 = vrcp.pop %v3176
    %v3186 = vmul.f32 %v3166, %v3185
    %v3187 = vrcp.pop %v3179
    %v3188 = vmul.f32 %v3168, %v3187
    %v3189 = vrcp.pop %v3182
    %v3190 = vmul.f32 %v3170, %v3189
    %3191 = vrot.lane.b32.xlu0 %v2543, 56
    %v3192 = vpop.permute.xlu0 %3191
    %3193 = vrot.lane.b32.xlu0 %v2548, 56
    %v3194 = vpop.permute.xlu0 %3193
    %v3198 = vsel %vm487, %v3184, 0
    %v3201 = vsel %vm487, %v3186, 0
    %3203 = vmatprep.subr.mxu0 0.0
    %3204 = vmatpush1.msra.mxu0 %v3192
    %3205 = vmatprep.subr.mxu0 0.0
    %3206 = vmatpush1.msra.mxu0 %v3194
    %3207 = vmatprep.subr.mxu0 0.0
    %3208 = vmatpush1.msra.mxu0 0.0
    %3209 = vmatprep.subr.mxu0 0.0
    %3210 = vmatpush1.msra.mxu0 0.0
    %3211 = vmatprep.subr.mxu0 0.0
    %3212 = vmatpush1.msra.mxu0 0.0
    %3213 = vmatprep.subr.mxu0 0.0
    %3214 = vmatpush1.msra.mxu0 0.0
    %3215 = vmatprep.subr.mxu0 0.0
    %3216 = vmatpush1.msra.mxu0 0.0
    %3217 = vmatprep.subr.mxu0 0.0
    %3218 = vmatpush1.msra.mxu0 0.0
    %3219 = vmatprep.subr.mxu0 0.0
    %3220 = vmatpush1.msra.mxu0 0.0
    %3221 = vmatprep.subr.mxu0 0.0
    %3222 = vmatpush1.msra.mxu0 0.0
    %3223 = vmatprep.subr.mxu0 0.0
    %3224 = vmatpush1.msra.mxu0 0.0
    %3225 = vmatprep.subr.mxu0 0.0
    %3226 = vmatpush1.msra.mxu0 0.0
    %3227 = vmatprep.subr.mxu0 0.0
    %3228 = vmatpush1.msra.mxu0 0.0
    %3229 = vmatprep.subr.mxu0 0.0
    %3230 = vmatpush1.msra.mxu0 0.0
    %3231 = vmatprep.subr.mxu0 0.0
    %3232 = vmatpush1.msra.mxu0 0.0
    %3233 = vmatprep.subr.mxu0 0.0
    %3234 = vmatpush1.msra.mxu0 0.0
    %3235 = vmatprep.subr.mxu0 0.0
    %3236 = vmatpush1.msra.mxu0 0.0
    %3237 = vmatprep.subr.mxu0 0.0
    %3238 = vmatpush1.msra.mxu0 0.0
    %3239 = vmatprep.subr.mxu0 0.0
    %3240 = vmatpush1.msra.mxu0 0.0
    %3241 = vmatprep.subr.mxu0 0.0
    %3242 = vmatpush1.msra.mxu0 0.0
    %3243 = vmatprep.subr.mxu0 0.0
    %3244 = vmatpush1.msra.mxu0 0.0
    %3245 = vmatprep.subr.mxu0 0.0
    %3246 = vmatpush1.msra.mxu0 0.0
    %3247 = vmatprep.subr.mxu0 0.0
    %3248 = vmatpush1.msra.mxu0 0.0
    %3249 = vmatprep.subr.mxu0 0.0
    %3250 = vmatpush1.msra.mxu0 0.0
    %3251 = vmatprep.subr.mxu0 0.0
    %3252 = vmatpush1.msra.mxu0 0.0
    %3253 = vmatprep.subr.mxu0 0.0
    %3254 = vmatpush1.msra.mxu0 0.0
    %3255 = vmatprep.subr.mxu0 0.0
    %3256 = vmatpush1.msra.mxu0 0.0
    %3257 = vmatprep.subr.mxu0 0.0
    %3258 = vmatpush1.msra.mxu0 0.0
    %3259 = vmatprep.subr.mxu0 0.0
    %3260 = vmatpush1.msra.mxu0 0.0
    %3261 = vmatprep.subr.mxu0 0.0
    %3262 = vmatpush1.msra.mxu0 0.0
    %3263 = vmatprep.subr.mxu0 0.0
    %3264 = vmatpush1.msra.mxu0 0.0
    %3265 = vmatprep.subr.mxu0 0.0
    %3266 = vmatpush1.msra.mxu0 0.0
    %3267 = vmatprep.mubr.f32.mxu0 0.0
    %3268 = vmatmul.mubr.f32.gmra.mrb[0].mxu0 %v3198
    %v3269 = vpop.f32.mrb[0].mxu0
    %v3270 = vadd.f32 0.0, %v3269
    %v3271 = vpop.f32.mrb[0].mxu0
    %3272 = vmatprep.mubr.f32.mxu0 0.0
    %3273 = vmatmul.mubr.f32.gmra.mrb[0].mxu0 %v3201
    %v3274 = vpop.f32.mrb[0].mxu0
    %v3275 = vadd.f32 0.0, %v3274
    %v3276 = vpop.f32.mrb[0].mxu0
    %3277 = vdwg.mxu0
    %3278 = vrot.lane.b32.xlu0 %v2553, 56
    %v3279 = vpop.permute.xlu0 %3278
    %3280 = vrot.lane.b32.xlu0 %v2558, 56
    %v3281 = vpop.permute.xlu0 %3280
    %v3285 = vsel %vm487, %v3188, 0
    %v3288 = vsel %vm487, %v3190, 0
    %3290 = vmatprep.subr.mxu0 0.0
    %3291 = vmatpush1.msra.mxu0 %v3279
    %3292 = vmatprep.subr.mxu0 0.0
    %3293 = vmatpush1.msra.mxu0 %v3281
    %3294 = vmatprep.subr.mxu0 0.0
    %3295 = vmatpush1.msra.mxu0 0.0
    %3296 = vmatprep.subr.mxu0 0.0
    %3297 = vmatpush1.msra.mxu0 0.0
    %3298 = vmatprep.subr.mxu0 0.0
    %3299 = vmatpush1.msra.mxu0 0.0
    %3300 = vmatprep.subr.mxu0 0.0
    %3301 = vmatpush1.msra.mxu0 0.0
    %3302 = vmatprep.subr.mxu0 0.0
    %3303 = vmatpush1.msra.mxu0 0.0
    %3304 = vmatprep.subr.mxu0 0.0
    %3305 = vmatpush1.msra.mxu0 0.0
    %3306 = vmatprep.subr.mxu0 0.0
    %3307 = vmatpush1.msra.mxu0 0.0
    %3308 = vmatprep.subr.mxu0 0.0
    %3309 = vmatpush1.msra.mxu0 0.0
    %3310 = vmatprep.subr.mxu0 0.0
    %3311 = vmatpush1.msra.mxu0 0.0
    %3312 = vmatprep.subr.mxu0 0.0
    %3313 = vmatpush1.msra.mxu0 0.0
    %3314 = vmatprep.subr.mxu0 0.0
    %3315 = vmatpush1.msra.mxu0 0.0
    %3316 = vmatprep.subr.mxu0 0.0
    %3317 = vmatpush1.msra.mxu0 0.0
    %3318 = vmatprep.subr.mxu0 0.0
    %3319 = vmatpush1.msra.mxu0 0.0
    %3320 = vmatprep.subr.mxu0 0.0
    %3321 = vmatpush1.msra.mxu0 0.0
    %3322 = vmatprep.subr.mxu0 0.0
    %3323 = vmatpush1.msra.mxu0 0.0
    %3324 = vmatprep.subr.mxu0 0.0
    %3325 = vmatpush1.msra.mxu0 0.0
    %3326 = vmatprep.subr.mxu0 0.0
    %3327 = vmatpush1.msra.mxu0 0.0
    %3328 = vmatprep.subr.mxu0 0.0
    %3329 = vmatpush1.msra.mxu0 0.0
    %3330 = vmatprep.subr.mxu0 0.0
    %3331 = vmatpush1.msra.mxu0 0.0
    %3332 = vmatprep.subr.mxu0 0.0
    %3333 = vmatpush1.msra.mxu0 0.0
    %3334 = vmatprep.subr.mxu0 0.0
    %3335 = vmatpush1.msra.mxu0 0.0
    %3336 = vmatprep.subr.mxu0 0.0
    %3337 = vmatpush1.msra.mxu0 0.0
    %3338 = vmatprep.subr.mxu0 0.0
    %3339 = vmatpush1.msra.mxu0 0.0
    %3340 = vmatprep.subr.mxu0 0.0
    %3341 = vmatpush1.msra.mxu0 0.0
    %3342 = vmatprep.subr.mxu0 0.0
    %3343 = vmatpush1.msra.mxu0 0.0
    %3344 = vmatprep.subr.mxu0 0.0
    %3345 = vmatpush1.msra.mxu0 0.0
    %3346 = vmatprep.subr.mxu0 0.0
    %3347 = vmatpush1.msra.mxu0 0.0
    %3348 = vmatprep.subr.mxu0 0.0
    %3349 = vmatpush1.msra.mxu0 0.0
    %3350 = vmatprep.subr.mxu0 0.0
    %3351 = vmatpush1.msra.mxu0 0.0
    %3352 = vmatprep.subr.mxu0 0.0
    %3353 = vmatpush1.msra.mxu0 0.0
    %3354 = vmatprep.mubr.f32.mxu0 0.0
    %3355 = vmatmul.mubr.f32.gmra.mrb[0].mxu0 %v3285
    %v3356 = vpop.f32.mrb[0].mxu0
    %v3357 = vadd.f32 0.0, %v3356
    %v3358 = vpop.f32.mrb[0].mxu0
    %3359 = vmatprep.mubr.f32.mxu0 0.0
    %3360 = vmatmul.mubr.f32.gmra.mrb[0].mxu0 %v3288
    %v3361 = vpop.f32.mrb[0].mxu0
    %v3362 = vadd.f32 0.0, %v3361
    %v3363 = vpop.f32.mrb[0].mxu0
    %3364 = vdwg.mxu0
    %3365 = vrot.lane.b32.xlu0 %v2543, 112
    %v3366 = vpop.permute.xlu0 %3365
    %3367 = vrot.lane.b32.xlu0 %v2548, 112
    %v3368 = vpop.permute.xlu0 %3367
    %3369 = vrot.lane.b32.xlu0 %v2543, 80
    %v3370 = vpop.permute.xlu0 %3369
    %3371 = vrot.lane.b32.xlu0 %v2548, 80
    %v3372 = vpop.permute.xlu0 %3371
    %v3373 = vsel %vm310, %v3366, 0
    %v3375 = vsel %vm310, %v3368, 0
    %v3377 = vsel %vm310, %v3370, 0
    %v3379 = vsel %vm310, %v3372, 0
    %3381 = vmatprep.subr.mxu0 0.0
    %3382 = vmatpush1.xpose.msra.mxu0 %v3377
    %3383 = vmatprep.subr.mxu0 0.0
    %3384 = vmatpush1.xpose.msra.mxu0 %v3379
    %3385 = vmatprep.subr.mxu0 0.0
    %3386 = vmatpush1.xpose.msra.mxu0 0.0
    %3387 = vmatprep.subr.mxu0 0.0
    %3388 = vmatpush1.xpose.msra.mxu0 0.0
    %3389 = vmatprep.subr.mxu0 0.0
    %3390 = vmatpush1.xpose.msra.mxu0 0.0
    %3391 = vmatprep.subr.mxu0 0.0
    %3392 = vmatpush1.xpose.msra.mxu0 0.0
    %3393 = vmatprep.subr.mxu0 0.0
    %3394 = vmatpush1.xpose.msra.mxu0 0.0
    %3395 = vmatprep.subr.mxu0 0.0
    %3396 = vmatpush1.xpose.msra.mxu0 0.0
    %3397 = vmatprep.subr.mxu0 0.0
    %3398 = vmatpush1.xpose.msra.mxu0 0.0
    %3399 = vmatprep.subr.mxu0 0.0
    %3400 = vmatpush1.xpose.msra.mxu0 0.0
    %3401 = vmatprep.subr.mxu0 0.0
    %3402 = vmatpush1.xpose.msra.mxu0 0.0
    %3403 = vmatprep.subr.mxu0 0.0
    %3404 = vmatpush1.xpose.msra.mxu0 0.0
    %3405 = vmatprep.subr.mxu0 0.0
    %3406 = vmatpush1.xpose.msra.mxu0 0.0
    %3407 = vmatprep.subr.mxu0 0.0
    %3408 = vmatpush1.xpose.msra.mxu0 0.0
    %3409 = vmatprep.subr.mxu0 0.0
    %3410 = vmatpush1.xpose.msra.mxu0 0.0
    %3411 = vmatprep.subr.mxu0 0.0
    %3412 = vmatpush1.xpose.msra.mxu0 0.0
    %3413 = vmatprep.subr.mxu0 0.0
    %3414 = vmatpush1.xpose.msra.mxu0 0.0
    %3415 = vmatprep.subr.mxu0 0.0
    %3416 = vmatpush1.xpose.msra.mxu0 0.0
    %3417 = vmatprep.subr.mxu0 0.0
    %3418 = vmatpush1.xpose.msra.mxu0 0.0
    %3419 = vmatprep.subr.mxu0 0.0
    %3420 = vmatpush1.xpose.msra.mxu0 0.0
    %3421 = vmatprep.subr.mxu0 0.0
    %3422 = vmatpush1.xpose.msra.mxu0 0.0
    %3423 = vmatprep.subr.mxu0 0.0
    %3424 = vmatpush1.xpose.msra.mxu0 0.0
    %3425 = vmatprep.subr.mxu0 0.0
    %3426 = vmatpush1.xpose.msra.mxu0 0.0
    %3427 = vmatprep.subr.mxu0 0.0
    %3428 = vmatpush1.xpose.msra.mxu0 0.0
    %3429 = vmatprep.subr.mxu0 0.0
    %3430 = vmatpush1.xpose.msra.mxu0 0.0
    %3431 = vmatprep.subr.mxu0 0.0
    %3432 = vmatpush1.xpose.msra.mxu0 0.0
    %3433 = vmatprep.subr.mxu0 0.0
    %3434 = vmatpush1.xpose.msra.mxu0 0.0
    %3435 = vmatprep.subr.mxu0 0.0
    %3436 = vmatpush1.xpose.msra.mxu0 0.0
    %3437 = vmatprep.subr.mxu0 0.0
    %3438 = vmatpush1.xpose.msra.mxu0 0.0
    %3439 = vmatprep.subr.mxu0 0.0
    %3440 = vmatpush1.xpose.msra.mxu0 0.0
    %3441 = vmatprep.subr.mxu0 0.0
    %3442 = vmatpush1.xpose.msra.mxu0 0.0
    %3443 = vmatprep.subr.mxu0 0.0
    %3444 = vmatpush1.xpose.msra.mxu0 0.0
    %3445 = vmatprep.mubr.f32.mxu0 0.0
    %3446 = vmatmul.mubr.f32.gmra.mrb[0].mxu0 %v3373
    %v3447 = vpop.f32.mrb[0].mxu0
    %v3448 = vadd.f32 0.0, %v3447
    %v3449 = vpop.f32.mrb[0].mxu0
    %3450 = vmatprep.mubr.f32.mxu0 0.0
    %3451 = vmatmul.mubr.f32.gmra.mrb[0].mxu0 %v3375
    %v3452 = vpop.f32.mrb[0].mxu0
    %v3453 = vadd.f32 0.0, %v3452
    %v3454 = vpop.f32.mrb[0].mxu0
    %3455 = vdwg.mxu0
    %3456 = vrot.lane.b32.xlu0 %v2553, 112
    %v3457 = vpop.permute.xlu0 %3456
    %3458 = vrot.lane.b32.xlu0 %v2558, 112
    %v3459 = vpop.permute.xlu0 %3458
    %3460 = vrot.lane.b32.xlu0 %v2553, 80
    %v3461 = vpop.permute.xlu0 %3460
    %3462 = vrot.lane.b32.xlu0 %v2558, 80
    %v3463 = vpop.permute.xlu0 %3462
    %v3464 = vsel %vm310, %v3457, 0
    %v3466 = vsel %vm310, %v3459, 0
    %v3468 = vsel %vm310, %v3461, 0
    %v3470 = vsel %vm310, %v3463, 0
    %3472 = vmatprep.subr.mxu0 0.0
    %3473 = vmatpush1.xpose.msra.mxu0 %v3468
    %3474 = vmatprep.subr.mxu0 0.0
    %3475 = vmatpush1.xpose.msra.mxu0 %v3470
    %3476 = vmatprep.subr.mxu0 0.0
    %3477 = vmatpush1.xpose.msra.mxu0 0.0
    %3478 = vmatprep.subr.mxu0 0.0
    %3479 = vmatpush1.xpose.msra.mxu0 0.0
    %3480 = vmatprep.subr.mxu0 0.0
    %3481 = vmatpush1.xpose.msra.mxu0 0.0
    %3482 = vmatprep.subr.mxu0 0.0
    %3483 = vmatpush1.xpose.msra.mxu0 0.0
    %3484 = vmatprep.subr.mxu0 0.0
    %3485 = vmatpush1.xpose.msra.mxu0 0.0
    %3486 = vmatprep.subr.mxu0 0.0
    %3487 = vmatpush1.xpose.msra.mxu0 0.0
    %3488 = vmatprep.subr.mxu0 0.0
    %3489 = vmatpush1.xpose.msra.mxu0 0.0
    %3490 = vmatprep.subr.mxu0 0.0
    %3491 = vmatpush1.xpose.msra.mxu0 0.0
    %3492 = vmatprep.subr.mxu0 0.0
    %3493 = vmatpush1.xpose.msra.mxu0 0.0
    %3494 = vmatprep.subr.mxu0 0.0
    %3495 = vmatpush1.xpose.msra.mxu0 0.0
    %3496 = vmatprep.subr.mxu0 0.0
    %3497 = vmatpush1.xpose.msra.mxu0 0.0
    %3498 = vmatprep.subr.mxu0 0.0
    %3499 = vmatpush1.xpose.msra.mxu0 0.0
    %3500 = vmatprep.subr.mxu0 0.0
    %3501 = vmatpush1.xpose.msra.mxu0 0.0
    %3502 = vmatprep.subr.mxu0 0.0
    %3503 = vmatpush1.xpose.msra.mxu0 0.0
    %3504 = vmatprep.subr.mxu0 0.0
    %3505 = vmatpush1.xpose.msra.mxu0 0.0
    %3506 = vmatprep.subr.mxu0 0.0
    %3507 = vmatpush1.xpose.msra.mxu0 0.0
    %3508 = vmatprep.subr.mxu0 0.0
    %3509 = vmatpush1.xpose.msra.mxu0 0.0
    %3510 = vmatprep.subr.mxu0 0.0
    %3511 = vmatpush1.xpose.msra.mxu0 0.0
    %3512 = vmatprep.subr.mxu0 0.0
    %3513 = vmatpush1.xpose.msra.mxu0 0.0
    %3514 = vmatprep.subr.mxu0 0.0
    %3515 = vmatpush1.xpose.msra.mxu0 0.0
    %3516 = vmatprep.subr.mxu0 0.0
    %3517 = vmatpush1.xpose.msra.mxu0 0.0
    %3518 = vmatprep.subr.mxu0 0.0
    %3519 = vmatpush1.xpose.msra.mxu0 0.0
    %3520 = vmatprep.subr.mxu0 0.0
    %3521 = vmatpush1.xpose.msra.mxu0 0.0
    %3522 = vmatprep.subr.mxu0 0.0
    %3523 = vmatpush1.xpose.msra.mxu0 0.0
    %3524 = vmatprep.subr.mxu0 0.0
    %3525 = vmatpush1.xpose.msra.mxu0 0.0
    %3526 = vmatprep.subr.mxu0 0.0
    %3527 = vmatpush1.xpose.msra.mxu0 0.0
    %3528 = vmatprep.subr.mxu0 0.0
    %3529 = vmatpush1.xpose.msra.mxu0 0.0
    %3530 = vmatprep.subr.mxu0 0.0
    %3531 = vmatpush1.xpose.msra.mxu0 0.0
    %3532 = vmatprep.subr.mxu0 0.0
    %3533 = vmatpush1.xpose.msra.mxu0 0.0
    %3534 = vmatprep.subr.mxu0 0.0
    %3535 = vmatpush1.xpose.msra.mxu0 0.0
    %3536 = vmatprep.mubr.f32.mxu0 0.0
    %3537 = vmatmul.mubr.f32.gmra.mrb[0].mxu0 %v3464
    %v3538 = vpop.f32.mrb[0].mxu0
    %v3539 = vadd.f32 0.0, %v3538
    %v3540 = vpop.f32.mrb[0].mxu0
    %3541 = vmatprep.mubr.f32.mxu0 0.0
    %3542 = vmatmul.mubr.f32.gmra.mrb[0].mxu0 %v3466
    %v3543 = vpop.f32.mrb[0].mxu0
    %v3544 = vadd.f32 0.0, %v3543
    %v3545 = vpop.f32.mrb[0].mxu0
    %3546 = vdwg.mxu0
    %v3547 = vmul.f32 %v3448, 0.35355338
    %v3548 = vmul.f32 %v3453, 0.35355338
    %v3549 = vmul.f32 %v3539, 0.35355338
    %v3550 = vmul.f32 %v3544, 0.35355338
    %v3551 = vsel %vm487, %v3547, -inf
    %3552 = vmax.xlane.f32.xlu0 %v3551
    %v3553 = vpop.xlane.xlu0 %3552
    %v3554 = vsel %vm487, %v3548, -inf
    %3555 = vmax.xlane.f32.xlu0 %v3554
    %v3556 = vpop.xlane.xlu0 %3555
    %v3557 = vsel %vm487, %v3549, -inf
    %3558 = vmax.xlane.f32.xlu0 %v3557
    %v3559 = vpop.xlane.xlu0 %3558
    %v3560 = vsel %vm487, %v3550, -inf
    %3561 = vmax.xlane.f32.xlu0 %v3560
    %v3562 = vpop.xlane.xlu0 %3561
    %v3563 = vsub.f32 %v3547, %v3553
    %v3564 = vsub.f32 %v3548, %v3556
    %v3565 = vsub.f32 %v3549, %v3559
    %v3566 = vsub.f32 %v3550, %v3562
    %v3567 = vmul.f32 %v3563, 1.442695
    %v3568 = vpow.pop %v3567
    %v3569 = vmul.f32 %v3564, 1.442695
    %v3570 = vpow.pop %v3569
    %v3571 = vmul.f32 %v3565, 1.442695
    %v3572 = vpow.pop %v3571
    %v3573 = vmul.f32 %v3566, 1.442695
    %v3574 = vpow.pop %v3573
    %v3575 = vsel %vm487, %v3568, 0.0
    %3576 = vadd.xlane.f32.xlu0 %v3575
    %v3577 = vpop.xlane.xlu0 %3576
    %v3578 = vsel %vm487, %v3570, 0.0
    %3579 = vadd.xlane.f32.xlu0 %v3578
    %v3580 = vpop.xlane.xlu0 %3579
    %v3581 = vsel %vm487, %v3572, 0.0
    %3582 = vadd.xlane.f32.xlu0 %v3581
    %v3583 = vpop.xlane.xlu0 %3582
    %v3584 = vsel %vm487, %v3574, 0.0
    %3585 = vadd.xlane.f32.xlu0 %v3584
    %v3586 = vpop.xlane.xlu0 %3585
    %v3587 = vrcp.pop %v3577
    %v3588 = vmul.f32 %v3568, %v3587
    %v3589 = vrcp.pop %v3580
    %v3590 = vmul.f32 %v3570, %v3589
    %v3591 = vrcp.pop %v3583
    %v3592 = vmul.f32 %v3572, %v3591
    %v3593 = vrcp.pop %v3586
    %v3594 = vmul.f32 %v3574, %v3593
    %3595 = vrot.lane.b32.xlu0 %v2543, 48
    %v3596 = vpop.permute.xlu0 %3595
    %3597 = vrot.lane.b32.xlu0 %v2548, 48
    %v3598 = vpop.permute.xlu0 %3597
    %v3602 = vsel %vm487, %v3588, 0
    %v3605 = vsel %vm487, %v3590, 0
    %3607 = vmatprep.subr.mxu0 0.0
    %3608 = vmatpush1.msra.mxu0 %v3596
    %3609 = vmatprep.subr.mxu0 0.0
    %3610 = vmatpush1.msra.mxu0 %v3598
    %3611 = vmatprep.subr.mxu0 0.0
    %3612 = vmatpush1.msra.mxu0 0.0
    %3613 = vmatprep.subr.mxu0 0.0
    %3614 = vmatpush1.msra.mxu0 0.0
    %3615 = vmatprep.subr.mxu0 0.0
    %3616 = vmatpush1.msra.mxu0 0.0
    %3617 = vmatprep.subr.mxu0 0.0
    %3618 = vmatpush1.msra.mxu0 0.0
    %3619 = vmatprep.subr.mxu0 0.0
    %3620 = vmatpush1.msra.mxu0 0.0
    %3621 = vmatprep.subr.mxu0 0.0
    %3622 = vmatpush1.msra.mxu0 0.0
    %3623 = vmatprep.subr.mxu0 0.0
    %3624 = vmatpush1.msra.mxu0 0.0
    %3625 = vmatprep.subr.mxu0 0.0
    %3626 = vmatpush1.msra.mxu0 0.0
    %3627 = vmatprep.subr.mxu0 0.0
    %3628 = vmatpush1.msra.mxu0 0.0
    %3629 = vmatprep.subr.mxu0 0.0
    %3630 = vmatpush1.msra.mxu0 0.0
    %3631 = vmatprep.subr.mxu0 0.0
    %3632 = vmatpush1.msra.mxu0 0.0
    %3633 = vmatprep.subr.mxu0 0.0
    %3634 = vmatpush1.msra.mxu0 0.0
    %3635 = vmatprep.subr.mxu0 0.0
    %3636 = vmatpush1.msra.mxu0 0.0
    %3637 = vmatprep.subr.mxu0 0.0
    %3638 = vmatpush1.msra.mxu0 0.0
    %3639 = vmatprep.subr.mxu0 0.0
    %3640 = vmatpush1.msra.mxu0 0.0
    %3641 = vmatprep.subr.mxu0 0.0
    %3642 = vmatpush1.msra.mxu0 0.0
    %3643 = vmatprep.subr.mxu0 0.0
    %3644 = vmatpush1.msra.mxu0 0.0
    %3645 = vmatprep.subr.mxu0 0.0
    %3646 = vmatpush1.msra.mxu0 0.0
    %3647 = vmatprep.subr.mxu0 0.0
    %3648 = vmatpush1.msra.mxu0 0.0
    %3649 = vmatprep.subr.mxu0 0.0
    %3650 = vmatpush1.msra.mxu0 0.0
    %3651 = vmatprep.subr.mxu0 0.0
    %3652 = vmatpush1.msra.mxu0 0.0
    %3653 = vmatprep.subr.mxu0 0.0
    %3654 = vmatpush1.msra.mxu0 0.0
    %3655 = vmatprep.subr.mxu0 0.0
    %3656 = vmatpush1.msra.mxu0 0.0
    %3657 = vmatprep.subr.mxu0 0.0
    %3658 = vmatpush1.msra.mxu0 0.0
    %3659 = vmatprep.subr.mxu0 0.0
    %3660 = vmatpush1.msra.mxu0 0.0
    %3661 = vmatprep.subr.mxu0 0.0
    %3662 = vmatpush1.msra.mxu0 0.0
    %3663 = vmatprep.subr.mxu0 0.0
    %3664 = vmatpush1.msra.mxu0 0.0
    %3665 = vmatprep.subr.mxu0 0.0
    %3666 = vmatpush1.msra.mxu0 0.0
    %3667 = vmatprep.subr.mxu0 0.0
    %3668 = vmatpush1.msra.mxu0 0.0
    %3669 = vmatprep.subr.mxu0 0.0
    %3670 = vmatpush1.msra.mxu0 0.0
    %3671 = vmatprep.mubr.f32.mxu0 0.0
    %3672 = vmatmul.mubr.f32.gmra.mrb[0].mxu0 %v3602
    %v3673 = vpop.f32.mrb[0].mxu0
    %v3674 = vadd.f32 0.0, %v3673
    %v3675 = vpop.f32.mrb[0].mxu0
    %3676 = vmatprep.mubr.f32.mxu0 0.0
    %3677 = vmatmul.mubr.f32.gmra.mrb[0].mxu0 %v3605
    %v3678 = vpop.f32.mrb[0].mxu0
    %v3679 = vadd.f32 0.0, %v3678
    %v3680 = vpop.f32.mrb[0].mxu0
    %3681 = vdwg.mxu0
    %3682 = vrot.lane.b32.xlu0 %v2553, 48
    %v3683 = vpop.permute.xlu0 %3682
    %3684 = vrot.lane.b32.xlu0 %v2558, 48
    %v3685 = vpop.permute.xlu0 %3684
    %v3689 = vsel %vm487, %v3592, 0
    %v3692 = vsel %vm487, %v3594, 0
    %3694 = vmatprep.subr.mxu0 0.0
    %3695 = vmatpush1.msra.mxu0 %v3683
    %3696 = vmatprep.subr.mxu0 0.0
    %3697 = vmatpush1.msra.mxu0 %v3685
    %3698 = vmatprep.subr.mxu0 0.0
    %3699 = vmatpush1.msra.mxu0 0.0
    %3700 = vmatprep.subr.mxu0 0.0
    %3701 = vmatpush1.msra.mxu0 0.0
    %3702 = vmatprep.subr.mxu0 0.0
    %3703 = vmatpush1.msra.mxu0 0.0
    %3704 = vmatprep.subr.mxu0 0.0
    %3705 = vmatpush1.msra.mxu0 0.0
    %3706 = vmatprep.subr.mxu0 0.0
    %3707 = vmatpush1.msra.mxu0 0.0
    %3708 = vmatprep.subr.mxu0 0.0
    %3709 = vmatpush1.msra.mxu0 0.0
    %3710 = vmatprep.subr.mxu0 0.0
    %3711 = vmatpush1.msra.mxu0 0.0
    %3712 = vmatprep.subr.mxu0 0.0
    %3713 = vmatpush1.msra.mxu0 0.0
    %3714 = vmatprep.subr.mxu0 0.0
    %3715 = vmatpush1.msra.mxu0 0.0
    %3716 = vmatprep.subr.mxu0 0.0
    %3717 = vmatpush1.msra.mxu0 0.0
    %3718 = vmatprep.subr.mxu0 0.0
    %3719 = vmatpush1.msra.mxu0 0.0
    %3720 = vmatprep.subr.mxu0 0.0
    %3721 = vmatpush1.msra.mxu0 0.0
    %3722 = vmatprep.subr.mxu0 0.0
    %3723 = vmatpush1.msra.mxu0 0.0
    %3724 = vmatprep.subr.mxu0 0.0
    %3725 = vmatpush1.msra.mxu0 0.0
    %3726 = vmatprep.subr.mxu0 0.0
    %3727 = vmatpush1.msra.mxu0 0.0
    %3728 = vmatprep.subr.mxu0 0.0
    %3729 = vmatpush1.msra.mxu0 0.0
    %3730 = vmatprep.subr.mxu0 0.0
    %3731 = vmatpush1.msra.mxu0 0.0
    %3732 = vmatprep.subr.mxu0 0.0
    %3733 = vmatpush1.msra.mxu0 0.0
    %3734 = vmatprep.subr.mxu0 0.0
    %3735 = vmatpush1.msra.mxu0 0.0
    %3736 = vmatprep.subr.mxu0 0.0
    %3737 = vmatpush1.msra.mxu0 0.0
    %3738 = vmatprep.subr.mxu0 0.0
    %3739 = vmatpush1.msra.mxu0 0.0
    %3740 = vmatprep.subr.mxu0 0.0
    %3741 = vmatpush1.msra.mxu0 0.0
    %3742 = vmatprep.subr.mxu0 0.0
    %3743 = vmatpush1.msra.mxu0 0.0
    %3744 = vmatprep.subr.mxu0 0.0
    %3745 = vmatpush1.msra.mxu0 0.0
    %3746 = vmatprep.subr.mxu0 0.0
    %3747 = vmatpush1.msra.mxu0 0.0
    %3748 = vmatprep.subr.mxu0 0.0
    %3749 = vmatpush1.msra.mxu0 0.0
    %3750 = vmatprep.subr.mxu0 0.0
    %3751 = vmatpush1.msra.mxu0 0.0
    %3752 = vmatprep.subr.mxu0 0.0
    %3753 = vmatpush1.msra.mxu0 0.0
    %3754 = vmatprep.subr.mxu0 0.0
    %3755 = vmatpush1.msra.mxu0 0.0
    %3756 = vmatprep.subr.mxu0 0.0
    %3757 = vmatpush1.msra.mxu0 0.0
    %3758 = vmatprep.mubr.f32.mxu0 0.0
    %3759 = vmatmul.mubr.f32.gmra.mrb[0].mxu0 %v3689
    %v3760 = vpop.f32.mrb[0].mxu0
    %v3761 = vadd.f32 0.0, %v3760
    %v3762 = vpop.f32.mrb[0].mxu0
    %3763 = vmatprep.mubr.f32.mxu0 0.0
    %3764 = vmatmul.mubr.f32.gmra.mrb[0].mxu0 %v3692
    %v3765 = vpop.f32.mrb[0].mxu0
    %v3766 = vadd.f32 0.0, %v3765
    %v3767 = vpop.f32.mrb[0].mxu0
    %3768 = vdwg.mxu0
    %3769 = vrot.lane.b32.xlu0 %v2543, 104
    %v3770 = vpop.permute.xlu0 %3769
    %3771 = vrot.lane.b32.xlu0 %v2548, 104
    %v3772 = vpop.permute.xlu0 %3771
    %3773 = vrot.lane.b32.xlu0 %v2543, 72
    %v3774 = vpop.permute.xlu0 %3773
    %3775 = vrot.lane.b32.xlu0 %v2548, 72
    %v3776 = vpop.permute.xlu0 %3775
    %v3777 = vsel %vm310, %v3770, 0
    %v3779 = vsel %vm310, %v3772, 0
    %v3781 = vsel %vm310, %v3774, 0
    %v3783 = vsel %vm310, %v3776, 0
    %3785 = vmatprep.subr.mxu0 0.0
    %3786 = vmatpush1.xpose.msra.mxu0 %v3781
    %3787 = vmatprep.subr.mxu0 0.0
    %3788 = vmatpush1.xpose.msra.mxu0 %v3783
    %3789 = vmatprep.subr.mxu0 0.0
    %3790 = vmatpush1.xpose.msra.mxu0 0.0
    %3791 = vmatprep.subr.mxu0 0.0
    %3792 = vmatpush1.xpose.msra.mxu0 0.0
    %3793 = vmatprep.subr.mxu0 0.0
    %3794 = vmatpush1.xpose.msra.mxu0 0.0
    %3795 = vmatprep.subr.mxu0 0.0
    %3796 = vmatpush1.xpose.msra.mxu0 0.0
    %3797 = vmatprep.subr.mxu0 0.0
    %3798 = vmatpush1.xpose.msra.mxu0 0.0
    %3799 = vmatprep.subr.mxu0 0.0
    %3800 = vmatpush1.xpose.msra.mxu0 0.0
    %3801 = vmatprep.subr.mxu0 0.0
    %3802 = vmatpush1.xpose.msra.mxu0 0.0
    %3803 = vmatprep.subr.mxu0 0.0
    %3804 = vmatpush1.xpose.msra.mxu0 0.0
    %3805 = vmatprep.subr.mxu0 0.0
    %3806 = vmatpush1.xpose.msra.mxu0 0.0
    %3807 = vmatprep.subr.mxu0 0.0
    %3808 = vmatpush1.xpose.msra.mxu0 0.0
    %3809 = vmatprep.subr.mxu0 0.0
    %3810 = vmatpush1.xpose.msra.mxu0 0.0
    %3811 = vmatprep.subr.mxu0 0.0
    %3812 = vmatpush1.xpose.msra.mxu0 0.0
    %3813 = vmatprep.subr.mxu0 0.0
    %3814 = vmatpush1.xpose.msra.mxu0 0.0
    %3815 = vmatprep.subr.mxu0 0.0
    %3816 = vmatpush1.xpose.msra.mxu0 0.0
    %3817 = vmatprep.subr.mxu0 0.0
    %3818 = vmatpush1.xpose.msra.mxu0 0.0
    %3819 = vmatprep.subr.mxu0 0.0
    %3820 = vmatpush1.xpose.msra.mxu0 0.0
    %3821 = vmatprep.subr.mxu0 0.0
    %3822 = vmatpush1.xpose.msra.mxu0 0.0
    %3823 = vmatprep.subr.mxu0 0.0
    %3824 = vmatpush1.xpose.msra.mxu0 0.0
    %3825 = vmatprep.subr.mxu0 0.0
    %3826 = vmatpush1.xpose.msra.mxu0 0.0
    %3827 = vmatprep.subr.mxu0 0.0
    %3828 = vmatpush1.xpose.msra.mxu0 0.0
    %3829 = vmatprep.subr.mxu0 0.0
    %3830 = vmatpush1.xpose.msra.mxu0 0.0
    %3831 = vmatprep.subr.mxu0 0.0
    %3832 = vmatpush1.xpose.msra.mxu0 0.0
    %3833 = vmatprep.subr.mxu0 0.0
    %3834 = vmatpush1.xpose.msra.mxu0 0.0
    %3835 = vmatprep.subr.mxu0 0.0
    %3836 = vmatpush1.xpose.msra.mxu0 0.0
    %3837 = vmatprep.subr.mxu0 0.0
    %3838 = vmatpush1.xpose.msra.mxu0 0.0
    %3839 = vmatprep.subr.mxu0 0.0
    %3840 = vmatpush1.xpose.msra.mxu0 0.0
    %3841 = vmatprep.subr.mxu0 0.0
    %3842 = vmatpush1.xpose.msra.mxu0 0.0
    %3843 = vmatprep.subr.mxu0 0.0
    %3844 = vmatpush1.xpose.msra.mxu0 0.0
    %3845 = vmatprep.subr.mxu0 0.0
    %3846 = vmatpush1.xpose.msra.mxu0 0.0
    %3847 = vmatprep.subr.mxu0 0.0
    %3848 = vmatpush1.xpose.msra.mxu0 0.0
    %3849 = vmatprep.mubr.f32.mxu0 0.0
    %3850 = vmatmul.mubr.f32.gmra.mrb[0].mxu0 %v3777
    %v3851 = vpop.f32.mrb[0].mxu0
    %v3852 = vadd.f32 0.0, %v3851
    %v3853 = vpop.f32.mrb[0].mxu0
    %3854 = vmatprep.mubr.f32.mxu0 0.0
    %3855 = vmatmul.mubr.f32.gmra.mrb[0].mxu0 %v3779
    %v3856 = vpop.f32.mrb[0].mxu0
    %v3857 = vadd.f32 0.0, %v3856
    %v3858 = vpop.f32.mrb[0].mxu0
    %3859 = vdwg.mxu0
    %3860 = vrot.lane.b32.xlu0 %v2553, 104
    %v3861 = vpop.permute.xlu0 %3860
    %3862 = vrot.lane.b32.xlu0 %v2558, 104
    %v3863 = vpop.permute.xlu0 %3862
    %3864 = vrot.lane.b32.xlu0 %v2553, 72
    %v3865 = vpop.permute.xlu0 %3864
    %3866 = vrot.lane.b32.xlu0 %v2558, 72
    %v3867 = vpop.permute.xlu0 %3866
    %v3868 = vsel %vm310, %v3861, 0
    %v3870 = vsel %vm310, %v3863, 0
    %v3872 = vsel %vm310, %v3865, 0
    %v3874 = vsel %vm310, %v3867, 0
    %3876 = vmatprep.subr.mxu0 0.0
    %3877 = vmatpush1.xpose.msra.mxu0 %v3872
    %3878 = vmatprep.subr.mxu0 0.0
    %3879 = vmatpush1.xpose.msra.mxu0 %v3874
    %3880 = vmatprep.subr.mxu0 0.0
    %3881 = vmatpush1.xpose.msra.mxu0 0.0
    %3882 = vmatprep.subr.mxu0 0.0
    %3883 = vmatpush1.xpose.msra.mxu0 0.0
    %3884 = vmatprep.subr.mxu0 0.0
    %3885 = vmatpush1.xpose.msra.mxu0 0.0
    %3886 = vmatprep.subr.mxu0 0.0
    %3887 = vmatpush1.xpose.msra.mxu0 0.0
    %3888 = vmatprep.subr.mxu0 0.0
    %3889 = vmatpush1.xpose.msra.mxu0 0.0
    %3890 = vmatprep.subr.mxu0 0.0
    %3891 = vmatpush1.xpose.msra.mxu0 0.0
    %3892 = vmatprep.subr.mxu0 0.0
    %3893 = vmatpush1.xpose.msra.mxu0 0.0
    %3894 = vmatprep.subr.mxu0 0.0
    %3895 = vmatpush1.xpose.msra.mxu0 0.0
    %3896 = vmatprep.subr.mxu0 0.0
    %3897 = vmatpush1.xpose.msra.mxu0 0.0
    %3898 = vmatprep.subr.mxu0 0.0
    %3899 = vmatpush1.xpose.msra.mxu0 0.0
    %3900 = vmatprep.subr.mxu0 0.0
    %3901 = vmatpush1.xpose.msra.mxu0 0.0
    %3902 = vmatprep.subr.mxu0 0.0
    %3903 = vmatpush1.xpose.msra.mxu0 0.0
    %3904 = vmatprep.subr.mxu0 0.0
    %3905 = vmatpush1.xpose.msra.mxu0 0.0
    %3906 = vmatprep.subr.mxu0 0.0
    %3907 = vmatpush1.xpose.msra.mxu0 0.0
    %3908 = vmatprep.subr.mxu0 0.0
    %3909 = vmatpush1.xpose.msra.mxu0 0.0
    %3910 = vmatprep.subr.mxu0 0.0
    %3911 = vmatpush1.xpose.msra.mxu0 0.0
    %3912 = vmatprep.subr.mxu0 0.0
    %3913 = vmatpush1.xpose.msra.mxu0 0.0
    %3914 = vmatprep.subr.mxu0 0.0
    %3915 = vmatpush1.xpose.msra.mxu0 0.0
    %3916 = vmatprep.subr.mxu0 0.0
    %3917 = vmatpush1.xpose.msra.mxu0 0.0
    %3918 = vmatprep.subr.mxu0 0.0
    %3919 = vmatpush1.xpose.msra.mxu0 0.0
    %3920 = vmatprep.subr.mxu0 0.0
    %3921 = vmatpush1.xpose.msra.mxu0 0.0
    %3922 = vmatprep.subr.mxu0 0.0
    %3923 = vmatpush1.xpose.msra.mxu0 0.0
    %3924 = vmatprep.subr.mxu0 0.0
    %3925 = vmatpush1.xpose.msra.mxu0 0.0
    %3926 = vmatprep.subr.mxu0 0.0
    %3927 = vmatpush1.xpose.msra.mxu0 0.0
    %3928 = vmatprep.subr.mxu0 0.0
    %3929 = vmatpush1.xpose.msra.mxu0 0.0
    %3930 = vmatprep.subr.mxu0 0.0
    %3931 = vmatpush1.xpose.msra.mxu0 0.0
    %3932 = vmatprep.subr.mxu0 0.0
    %3933 = vmatpush1.xpose.msra.mxu0 0.0
    %3934 = vmatprep.subr.mxu0 0.0
    %3935 = vmatpush1.xpose.msra.mxu0 0.0
    %3936 = vmatprep.subr.mxu0 0.0
    %3937 = vmatpush1.xpose.msra.mxu0 0.0
    %3938 = vmatprep.subr.mxu0 0.0
    %3939 = vmatpush1.xpose.msra.mxu0 0.0
    %3940 = vmatprep.mubr.f32.mxu0 0.0
    %3941 = vmatmul.mubr.f32.gmra.mrb[0].mxu0 %v3868
    %v3942 = vpop.f32.mrb[0].mxu0
    %v3943 = vadd.f32 0.0, %v3942
    %v3944 = vpop.f32.mrb[0].mxu0
    %3945 = vmatprep.mubr.f32.mxu0 0.0
    %3946 = vmatmul.mubr.f32.gmra.mrb[0].mxu0 %v3870
    %v3947 = vpop.f32.mrb[0].mxu0
    %v3948 = vadd.f32 0.0, %v3947
    %v3949 = vpop.f32.mrb[0].mxu0
    %3950 = vdwg.mxu0
    %v3951 = vmul.f32 %v3852, 0.35355338
    %v3952 = vmul.f32 %v3857, 0.35355338
    %v3953 = vmul.f32 %v3943, 0.35355338
    %v3954 = vmul.f32 %v3948, 0.35355338
    %v3955 = vsel %vm487, %v3951, -inf
    %3956 = vmax.xlane.f32.xlu0 %v3955
    %v3957 = vpop.xlane.xlu0 %3956
    %v3958 = vsel %vm487, %v3952, -inf
    %3959 = vmax.xlane.f32.xlu0 %v3958
    %v3960 = vpop.xlane.xlu0 %3959
    %v3961 = vsel %vm487, %v3953, -inf
    %3962 = vmax.xlane.f32.xlu0 %v3961
    %v3963 = vpop.xlane.xlu0 %3962
    %v3964 = vsel %vm487, %v3954, -inf
    %3965 = vmax.xlane.f32.xlu0 %v3964
    %v3966 = vpop.xlane.xlu0 %3965
    %v3967 = vsub.f32 %v3951, %v3957
    %v3968 = vsub.f32 %v3952, %v3960
    %v3969 = vsub.f32 %v3953, %v3963
    %v3970 = vsub.f32 %v3954, %v3966
    %v3971 = vmul.f32 %v3967, 1.442695
    %v3972 = vpow.pop %v3971
    %v3973 = vmul.f32 %v3968, 1.442695
    %v3974 = vpow.pop %v3973
    %v3975 = vmul.f32 %v3969, 1.442695
    %v3976 = vpow.pop %v3975
    %v3977 = vmul.f32 %v3970, 1.442695
    %v3978 = vpow.pop %v3977
    %v3979 = vsel %vm487, %v3972, 0.0
    %3980 = vadd.xlane.f32.xlu0 %v3979
    %v3981 = vpop.xlane.xlu0 %3980
    %v3982 = vsel %vm487, %v3974, 0.0
    %3983 = vadd.xlane.f32.xlu0 %v3982
    %v3984 = vpop.xlane.xlu0 %3983
    %v3985 = vsel %vm487, %v3976, 0.0
    %3986 = vadd.xlane.f32.xlu0 %v3985
    %v3987 = vpop.xlane.xlu0 %3986
    %v3988 = vsel %vm487, %v3978, 0.0
    %3989 = vadd.xlane.f32.xlu0 %v3988
    %v3990 = vpop.xlane.xlu0 %3989
    %v3991 = vrcp.pop %v3981
    %v3992 = vmul.f32 %v3972, %v3991
    %v3993 = vrcp.pop %v3984
    %v3994 = vmul.f32 %v3974, %v3993
    %v3995 = vrcp.pop %v3987
    %v3996 = vmul.f32 %v3976, %v3995
    %v3997 = vrcp.pop %v3990
    %v3998 = vmul.f32 %v3978, %v3997
    %3999 = vrot.lane.b32.xlu0 %v2543, 40
    %v4000 = vpop.permute.xlu0 %3999
    %4001 = vrot.lane.b32.xlu0 %v2548, 40
    %v4002 = vpop.permute.xlu0 %4001
    %v4006 = vsel %vm487, %v3992, 0
    %v4009 = vsel %vm487, %v3994, 0
    %4011 = vmatprep.subr.mxu0 0.0
    %4012 = vmatpush1.msra.mxu0 %v4000
    %4013 = vmatprep.subr.mxu0 0.0
    %4014 = vmatpush1.msra.mxu0 %v4002
    %4015 = vmatprep.subr.mxu0 0.0
    %4016 = vmatpush1.msra.mxu0 0.0
    %4017 = vmatprep.subr.mxu0 0.0
    %4018 = vmatpush1.msra.mxu0 0.0
    %4019 = vmatprep.subr.mxu0 0.0
    %4020 = vmatpush1.msra.mxu0 0.0
    %4021 = vmatprep.subr.mxu0 0.0
    %4022 = vmatpush1.msra.mxu0 0.0
    %4023 = vmatprep.subr.mxu0 0.0
    %4024 = vmatpush1.msra.mxu0 0.0
    %4025 = vmatprep.subr.mxu0 0.0
    %4026 = vmatpush1.msra.mxu0 0.0
    %4027 = vmatprep.subr.mxu0 0.0
    %4028 = vmatpush1.msra.mxu0 0.0
    %4029 = vmatprep.subr.mxu0 0.0
    %4030 = vmatpush1.msra.mxu0 0.0
    %4031 = vmatprep.subr.mxu0 0.0
    %4032 = vmatpush1.msra.mxu0 0.0
    %4033 = vmatprep.subr.mxu0 0.0
    %4034 = vmatpush1.msra.mxu0 0.0
    %4035 = vmatprep.subr.mxu0 0.0
    %4036 = vmatpush1.msra.mxu0 0.0
    %4037 = vmatprep.subr.mxu0 0.0
    %4038 = vmatpush1.msra.mxu0 0.0
    %4039 = vmatprep.subr.mxu0 0.0
    %4040 = vmatpush1.msra.mxu0 0.0
    %4041 = vmatprep.subr.mxu0 0.0
    %4042 = vmatpush1.msra.mxu0 0.0
    %4043 = vmatprep.subr.mxu0 0.0
    %4044 = vmatpush1.msra.mxu0 0.0
    %4045 = vmatprep.subr.mxu0 0.0
    %4046 = vmatpush1.msra.mxu0 0.0
    %4047 = vmatprep.subr.mxu0 0.0
    %4048 = vmatpush1.msra.mxu0 0.0
    %4049 = vmatprep.subr.mxu0 0.0
    %4050 = vmatpush1.msra.mxu0 0.0
    %4051 = vmatprep.subr.mxu0 0.0
    %4052 = vmatpush1.msra.mxu0 0.0
    %4053 = vmatprep.subr.mxu0 0.0
    %4054 = vmatpush1.msra.mxu0 0.0
    %4055 = vmatprep.subr.mxu0 0.0
    %4056 = vmatpush1.msra.mxu0 0.0
    %4057 = vmatprep.subr.mxu0 0.0
    %4058 = vmatpush1.msra.mxu0 0.0
    %4059 = vmatprep.subr.mxu0 0.0
    %4060 = vmatpush1.msra.mxu0 0.0
    %4061 = vmatprep.subr.mxu0 0.0
    %4062 = vmatpush1.msra.mxu0 0.0
    %4063 = vmatprep.subr.mxu0 0.0
    %4064 = vmatpush1.msra.mxu0 0.0
    %4065 = vmatprep.subr.mxu0 0.0
    %4066 = vmatpush1.msra.mxu0 0.0
    %4067 = vmatprep.subr.mxu0 0.0
    %4068 = vmatpush1.msra.mxu0 0.0
    %4069 = vmatprep.subr.mxu0 0.0
    %4070 = vmatpush1.msra.mxu0 0.0
    %4071 = vmatprep.subr.mxu0 0.0
    %4072 = vmatpush1.msra.mxu0 0.0
    %4073 = vmatprep.subr.mxu0 0.0
    %4074 = vmatpush1.msra.mxu0 0.0
    %4075 = vmatprep.mubr.f32.mxu0 0.0
    %4076 = vmatmul.mubr.f32.gmra.mrb[0].mxu0 %v4006
    %v4077 = vpop.f32.mrb[0].mxu0
    %v4078 = vadd.f32 0.0, %v4077
    %v4079 = vpop.f32.mrb[0].mxu0
    %4080 = vmatprep.mubr.f32.mxu0 0.0
    %4081 = vmatmul.mubr.f32.gmra.mrb[0].mxu0 %v4009
    %v4082 = vpop.f32.mrb[0].mxu0
    %v4083 = vadd.f32 0.0, %v4082
    %v4084 = vpop.f32.mrb[0].mxu0
    %4085 = vdwg.mxu0
    %4086 = vrot.lane.b32.xlu0 %v2553, 40
    %v4087 = vpop.permute.xlu0 %4086
    %4088 = vrot.lane.b32.xlu0 %v2558, 40
    %v4089 = vpop.permute.xlu0 %4088
    %v4093 = vsel %vm487, %v3996, 0
    %v4096 = vsel %vm487, %v3998, 0
    %4098 = vmatprep.subr.mxu0 0.0
    %4099 = vmatpush1.msra.mxu0 %v4087
    %4100 = vmatprep.subr.mxu0 0.0
    %4101 = vmatpush1.msra.mxu0 %v4089
    %4102 = vmatprep.subr.mxu0 0.0
    %4103 = vmatpush1.msra.mxu0 0.0
    %4104 = vmatprep.subr.mxu0 0.0
    %4105 = vmatpush1.msra.mxu0 0.0
    %4106 = vmatprep.subr.mxu0 0.0
    %4107 = vmatpush1.msra.mxu0 0.0
    %4108 = vmatprep.subr.mxu0 0.0
    %4109 = vmatpush1.msra.mxu0 0.0
    %4110 = vmatprep.subr.mxu0 0.0
    %4111 = vmatpush1.msra.mxu0 0.0
    %4112 = vmatprep.subr.mxu0 0.0
    %4113 = vmatpush1.msra.mxu0 0.0
    %4114 = vmatprep.subr.mxu0 0.0
    %4115 = vmatpush1.msra.mxu0 0.0
    %4116 = vmatprep.subr.mxu0 0.0
    %4117 = vmatpush1.msra.mxu0 0.0
    %4118 = vmatprep.subr.mxu0 0.0
    %4119 = vmatpush1.msra.mxu0 0.0
    %4120 = vmatprep.subr.mxu0 0.0
    %4121 = vmatpush1.msra.mxu0 0.0
    %4122 = vmatprep.subr.mxu0 0.0
    %4123 = vmatpush1.msra.mxu0 0.0
    %4124 = vmatprep.subr.mxu0 0.0
    %4125 = vmatpush1.msra.mxu0 0.0
    %4126 = vmatprep.subr.mxu0 0.0
    %4127 = vmatpush1.msra.mxu0 0.0
    %4128 = vmatprep.subr.mxu0 0.0
    %4129 = vmatpush1.msra.mxu0 0.0
    %4130 = vmatprep.subr.mxu0 0.0
    %4131 = vmatpush1.msra.mxu0 0.0
    %4132 = vmatprep.subr.mxu0 0.0
    %4133 = vmatpush1.msra.mxu0 0.0
    %4134 = vmatprep.subr.mxu0 0.0
    %4135 = vmatpush1.msra.mxu0 0.0
    %4136 = vmatprep.subr.mxu0 0.0
    %4137 = vmatpush1.msra.mxu0 0.0
    %4138 = vmatprep.subr.mxu0 0.0
    %4139 = vmatpush1.msra.mxu0 0.0
    %4140 = vmatprep.subr.mxu0 0.0
    %4141 = vmatpush1.msra.mxu0 0.0
    %4142 = vmatprep.subr.mxu0 0.0
    %4143 = vmatpush1.msra.mxu0 0.0
    %4144 = vmatprep.subr.mxu0 0.0
    %4145 = vmatpush1.msra.mxu0 0.0
    %4146 = vmatprep.subr.mxu0 0.0
    %4147 = vmatpush1.msra.mxu0 0.0
    %4148 = vmatprep.subr.mxu0 0.0
    %4149 = vmatpush1.msra.mxu0 0.0
    %4150 = vmatprep.subr.mxu0 0.0
    %4151 = vmatpush1.msra.mxu0 0.0
    %4152 = vmatprep.subr.mxu0 0.0
    %4153 = vmatpush1.msra.mxu0 0.0
    %4154 = vmatprep.subr.mxu0 0.0
    %4155 = vmatpush1.msra.mxu0 0.0
    %4156 = vmatprep.subr.mxu0 0.0
    %4157 = vmatpush1.msra.mxu0 0.0
    %4158 = vmatprep.subr.mxu0 0.0
    %4159 = vmatpush1.msra.mxu0 0.0
    %4160 = vmatprep.subr.mxu0 0.0
    %4161 = vmatpush1.msra.mxu0 0.0
    %4162 = vmatprep.mubr.f32.mxu0 0.0
    %4163 = vmatmul.mubr.f32.gmra.mrb[0].mxu0 %v4093
    %v4164 = vpop.f32.mrb[0].mxu0
    %v4165 = vadd.f32 0.0, %v4164
    %v4166 = vpop.f32.mrb[0].mxu0
    %4167 = vmatprep.mubr.f32.mxu0 0.0
    %4168 = vmatmul.mubr.f32.gmra.mrb[0].mxu0 %v4096
    %v4169 = vpop.f32.mrb[0].mxu0
    %v4170 = vadd.f32 0.0, %v4169
    %v4171 = vpop.f32.mrb[0].mxu0
    %4172 = vdwg.mxu0
    %4177 = vrot.lane.b32.xlu0 %v3270, 8
    %v4178 = vpop.permute.xlu0 %4177
    %4179 = vrot.lane.b32.xlu0 %v3275, 8
    %v4180 = vpop.permute.xlu0 %4179
    %4181 = vrot.lane.b32.xlu0 %v3357, 8
    %v4182 = vpop.permute.xlu0 %4181
    %4183 = vrot.lane.b32.xlu0 %v3362, 8
    %v4184 = vpop.permute.xlu0 %4183
    %4193 = vrot.lane.b32.xlu0 %v3674, 16
    %v4194 = vpop.permute.xlu0 %4193
    %4195 = vrot.lane.b32.xlu0 %v3679, 16
    %v4196 = vpop.permute.xlu0 %4195
    %4197 = vrot.lane.b32.xlu0 %v3761, 16
    %v4198 = vpop.permute.xlu0 %4197
    %4199 = vrot.lane.b32.xlu0 %v3766, 16
    %v4200 = vpop.permute.xlu0 %4199
    %4209 = vrot.lane.b32.xlu0 %v4078, 24
    %v4210 = vpop.permute.xlu0 %4209
    %4211 = vrot.lane.b32.xlu0 %v4083, 24
    %v4212 = vpop.permute.xlu0 %4211
    %4213 = vrot.lane.b32.xlu0 %v4165, 24
    %v4214 = vpop.permute.xlu0 %4213
    %4215 = vrot.lane.b32.xlu0 %v4170, 24
    %v4216 = vpop.permute.xlu0 %4215
    %v4221 = vsel %vm310, %v2866, %v4178
    %v4222 = vsel %vm310, %v2871, %v4180
    %v4223 = vsel %vm310, %v2953, %v4182
    %v4224 = vsel %vm310, %v2958, %v4184
    %v4225 = vsel %vm487, %v4221, %v4194
    %v4226 = vsel %vm487, %v4222, %v4196
    %v4227 = vsel %vm487, %v4223, %v4198
    %v4228 = vsel %vm487, %v4224, %v4200
    %v4229 = vsel %vm1974, %v4225, %v4210
    %v4230 = vsel %vm1974, %v4226, %v4212
    %v4231 = vsel %vm1974, %v4227, %v4214
    %v4232 = vsel %vm1974, %v4228, %v4216
    %v4233 = vlaneseq
    %v4234 = vshrl.u32 %v4233, 7
    %v4235 = vsub.s32 0, %v4234
    %v4236 = vrot.slane %v2441, %v4235
    %v4238 = vsel %vm45, %v4229, 0
    %v4241 = vsel %vm45, %v4230, 0
    %v4244 = vsel %vm45, %v4231, 0
    %v4247 = vsel %vm45, %v4232, 0
    %4249 = vmatprep.subr.mxu0 0.0
    %4250 = vmatpush1.msra.mxu0 %v2437
    %4251 = vmatprep.subr.mxu0 0.0
    %4252 = vmatpush1.msra.mxu0 %v2438
    %4253 = vmatprep.subr.mxu0 0.0
    %4254 = vmatpush1.msra.mxu0 %v2439
    %4255 = vmatprep.subr.mxu0 0.0
    %4256 = vmatpush1.msra.mxu0 %v2440
    %4257 = vmatprep.subr.mxu0 0.0
    %4258 = vmatpush1.msra.mxu0 0.0
    %4259 = vmatprep.subr.mxu0 0.0
    %4260 = vmatpush1.msra.mxu0 0.0
    %4261 = vmatprep.subr.mxu0 0.0
    %4262 = vmatpush1.msra.mxu0 0.0
    %4263 = vmatprep.subr.mxu0 0.0
    %4264 = vmatpush1.msra.mxu0 0.0
    %4265 = vmatprep.subr.mxu0 0.0
    %4266 = vmatpush1.msra.mxu0 0.0
    %4267 = vmatprep.subr.mxu0 0.0
    %4268 = vmatpush1.msra.mxu0 0.0
    %4269 = vmatprep.subr.mxu0 0.0
    %4270 = vmatpush1.msra.mxu0 0.0
    %4271 = vmatprep.subr.mxu0 0.0
    %4272 = vmatpush1.msra.mxu0 0.0
    %4273 = vmatprep.subr.mxu0 0.0
    %4274 = vmatpush1.msra.mxu0 0.0
    %4275 = vmatprep.subr.mxu0 0.0
    %4276 = vmatpush1.msra.mxu0 0.0
    %4277 = vmatprep.subr.mxu0 0.0
    %4278 = vmatpush1.msra.mxu0 0.0
    %4279 = vmatprep.subr.mxu0 0.0
    %4280 = vmatpush1.msra.mxu0 0.0
    %4281 = vmatprep.subr.mxu0 0.0
    %4282 = vmatpush1.msra.mxu0 0.0
    %4283 = vmatprep.subr.mxu0 0.0
    %4284 = vmatpush1.msra.mxu0 0.0
    %4285 = vmatprep.subr.mxu0 0.0
    %4286 = vmatpush1.msra.mxu0 0.0
    %4287 = vmatprep.subr.mxu0 0.0
    %4288 = vmatpush1.msra.mxu0 0.0
    %4289 = vmatprep.subr.mxu0 0.0
    %4290 = vmatpush1.msra.mxu0 0.0
    %4291 = vmatprep.subr.mxu0 0.0
    %4292 = vmatpush1.msra.mxu0 0.0
    %4293 = vmatprep.subr.mxu0 0.0
    %4294 = vmatpush1.msra.mxu0 0.0
    %4295 = vmatprep.subr.mxu0 0.0
    %4296 = vmatpush1.msra.mxu0 0.0
    %4297 = vmatprep.subr.mxu0 0.0
    %4298 = vmatpush1.msra.mxu0 0.0
    %4299 = vmatprep.subr.mxu0 0.0
    %4300 = vmatpush1.msra.mxu0 0.0
    %4301 = vmatprep.subr.mxu0 0.0
    %4302 = vmatpush1.msra.mxu0 0.0
    %4303 = vmatprep.subr.mxu0 0.0
    %4304 = vmatpush1.msra.mxu0 0.0
    %4305 = vmatprep.subr.mxu0 0.0
    %4306 = vmatpush1.msra.mxu0 0.0
    %4307 = vmatprep.subr.mxu0 0.0
    %4308 = vmatpush1.msra.mxu0 0.0
    %4309 = vmatprep.subr.mxu0 0.0
    %4310 = vmatpush1.msra.mxu0 0.0
    %4311 = vmatprep.subr.mxu0 0.0
    %4312 = vmatpush1.msra.mxu0 0.0
    %4313 = vmatprep.mubr.f32.mxu0 0.0
    %4314 = vmatmul.mubr.f32.gmra.mrb[0].mxu0 %v4238
    %v4315 = vpop.f32.mrb[0].mxu0
    %v4316 = vadd.f32 %v4236, %v4315
    %v4317 = vpop.f32.mrb[0].mxu0
    %4318 = vmatprep.mubr.f32.mxu0 0.0
    %4319 = vmatmul.mubr.f32.gmra.mrb[0].mxu0 %v4241
    %v4320 = vpop.f32.mrb[0].mxu0
    %v4321 = vadd.f32 %v4236, %v4320
    %v4322 = vpop.f32.mrb[0].mxu0
    %4323 = vmatprep.mubr.f32.mxu0 0.0
    %4324 = vmatmul.mubr.f32.gmra.mrb[0].mxu0 %v4244
    %v4325 = vpop.f32.mrb[0].mxu0
    %v4326 = vadd.f32 %v4236, %v4325
    %v4327 = vpop.f32.mrb[0].mxu0
    %4328 = vmatprep.mubr.f32.mxu0 0.0
    %4329 = vmatmul.mubr.f32.gmra.mrb[0].mxu0 %v4247
    %v4330 = vpop.f32.mrb[0].mxu0
    %v4331 = vadd.f32 %v4236, %v4330
    %v4332 = vpop.f32.mrb[0].mxu0
    %4333 = vdwg.mxu0
    %v4334 = vadd.f32 %v2428, %v4316
    %v4335 = vadd.f32 %v2429, %v4321
    %v4336 = vadd.f32 %v2430, %v4326
    %v4337 = vadd.f32 %v2431, %v4331
    %v4338 = vsel %vm45, %v4334, 0.0
    %4339 = vadd.xlane.f32.xlu0 %v4338
    %v4340 = vpop.xlane.xlu0 %4339
    %v4341 = vsel %vm45, %v4335, 0.0
    %4342 = vadd.xlane.f32.xlu0 %v4341
    %v4343 = vpop.xlane.xlu0 %4342
    %v4344 = vsel %vm45, %v4336, 0.0
    %4345 = vadd.xlane.f32.xlu0 %v4344
    %v4346 = vpop.xlane.xlu0 %4345
    %v4347 = vsel %vm45, %v4337, 0.0
    %4348 = vadd.xlane.f32.xlu0 %v4347
    %v4349 = vpop.xlane.xlu0 %4348
    %v4350 = vmul.f32 %v4340, %v2096
    %v4351 = vmul.f32 %v4343, %v2096
    %v4352 = vmul.f32 %v4346, %v2096
    %v4353 = vmul.f32 %v4349, %v2096
    %v4354 = vsub.f32 %v4334, %v4350
    %v4355 = vsub.f32 %v4335, %v4351
    %v4356 = vsub.f32 %v4336, %v4352
    %v4357 = vsub.f32 %v4337, %v4353
    %v4358 = vmul.f32 %v4354, %v4354
    %v4359 = vmul.f32 %v4355, %v4355
    %v4360 = vmul.f32 %v4356, %v4356
    %v4361 = vmul.f32 %v4357, %v4357
    %v4362 = vsel %vm45, %v4358, 0.0
    %4363 = vadd.xlane.f32.xlu0 %v4362
    %v4364 = vpop.xlane.xlu0 %4363
    %v4365 = vsel %vm45, %v4359, 0.0
    %4366 = vadd.xlane.f32.xlu0 %v4365
    %v4367 = vpop.xlane.xlu0 %4366
    %v4368 = vsel %vm45, %v4360, 0.0
    %4369 = vadd.xlane.f32.xlu0 %v4368
    %v4370 = vpop.xlane.xlu0 %4369
    %v4371 = vsel %vm45, %v4361, 0.0
    %4372 = vadd.xlane.f32.xlu0 %v4371
    %v4373 = vpop.xlane.xlu0 %4372
    %v4374 = vmul.f32 %v4364, %v2096
    %v4375 = vmul.f32 %v4367, %v2096
    %v4376 = vmul.f32 %v4370, %v2096
    %v4377 = vmul.f32 %v4373, %v2096
    %v4378 = vadd.f32 %v4374, 1e-05
    %v4379 = vadd.f32 %v4375, 1e-05
    %v4380 = vadd.f32 %v4376, 1e-05
    %v4381 = vadd.f32 %v4377, 1e-05
    %v4382 = vrsqrt.pop %v4378
    %v4383 = vrsqrt.pop %v4379
    %v4384 = vrsqrt.pop %v4380
    %v4385 = vrsqrt.pop %v4381
    %v4386 = vmul.f32 %v4354, %v4382
    %v4387 = vmul.f32 %v4355, %v4383
    %v4388 = vmul.f32 %v4356, %v4384
    %v4389 = vmul.f32 %v4357, %v4385
    %v4390 = vlaneseq
    %v4391 = vshrl.u32 %v4390, 7
    %v4392 = vsub.s32 0, %v4391
    %v4393 = vrot.slane %v2456, %v4392
    %v4394 = vmul.f32 %v4386, %v4393
    %v4395 = vmul.f32 %v4387, %v4393
    %v4396 = vmul.f32 %v4388, %v4393
    %v4397 = vmul.f32 %v4389, %v4393
    %v4398 = vlaneseq
    %v4399 = vshrl.u32 %v4398, 7
    %v4400 = vsub.s32 0, %v4399
    %v4401 = vrot.slane %v2457, %v4400
    %v4402 = vadd.f32 %v4394, %v4401
    %v4403 = vadd.f32 %v4395, %v4401
    %v4404 = vadd.f32 %v4396, %v4401
    %v4405 = vadd.f32 %v4397, %v4401
    %v4406 = vlaneseq
    %v4407 = vshrl.u32 %v4406, 7
    %v4408 = vsub.s32 0, %v4407
    %v4409 = vrot.slane %v2446, %v4408
    %v4411 = vsel %vm45, %v4402, 0
    %v4414 = vsel %vm45, %v4403, 0
    %v4417 = vsel %vm45, %v4404, 0
    %v4420 = vsel %vm45, %v4405, 0
    %4422 = vmatprep.subr.mxu0 0.0
    %4423 = vmatpush1.msra.mxu0 %v2442
    %4424 = vmatprep.subr.mxu0 0.0
    %4425 = vmatpush1.msra.mxu0 %v2443
    %4426 = vmatprep.subr.mxu0 0.0
    %4427 = vmatpush1.msra.mxu0 %v2444
    %4428 = vmatprep.subr.mxu0 0.0
    %4429 = vmatpush1.msra.mxu0 %v2445
    %4430 = vmatprep.subr.mxu0 0.0
    %4431 = vmatpush1.msra.mxu0 0.0
    %4432 = vmatprep.subr.mxu0 0.0
    %4433 = vmatpush1.msra.mxu0 0.0
    %4434 = vmatprep.subr.mxu0 0.0
    %4435 = vmatpush1.msra.mxu0 0.0
    %4436 = vmatprep.subr.mxu0 0.0
    %4437 = vmatpush1.msra.mxu0 0.0
    %4438 = vmatprep.subr.mxu0 0.0
    %4439 = vmatpush1.msra.mxu0 0.0
    %4440 = vmatprep.subr.mxu0 0.0
    %4441 = vmatpush1.msra.mxu0 0.0
    %4442 = vmatprep.subr.mxu0 0.0
    %4443 = vmatpush1.msra.mxu0 0.0
    %4444 = vmatprep.subr.mxu0 0.0
    %4445 = vmatpush1.msra.mxu0 0.0
    %4446 = vmatprep.subr.mxu0 0.0
    %4447 = vmatpush1.msra.mxu0 0.0
    %4448 = vmatprep.subr.mxu0 0.0
    %4449 = vmatpush1.msra.mxu0 0.0
    %4450 = vmatprep.subr.mxu0 0.0
    %4451 = vmatpush1.msra.mxu0 0.0
    %4452 = vmatprep.subr.mxu0 0.0
    %4453 = vmatpush1.msra.mxu0 0.0
    %4454 = vmatprep.subr.mxu0 0.0
    %4455 = vmatpush1.msra.mxu0 0.0
    %4456 = vmatprep.subr.mxu0 0.0
    %4457 = vmatpush1.msra.mxu0 0.0
    %4458 = vmatprep.subr.mxu0 0.0
    %4459 = vmatpush1.msra.mxu0 0.0
    %4460 = vmatprep.subr.mxu0 0.0
    %4461 = vmatpush1.msra.mxu0 0.0
    %4462 = vmatprep.subr.mxu0 0.0
    %4463 = vmatpush1.msra.mxu0 0.0
    %4464 = vmatprep.subr.mxu0 0.0
    %4465 = vmatpush1.msra.mxu0 0.0
    %4466 = vmatprep.subr.mxu0 0.0
    %4467 = vmatpush1.msra.mxu0 0.0
    %4468 = vmatprep.subr.mxu0 0.0
    %4469 = vmatpush1.msra.mxu0 0.0
    %4470 = vmatprep.subr.mxu0 0.0
    %4471 = vmatpush1.msra.mxu0 0.0
    %4472 = vmatprep.subr.mxu0 0.0
    %4473 = vmatpush1.msra.mxu0 0.0
    %4474 = vmatprep.subr.mxu0 0.0
    %4475 = vmatpush1.msra.mxu0 0.0
    %4476 = vmatprep.subr.mxu0 0.0
    %4477 = vmatpush1.msra.mxu0 0.0
    %4478 = vmatprep.subr.mxu0 0.0
    %4479 = vmatpush1.msra.mxu0 0.0
    %4480 = vmatprep.subr.mxu0 0.0
    %4481 = vmatpush1.msra.mxu0 0.0
    %4482 = vmatprep.subr.mxu0 0.0
    %4483 = vmatpush1.msra.mxu0 0.0
    %4484 = vmatprep.subr.mxu0 0.0
    %4485 = vmatpush1.msra.mxu0 0.0
    %4486 = vmatprep.mubr.f32.mxu0 0.0
    %4487 = vmatmul.mubr.f32.gmra.mrb[0].mxu0 %v4411
    %v4488 = vpop.f32.mrb[0].mxu0
    %v4489 = vadd.f32 %v4409, %v4488
    %v4490 = vpop.f32.mrb[0].mxu0
    %4491 = vmatprep.mubr.f32.mxu0 0.0
    %4492 = vmatmul.mubr.f32.gmra.mrb[0].mxu0 %v4414
    %v4493 = vpop.f32.mrb[0].mxu0
    %v4494 = vadd.f32 %v4409, %v4493
    %v4495 = vpop.f32.mrb[0].mxu0
    %4496 = vmatprep.mubr.f32.mxu0 0.0
    %4497 = vmatmul.mubr.f32.gmra.mrb[0].mxu0 %v4417
    %v4498 = vpop.f32.mrb[0].mxu0
    %v4499 = vadd.f32 %v4409, %v4498
    %v4500 = vpop.f32.mrb[0].mxu0
    %4501 = vmatprep.mubr.f32.mxu0 0.0
    %4502 = vmatmul.mubr.f32.gmra.mrb[0].mxu0 %v4420
    %v4503 = vpop.f32.mrb[0].mxu0
    %v4504 = vadd.f32 %v4409, %v4503
    %v4505 = vpop.f32.mrb[0].mxu0
    %4506 = vdwg.mxu0
    %v4507 = vmax.f32 %v4489, 0.0
    %v4508 = vmax.f32 %v4494, 0.0
    %v4509 = vmax.f32 %v4499, 0.0
    %v4510 = vmax.f32 %v4504, 0.0
    %v4511 = vlaneseq
    %v4512 = vshrl.u32 %v4511, 7
    %v4513 = vsub.s32 0, %v4512
    %v4514 = vrot.slane %v2455, %v4513
    %v4516 = vsel %vm2262, %v4507, 0
    %v4519 = vsel %vm2262, %v4508, 0
    %v4522 = vsel %vm2262, %v4509, 0
    %v4525 = vsel %vm2262, %v4510, 0
    %4527 = vmatprep.subr.mxu0 0.0
    %4528 = vmatpush1.msra.mxu0 %v2447
    %4529 = vmatprep.subr.mxu0 0.0
    %4530 = vmatpush1.msra.mxu0 %v2448
    %4531 = vmatprep.subr.mxu0 0.0
    %4532 = vmatpush1.msra.mxu0 %v2449
    %4533 = vmatprep.subr.mxu0 0.0
    %4534 = vmatpush1.msra.mxu0 %v2450
    %4535 = vmatprep.subr.mxu0 0.0
    %4536 = vmatpush1.msra.mxu0 %v2451
    %4537 = vmatprep.subr.mxu0 0.0
    %4538 = vmatpush1.msra.mxu0 %v2452
    %4539 = vmatprep.subr.mxu0 0.0
    %4540 = vmatpush1.msra.mxu0 %v2453
    %4541 = vmatprep.subr.mxu0 0.0
    %4542 = vmatpush1.msra.mxu0 %v2454
    %4543 = vmatprep.subr.mxu0 0.0
    %4544 = vmatpush1.msra.mxu0 0.0
    %4545 = vmatprep.subr.mxu0 0.0
    %4546 = vmatpush1.msra.mxu0 0.0
    %4547 = vmatprep.subr.mxu0 0.0
    %4548 = vmatpush1.msra.mxu0 0.0
    %4549 = vmatprep.subr.mxu0 0.0
    %4550 = vmatpush1.msra.mxu0 0.0
    %4551 = vmatprep.subr.mxu0 0.0
    %4552 = vmatpush1.msra.mxu0 0.0
    %4553 = vmatprep.subr.mxu0 0.0
    %4554 = vmatpush1.msra.mxu0 0.0
    %4555 = vmatprep.subr.mxu0 0.0
    %4556 = vmatpush1.msra.mxu0 0.0
    %4557 = vmatprep.subr.mxu0 0.0
    %4558 = vmatpush1.msra.mxu0 0.0
    %4559 = vmatprep.subr.mxu0 0.0
    %4560 = vmatpush1.msra.mxu0 0.0
    %4561 = vmatprep.subr.mxu0 0.0
    %4562 = vmatpush1.msra.mxu0 0.0
    %4563 = vmatprep.subr.mxu0 0.0
    %4564 = vmatpush1.msra.mxu0 0.0
    %4565 = vmatprep.subr.mxu0 0.0
    %4566 = vmatpush1.msra.mxu0 0.0
    %4567 = vmatprep.subr.mxu0 0.0
    %4568 = vmatpush1.msra.mxu0 0.0
    %4569 = vmatprep.subr.mxu0 0.0
    %4570 = vmatpush1.msra.mxu0 0.0
    %4571 = vmatprep.subr.mxu0 0.0
    %4572 = vmatpush1.msra.mxu0 0.0
    %4573 = vmatprep.subr.mxu0 0.0
    %4574 = vmatpush1.msra.mxu0 0.0
    %4575 = vmatprep.subr.mxu0 0.0
    %4576 = vmatpush1.msra.mxu0 0.0
    %4577 = vmatprep.subr.mxu0 0.0
    %4578 = vmatpush1.msra.mxu0 0.0
    %4579 = vmatprep.subr.mxu0 0.0
    %4580 = vmatpush1.msra.mxu0 0.0
    %4581 = vmatprep.subr.mxu0 0.0
    %4582 = vmatpush1.msra.mxu0 0.0
    %4583 = vmatprep.subr.mxu0 0.0
    %4584 = vmatpush1.msra.mxu0 0.0
    %4585 = vmatprep.subr.mxu0 0.0
    %4586 = vmatpush1.msra.mxu0 0.0
    %4587 = vmatprep.subr.mxu0 0.0
    %4588 = vmatpush1.msra.mxu0 0.0
    %4589 = vmatprep.subr.mxu0 0.0
    %4590 = vmatpush1.msra.mxu0 0.0
    %4591 = vmatprep.mubr.f32.mxu0 0.0
    %4592 = vmatmul.mubr.f32.gmra.mrb[0].mxu0 %v4516
    %v4593 = vpop.f32.mrb[0].mxu0
    %v4594 = vadd.f32 %v4514, %v4593
    %v4595 = vpop.f32.mrb[0].mxu0
    %4596 = vmatprep.mubr.f32.mxu0 0.0
    %4597 = vmatmul.mubr.f32.gmra.mrb[0].mxu0 %v4519
    %v4598 = vpop.f32.mrb[0].mxu0
    %v4599 = vadd.f32 %v4514, %v4598
    %v4600 = vpop.f32.mrb[0].mxu0
    %4601 = vmatprep.mubr.f32.mxu0 0.0
    %4602 = vmatmul.mubr.f32.gmra.mrb[0].mxu0 %v4522
    %v4603 = vpop.f32.mrb[0].mxu0
    %v4604 = vadd.f32 %v4514, %v4603
    %v4605 = vpop.f32.mrb[0].mxu0
    %4606 = vmatprep.mubr.f32.mxu0 0.0
    %4607 = vmatmul.mubr.f32.gmra.mrb[0].mxu0 %v4525
    %v4608 = vpop.f32.mrb[0].mxu0
    %v4609 = vadd.f32 %v4514, %v4608
    %v4610 = vpop.f32.mrb[0].mxu0
    %4611 = vdwg.mxu0
    %v4612 = vadd.f32 %v4402, %v4594
    %v4613 = vadd.f32 %v4403, %v4599
    %v4614 = vadd.f32 %v4404, %v4604
    %v4615 = vadd.f32 %v4405, %v4609
    %v4616 = vsel %vm45, %v4612, 0.0
    %4617 = vadd.xlane.f32.xlu0 %v4616
    %v4618 = vpop.xlane.xlu0 %4617
    %v4619 = vsel %vm45, %v4613, 0.0
    %4620 = vadd.xlane.f32.xlu0 %v4619
    %v4621 = vpop.xlane.xlu0 %4620
    %v4622 = vsel %vm45, %v4614, 0.0
    %4623 = vadd.xlane.f32.xlu0 %v4622
    %v4624 = vpop.xlane.xlu0 %4623
    %v4625 = vsel %vm45, %v4615, 0.0
    %4626 = vadd.xlane.f32.xlu0 %v4625
    %v4627 = vpop.xlane.xlu0 %4626
    %v4628 = vmul.f32 %v4618, %v2096
    %v4629 = vmul.f32 %v4621, %v2096
    %v4630 = vmul.f32 %v4624, %v2096
    %v4631 = vmul.f32 %v4627, %v2096
    %v4632 = vsub.f32 %v4612, %v4628
    %v4633 = vsub.f32 %v4613, %v4629
    %v4634 = vsub.f32 %v4614, %v4630
    %v4635 = vsub.f32 %v4615, %v4631
    %v4636 = vmul.f32 %v4632, %v4632
    %v4637 = vmul.f32 %v4633, %v4633
    %v4638 = vmul.f32 %v4634, %v4634
    %v4639 = vmul.f32 %v4635, %v4635
    %v4640 = vsel %vm45, %v4636, 0.0
    %4641 = vadd.xlane.f32.xlu0 %v4640
    %v4642 = vpop.xlane.xlu0 %4641
    %v4643 = vsel %vm45, %v4637, 0.0
    %4644 = vadd.xlane.f32.xlu0 %v4643
    %v4645 = vpop.xlane.xlu0 %4644
    %v4646 = vsel %vm45, %v4638, 0.0
    %4647 = vadd.xlane.f32.xlu0 %v4646
    %v4648 = vpop.xlane.xlu0 %4647
    %v4649 = vsel %vm45, %v4639, 0.0
    %4650 = vadd.xlane.f32.xlu0 %v4649
    %v4651 = vpop.xlane.xlu0 %4650
    %v4652 = vmul.f32 %v4642, %v2096
    %v4653 = vmul.f32 %v4645, %v2096
    %v4654 = vmul.f32 %v4648, %v2096
    %v4655 = vmul.f32 %v4651, %v2096
    %v4656 = vadd.f32 %v4652, 1e-05
    %v4657 = vadd.f32 %v4653, 1e-05
    %v4658 = vadd.f32 %v4654, 1e-05
    %v4659 = vadd.f32 %v4655, 1e-05
    %v4660 = vrsqrt.pop %v4656
    %v4661 = vrsqrt.pop %v4657
    %v4662 = vrsqrt.pop %v4658
    %v4663 = vrsqrt.pop %v4659
    %v4664 = vmul.f32 %v4632, %v4660
    %v4665 = vmul.f32 %v4633, %v4661
    %v4666 = vmul.f32 %v4634, %v4662
    %v4667 = vmul.f32 %v4635, %v4663
    %v4668 = vlaneseq
    %v4669 = vshrl.u32 %v4668, 7
    %v4670 = vsub.s32 0, %v4669
    %v4671 = vrot.slane %v2458, %v4670
    %v4672 = vmul.f32 %v4664, %v4671
    %v4673 = vmul.f32 %v4665, %v4671
    %v4674 = vmul.f32 %v4666, %v4671
    %v4675 = vmul.f32 %v4667, %v4671
    %v4676 = vlaneseq
    %v4677 = vshrl.u32 %v4676, 7
    %v4678 = vsub.s32 0, %v4677
    %v4679 = vrot.slane %v2459, %v4678
    %v4680 = vadd.f32 %v4672, %v4679
    %v4681 = vadd.f32 %v4673, %v4679
    %v4682 = vadd.f32 %v4674, %v4679
    %v4683 = vadd.f32 %v4675, %v4679
    %v4684 = vld [vmem:[#allocation2 + $0x220] sm:$0x1]
    %v4685 = vld [vmem:[#allocation2 + $0x228] sm:$0x1]
    %v4686 = vsel %vm45, %v4680, 0.0
    %4687 = vadd.xlane.f32.xlu0 %v4686
    %v4688 = vpop.xlane.xlu0 %4687
    %v4689 = vsel %vm45, %v4681, 0.0
    %4690 = vadd.xlane.f32.xlu0 %v4689
    %v4691 = vpop.xlane.xlu0 %4690
    %v4692 = vsel %vm45, %v4682, 0.0
    %4693 = vadd.xlane.f32.xlu0 %v4692
    %v4694 = vpop.xlane.xlu0 %4693
    %v4695 = vsel %vm45, %v4683, 0.0
    %4696 = vadd.xlane.f32.xlu0 %v4695
    %v4697 = vpop.xlane.xlu0 %4696
    %v4698 = vmul.f32 %v4688, %v2096
    %v4699 = vmul.f32 %v4691, %v2096
    %v4700 = vmul.f32 %v4694, %v2096
    %v4701 = vmul.f32 %v4697, %v2096
    %v4702 = vsub.f32 %v4680, %v4698
    %v4703 = vsub.f32 %v4681, %v4699
    %v4704 = vsub.f32 %v4682, %v4700
    %v4705 = vsub.f32 %v4683, %v4701
    %v4706 = vmul.f32 %v4702, %v4702
    %v4707 = vmul.f32 %v4703, %v4703
    %v4708 = vmul.f32 %v4704, %v4704
    %v4709 = vmul.f32 %v4705, %v4705
    %v4710 = vsel %vm45, %v4706, 0.0
    %4711 = vadd.xlane.f32.xlu0 %v4710
    %v4712 = vpop.xlane.xlu0 %4711
    %v4713 = vsel %vm45, %v4707, 0.0
    %4714 = vadd.xlane.f32.xlu0 %v4713
    %v4715 = vpop.xlane.xlu0 %4714
    %v4716 = vsel %vm45, %v4708, 0.0
    %4717 = vadd.xlane.f32.xlu0 %v4716
    %v4718 = vpop.xlane.xlu0 %4717
    %v4719 = vsel %vm45, %v4709, 0.0
    %4720 = vadd.xlane.f32.xlu0 %v4719
    %v4721 = vpop.xlane.xlu0 %4720
    %v4722 = vmul.f32 %v4712, %v2096
    %v4723 = vmul.f32 %v4715, %v2096
    %v4724 = vmul.f32 %v4718, %v2096
    %v4725 = vmul.f32 %v4721, %v2096
    %v4726 = vadd.f32 %v4722, 1e-05
    %v4727 = vadd.f32 %v4723, 1e-05
    %v4728 = vadd.f32 %v4724, 1e-05
    %v4729 = vadd.f32 %v4725, 1e-05
    %v4730 = vrsqrt.pop %v4726
    %v4731 = vrsqrt.pop %v4727
    %v4732 = vrsqrt.pop %v4728
    %v4733 = vrsqrt.pop %v4729
    %v4734 = vmul.f32 %v4702, %v4730
    %v4735 = vmul.f32 %v4703, %v4731
    %v4736 = vmul.f32 %v4704, %v4732
    %v4737 = vmul.f32 %v4705, %v4733
    %v4738 = vlaneseq
    %v4739 = vshrl.u32 %v4738, 7
    %v4740 = vsub.s32 0, %v4739
    %v4741 = vrot.slane %v4684, %v4740
    %v4742 = vmul.f32 %v4734, %v4741
    %v4743 = vmul.f32 %v4735, %v4741
    %v4744 = vmul.f32 %v4736, %v4741
    %v4745 = vmul.f32 %v4737, %v4741
    %v4746 = vlaneseq
    %v4747 = vshrl.u32 %v4746, 7
    %v4748 = vsub.s32 0, %v4747
    %v4749 = vrot.slane %v4685, %v4748
    %v4750 = vadd.f32 %v4742, %v4749
    %v4751 = vadd.f32 %v4743, %v4749
    %v4752 = vadd.f32 %v4744, %v4749
    %v4753 = vadd.f32 %v4745, %v4749
    %v4754 = vld [vmem:[#allocation2 + $0x230] sm:$0xff]
    %v4755 = vld [vmem:[#allocation2 + $0x238] sm:$0xff]
    %v4756 = vld [vmem:[#allocation2 + $0x240] sm:$0xff]
    %v4757 = vld [vmem:[#allocation2 + $0x248] sm:$0xff]
    %v4758 = vld [vmem:[#allocation2 + $0x250] sm:$0x1]
    %v4759 = vld [vmem:[#allocation2 + $0x258] sm:$0xff]
    %v4760 = vld [vmem:[#allocation2 + $0x260] sm:$0xff]
    %v4761 = vld [vmem:[#allocation2 + $0x268] sm:$0xff]
    %v4762 = vld [vmem:[#allocation2 + $0x270] sm:$0xff]
    %v4763 = vld [vmem:[#allocation2 + $0x278] sm:$0x1]
    %v4764 = vld [vmem:[#allocation2 + $0x280] sm:$0xff]
    %v4765 = vld [vmem:[#allocation2 + $0x288] sm:$0xff]
    %v4766 = vld [vmem:[#allocation2 + $0x290] sm:$0xff]
    %v4767 = vld [vmem:[#allocation2 + $0x298] sm:$0xff]
    %v4768 = vld [vmem:[#allocation2 + $0x2a0] sm:$0x1]
    %v4769 = vld [vmem:[#allocation2 + $0x2a8] sm:$0xff]
    %v4770 = vld [vmem:[#allocation2 + $0x2b0] sm:$0xff]
    %v4771 = vld [vmem:[#allocation2 + $0x2b8] sm:$0xff]
    %v4772 = vld [vmem:[#allocation2 + $0x2c0] sm:$0xff]
    %v4773 = vld [vmem:[#allocation2 + $0x2c8] sm:$0x1]
    %v4774 = vld [vmem:[#allocation2 + $0x2d0] sm:$0xff]
    %v4775 = vld [vmem:[#allocation2 + $0x2d8] sm:$0xff]
    %v4776 = vld [vmem:[#allocation2 + $0x2e0] sm:$0xff]
    %v4777 = vld [vmem:[#allocation2 + $0x2e8] sm:$0xff]
    %v4778 = vld [vmem:[#allocation2 + $0x2f0] sm:$0x1]
    %v4779 = vld [vmem:[#allocation2 + $0x2f8] sm:$0xff]
    %v4780 = vld [vmem:[#allocation2 + $0x300] sm:$0xff]
    %v4781 = vld [vmem:[#allocation2 + $0x308] sm:$0xff]
    %v4782 = vld [vmem:[#allocation2 + $0x310] sm:$0xff]
    %v4783 = vld [vmem:[#allocation2 + $0x318] sm:$0x1]
    %v4784 = vld [vmem:[#allocation2 + $0x320] sm:$0xff]
    %v4785 = vld [vmem:[#allocation2 + $0x328] sm:$0xff]
    %v4786 = vld [vmem:[#allocation2 + $0x330] sm:$0xff]
    %v4787 = vld [vmem:[#allocation2 + $0x338] sm:$0xff]
    %v4788 = vld [vmem:[#allocation2 + $0x340] sm:$0xff]
    %v4789 = vld [vmem:[#allocation2 + $0x348] sm:$0xff]
    %v4790 = vld [vmem:[#allocation2 + $0x350] sm:$0xff]
    %v4791 = vld [vmem:[#allocation2 + $0x358] sm:$0xff]
    %v4792 = vld [vmem:[#allocation2 + $0x360] sm:$0x1]
    %v4793 = vld [vmem:[#allocation2 + $0x368] sm:$0x1]
    %v4794 = vld [vmem:[#allocation2 + $0x370] sm:$0x1]
    %v4795 = vld [vmem:[#allocation2 + $0x378] sm:$0x1]
    %v4796 = vld [vmem:[#allocation2 + $0x380] sm:$0x1]
    %v4797 = vld [vmem:[#allocation2 + $0x388] sm:$0x1]
    %v4798 = vld [vmem:[#allocation2 + $0x390] sm:$0x1]
    %v4799 = vlaneseq
    %v4800 = vshrl.u32 %v4799, 7
    %v4801 = vsub.s32 0, %v4800
    %v4802 = vrot.slane %v4758, %v4801
    %v4804 = vsel %vm45, %v157, 0
    %v4807 = vsel %vm45, %v162, 0
    %v4810 = vsel %vm45, %v167, 0
    %v4813 = vsel %vm45, %v172, 0
    %4815 = vmatprep.subr.mxu0 0.0
    %4816 = vmatpush1.msra.mxu0 %v4754
    %4817 = vmatprep.subr.mxu0 0.0
    %4818 = vmatpush1.msra.mxu0 %v4755
    %4819 = vmatprep.subr.mxu0 0.0
    %4820 = vmatpush1.msra.mxu0 %v4756
    %4821 = vmatprep.subr.mxu0 0.0
    %4822 = vmatpush1.msra.mxu0 %v4757
    %4823 = vmatprep.subr.mxu0 0.0
    %4824 = vmatpush1.msra.mxu0 0.0
    %4825 = vmatprep.subr.mxu0 0.0
    %4826 = vmatpush1.msra.mxu0 0.0
    %4827 = vmatprep.subr.mxu0 0.0
    %4828 = vmatpush1.msra.mxu0 0.0
    %4829 = vmatprep.subr.mxu0 0.0
    %4830 = vmatpush1.msra.mxu0 0.0
    %4831 = vmatprep.subr.mxu0 0.0
    %4832 = vmatpush1.msra.mxu0 0.0
    %4833 = vmatprep.subr.mxu0 0.0
    %4834 = vmatpush1.msra.mxu0 0.0
    %4835 = vmatprep.subr.mxu0 0.0
    %4836 = vmatpush1.msra.mxu0 0.0
    %4837 = vmatprep.subr.mxu0 0.0
    %4838 = vmatpush1.msra.mxu0 0.0
    %4839 = vmatprep.subr.mxu0 0.0
    %4840 = vmatpush1.msra.mxu0 0.0
    %4841 = vmatprep.subr.mxu0 0.0
    %4842 = vmatpush1.msra.mxu0 0.0
    %4843 = vmatprep.subr.mxu0 0.0
    %4844 = vmatpush1.msra.mxu0 0.0
    %4845 = vmatprep.subr.mxu0 0.0
    %4846 = vmatpush1.msra.mxu0 0.0
    %4847 = vmatprep.subr.mxu0 0.0
    %4848 = vmatpush1.msra.mxu0 0.0
    %4849 = vmatprep.subr.mxu0 0.0
    %4850 = vmatpush1.msra.mxu0 0.0
    %4851 = vmatprep.subr.mxu0 0.0
    %4852 = vmatpush1.msra.mxu0 0.0
    %4853 = vmatprep.subr.mxu0 0.0
    %4854 = vmatpush1.msra.mxu0 0.0
    %4855 = vmatprep.subr.mxu0 0.0
    %4856 = vmatpush1.msra.mxu0 0.0
    %4857 = vmatprep.subr.mxu0 0.0
    %4858 = vmatpush1.msra.mxu0 0.0
    %4859 = vmatprep.subr.mxu0 0.0
    %4860 = vmatpush1.msra.mxu0 0.0
    %4861 = vmatprep.subr.mxu0 0.0
    %4862 = vmatpush1.msra.mxu0 0.0
    %4863 = vmatprep.subr.mxu0 0.0
    %4864 = vmatpush1.msra.mxu0 0.0
    %4865 = vmatprep.subr.mxu0 0.0
    %4866 = vmatpush1.msra.mxu0 0.0
    %4867 = vmatprep.subr.mxu0 0.0
    %4868 = vmatpush1.msra.mxu0 0.0
    %4869 = vmatprep.subr.mxu0 0.0
    %4870 = vmatpush1.msra.mxu0 0.0
    %4871 = vmatprep.subr.mxu0 0.0
    %4872 = vmatpush1.msra.mxu0 0.0
    %4873 = vmatprep.subr.mxu0 0.0
    %4874 = vmatpush1.msra.mxu0 0.0
    %4875 = vmatprep.subr.mxu0 0.0
    %4876 = vmatpush1.msra.mxu0 0.0
    %4877 = vmatprep.subr.mxu0 0.0
    %4878 = vmatpush1.msra.mxu0 0.0
    %4879 = vmatprep.mubr.f32.mxu0 0.0
    %4880 = vmatmul.mubr.f32.gmra.mrb[0].mxu0 %v4804
    %v4881 = vpop.f32.mrb[0].mxu0
    %v4882 = vadd.f32 %v4802, %v4881
    %v4883 = vpop.f32.mrb[0].mxu0
    %4884 = vmatprep.mubr.f32.mxu0 0.0
    %4885 = vmatmul.mubr.f32.gmra.mrb[0].mxu0 %v4807
    %v4886 = vpop.f32.mrb[0].mxu0
    %v4887 = vadd.f32 %v4802, %v4886
    %v4888 = vpop.f32.mrb[0].mxu0
    %4889 = vmatprep.mubr.f32.mxu0 0.0
    %4890 = vmatmul.mubr.f32.gmra.mrb[0].mxu0 %v4810
    %v4891 = vpop.f32.mrb[0].mxu0
    %v4892 = vadd.f32 %v4802, %v4891
    %v4893 = vpop.f32.mrb[0].mxu0
    %4894 = vmatprep.mubr.f32.mxu0 0.0
    %4895 = vmatmul.mubr.f32.gmra.mrb[0].mxu0 %v4813
    %v4896 = vpop.f32.mrb[0].mxu0
    %v4897 = vadd.f32 %v4802, %v4896
    %v4898 = vpop.f32.mrb[0].mxu0
    %4899 = vdwg.mxu0
    %v4900 = vlaneseq
    %v4901 = vshrl.u32 %v4900, 7
    %v4902 = vadd.s32 %v4901, 8
    %v4903 = vlaneseq
    %v4904 = vand.u32 %v4903, 127
    %vm4905 = vcmp.gt.s32.totalorder %v4904, %v4901
    %vm4906 = vcmp.gt.s32.totalorder %v4904, %v4902
    %v4907 = vsel %vm4905, -1e+30, 0.0
    %v4908 = vsel %vm4906, -1e+30, 0.0
    %4911 = vrot.lane.b32.xlu0 %v4882, 96
    %v4912 = vpop.permute.xlu0 %4911
    %4913 = vrot.lane.b32.xlu0 %v4887, 96
    %v4914 = vpop.permute.xlu0 %4913
    %v4915 = vsel %vm310, %v4882, 0
    %v4917 = vsel %vm310, %v4887, 0
    %v4919 = vsel %vm310, %v4912, 0
    %v4921 = vsel %vm310, %v4914, 0
    %4923 = vmatprep.subr.mxu0 0.0
    %4924 = vmatpush1.xpose.msra.mxu0 %v4919
    %4925 = vmatprep.subr.mxu0 0.0
    %4926 = vmatpush1.xpose.msra.mxu0 %v4921
    %4927 = vmatprep.subr.mxu0 0.0
    %4928 = vmatpush1.xpose.msra.mxu0 0.0
    %4929 = vmatprep.subr.mxu0 0.0
    %4930 = vmatpush1.xpose.msra.mxu0 0.0
    %4931 = vmatprep.subr.mxu0 0.0
    %4932 = vmatpush1.xpose.msra.mxu0 0.0
    %4933 = vmatprep.subr.mxu0 0.0
    %4934 = vmatpush1.xpose.msra.mxu0 0.0
    %4935 = vmatprep.subr.mxu0 0.0
    %4936 = vmatpush1.xpose.msra.mxu0 0.0
    %4937 = vmatprep.subr.mxu0 0.0
    %4938 = vmatpush1.xpose.msra.mxu0 0.0
    %4939 = vmatprep.subr.mxu0 0.0
    %4940 = vmatpush1.xpose.msra.mxu0 0.0
    %4941 = vmatprep.subr.mxu0 0.0
    %4942 = vmatpush1.xpose.msra.mxu0 0.0
    %4943 = vmatprep.subr.mxu0 0.0
    %4944 = vmatpush1.xpose.msra.mxu0 0.0
    %4945 = vmatprep.subr.mxu0 0.0
    %4946 = vmatpush1.xpose.msra.mxu0 0.0
    %4947 = vmatprep.subr.mxu0 0.0
    %4948 = vmatpush1.xpose.msra.mxu0 0.0
    %4949 = vmatprep.subr.mxu0 0.0
    %4950 = vmatpush1.xpose.msra.mxu0 0.0
    %4951 = vmatprep.subr.mxu0 0.0
    %4952 = vmatpush1.xpose.msra.mxu0 0.0
    %4953 = vmatprep.subr.mxu0 0.0
    %4954 = vmatpush1.xpose.msra.mxu0 0.0
    %4955 = vmatprep.subr.mxu0 0.0
    %4956 = vmatpush1.xpose.msra.mxu0 0.0
    %4957 = vmatprep.subr.mxu0 0.0
    %4958 = vmatpush1.xpose.msra.mxu0 0.0
    %4959 = vmatprep.subr.mxu0 0.0
    %4960 = vmatpush1.xpose.msra.mxu0 0.0
    %4961 = vmatprep.subr.mxu0 0.0
    %4962 = vmatpush1.xpose.msra.mxu0 0.0
    %4963 = vmatprep.subr.mxu0 0.0
    %4964 = vmatpush1.xpose.msra.mxu0 0.0
    %4965 = vmatprep.subr.mxu0 0.0
    %4966 = vmatpush1.xpose.msra.mxu0 0.0
    %4967 = vmatprep.subr.mxu0 0.0
    %4968 = vmatpush1.xpose.msra.mxu0 0.0
    %4969 = vmatprep.subr.mxu0 0.0
    %4970 = vmatpush1.xpose.msra.mxu0 0.0
    %4971 = vmatprep.subr.mxu0 0.0
    %4972 = vmatpush1.xpose.msra.mxu0 0.0
    %4973 = vmatprep.subr.mxu0 0.0
    %4974 = vmatpush1.xpose.msra.mxu0 0.0
    %4975 = vmatprep.subr.mxu0 0.0
    %4976 = vmatpush1.xpose.msra.mxu0 0.0
    %4977 = vmatprep.subr.mxu0 0.0
    %4978 = vmatpush1.xpose.msra.mxu0 0.0
    %4979 = vmatprep.subr.mxu0 0.0
    %4980 = vmatpush1.xpose.msra.mxu0 0.0
    %4981 = vmatprep.subr.mxu0 0.0
    %4982 = vmatpush1.xpose.msra.mxu0 0.0
    %4983 = vmatprep.subr.mxu0 0.0
    %4984 = vmatpush1.xpose.msra.mxu0 0.0
    %4985 = vmatprep.subr.mxu0 0.0
    %4986 = vmatpush1.xpose.msra.mxu0 0.0
    %4987 = vmatprep.mubr.f32.mxu0 0.0
    %4988 = vmatmul.mubr.f32.gmra.mrb[0].mxu0 %v4915
    %v4989 = vpop.f32.mrb[0].mxu0
    %v4990 = vadd.f32 0.0, %v4989
    %v4991 = vpop.f32.mrb[0].mxu0
    %4992 = vmatprep.mubr.f32.mxu0 0.0
    %4993 = vmatmul.mubr.f32.gmra.mrb[0].mxu0 %v4917
    %v4994 = vpop.f32.mrb[0].mxu0
    %v4995 = vadd.f32 0.0, %v4994
    %v4996 = vpop.f32.mrb[0].mxu0
    %4997 = vdwg.mxu0
    %5000 = vrot.lane.b32.xlu0 %v4892, 96
    %v5001 = vpop.permute.xlu0 %5000
    %5002 = vrot.lane.b32.xlu0 %v4897, 96
    %v5003 = vpop.permute.xlu0 %5002
    %v5004 = vsel %vm310, %v4892, 0
    %v5006 = vsel %vm310, %v4897, 0
    %v5008 = vsel %vm310, %v5001, 0
    %v5010 = vsel %vm310, %v5003, 0
    %5012 = vmatprep.subr.mxu0 0.0
    %5013 = vmatpush1.xpose.msra.mxu0 %v5008
    %5014 = vmatprep.subr.mxu0 0.0
    %5015 = vmatpush1.xpose.msra.mxu0 %v5010
    %5016 = vmatprep.subr.mxu0 0.0
    %5017 = vmatpush1.xpose.msra.mxu0 0.0
    %5018 = vmatprep.subr.mxu0 0.0
    %5019 = vmatpush1.xpose.msra.mxu0 0.0
    %5020 = vmatprep.subr.mxu0 0.0
    %5021 = vmatpush1.xpose.msra.mxu0 0.0
    %5022 = vmatprep.subr.mxu0 0.0
    %5023 = vmatpush1.xpose.msra.mxu0 0.0
    %5024 = vmatprep.subr.mxu0 0.0
    %5025 = vmatpush1.xpose.msra.mxu0 0.0
    %5026 = vmatprep.subr.mxu0 0.0
    %5027 = vmatpush1.xpose.msra.mxu0 0.0
    %5028 = vmatprep.subr.mxu0 0.0
    %5029 = vmatpush1.xpose.msra.mxu0 0.0
    %5030 = vmatprep.subr.mxu0 0.0
    %5031 = vmatpush1.xpose.msra.mxu0 0.0
    %5032 = vmatprep.subr.mxu0 0.0
    %5033 = vmatpush1.xpose.msra.mxu0 0.0
    %5034 = vmatprep.subr.mxu0 0.0
    %5035 = vmatpush1.xpose.msra.mxu0 0.0
    %5036 = vmatprep.subr.mxu0 0.0
    %5037 = vmatpush1.xpose.msra.mxu0 0.0
    %5038 = vmatprep.subr.mxu0 0.0
    %5039 = vmatpush1.xpose.msra.mxu0 0.0
    %5040 = vmatprep.subr.mxu0 0.0
    %5041 = vmatpush1.xpose.msra.mxu0 0.0
    %5042 = vmatprep.subr.mxu0 0.0
    %5043 = vmatpush1.xpose.msra.mxu0 0.0
    %5044 = vmatprep.subr.mxu0 0.0
    %5045 = vmatpush1.xpose.msra.mxu0 0.0
    %5046 = vmatprep.subr.mxu0 0.0
    %5047 = vmatpush1.xpose.msra.mxu0 0.0
    %5048 = vmatprep.subr.mxu0 0.0
    %5049 = vmatpush1.xpose.msra.mxu0 0.0
    %5050 = vmatprep.subr.mxu0 0.0
    %5051 = vmatpush1.xpose.msra.mxu0 0.0
    %5052 = vmatprep.subr.mxu0 0.0
    %5053 = vmatpush1.xpose.msra.mxu0 0.0
    %5054 = vmatprep.subr.mxu0 0.0
    %5055 = vmatpush1.xpose.msra.mxu0 0.0
    %5056 = vmatprep.subr.mxu0 0.0
    %5057 = vmatpush1.xpose.msra.mxu0 0.0
    %5058 = vmatprep.subr.mxu0 0.0
    %5059 = vmatpush1.xpose.msra.mxu0 0.0
    %5060 = vmatprep.subr.mxu0 0.0
    %5061 = vmatpush1.xpose.msra.mxu0 0.0
    %5062 = vmatprep.subr.mxu0 0.0
    %5063 = vmatpush1.xpose.msra.mxu0 0.0
    %5064 = vmatprep.subr.mxu0 0.0
    %5065 = vmatpush1.xpose.msra.mxu0 0.0
    %5066 = vmatprep.subr.mxu0 0.0
    %5067 = vmatpush1.xpose.msra.mxu0 0.0
    %5068 = vmatprep.subr.mxu0 0.0
    %5069 = vmatpush1.xpose.msra.mxu0 0.0
    %5070 = vmatprep.subr.mxu0 0.0
    %5071 = vmatpush1.xpose.msra.mxu0 0.0
    %5072 = vmatprep.subr.mxu0 0.0
    %5073 = vmatpush1.xpose.msra.mxu0 0.0
    %5074 = vmatprep.subr.mxu0 0.0
    %5075 = vmatpush1.xpose.msra.mxu0 0.0
    %5076 = vmatprep.mubr.f32.mxu0 0.0
    %5077 = vmatmul.mubr.f32.gmra.mrb[0].mxu0 %v5004
    %v5078 = vpop.f32.mrb[0].mxu0
    %v5079 = vadd.f32 0.0, %v5078
    %v5080 = vpop.f32.mrb[0].mxu0
    %5081 = vmatprep.mubr.f32.mxu0 0.0
    %5082 = vmatmul.mubr.f32.gmra.mrb[0].mxu0 %v5006
    %v5083 = vpop.f32.mrb[0].mxu0
    %v5084 = vadd.f32 0.0, %v5083
    %v5085 = vpop.f32.mrb[0].mxu0
    %5086 = vdwg.mxu0
    %v5087 = vmul.f32 %v4990, 0.35355338
    %v5088 = vmul.f32 %v4995, 0.35355338
    %v5089 = vmul.f32 %v5079, 0.35355338
    %v5090 = vmul.f32 %v5084, 0.35355338
    %v5091 = vadd.f32 %v5087, %v4907
    %v5092 = vadd.f32 %v5088, %v4908
    %v5093 = vadd.f32 %v5089, %v4907
    %v5094 = vadd.f32 %v5090, %v4908
    %v5095 = vsel %vm487, %v5091, -inf
    %5096 = vmax.xlane.f32.xlu0 %v5095
    %v5097 = vpop.xlane.xlu0 %5096
    %v5098 = vsel %vm487, %v5092, -inf
    %5099 = vmax.xlane.f32.xlu0 %v5098
    %v5100 = vpop.xlane.xlu0 %5099
    %v5101 = vsel %vm487, %v5093, -inf
    %5102 = vmax.xlane.f32.xlu0 %v5101
    %v5103 = vpop.xlane.xlu0 %5102
    %v5104 = vsel %vm487, %v5094, -inf
    %5105 = vmax.xlane.f32.xlu0 %v5104
    %v5106 = vpop.xlane.xlu0 %5105
    %v5107 = vsub.f32 %v5091, %v5097
    %v5108 = vsub.f32 %v5092, %v5100
    %v5109 = vsub.f32 %v5093, %v5103
    %v5110 = vsub.f32 %v5094, %v5106
    %v5111 = vmul.f32 %v5107, 1.442695
    %v5112 = vpow.pop %v5111
    %v5113 = vmul.f32 %v5108, 1.442695
    %v5114 = vpow.pop %v5113
    %v5115 = vmul.f32 %v5109, 1.442695
    %v5116 = vpow.pop %v5115
    %v5117 = vmul.f32 %v5110, 1.442695
    %v5118 = vpow.pop %v5117
    %v5119 = vsel %vm487, %v5112, 0.0
    %5120 = vadd.xlane.f32.xlu0 %v5119
    %v5121 = vpop.xlane.xlu0 %5120
    %v5122 = vsel %vm487, %v5114, 0.0
    %5123 = vadd.xlane.f32.xlu0 %v5122
    %v5124 = vpop.xlane.xlu0 %5123
    %v5125 = vsel %vm487, %v5116, 0.0
    %5126 = vadd.xlane.f32.xlu0 %v5125
    %v5127 = vpop.xlane.xlu0 %5126
    %v5128 = vsel %vm487, %v5118, 0.0
    %5129 = vadd.xlane.f32.xlu0 %v5128
    %v5130 = vpop.xlane.xlu0 %5129
    %v5131 = vrcp.pop %v5121
    %v5132 = vmul.f32 %v5112, %v5131
    %v5133 = vrcp.pop %v5124
    %v5134 = vmul.f32 %v5114, %v5133
    %v5135 = vrcp.pop %v5127
    %v5136 = vmul.f32 %v5116, %v5135
    %v5137 = vrcp.pop %v5130
    %v5138 = vmul.f32 %v5118, %v5137
    %5139 = vrot.lane.b32.xlu0 %v4882, 64
    %v5140 = vpop.permute.xlu0 %5139
    %5141 = vrot.lane.b32.xlu0 %v4887, 64
    %v5142 = vpop.permute.xlu0 %5141
    %v5146 = vsel %vm487, %v5132, 0
    %v5149 = vsel %vm487, %v5134, 0
    %5151 = vmatprep.subr.mxu0 0.0
    %5152 = vmatpush1.msra.mxu0 %v5140
    %5153 = vmatprep.subr.mxu0 0.0
    %5154 = vmatpush1.msra.mxu0 %v5142
    %5155 = vmatprep.subr.mxu0 0.0
    %5156 = vmatpush1.msra.mxu0 0.0
    %5157 = vmatprep.subr.mxu0 0.0
    %5158 = vmatpush1.msra.mxu0 0.0
    %5159 = vmatprep.subr.mxu0 0.0
    %5160 = vmatpush1.msra.mxu0 0.0
    %5161 = vmatprep.subr.mxu0 0.0
    %5162 = vmatpush1.msra.mxu0 0.0
    %5163 = vmatprep.subr.mxu0 0.0
    %5164 = vmatpush1.msra.mxu0 0.0
    %5165 = vmatprep.subr.mxu0 0.0
    %5166 = vmatpush1.msra.mxu0 0.0
    %5167 = vmatprep.subr.mxu0 0.0
    %5168 = vmatpush1.msra.mxu0 0.0
    %5169 = vmatprep.subr.mxu0 0.0
    %5170 = vmatpush1.msra.mxu0 0.0
    %5171 = vmatprep.subr.mxu0 0.0
    %5172 = vmatpush1.msra.mxu0 0.0
    %5173 = vmatprep.subr.mxu0 0.0
    %5174 = vmatpush1.msra.mxu0 0.0
    %5175 = vmatprep.subr.mxu0 0.0
    %5176 = vmatpush1.msra.mxu0 0.0
    %5177 = vmatprep.subr.mxu0 0.0
    %5178 = vmatpush1.msra.mxu0 0.0
    %5179 = vmatprep.subr.mxu0 0.0
    %5180 = vmatpush1.msra.mxu0 0.0
    %5181 = vmatprep.subr.mxu0 0.0
    %5182 = vmatpush1.msra.mxu0 0.0
    %5183 = vmatprep.subr.mxu0 0.0
    %5184 = vmatpush1.msra.mxu0 0.0
    %5185 = vmatprep.subr.mxu0 0.0
    %5186 = vmatpush1.msra.mxu0 0.0
    %5187 = vmatprep.subr.mxu0 0.0
    %5188 = vmatpush1.msra.mxu0 0.0
    %5189 = vmatprep.subr.mxu0 0.0
    %5190 = vmatpush1.msra.mxu0 0.0
    %5191 = vmatprep.subr.mxu0 0.0
    %5192 = vmatpush1.msra.mxu0 0.0
    %5193 = vmatprep.subr.mxu0 0.0
    %5194 = vmatpush1.msra.mxu0 0.0
    %5195 = vmatprep.subr.mxu0 0.0
    %5196 = vmatpush1.msra.mxu0 0.0
    %5197 = vmatprep.subr.mxu0 0.0
    %5198 = vmatpush1.msra.mxu0 0.0
    %5199 = vmatprep.subr.mxu0 0.0
    %5200 = vmatpush1.msra.mxu0 0.0
    %5201 = vmatprep.subr.mxu0 0.0
    %5202 = vmatpush1.msra.mxu0 0.0
    %5203 = vmatprep.subr.mxu0 0.0
    %5204 = vmatpush1.msra.mxu0 0.0
    %5205 = vmatprep.subr.mxu0 0.0
    %5206 = vmatpush1.msra.mxu0 0.0
    %5207 = vmatprep.subr.mxu0 0.0
    %5208 = vmatpush1.msra.mxu0 0.0
    %5209 = vmatprep.subr.mxu0 0.0
    %5210 = vmatpush1.msra.mxu0 0.0
    %5211 = vmatprep.subr.mxu0 0.0
    %5212 = vmatpush1.msra.mxu0 0.0
    %5213 = vmatprep.subr.mxu0 0.0
    %5214 = vmatpush1.msra.mxu0 0.0
    %5215 = vmatprep.mubr.f32.mxu0 0.0
    %5216 = vmatmul.mubr.f32.gmra.mrb[0].mxu0 %v5146
    %v5217 = vpop.f32.mrb[0].mxu0
    %v5218 = vadd.f32 0.0, %v5217
    %v5219 = vpop.f32.mrb[0].mxu0
    %5220 = vmatprep.mubr.f32.mxu0 0.0
    %5221 = vmatmul.mubr.f32.gmra.mrb[0].mxu0 %v5149
    %v5222 = vpop.f32.mrb[0].mxu0
    %v5223 = vadd.f32 0.0, %v5222
    %v5224 = vpop.f32.mrb[0].mxu0
    %5225 = vdwg.mxu0
    %5226 = vrot.lane.b32.xlu0 %v4892, 64
    %v5227 = vpop.permute.xlu0 %5226
    %5228 = vrot.lane.b32.xlu0 %v4897, 64
    %v5229 = vpop.permute.xlu0 %5228
    %v5233 = vsel %vm487, %v5136, 0
    %v5236 = vsel %vm487, %v5138, 0
    %5238 = vmatprep.subr.mxu0 0.0
    %5239 = vmatpush1.msra.mxu0 %v5227
    %5240 = vmatprep.subr.mxu0 0.0
    %5241 = vmatpush1.msra.mxu0 %v5229
    %5242 = vmatprep.subr.mxu0 0.0
    %5243 = vmatpush1.msra.mxu0 0.0
    %5244 = vmatprep.subr.mxu0 0.0
    %5245 = vmatpush1.msra.mxu0 0.0
    %5246 = vmatprep.subr.mxu0 0.0
    %5247 = vmatpush1.msra.mxu0 0.0
    %5248 = vmatprep.subr.mxu0 0.0
    %5249 = vmatpush1.msra.mxu0 0.0
    %5250 = vmatprep.subr.mxu0 0.0
    %5251 = vmatpush1.msra.mxu0 0.0
    %5252 = vmatprep.subr.mxu0 0.0
    %5253 = vmatpush1.msra.mxu0 0.0
    %5254 = vmatprep.subr.mxu0 0.0
    %5255 = vmatpush1.msra.mxu0 0.0
    %5256 = vmatprep.subr.mxu0 0.0
    %5257 = vmatpush1.msra.mxu0 0.0
    %5258 = vmatprep.subr.mxu0 0.0
    %5259 = vmatpush1.msra.mxu0 0.0
    %5260 = vmatprep.subr.mxu0 0.0
    %5261 = vmatpush1.msra.mxu0 0.0
    %5262 = vmatprep.subr.mxu0 0.0
    %5263 = vmatpush1.msra.mxu0 0.0
    %5264 = vmatprep.subr.mxu0 0.0
    %5265 = vmatpush1.msra.mxu0 0.0
    %5266 = vmatprep.subr.mxu0 0.0
    %5267 = vmatpush1.msra.mxu0 0.0
    %5268 = vmatprep.subr.mxu0 0.0
    %5269 = vmatpush1.msra.mxu0 0.0
    %5270 = vmatprep.subr.mxu0 0.0
    %5271 = vmatpush1.msra.mxu0 0.0
    %5272 = vmatprep.subr.mxu0 0.0
    %5273 = vmatpush1.msra.mxu0 0.0
    %5274 = vmatprep.subr.mxu0 0.0
    %5275 = vmatpush1.msra.mxu0 0.0
    %5276 = vmatprep.subr.mxu0 0.0
    %5277 = vmatpush1.msra.mxu0 0.0
    %5278 = vmatprep.subr.mxu0 0.0
    %5279 = vmatpush1.msra.mxu0 0.0
    %5280 = vmatprep.subr.mxu0 0.0
    %5281 = vmatpush1.msra.mxu0 0.0
    %5282 = vmatprep.subr.mxu0 0.0
    %5283 = vmatpush1.msra.mxu0 0.0
    %5284 = vmatprep.subr.mxu0 0.0
    %5285 = vmatpush1.msra.mxu0 0.0
    %5286 = vmatprep.subr.mxu0 0.0
    %5287 = vmatpush1.msra.mxu0 0.0
    %5288 = vmatprep.subr.mxu0 0.0
    %5289 = vmatpush1.msra.mxu0 0.0
    %5290 = vmatprep.subr.mxu0 0.0
    %5291 = vmatpush1.msra.mxu0 0.0
    %5292 = vmatprep.subr.mxu0 0.0
    %5293 = vmatpush1.msra.mxu0 0.0
    %5294 = vmatprep.subr.mxu0 0.0
    %5295 = vmatpush1.msra.mxu0 0.0
    %5296 = vmatprep.subr.mxu0 0.0
    %5297 = vmatpush1.msra.mxu0 0.0
    %5298 = vmatprep.subr.mxu0 0.0
    %5299 = vmatpush1.msra.mxu0 0.0
    %5300 = vmatprep.subr.mxu0 0.0
    %5301 = vmatpush1.msra.mxu0 0.0
    %5302 = vmatprep.mubr.f32.mxu0 0.0
    %5303 = vmatmul.mubr.f32.gmra.mrb[0].mxu0 %v5233
    %v5304 = vpop.f32.mrb[0].mxu0
    %v5305 = vadd.f32 0.0, %v5304
    %v5306 = vpop.f32.mrb[0].mxu0
    %5307 = vmatprep.mubr.f32.mxu0 0.0
    %5308 = vmatmul.mubr.f32.gmra.mrb[0].mxu0 %v5236
    %v5309 = vpop.f32.mrb[0].mxu0
    %v5310 = vadd.f32 0.0, %v5309
    %v5311 = vpop.f32.mrb[0].mxu0
    %5312 = vdwg.mxu0
    %5313 = vrot.lane.b32.xlu0 %v4882, 120
    %v5314 = vpop.permute.xlu0 %5313
    %5315 = vrot.lane.b32.xlu0 %v4887, 120
    %v5316 = vpop.permute.xlu0 %5315
    %5317 = vrot.lane.b32.xlu0 %v4882, 88
    %v5318 = vpop.permute.xlu0 %5317
    %5319 = vrot.lane.b32.xlu0 %v4887, 88
    %v5320 = vpop.permute.xlu0 %5319
    %v5321 = vsel %vm310, %v5314, 0
    %v5323 = vsel %vm310, %v5316, 0
    %v5325 = vsel %vm310, %v5318, 0
    %v5327 = vsel %vm310, %v5320, 0
    %5329 = vmatprep.subr.mxu0 0.0
    %5330 = vmatpush1.xpose.msra.mxu0 %v5325
    %5331 = vmatprep.subr.mxu0 0.0
    %5332 = vmatpush1.xpose.msra.mxu0 %v5327
    %5333 = vmatprep.subr.mxu0 0.0
    %5334 = vmatpush1.xpose.msra.mxu0 0.0
    %5335 = vmatprep.subr.mxu0 0.0
    %5336 = vmatpush1.xpose.msra.mxu0 0.0
    %5337 = vmatprep.subr.mxu0 0.0
    %5338 = vmatpush1.xpose.msra.mxu0 0.0
    %5339 = vmatprep.subr.mxu0 0.0
    %5340 = vmatpush1.xpose.msra.mxu0 0.0
    %5341 = vmatprep.subr.mxu0 0.0
    %5342 = vmatpush1.xpose.msra.mxu0 0.0
    %5343 = vmatprep.subr.mxu0 0.0
    %5344 = vmatpush1.xpose.msra.mxu0 0.0
    %5345 = vmatprep.subr.mxu0 0.0
    %5346 = vmatpush1.xpose.msra.mxu0 0.0
    %5347 = vmatprep.subr.mxu0 0.0
    %5348 = vmatpush1.xpose.msra.mxu0 0.0
    %5349 = vmatprep.subr.mxu0 0.0
    %5350 = vmatpush1.xpose.msra.mxu0 0.0
    %5351 = vmatprep.subr.mxu0 0.0
    %5352 = vmatpush1.xpose.msra.mxu0 0.0
    %5353 = vmatprep.subr.mxu0 0.0
    %5354 = vmatpush1.xpose.msra.mxu0 0.0
    %5355 = vmatprep.subr.mxu0 0.0
    %5356 = vmatpush1.xpose.msra.mxu0 0.0
    %5357 = vmatprep.subr.mxu0 0.0
    %5358 = vmatpush1.xpose.msra.mxu0 0.0
    %5359 = vmatprep.subr.mxu0 0.0
    %5360 = vmatpush1.xpose.msra.mxu0 0.0
    %5361 = vmatprep.subr.mxu0 0.0
    %5362 = vmatpush1.xpose.msra.mxu0 0.0
    %5363 = vmatprep.subr.mxu0 0.0
    %5364 = vmatpush1.xpose.msra.mxu0 0.0
    %5365 = vmatprep.subr.mxu0 0.0
    %5366 = vmatpush1.xpose.msra.mxu0 0.0
    %5367 = vmatprep.subr.mxu0 0.0
    %5368 = vmatpush1.xpose.msra.mxu0 0.0
    %5369 = vmatprep.subr.mxu0 0.0
    %5370 = vmatpush1.xpose.msra.mxu0 0.0
    %5371 = vmatprep.subr.mxu0 0.0
    %5372 = vmatpush1.xpose.msra.mxu0 0.0
    %5373 = vmatprep.subr.mxu0 0.0
    %5374 = vmatpush1.xpose.msra.mxu0 0.0
    %5375 = vmatprep.subr.mxu0 0.0
    %5376 = vmatpush1.xpose.msra.mxu0 0.0
    %5377 = vmatprep.subr.mxu0 0.0
    %5378 = vmatpush1.xpose.msra.mxu0 0.0
    %5379 = vmatprep.subr.mxu0 0.0
    %5380 = vmatpush1.xpose.msra.mxu0 0.0
    %5381 = vmatprep.subr.mxu0 0.0
    %5382 = vmatpush1.xpose.msra.mxu0 0.0
    %5383 = vmatprep.subr.mxu0 0.0
    %5384 = vmatpush1.xpose.msra.mxu0 0.0
    %5385 = vmatprep.subr.mxu0 0.0
    %5386 = vmatpush1.xpose.msra.mxu0 0.0
    %5387 = vmatprep.subr.mxu0 0.0
    %5388 = vmatpush1.xpose.msra.mxu0 0.0
    %5389 = vmatprep.subr.mxu0 0.0
    %5390 = vmatpush1.xpose.msra.mxu0 0.0
    %5391 = vmatprep.subr.mxu0 0.0
    %5392 = vmatpush1.xpose.msra.mxu0 0.0
    %5393 = vmatprep.mubr.f32.mxu0 0.0
    %5394 = vmatmul.mubr.f32.gmra.mrb[0].mxu0 %v5321
    %v5395 = vpop.f32.mrb[0].mxu0
    %v5396 = vadd.f32 0.0, %v5395
    %v5397 = vpop.f32.mrb[0].mxu0
    %5398 = vmatprep.mubr.f32.mxu0 0.0
    %5399 = vmatmul.mubr.f32.gmra.mrb[0].mxu0 %v5323
    %v5400 = vpop.f32.mrb[0].mxu0
    %v5401 = vadd.f32 0.0, %v5400
    %v5402 = vpop.f32.mrb[0].mxu0
    %5403 = vdwg.mxu0
    %5404 = vrot.lane.b32.xlu0 %v4892, 120
    %v5405 = vpop.permute.xlu0 %5404
    %5406 = vrot.lane.b32.xlu0 %v4897, 120
    %v5407 = vpop.permute.xlu0 %5406
    %5408 = vrot.lane.b32.xlu0 %v4892, 88
    %v5409 = vpop.permute.xlu0 %5408
    %5410 = vrot.lane.b32.xlu0 %v4897, 88
    %v5411 = vpop.permute.xlu0 %5410
    %v5412 = vsel %vm310, %v5405, 0
    %v5414 = vsel %vm310, %v5407, 0
    %v5416 = vsel %vm310, %v5409, 0
    %v5418 = vsel %vm310, %v5411, 0
    %5420 = vmatprep.subr.mxu0 0.0
    %5421 = vmatpush1.xpose.msra.mxu0 %v5416
    %5422 = vmatprep.subr.mxu0 0.0
    %5423 = vmatpush1.xpose.msra.mxu0 %v5418
    %5424 = vmatprep.subr.mxu0 0.0
    %5425 = vmatpush1.xpose.msra.mxu0 0.0
    %5426 = vmatprep.subr.mxu0 0.0
    %5427 = vmatpush1.xpose.msra.mxu0 0.0
    %5428 = vmatprep.subr.mxu0 0.0
    %5429 = vmatpush1.xpose.msra.mxu0 0.0
    %5430 = vmatprep.subr.mxu0 0.0
    %5431 = vmatpush1.xpose.msra.mxu0 0.0
    %5432 = vmatprep.subr.mxu0 0.0
    %5433 = vmatpush1.xpose.msra.mxu0 0.0
    %5434 = vmatprep.subr.mxu0 0.0
    %5435 = vmatpush1.xpose.msra.mxu0 0.0
    %5436 = vmatprep.subr.mxu0 0.0
    %5437 = vmatpush1.xpose.msra.mxu0 0.0
    %5438 = vmatprep.subr.mxu0 0.0
    %5439 = vmatpush1.xpose.msra.mxu0 0.0
    %5440 = vmatprep.subr.mxu0 0.0
    %5441 = vmatpush1.xpose.msra.mxu0 0.0
    %5442 = vmatprep.subr.mxu0 0.0
    %5443 = vmatpush1.xpose.msra.mxu0 0.0
    %5444 = vmatprep.subr.mxu0 0.0
    %5445 = vmatpush1.xpose.msra.mxu0 0.0
    %5446 = vmatprep.subr.mxu0 0.0
    %5447 = vmatpush1.xpose.msra.mxu0 0.0
    %5448 = vmatprep.subr.mxu0 0.0
    %5449 = vmatpush1.xpose.msra.mxu0 0.0
    %5450 = vmatprep.subr.mxu0 0.0
    %5451 = vmatpush1.xpose.msra.mxu0 0.0
    %5452 = vmatprep.subr.mxu0 0.0
    %5453 = vmatpush1.xpose.msra.mxu0 0.0
    %5454 = vmatprep.subr.mxu0 0.0
    %5455 = vmatpush1.xpose.msra.mxu0 0.0
    %5456 = vmatprep.subr.mxu0 0.0
    %5457 = vmatpush1.xpose.msra.mxu0 0.0
    %5458 = vmatprep.subr.mxu0 0.0
    %5459 = vmatpush1.xpose.msra.mxu0 0.0
    %5460 = vmatprep.subr.mxu0 0.0
    %5461 = vmatpush1.xpose.msra.mxu0 0.0
    %5462 = vmatprep.subr.mxu0 0.0
    %5463 = vmatpush1.xpose.msra.mxu0 0.0
    %5464 = vmatprep.subr.mxu0 0.0
    %5465 = vmatpush1.xpose.msra.mxu0 0.0
    %5466 = vmatprep.subr.mxu0 0.0
    %5467 = vmatpush1.xpose.msra.mxu0 0.0
    %5468 = vmatprep.subr.mxu0 0.0
    %5469 = vmatpush1.xpose.msra.mxu0 0.0
    %5470 = vmatprep.subr.mxu0 0.0
    %5471 = vmatpush1.xpose.msra.mxu0 0.0
    %5472 = vmatprep.subr.mxu0 0.0
    %5473 = vmatpush1.xpose.msra.mxu0 0.0
    %5474 = vmatprep.subr.mxu0 0.0
    %5475 = vmatpush1.xpose.msra.mxu0 0.0
    %5476 = vmatprep.subr.mxu0 0.0
    %5477 = vmatpush1.xpose.msra.mxu0 0.0
    %5478 = vmatprep.subr.mxu0 0.0
    %5479 = vmatpush1.xpose.msra.mxu0 0.0
    %5480 = vmatprep.subr.mxu0 0.0
    %5481 = vmatpush1.xpose.msra.mxu0 0.0
    %5482 = vmatprep.subr.mxu0 0.0
    %5483 = vmatpush1.xpose.msra.mxu0 0.0
    %5484 = vmatprep.mubr.f32.mxu0 0.0
    %5485 = vmatmul.mubr.f32.gmra.mrb[0].mxu0 %v5412
    %v5486 = vpop.f32.mrb[0].mxu0
    %v5487 = vadd.f32 0.0, %v5486
    %v5488 = vpop.f32.mrb[0].mxu0
    %5489 = vmatprep.mubr.f32.mxu0 0.0
    %5490 = vmatmul.mubr.f32.gmra.mrb[0].mxu0 %v5414
    %v5491 = vpop.f32.mrb[0].mxu0
    %v5492 = vadd.f32 0.0, %v5491
    %v5493 = vpop.f32.mrb[0].mxu0
    %5494 = vdwg.mxu0
    %v5495 = vmul.f32 %v5396, 0.35355338
    %v5496 = vmul.f32 %v5401, 0.35355338
    %v5497 = vmul.f32 %v5487, 0.35355338
    %v5498 = vmul.f32 %v5492, 0.35355338
    %v5499 = vadd.f32 %v5495, %v4907
    %v5500 = vadd.f32 %v5496, %v4908
    %v5501 = vadd.f32 %v5497, %v4907
    %v5502 = vadd.f32 %v5498, %v4908
    %v5503 = vsel %vm487, %v5499, -inf
    %5504 = vmax.xlane.f32.xlu0 %v5503
    %v5505 = vpop.xlane.xlu0 %5504
    %v5506 = vsel %vm487, %v5500, -inf
    %5507 = vmax.xlane.f32.xlu0 %v5506
    %v5508 = vpop.xlane.xlu0 %5507
    %v5509 = vsel %vm487, %v5501, -inf
    %5510 = vmax.xlane.f32.xlu0 %v5509
    %v5511 = vpop.xlane.xlu0 %5510
    %v5512 = vsel %vm487, %v5502, -inf
    %5513 = vmax.xlane.f32.xlu0 %v5512
    %v5514 = vpop.xlane.xlu0 %5513
    %v5515 = vsub.f32 %v5499, %v5505
    %v5516 = vsub.f32 %v5500, %v5508
    %v5517 = vsub.f32 %v5501, %v5511
    %v5518 = vsub.f32 %v5502, %v5514
    %v5519 = vmul.f32 %v5515, 1.442695
    %v5520 = vpow.pop %v5519
    %v5521 = vmul.f32 %v5516, 1.442695
    %v5522 = vpow.pop %v5521
    %v5523 = vmul.f32 %v5517, 1.442695
    %v5524 = vpow.pop %v5523
    %v5525 = vmul.f32 %v5518, 1.442695
    %v5526 = vpow.pop %v5525
    %v5527 = vsel %vm487, %v5520, 0.0
    %5528 = vadd.xlane.f32.xlu0 %v5527
    %v5529 = vpop.xlane.xlu0 %5528
    %v5530 = vsel %vm487, %v5522, 0.0
    %5531 = vadd.xlane.f32.xlu0 %v5530
    %v5532 = vpop.xlane.xlu0 %5531
    %v5533 = vsel %vm487, %v5524, 0.0
    %5534 = vadd.xlane.f32.xlu0 %v5533
    %v5535 = vpop.xlane.xlu0 %5534
    %v5536 = vsel %vm487, %v5526, 0.0
    %5537 = vadd.xlane.f32.xlu0 %v5536
    %v5538 = vpop.xlane.xlu0 %5537
    %v5539 = vrcp.pop %v5529
    %v5540 = vmul.f32 %v5520, %v5539
    %v5541 = vrcp.pop %v5532
    %v5542 = vmul.f32 %v5522, %v5541
    %v5543 = vrcp.pop %v5535
    %v5544 = vmul.f32 %v5524, %v5543
    %v5545 = vrcp.pop %v5538
    %v5546 = vmul.f32 %v5526, %v5545
    %5547 = vrot.lane.b32.xlu0 %v4882, 56
    %v5548 = vpop.permute.xlu0 %5547
    %5549 = vrot.lane.b32.xlu0 %v4887, 56
    %v5550 = vpop.permute.xlu0 %5549
    %v5554 = vsel %vm487, %v5540, 0
    %v5557 = vsel %vm487, %v5542, 0
    %5559 = vmatprep.subr.mxu0 0.0
    %5560 = vmatpush1.msra.mxu0 %v5548
    %5561 = vmatprep.subr.mxu0 0.0
    %5562 = vmatpush1.msra.mxu0 %v5550
    %5563 = vmatprep.subr.mxu0 0.0
    %5564 = vmatpush1.msra.mxu0 0.0
    %5565 = vmatprep.subr.mxu0 0.0
    %5566 = vmatpush1.msra.mxu0 0.0
    %5567 = vmatprep.subr.mxu0 0.0
    %5568 = vmatpush1.msra.mxu0 0.0
    %5569 = vmatprep.subr.mxu0 0.0
    %5570 = vmatpush1.msra.mxu0 0.0
    %5571 = vmatprep.subr.mxu0 0.0
    %5572 = vmatpush1.msra.mxu0 0.0
    %5573 = vmatprep.subr.mxu0 0.0
    %5574 = vmatpush1.msra.mxu0 0.0
    %5575 = vmatprep.subr.mxu0 0.0
    %5576 = vmatpush1.msra.mxu0 0.0
    %5577 = vmatprep.subr.mxu0 0.0
    %5578 = vmatpush1.msra.mxu0 0.0
    %5579 = vmatprep.subr.mxu0 0.0
    %5580 = vmatpush1.msra.mxu0 0.0
    %5581 = vmatprep.subr.mxu0 0.0
    %5582 = vmatpush1.msra.mxu0 0.0
    %5583 = vmatprep.subr.mxu0 0.0
    %5584 = vmatpush1.msra.mxu0 0.0
    %5585 = vmatprep.subr.mxu0 0.0
    %5586 = vmatpush1.msra.mxu0 0.0
    %5587 = vmatprep.subr.mxu0 0.0
    %5588 = vmatpush1.msra.mxu0 0.0
    %5589 = vmatprep.subr.mxu0 0.0
    %5590 = vmatpush1.msra.mxu0 0.0
    %5591 = vmatprep.subr.mxu0 0.0
    %5592 = vmatpush1.msra.mxu0 0.0
    %5593 = vmatprep.subr.mxu0 0.0
    %5594 = vmatpush1.msra.mxu0 0.0
    %5595 = vmatprep.subr.mxu0 0.0
    %5596 = vmatpush1.msra.mxu0 0.0
    %5597 = vmatprep.subr.mxu0 0.0
    %5598 = vmatpush1.msra.mxu0 0.0
    %5599 = vmatprep.subr.mxu0 0.0
    %5600 = vmatpush1.msra.mxu0 0.0
    %5601 = vmatprep.subr.mxu0 0.0
    %5602 = vmatpush1.msra.mxu0 0.0
    %5603 = vmatprep.subr.mxu0 0.0
    %5604 = vmatpush1.msra.mxu0 0.0
    %5605 = vmatprep.subr.mxu0 0.0
    %5606 = vmatpush1.msra.mxu0 0.0
    %5607 = vmatprep.subr.mxu0 0.0
    %5608 = vmatpush1.msra.mxu0 0.0
    %5609 = vmatprep.subr.mxu0 0.0
    %5610 = vmatpush1.msra.mxu0 0.0
    %5611 = vmatprep.subr.mxu0 0.0
    %5612 = vmatpush1.msra.mxu0 0.0
    %5613 = vmatprep.subr.mxu0 0.0
    %5614 = vmatpush1.msra.mxu0 0.0
    %5615 = vmatprep.subr.mxu0 0.0
    %5616 = vmatpush1.msra.mxu0 0.0
    %5617 = vmatprep.subr.mxu0 0.0
    %5618 = vmatpush1.msra.mxu0 0.0
    %5619 = vmatprep.subr.mxu0 0.0
    %5620 = vmatpush1.msra.mxu0 0.0
    %5621 = vmatprep.subr.mxu0 0.0
    %5622 = vmatpush1.msra.mxu0 0.0
    %5623 = vmatprep.mubr.f32.mxu0 0.0
    %5624 = vmatmul.mubr.f32.gmra.mrb[0].mxu0 %v5554
    %v5625 = vpop.f32.mrb[0].mxu0
    %v5626 = vadd.f32 0.0, %v5625
    %v5627 = vpop.f32.mrb[0].mxu0
    %5628 = vmatprep.mubr.f32.mxu0 0.0
    %5629 = vmatmul.mubr.f32.gmra.mrb[0].mxu0 %v5557
    %v5630 = vpop.f32.mrb[0].mxu0
    %v5631 = vadd.f32 0.0, %v5630
    %v5632 = vpop.f32.mrb[0].mxu0
    %5633 = vdwg.mxu0
    %5634 = vrot.lane.b32.xlu0 %v4892, 56
    %v5635 = vpop.permute.xlu0 %5634
    %5636 = vrot.lane.b32.xlu0 %v4897, 56
    %v5637 = vpop.permute.xlu0 %5636
    %v5641 = vsel %vm487, %v5544, 0
    %v5644 = vsel %vm487, %v5546, 0
    %5646 = vmatprep.subr.mxu0 0.0
    %5647 = vmatpush1.msra.mxu0 %v5635
    %5648 = vmatprep.subr.mxu0 0.0
    %5649 = vmatpush1.msra.mxu0 %v5637
    %5650 = vmatprep.subr.mxu0 0.0
    %5651 = vmatpush1.msra.mxu0 0.0
    %5652 = vmatprep.subr.mxu0 0.0
    %5653 = vmatpush1.msra.mxu0 0.0
    %5654 = vmatprep.subr.mxu0 0.0
    %5655 = vmatpush1.msra.mxu0 0.0
    %5656 = vmatprep.subr.mxu0 0.0
    %5657 = vmatpush1.msra.mxu0 0.0
    %5658 = vmatprep.subr.mxu0 0.0
    %5659 = vmatpush1.msra.mxu0 0.0
    %5660 = vmatprep.subr.mxu0 0.0
    %5661 = vmatpush1.msra.mxu0 0.0
    %5662 = vmatprep.subr.mxu0 0.0
    %5663 = vmatpush1.msra.mxu0 0.0
    %5664 = vmatprep.subr.mxu0 0.0
    %5665 = vmatpush1.msra.mxu0 0.0
    %5666 = vmatprep.subr.mxu0 0.0
    %5667 = vmatpush1.msra.mxu0 0.0
    %5668 = vmatprep.subr.mxu0 0.0
    %5669 = vmatpush1.msra.mxu0 0.0
    %5670 = vmatprep.subr.mxu0 0.0
    %5671 = vmatpush1.msra.mxu0 0.0
    %5672 = vmatprep.subr.mxu0 0.0
    %5673 = vmatpush1.msra.mxu0 0.0
    %5674 = vmatprep.subr.mxu0 0.0
    %5675 = vmatpush1.msra.mxu0 0.0
    %5676 = vmatprep.subr.mxu0 0.0
    %5677 = vmatpush1.msra.mxu0 0.0
    %5678 = vmatprep.subr.mxu0 0.0
    %5679 = vmatpush1.msra.mxu0 0.0
    %5680 = vmatprep.subr.mxu0 0.0
    %5681 = vmatpush1.msra.mxu0 0.0
    %5682 = vmatprep.subr.mxu0 0.0
    %5683 = vmatpush1.msra.mxu0 0.0
    %5684 = vmatprep.subr.mxu0 0.0
    %5685 = vmatpush1.msra.mxu0 0.0
    %5686 = vmatprep.subr.mxu0 0.0
    %5687 = vmatpush1.msra.mxu0 0.0
    %5688 = vmatprep.subr.mxu0 0.0
    %5689 = vmatpush1.msra.mxu0 0.0
    %5690 = vmatprep.subr.mxu0 0.0
    %5691 = vmatpush1.msra.mxu0 0.0
    %5692 = vmatprep.subr.mxu0 0.0
    %5693 = vmatpush1.msra.mxu0 0.0
    %5694 = vmatprep.subr.mxu0 0.0
    %5695 = vmatpush1.msra.mxu0 0.0
    %5696 = vmatprep.subr.mxu0 0.0
    %5697 = vmatpush1.msra.mxu0 0.0
    %5698 = vmatprep.subr.mxu0 0.0
    %5699 = vmatpush1.msra.mxu0 0.0
    %5700 = vmatprep.subr.mxu0 0.0
    %5701 = vmatpush1.msra.mxu0 0.0
    %5702 = vmatprep.subr.mxu0 0.0
    %5703 = vmatpush1.msra.mxu0 0.0
    %5704 = vmatprep.subr.mxu0 0.0
    %5705 = vmatpush1.msra.mxu0 0.0
    %5706 = vmatprep.subr.mxu0 0.0
    %5707 = vmatpush1.msra.mxu0 0.0
    %5708 = vmatprep.subr.mxu0 0.0
    %5709 = vmatpush1.msra.mxu0 0.0
    %5710 = vmatprep.mubr.f32.mxu0 0.0
    %5711 = vmatmul.mubr.f32.gmra.mrb[0].mxu0 %v5641
    %v5712 = vpop.f32.mrb[0].mxu0
    %v5713 = vadd.f32 0.0, %v5712
    %v5714 = vpop.f32.mrb[0].mxu0
    %5715 = vmatprep.mubr.f32.mxu0 0.0
    %5716 = vmatmul.mubr.f32.gmra.mrb[0].mxu0 %v5644
    %v5717 = vpop.f32.mrb[0].mxu0
    %v5718 = vadd.f32 0.0, %v5717
    %v5719 = vpop.f32.mrb[0].mxu0
    %5720 = vdwg.mxu0
    %5721 = vrot.lane.b32.xlu0 %v4882, 112
    %v5722 = vpop.permute.xlu0 %5721
    %5723 = vrot.lane.b32.xlu0 %v4887, 112
    %v5724 = vpop.permute.xlu0 %5723
    %5725 = vrot.lane.b32.xlu0 %v4882, 80
    %v5726 = vpop.permute.xlu0 %5725
    %5727 = vrot.lane.b32.xlu0 %v4887, 80
    %v5728 = vpop.permute.xlu0 %5727
    %v5729 = vsel %vm310, %v5722, 0
    %v5731 = vsel %vm310, %v5724, 0
    %v5733 = vsel %vm310, %v5726, 0
    %v5735 = vsel %vm310, %v5728, 0
    %5737 = vmatprep.subr.mxu0 0.0
    %5738 = vmatpush1.xpose.msra.mxu0 %v5733
    %5739 = vmatprep.subr.mxu0 0.0
    %5740 = vmatpush1.xpose.msra.mxu0 %v5735
    %5741 = vmatprep.subr.mxu0 0.0
    %5742 = vmatpush1.xpose.msra.mxu0 0.0
    %5743 = vmatprep.subr.mxu0 0.0
    %5744 = vmatpush1.xpose.msra.mxu0 0.0
    %5745 = vmatprep.subr.mxu0 0.0
    %5746 = vmatpush1.xpose.msra.mxu0 0.0
    %5747 = vmatprep.subr.mxu0 0.0
    %5748 = vmatpush1.xpose.msra.mxu0 0.0
    %5749 = vmatprep.subr.mxu0 0.0
    %5750 = vmatpush1.xpose.msra.mxu0 0.0
    %5751 = vmatprep.subr.mxu0 0.0
    %5752 = vmatpush1.xpose.msra.mxu0 0.0
    %5753 = vmatprep.subr.mxu0 0.0
    %5754 = vmatpush1.xpose.msra.mxu0 0.0
    %5755 = vmatprep.subr.mxu0 0.0
    %5756 = vmatpush1.xpose.msra.mxu0 0.0
    %5757 = vmatprep.subr.mxu0 0.0
    %5758 = vmatpush1.xpose.msra.mxu0 0.0
    %5759 = vmatprep.subr.mxu0 0.0
    %5760 = vmatpush1.xpose.msra.mxu0 0.0
    %5761 = vmatprep.subr.mxu0 0.0
    %5762 = vmatpush1.xpose.msra.mxu0 0.0
    %5763 = vmatprep.subr.mxu0 0.0
    %5764 = vmatpush1.xpose.msra.mxu0 0.0
    %5765 = vmatprep.subr.mxu0 0.0
    %5766 = vmatpush1.xpose.msra.mxu0 0.0
    %5767 = vmatprep.subr.mxu0 0.0
    %5768 = vmatpush1.xpose.msra.mxu0 0.0
    %5769 = vmatprep.subr.mxu0 0.0
    %5770 = vmatpush1.xpose.msra.mxu0 0.0
    %5771 = vmatprep.subr.mxu0 0.0
    %5772 = vmatpush1.xpose.msra.mxu0 0.0
    %5773 = vmatprep.subr.mxu0 0.0
    %5774 = vmatpush1.xpose.msra.mxu0 0.0
    %5775 = vmatprep.subr.mxu0 0.0
    %5776 = vmatpush1.xpose.msra.mxu0 0.0
    %5777 = vmatprep.subr.mxu0 0.0
    %5778 = vmatpush1.xpose.msra.mxu0 0.0
    %5779 = vmatprep.subr.mxu0 0.0
    %5780 = vmatpush1.xpose.msra.mxu0 0.0
    %5781 = vmatprep.subr.mxu0 0.0
    %5782 = vmatpush1.xpose.msra.mxu0 0.0
    %5783 = vmatprep.subr.mxu0 0.0
    %5784 = vmatpush1.xpose.msra.mxu0 0.0
    %5785 = vmatprep.subr.mxu0 0.0
    %5786 = vmatpush1.xpose.msra.mxu0 0.0
    %5787 = vmatprep.subr.mxu0 0.0
    %5788 = vmatpush1.xpose.msra.mxu0 0.0
    %5789 = vmatprep.subr.mxu0 0.0
    %5790 = vmatpush1.xpose.msra.mxu0 0.0
    %5791 = vmatprep.subr.mxu0 0.0
    %5792 = vmatpush1.xpose.msra.mxu0 0.0
    %5793 = vmatprep.subr.mxu0 0.0
    %5794 = vmatpush1.xpose.msra.mxu0 0.0
    %5795 = vmatprep.subr.mxu0 0.0
    %5796 = vmatpush1.xpose.msra.mxu0 0.0
    %5797 = vmatprep.subr.mxu0 0.0
    %5798 = vmatpush1.xpose.msra.mxu0 0.0
    %5799 = vmatprep.subr.mxu0 0.0
    %5800 = vmatpush1.xpose.msra.mxu0 0.0
    %5801 = vmatprep.mubr.f32.mxu0 0.0
    %5802 = vmatmul.mubr.f32.gmra.mrb[0].mxu0 %v5729
    %v5803 = vpop.f32.mrb[0].mxu0
    %v5804 = vadd.f32 0.0, %v5803
    %v5805 = vpop.f32.mrb[0].mxu0
    %5806 = vmatprep.mubr.f32.mxu0 0.0
    %5807 = vmatmul.mubr.f32.gmra.mrb[0].mxu0 %v5731
    %v5808 = vpop.f32.mrb[0].mxu0
    %v5809 = vadd.f32 0.0, %v5808
    %v5810 = vpop.f32.mrb[0].mxu0
    %5811 = vdwg.mxu0
    %5812 = vrot.lane.b32.xlu0 %v4892, 112
    %v5813 = vpop.permute.xlu0 %5812
    %5814 = vrot.lane.b32.xlu0 %v4897, 112
    %v5815 = vpop.permute.xlu0 %5814
    %5816 = vrot.lane.b32.xlu0 %v4892, 80
    %v5817 = vpop.permute.xlu0 %5816
    %5818 = vrot.lane.b32.xlu0 %v4897, 80
    %v5819 = vpop.permute.xlu0 %5818
    %v5820 = vsel %vm310, %v5813, 0
    %v5822 = vsel %vm310, %v5815, 0
    %v5824 = vsel %vm310, %v5817, 0
    %v5826 = vsel %vm310, %v5819, 0
    %5828 = vmatprep.subr.mxu0 0.0
    %5829 = vmatpush1.xpose.msra.mxu0 %v5824
    %5830 = vmatprep.subr.mxu0 0.0
    %5831 = vmatpush1.xpose.msra.mxu0 %v5826
    %5832 = vmatprep.subr.mxu0 0.0
    %5833 = vmatpush1.xpose.msra.mxu0 0.0
    %5834 = vmatprep.subr.mxu0 0.0
    %5835 = vmatpush1.xpose.msra.mxu0 0.0
    %5836 = vmatprep.subr.mxu0 0.0
    %5837 = vmatpush1.xpose.msra.mxu0 0.0
    %5838 = vmatprep.subr.mxu0 0.0
    %5839 = vmatpush1.xpose.msra.mxu0 0.0
    %5840 = vmatprep.subr.mxu0 0.0
    %5841 = vmatpush1.xpose.msra.mxu0 0.0
    %5842 = vmatprep.subr.mxu0 0.0
    %5843 = vmatpush1.xpose.msra.mxu0 0.0
    %5844 = vmatprep.subr.mxu0 0.0
    %5845 = vmatpush1.xpose.msra.mxu0 0.0
    %5846 = vmatprep.subr.mxu0 0.0
    %5847 = vmatpush1.xpose.msra.mxu0 0.0
    %5848 = vmatprep.subr.mxu0 0.0
    %5849 = vmatpush1.xpose.msra.mxu0 0.0
    %5850 = vmatprep.subr.mxu0 0.0
    %5851 = vmatpush1.xpose.msra.mxu0 0.0
    %5852 = vmatprep.subr.mxu0 0.0
    %5853 = vmatpush1.xpose.msra.mxu0 0.0
    %5854 = vmatprep.subr.mxu0 0.0
    %5855 = vmatpush1.xpose.msra.mxu0 0.0
    %5856 = vmatprep.subr.mxu0 0.0
    %5857 = vmatpush1.xpose.msra.mxu0 0.0
    %5858 = vmatprep.subr.mxu0 0.0
    %5859 = vmatpush1.xpose.msra.mxu0 0.0
    %5860 = vmatprep.subr.mxu0 0.0
    %5861 = vmatpush1.xpose.msra.mxu0 0.0
    %5862 = vmatprep.subr.mxu0 0.0
    %5863 = vmatpush1.xpose.msra.mxu0 0.0
    %5864 = vmatprep.subr.mxu0 0.0
    %5865 = vmatpush1.xpose.msra.mxu0 0.0
    %5866 = vmatprep.subr.mxu0 0.0
    %5867 = vmatpush1.xpose.msra.mxu0 0.0
    %5868 = vmatprep.subr.mxu0 0.0
    %5869 = vmatpush1.xpose.msra.mxu0 0.0
    %5870 = vmatprep.subr.mxu0 0.0
    %5871 = vmatpush1.xpose.msra.mxu0 0.0
    %5872 = vmatprep.subr.mxu0 0.0
    %5873 = vmatpush1.xpose.msra.mxu0 0.0
    %5874 = vmatprep.subr.mxu0 0.0
    %5875 = vmatpush1.xpose.msra.mxu0 0.0
    %5876 = vmatprep.subr.mxu0 0.0
    %5877 = vmatpush1.xpose.msra.mxu0 0.0
    %5878 = vmatprep.subr.mxu0 0.0
    %5879 = vmatpush1.xpose.msra.mxu0 0.0
    %5880 = vmatprep.subr.mxu0 0.0
    %5881 = vmatpush1.xpose.msra.mxu0 0.0
    %5882 = vmatprep.subr.mxu0 0.0
    %5883 = vmatpush1.xpose.msra.mxu0 0.0
    %5884 = vmatprep.subr.mxu0 0.0
    %5885 = vmatpush1.xpose.msra.mxu0 0.0
    %5886 = vmatprep.subr.mxu0 0.0
    %5887 = vmatpush1.xpose.msra.mxu0 0.0
    %5888 = vmatprep.subr.mxu0 0.0
    %5889 = vmatpush1.xpose.msra.mxu0 0.0
    %5890 = vmatprep.subr.mxu0 0.0
    %5891 = vmatpush1.xpose.msra.mxu0 0.0
    %5892 = vmatprep.mubr.f32.mxu0 0.0
    %5893 = vmatmul.mubr.f32.gmra.mrb[0].mxu0 %v5820
    %v5894 = vpop.f32.mrb[0].mxu0
    %v5895 = vadd.f32 0.0, %v5894
    %v5896 = vpop.f32.mrb[0].mxu0
    %5897 = vmatprep.mubr.f32.mxu0 0.0
    %5898 = vmatmul.mubr.f32.gmra.mrb[0].mxu0 %v5822
    %v5899 = vpop.f32.mrb[0].mxu0
    %v5900 = vadd.f32 0.0, %v5899
    %v5901 = vpop.f32.mrb[0].mxu0
    %5902 = vdwg.mxu0
    %v5903 = vmul.f32 %v5804, 0.35355338
    %v5904 = vmul.f32 %v5809, 0.35355338
    %v5905 = vmul.f32 %v5895, 0.35355338
    %v5906 = vmul.f32 %v5900, 0.35355338
    %v5907 = vadd.f32 %v5903, %v4907
    %v5908 = vadd.f32 %v5904, %v4908
    %v5909 = vadd.f32 %v5905, %v4907
    %v5910 = vadd.f32 %v5906, %v4908
    %v5911 = vsel %vm487, %v5907, -inf
    %5912 = vmax.xlane.f32.xlu0 %v5911
    %v5913 = vpop.xlane.xlu0 %5912
    %v5914 = vsel %vm487, %v5908, -inf
    %5915 = vmax.xlane.f32.xlu0 %v5914
    %v5916 = vpop.xlane.xlu0 %5915
    %v5917 = vsel %vm487, %v5909, -inf
    %5918 = vmax.xlane.f32.xlu0 %v5917
    %v5919 = vpop.xlane.xlu0 %5918
    %v5920 = vsel %vm487, %v5910, -inf
    %5921 = vmax.xlane.f32.xlu0 %v5920
    %v5922 = vpop.xlane.xlu0 %5921
    %v5923 = vsub.f32 %v5907, %v5913
    %v5924 = vsub.f32 %v5908, %v5916
    %v5925 = vsub.f32 %v5909, %v5919
    %v5926 = vsub.f32 %v5910, %v5922
    %v5927 = vmul.f32 %v5923, 1.442695
    %v5928 = vpow.pop %v5927
    %v5929 = vmul.f32 %v5924, 1.442695
    %v5930 = vpow.pop %v5929
    %v5931 = vmul.f32 %v5925, 1.442695
    %v5932 = vpow.pop %v5931
    %v5933 = vmul.f32 %v5926, 1.442695
    %v5934 = vpow.pop %v5933
    %v5935 = vsel %vm487, %v5928, 0.0
    %5936 = vadd.xlane.f32.xlu0 %v5935
    %v5937 = vpop.xlane.xlu0 %5936
    %v5938 = vsel %vm487, %v5930, 0.0
    %5939 = vadd.xlane.f32.xlu0 %v5938
    %v5940 = vpop.xlane.xlu0 %5939
    %v5941 = vsel %vm487, %v5932, 0.0
    %5942 = vadd.xlane.f32.xlu0 %v5941
    %v5943 = vpop.xlane.xlu0 %5942
    %v5944 = vsel %vm487, %v5934, 0.0
    %5945 = vadd.xlane.f32.xlu0 %v5944
    %v5946 = vpop.xlane.xlu0 %5945
    %v5947 = vrcp.pop %v5937
    %v5948 = vmul.f32 %v5928, %v5947
    %v5949 = vrcp.pop %v5940
    %v5950 = vmul.f32 %v5930, %v5949
    %v5951 = vrcp.pop %v5943
    %v5952 = vmul.f32 %v5932, %v5951
    %v5953 = vrcp.pop %v5946
    %v5954 = vmul.f32 %v5934, %v5953
    %5955 = vrot.lane.b32.xlu0 %v4882, 48
    %v5956 = vpop.permute.xlu0 %5955
    %5957 = vrot.lane.b32.xlu0 %v4887, 48
    %v5958 = vpop.permute.xlu0 %5957
    %v5962 = vsel %vm487, %v5948, 0
    %v5965 = vsel %vm487, %v5950, 0
    %5967 = vmatprep.subr.mxu0 0.0
    %5968 = vmatpush1.msra.mxu0 %v5956
    %5969 = vmatprep.subr.mxu0 0.0
    %5970 = vmatpush1.msra.mxu0 %v5958
    %5971 = vmatprep.subr.mxu0 0.0
    %5972 = vmatpush1.msra.mxu0 0.0
    %5973 = vmatprep.subr.mxu0 0.0
    %5974 = vmatpush1.msra.mxu0 0.0
    %5975 = vmatprep.subr.mxu0 0.0
    %5976 = vmatpush1.msra.mxu0 0.0
    %5977 = vmatprep.subr.mxu0 0.0
    %5978 = vmatpush1.msra.mxu0 0.0
    %5979 = vmatprep.subr.mxu0 0.0
    %5980 = vmatpush1.msra.mxu0 0.0
    %5981 = vmatprep.subr.mxu0 0.0
    %5982 = vmatpush1.msra.mxu0 0.0
    %5983 = vmatprep.subr.mxu0 0.0
    %5984 = vmatpush1.msra.mxu0 0.0
    %5985 = vmatprep.subr.mxu0 0.0
    %5986 = vmatpush1.msra.mxu0 0.0
    %5987 = vmatprep.subr.mxu0 0.0
    %5988 = vmatpush1.msra.mxu0 0.0
    %5989 = vmatprep.subr.mxu0 0.0
    %5990 = vmatpush1.msra.mxu0 0.0
    %5991 = vmatprep.subr.mxu0 0.0
    %5992 = vmatpush1.msra.mxu0 0.0
    %5993 = vmatprep.subr.mxu0 0.0
    %5994 = vmatpush1.msra.mxu0 0.0
    %5995 = vmatprep.subr.mxu0 0.0
    %5996 = vmatpush1.msra.mxu0 0.0
    %5997 = vmatprep.subr.mxu0 0.0
    %5998 = vmatpush1.msra.mxu0 0.0
    %5999 = vmatprep.subr.mxu0 0.0
    %6000 = vmatpush1.msra.mxu0 0.0
    %6001 = vmatprep.subr.mxu0 0.0
    %6002 = vmatpush1.msra.mxu0 0.0
    %6003 = vmatprep.subr.mxu0 0.0
    %6004 = vmatpush1.msra.mxu0 0.0
    %6005 = vmatprep.subr.mxu0 0.0
    %6006 = vmatpush1.msra.mxu0 0.0
    %6007 = vmatprep.subr.mxu0 0.0
    %6008 = vmatpush1.msra.mxu0 0.0
    %6009 = vmatprep.subr.mxu0 0.0
    %6010 = vmatpush1.msra.mxu0 0.0
    %6011 = vmatprep.subr.mxu0 0.0
    %6012 = vmatpush1.msra.mxu0 0.0
    %6013 = vmatprep.subr.mxu0 0.0
    %6014 = vmatpush1.msra.mxu0 0.0
    %6015 = vmatprep.subr.mxu0 0.0
    %6016 = vmatpush1.msra.mxu0 0.0
    %6017 = vmatprep.subr.mxu0 0.0
    %6018 = vmatpush1.msra.mxu0 0.0
    %6019 = vmatprep.subr.mxu0 0.0
    %6020 = vmatpush1.msra.mxu0 0.0
    %6021 = vmatprep.subr.mxu0 0.0
    %6022 = vmatpush1.msra.mxu0 0.0
    %6023 = vmatprep.subr.mxu0 0.0
    %6024 = vmatpush1.msra.mxu0 0.0
    %6025 = vmatprep.subr.mxu0 0.0
    %6026 = vmatpush1.msra.mxu0 0.0
    %6027 = vmatprep.subr.mxu0 0.0
    %6028 = vmatpush1.msra.mxu0 0.0
    %6029 = vmatprep.subr.mxu0 0.0
    %6030 = vmatpush1.msra.mxu0 0.0
    %6031 = vmatprep.mubr.f32.mxu0 0.0
    %6032 = vmatmul.mubr.f32.gmra.mrb[0].mxu0 %v5962
    %v6033 = vpop.f32.mrb[0].mxu0
    %v6034 = vadd.f32 0.0, %v6033
    %v6035 = vpop.f32.mrb[0].mxu0
    %6036 = vmatprep.mubr.f32.mxu0 0.0
    %6037 = vmatmul.mubr.f32.gmra.mrb[0].mxu0 %v5965
    %v6038 = vpop.f32.mrb[0].mxu0
    %v6039 = vadd.f32 0.0, %v6038
    %v6040 = vpop.f32.mrb[0].mxu0
    %6041 = vdwg.mxu0
    %6042 = vrot.lane.b32.xlu0 %v4892, 48
    %v6043 = vpop.permute.xlu0 %6042
    %6044 = vrot.lane.b32.xlu0 %v4897, 48
    %v6045 = vpop.permute.xlu0 %6044
    %v6049 = vsel %vm487, %v5952, 0
    %v6052 = vsel %vm487, %v5954, 0
    %6054 = vmatprep.subr.mxu0 0.0
    %6055 = vmatpush1.msra.mxu0 %v6043
    %6056 = vmatprep.subr.mxu0 0.0
    %6057 = vmatpush1.msra.mxu0 %v6045
    %6058 = vmatprep.subr.mxu0 0.0
    %6059 = vmatpush1.msra.mxu0 0.0
    %6060 = vmatprep.subr.mxu0 0.0
    %6061 = vmatpush1.msra.mxu0 0.0
    %6062 = vmatprep.subr.mxu0 0.0
    %6063 = vmatpush1.msra.mxu0 0.0
    %6064 = vmatprep.subr.mxu0 0.0
    %6065 = vmatpush1.msra.mxu0 0.0
    %6066 = vmatprep.subr.mxu0 0.0
    %6067 = vmatpush1.msra.mxu0 0.0
    %6068 = vmatprep.subr.mxu0 0.0
    %6069 = vmatpush1.msra.mxu0 0.0
    %6070 = vmatprep.subr.mxu0 0.0
    %6071 = vmatpush1.msra.mxu0 0.0
    %6072 = vmatprep.subr.mxu0 0.0
    %6073 = vmatpush1.msra.mxu0 0.0
    %6074 = vmatprep.subr.mxu0 0.0
    %6075 = vmatpush1.msra.mxu0 0.0
    %6076 = vmatprep.subr.mxu0 0.0
    %6077 = vmatpush1.msra.mxu0 0.0
    %6078 = vmatprep.subr.mxu0 0.0
    %6079 = vmatpush1.msra.mxu0 0.0
    %6080 = vmatprep.subr.mxu0 0.0
    %6081 = vmatpush1.msra.mxu0 0.0
    %6082 = vmatprep.subr.mxu0 0.0
    %6083 = vmatpush1.msra.mxu0 0.0
    %6084 = vmatprep.subr.mxu0 0.0
    %6085 = vmatpush1.msra.mxu0 0.0
    %6086 = vmatprep.subr.mxu0 0.0
    %6087 = vmatpush1.msra.mxu0 0.0
    %6088 = vmatprep.subr.mxu0 0.0
    %6089 = vmatpush1.msra.mxu0 0.0
    %6090 = vmatprep.subr.mxu0 0.0
    %6091 = vmatpush1.msra.mxu0 0.0
    %6092 = vmatprep.subr.mxu0 0.0
    %6093 = vmatpush1.msra.mxu0 0.0
    %6094 = vmatprep.subr.mxu0 0.0
    %6095 = vmatpush1.msra.mxu0 0.0
    %6096 = vmatprep.subr.mxu0 0.0
    %6097 = vmatpush1.msra.mxu0 0.0
    %6098 = vmatprep.subr.mxu0 0.0
    %6099 = vmatpush1.msra.mxu0 0.0
    %6100 = vmatprep.subr.mxu0 0.0
    %6101 = vmatpush1.msra.mxu0 0.0
    %6102 = vmatprep.subr.mxu0 0.0
    %6103 = vmatpush1.msra.mxu0 0.0
    %6104 = vmatprep.subr.mxu0 0.0
    %6105 = vmatpush1.msra.mxu0 0.0
    %6106 = vmatprep.subr.mxu0 0.0
    %6107 = vmatpush1.msra.mxu0 0.0
    %6108 = vmatprep.subr.mxu0 0.0
    %6109 = vmatpush1.msra.mxu0 0.0
    %6110 = vmatprep.subr.mxu0 0.0
    %6111 = vmatpush1.msra.mxu0 0.0
    %6112 = vmatprep.subr.mxu0 0.0
    %6113 = vmatpush1.msra.mxu0 0.0
    %6114 = vmatprep.subr.mxu0 0.0
    %6115 = vmatpush1.msra.mxu0 0.0
    %6116 = vmatprep.subr.mxu0 0.0
    %6117 = vmatpush1.msra.mxu0 0.0
    %6118 = vmatprep.mubr.f32.mxu0 0.0
    %6119 = vmatmul.mubr.f32.gmra.mrb[0].mxu0 %v6049
    %v6120 = vpop.f32.mrb[0].mxu0
    %v6121 = vadd.f32 0.0, %v6120
    %v6122 = vpop.f32.mrb[0].mxu0
    %6123 = vmatprep.mubr.f32.mxu0 0.0
    %6124 = vmatmul.mubr.f32.gmra.mrb[0].mxu0 %v6052
    %v6125 = vpop.f32.mrb[0].mxu0
    %v6126 = vadd.f32 0.0, %v6125
    %v6127 = vpop.f32.mrb[0].mxu0
    %6128 = vdwg.mxu0
    %6129 = vrot.lane.b32.xlu0 %v4882, 104
    %v6130 = vpop.permute.xlu0 %6129
    %6131 = vrot.lane.b32.xlu0 %v4887, 104
    %v6132 = vpop.permute.xlu0 %6131
    %6133 = vrot.lane.b32.xlu0 %v4882, 72
    %v6134 = vpop.permute.xlu0 %6133
    %6135 = vrot.lane.b32.xlu0 %v4887, 72
    %v6136 = vpop.permute.xlu0 %6135
    %v6137 = vsel %vm310, %v6130, 0
    %v6139 = vsel %vm310, %v6132, 0
    %v6141 = vsel %vm310, %v6134, 0
    %v6143 = vsel %vm310, %v6136, 0
    %6145 = vmatprep.subr.mxu0 0.0
    %6146 = vmatpush1.xpose.msra.mxu0 %v6141
    %6147 = vmatprep.subr.mxu0 0.0
    %6148 = vmatpush1.xpose.msra.mxu0 %v6143
    %6149 = vmatprep.subr.mxu0 0.0
    %6150 = vmatpush1.xpose.msra.mxu0 0.0
    %6151 = vmatprep.subr.mxu0 0.0
    %6152 = vmatpush1.xpose.msra.mxu0 0.0
    %6153 = vmatprep.subr.mxu0 0.0
    %6154 = vmatpush1.xpose.msra.mxu0 0.0
    %6155 = vmatprep.subr.mxu0 0.0
    %6156 = vmatpush1.xpose.msra.mxu0 0.0
    %6157 = vmatprep.subr.mxu0 0.0
    %6158 = vmatpush1.xpose.msra.mxu0 0.0
    %6159 = vmatprep.subr.mxu0 0.0
    %6160 = vmatpush1.xpose.msra.mxu0 0.0
    %6161 = vmatprep.subr.mxu0 0.0
    %6162 = vmatpush1.xpose.msra.mxu0 0.0
    %6163 = vmatprep.subr.mxu0 0.0
    %6164 = vmatpush1.xpose.msra.mxu0 0.0
    %6165 = vmatprep.subr.mxu0 0.0
    %6166 = vmatpush1.xpose.msra.mxu0 0.0
    %6167 = vmatprep.subr.mxu0 0.0
    %6168 = vmatpush1.xpose.msra.mxu0 0.0
    %6169 = vmatprep.subr.mxu0 0.0
    %6170 = vmatpush1.xpose.msra.mxu0 0.0
    %6171 = vmatprep.subr.mxu0 0.0
    %6172 = vmatpush1.xpose.msra.mxu0 0.0
    %6173 = vmatprep.subr.mxu0 0.0
    %6174 = vmatpush1.xpose.msra.mxu0 0.0
    %6175 = vmatprep.subr.mxu0 0.0
    %6176 = vmatpush1.xpose.msra.mxu0 0.0
    %6177 = vmatprep.subr.mxu0 0.0
    %6178 = vmatpush1.xpose.msra.mxu0 0.0
    %6179 = vmatprep.subr.mxu0 0.0
    %6180 = vmatpush1.xpose.msra.mxu0 0.0
    %6181 = vmatprep.subr.mxu0 0.0
    %6182 = vmatpush1.xpose.msra.mxu0 0.0
    %6183 = vmatprep.subr.mxu0 0.0
    %6184 = vmatpush1.xpose.msra.mxu0 0.0
    %6185 = vmatprep.subr.mxu0 0.0
    %6186 = vmatpush1.xpose.msra.mxu0 0.0
    %6187 = vmatprep.subr.mxu0 0.0
    %6188 = vmatpush1.xpose.msra.mxu0 0.0
    %6189 = vmatprep.subr.mxu0 0.0
    %6190 = vmatpush1.xpose.msra.mxu0 0.0
    %6191 = vmatprep.subr.mxu0 0.0
    %6192 = vmatpush1.xpose.msra.mxu0 0.0
    %6193 = vmatprep.subr.mxu0 0.0
    %6194 = vmatpush1.xpose.msra.mxu0 0.0
    %6195 = vmatprep.subr.mxu0 0.0
    %6196 = vmatpush1.xpose.msra.mxu0 0.0
    %6197 = vmatprep.subr.mxu0 0.0
    %6198 = vmatpush1.xpose.msra.mxu0 0.0
    %6199 = vmatprep.subr.mxu0 0.0
    %6200 = vmatpush1.xpose.msra.mxu0 0.0
    %6201 = vmatprep.subr.mxu0 0.0
    %6202 = vmatpush1.xpose.msra.mxu0 0.0
    %6203 = vmatprep.subr.mxu0 0.0
    %6204 = vmatpush1.xpose.msra.mxu0 0.0
    %6205 = vmatprep.subr.mxu0 0.0
    %6206 = vmatpush1.xpose.msra.mxu0 0.0
    %6207 = vmatprep.subr.mxu0 0.0
    %6208 = vmatpush1.xpose.msra.mxu0 0.0
    %6209 = vmatprep.mubr.f32.mxu0 0.0
    %6210 = vmatmul.mubr.f32.gmra.mrb[0].mxu0 %v6137
    %v6211 = vpop.f32.mrb[0].mxu0
    %v6212 = vadd.f32 0.0, %v6211
    %v6213 = vpop.f32.mrb[0].mxu0
    %6214 = vmatprep.mubr.f32.mxu0 0.0
    %6215 = vmatmul.mubr.f32.gmra.mrb[0].mxu0 %v6139
    %v6216 = vpop.f32.mrb[0].mxu0
    %v6217 = vadd.f32 0.0, %v6216
    %v6218 = vpop.f32.mrb[0].mxu0
    %6219 = vdwg.mxu0
    %6220 = vrot.lane.b32.xlu0 %v4892, 104
    %v6221 = vpop.permute.xlu0 %6220
    %6222 = vrot.lane.b32.xlu0 %v4897, 104
    %v6223 = vpop.permute.xlu0 %6222
    %6224 = vrot.lane.b32.xlu0 %v4892, 72
    %v6225 = vpop.permute.xlu0 %6224
    %6226 = vrot.lane.b32.xlu0 %v4897, 72
    %v6227 = vpop.permute.xlu0 %6226
    %v6228 = vsel %vm310, %v6221, 0
    %v6230 = vsel %vm310, %v6223, 0
    %v6232 = vsel %vm310, %v6225, 0
    %v6234 = vsel %vm310, %v6227, 0
    %6236 = vmatprep.subr.mxu0 0.0
    %6237 = vmatpush1.xpose.msra.mxu0 %v6232
    %6238 = vmatprep.subr.mxu0 0.0
    %6239 = vmatpush1.xpose.msra.mxu0 %v6234
    %6240 = vmatprep.subr.mxu0 0.0
    %6241 = vmatpush1.xpose.msra.mxu0 0.0
    %6242 = vmatprep.subr.mxu0 0.0
    %6243 = vmatpush1.xpose.msra.mxu0 0.0
    %6244 = vmatprep.subr.mxu0 0.0
    %6245 = vmatpush1.xpose.msra.mxu0 0.0
    %6246 = vmatprep.subr.mxu0 0.0
    %6247 = vmatpush1.xpose.msra.mxu0 0.0
    %6248 = vmatprep.subr.mxu0 0.0
    %6249 = vmatpush1.xpose.msra.mxu0 0.0
    %6250 = vmatprep.subr.mxu0 0.0
    %6251 = vmatpush1.xpose.msra.mxu0 0.0
    %6252 = vmatprep.subr.mxu0 0.0
    %6253 = vmatpush1.xpose.msra.mxu0 0.0
    %6254 = vmatprep.subr.mxu0 0.0
    %6255 = vmatpush1.xpose.msra.mxu0 0.0
    %6256 = vmatprep.subr.mxu0 0.0
    %6257 = vmatpush1.xpose.msra.mxu0 0.0
    %6258 = vmatprep.subr.mxu0 0.0
    %6259 = vmatpush1.xpose.msra.mxu0 0.0
    %6260 = vmatprep.subr.mxu0 0.0
    %6261 = vmatpush1.xpose.msra.mxu0 0.0
    %6262 = vmatprep.subr.mxu0 0.0
    %6263 = vmatpush1.xpose.msra.mxu0 0.0
    %6264 = vmatprep.subr.mxu0 0.0
    %6265 = vmatpush1.xpose.msra.mxu0 0.0
    %6266 = vmatprep.subr.mxu0 0.0
    %6267 = vmatpush1.xpose.msra.mxu0 0.0
    %6268 = vmatprep.subr.mxu0 0.0
    %6269 = vmatpush1.xpose.msra.mxu0 0.0
    %6270 = vmatprep.subr.mxu0 0.0
    %6271 = vmatpush1.xpose.msra.mxu0 0.0
    %6272 = vmatprep.subr.mxu0 0.0
    %6273 = vmatpush1.xpose.msra.mxu0 0.0
    %6274 = vmatprep.subr.mxu0 0.0
    %6275 = vmatpush1.xpose.msra.mxu0 0.0
    %6276 = vmatprep.subr.mxu0 0.0
    %6277 = vmatpush1.xpose.msra.mxu0 0.0
    %6278 = vmatprep.subr.mxu0 0.0
    %6279 = vmatpush1.xpose.msra.mxu0 0.0
    %6280 = vmatprep.subr.mxu0 0.0
    %6281 = vmatpush1.xpose.msra.mxu0 0.0
    %6282 = vmatprep.subr.mxu0 0.0
    %6283 = vmatpush1.xpose.msra.mxu0 0.0
    %6284 = vmatprep.subr.mxu0 0.0
    %6285 = vmatpush1.xpose.msra.mxu0 0.0
    %6286 = vmatprep.subr.mxu0 0.0
    %6287 = vmatpush1.xpose.msra.mxu0 0.0
    %6288 = vmatprep.subr.mxu0 0.0
    %6289 = vmatpush1.xpose.msra.mxu0 0.0
    %6290 = vmatprep.subr.mxu0 0.0
    %6291 = vmatpush1.xpose.msra.mxu0 0.0
    %6292 = vmatprep.subr.mxu0 0.0
    %6293 = vmatpush1.xpose.msra.mxu0 0.0
    %6294 = vmatprep.subr.mxu0 0.0
    %6295 = vmatpush1.xpose.msra.mxu0 0.0
    %6296 = vmatprep.subr.mxu0 0.0
    %6297 = vmatpush1.xpose.msra.mxu0 0.0
    %6298 = vmatprep.subr.mxu0 0.0
    %6299 = vmatpush1.xpose.msra.mxu0 0.0
    %6300 = vmatprep.mubr.f32.mxu0 0.0
    %6301 = vmatmul.mubr.f32.gmra.mrb[0].mxu0 %v6228
    %v6302 = vpop.f32.mrb[0].mxu0
    %v6303 = vadd.f32 0.0, %v6302
    %v6304 = vpop.f32.mrb[0].mxu0
    %6305 = vmatprep.mubr.f32.mxu0 0.0
    %6306 = vmatmul.mubr.f32.gmra.mrb[0].mxu0 %v6230
    %v6307 = vpop.f32.mrb[0].mxu0
    %v6308 = vadd.f32 0.0, %v6307
    %v6309 = vpop.f32.mrb[0].mxu0
    %6310 = vdwg.mxu0
    %v6311 = vmul.f32 %v6212, 0.35355338
    %v6312 = vmul.f32 %v6217, 0.35355338
    %v6313 = vmul.f32 %v6303, 0.35355338
    %v6314 = vmul.f32 %v6308, 0.35355338
    %v6315 = vadd.f32 %v6311, %v4907
    %v6316 = vadd.f32 %v6312, %v4908
    %v6317 = vadd.f32 %v6313, %v4907
    %v6318 = vadd.f32 %v6314, %v4908
    %v6319 = vsel %vm487, %v6315, -inf
    %6320 = vmax.xlane.f32.xlu0 %v6319
    %v6321 = vpop.xlane.xlu0 %6320
    %v6322 = vsel %vm487, %v6316, -inf
    %6323 = vmax.xlane.f32.xlu0 %v6322
    %v6324 = vpop.xlane.xlu0 %6323
    %v6325 = vsel %vm487, %v6317, -inf
    %6326 = vmax.xlane.f32.xlu0 %v6325
    %v6327 = vpop.xlane.xlu0 %6326
    %v6328 = vsel %vm487, %v6318, -inf
    %6329 = vmax.xlane.f32.xlu0 %v6328
    %v6330 = vpop.xlane.xlu0 %6329
    %v6331 = vsub.f32 %v6315, %v6321
    %v6332 = vsub.f32 %v6316, %v6324
    %v6333 = vsub.f32 %v6317, %v6327
    %v6334 = vsub.f32 %v6318, %v6330
    %v6335 = vmul.f32 %v6331, 1.442695
    %v6336 = vpow.pop %v6335
    %v6337 = vmul.f32 %v6332, 1.442695
    %v6338 = vpow.pop %v6337
    %v6339 = vmul.f32 %v6333, 1.442695
    %v6340 = vpow.pop %v6339
    %v6341 = vmul.f32 %v6334, 1.442695
    %v6342 = vpow.pop %v6341
    %v6343 = vsel %vm487, %v6336, 0.0
    %6344 = vadd.xlane.f32.xlu0 %v6343
    %v6345 = vpop.xlane.xlu0 %6344
    %v6346 = vsel %vm487, %v6338, 0.0
    %6347 = vadd.xlane.f32.xlu0 %v6346
    %v6348 = vpop.xlane.xlu0 %6347
    %v6349 = vsel %vm487, %v6340, 0.0
    %6350 = vadd.xlane.f32.xlu0 %v6349
    %v6351 = vpop.xlane.xlu0 %6350
    %v6352 = vsel %vm487, %v6342, 0.0
    %6353 = vadd.xlane.f32.xlu0 %v6352
    %v6354 = vpop.xlane.xlu0 %6353
    %v6355 = vrcp.pop %v6345
    %v6356 = vmul.f32 %v6336, %v6355
    %v6357 = vrcp.pop %v6348
    %v6358 = vmul.f32 %v6338, %v6357
    %v6359 = vrcp.pop %v6351
    %v6360 = vmul.f32 %v6340, %v6359
    %v6361 = vrcp.pop %v6354
    %v6362 = vmul.f32 %v6342, %v6361
    %6363 = vrot.lane.b32.xlu0 %v4882, 40
    %v6364 = vpop.permute.xlu0 %6363
    %6365 = vrot.lane.b32.xlu0 %v4887, 40
    %v6366 = vpop.permute.xlu0 %6365
    %v6370 = vsel %vm487, %v6356, 0
    %v6373 = vsel %vm487, %v6358, 0
    %6375 = vmatprep.subr.mxu0 0.0
    %6376 = vmatpush1.msra.mxu0 %v6364
    %6377 = vmatprep.subr.mxu0 0.0
    %6378 = vmatpush1.msra.mxu0 %v6366
    %6379 = vmatprep.subr.mxu0 0.0
    %6380 = vmatpush1.msra.mxu0 0.0
    %6381 = vmatprep.subr.mxu0 0.0
    %6382 = vmatpush1.msra.mxu0 0.0
    %6383 = vmatprep.subr.mxu0 0.0
    %6384 = vmatpush1.msra.mxu0 0.0
    %6385 = vmatprep.subr.mxu0 0.0
    %6386 = vmatpush1.msra.mxu0 0.0
    %6387 = vmatprep.subr.mxu0 0.0
    %6388 = vmatpush1.msra.mxu0 0.0
    %6389 = vmatprep.subr.mxu0 0.0
    %6390 = vmatpush1.msra.mxu0 0.0
    %6391 = vmatprep.subr.mxu0 0.0
    %6392 = vmatpush1.msra.mxu0 0.0
    %6393 = vmatprep.subr.mxu0 0.0
    %6394 = vmatpush1.msra.mxu0 0.0
    %6395 = vmatprep.subr.mxu0 0.0
    %6396 = vmatpush1.msra.mxu0 0.0
    %6397 = vmatprep.subr.mxu0 0.0
    %6398 = vmatpush1.msra.mxu0 0.0
    %6399 = vmatprep.subr.mxu0 0.0
    %6400 = vmatpush1.msra.mxu0 0.0
    %6401 = vmatprep.subr.mxu0 0.0
    %6402 = vmatpush1.msra.mxu0 0.0
    %6403 = vmatprep.subr.mxu0 0.0
    %6404 = vmatpush1.msra.mxu0 0.0
    %6405 = vmatprep.subr.mxu0 0.0
    %6406 = vmatpush1.msra.mxu0 0.0
    %6407 = vmatprep.subr.mxu0 0.0
    %6408 = vmatpush1.msra.mxu0 0.0
    %6409 = vmatprep.subr.mxu0 0.0
    %6410 = vmatpush1.msra.mxu0 0.0
    %6411 = vmatprep.subr.mxu0 0.0
    %6412 = vmatpush1.msra.mxu0 0.0
    %6413 = vmatprep.subr.mxu0 0.0
    %6414 = vmatpush1.msra.mxu0 0.0
    %6415 = vmatprep.subr.mxu0 0.0
    %6416 = vmatpush1.msra.mxu0 0.0
    %6417 = vmatprep.subr.mxu0 0.0
    %6418 = vmatpush1.msra.mxu0 0.0
    %6419 = vmatprep.subr.mxu0 0.0
    %6420 = vmatpush1.msra.mxu0 0.0
    %6421 = vmatprep.subr.mxu0 0.0
    %6422 = vmatpush1.msra.mxu0 0.0
    %6423 = vmatprep.subr.mxu0 0.0
    %6424 = vmatpush1.msra.mxu0 0.0
    %6425 = vmatprep.subr.mxu0 0.0
    %6426 = vmatpush1.msra.mxu0 0.0
    %6427 = vmatprep.subr.mxu0 0.0
    %6428 = vmatpush1.msra.mxu0 0.0
    %6429 = vmatprep.subr.mxu0 0.0
    %6430 = vmatpush1.msra.mxu0 0.0
    %6431 = vmatprep.subr.mxu0 0.0
    %6432 = vmatpush1.msra.mxu0 0.0
    %6433 = vmatprep.subr.mxu0 0.0
    %6434 = vmatpush1.msra.mxu0 0.0
    %6435 = vmatprep.subr.mxu0 0.0
    %6436 = vmatpush1.msra.mxu0 0.0
    %6437 = vmatprep.subr.mxu0 0.0
    %6438 = vmatpush1.msra.mxu0 0.0
    %6439 = vmatprep.mubr.f32.mxu0 0.0
    %6440 = vmatmul.mubr.f32.gmra.mrb[0].mxu0 %v6370
    %v6441 = vpop.f32.mrb[0].mxu0
    %v6442 = vadd.f32 0.0, %v6441
    %v6443 = vpop.f32.mrb[0].mxu0
    %6444 = vmatprep.mubr.f32.mxu0 0.0
    %6445 = vmatmul.mubr.f32.gmra.mrb[0].mxu0 %v6373
    %v6446 = vpop.f32.mrb[0].mxu0
    %v6447 = vadd.f32 0.0, %v6446
    %v6448 = vpop.f32.mrb[0].mxu0
    %6449 = vdwg.mxu0
    %6450 = vrot.lane.b32.xlu0 %v4892, 40
    %v6451 = vpop.permute.xlu0 %6450
    %6452 = vrot.lane.b32.xlu0 %v4897, 40
    %v6453 = vpop.permute.xlu0 %6452
    %v6457 = vsel %vm487, %v6360, 0
    %v6460 = vsel %vm487, %v6362, 0
    %6462 = vmatprep.subr.mxu0 0.0
    %6463 = vmatpush1.msra.mxu0 %v6451
    %6464 = vmatprep.subr.mxu0 0.0
    %6465 = vmatpush1.msra.mxu0 %v6453
    %6466 = vmatprep.subr.mxu0 0.0
    %6467 = vmatpush1.msra.mxu0 0.0
    %6468 = vmatprep.subr.mxu0 0.0
    %6469 = vmatpush1.msra.mxu0 0.0
    %6470 = vmatprep.subr.mxu0 0.0
    %6471 = vmatpush1.msra.mxu0 0.0
    %6472 = vmatprep.subr.mxu0 0.0
    %6473 = vmatpush1.msra.mxu0 0.0
    %6474 = vmatprep.subr.mxu0 0.0
    %6475 = vmatpush1.msra.mxu0 0.0
    %6476 = vmatprep.subr.mxu0 0.0
    %6477 = vmatpush1.msra.mxu0 0.0
    %6478 = vmatprep.subr.mxu0 0.0
    %6479 = vmatpush1.msra.mxu0 0.0
    %6480 = vmatprep.subr.mxu0 0.0
    %6481 = vmatpush1.msra.mxu0 0.0
    %6482 = vmatprep.subr.mxu0 0.0
    %6483 = vmatpush1.msra.mxu0 0.0
    %6484 = vmatprep.subr.mxu0 0.0
    %6485 = vmatpush1.msra.mxu0 0.0
    %6486 = vmatprep.subr.mxu0 0.0
    %6487 = vmatpush1.msra.mxu0 0.0
    %6488 = vmatprep.subr.mxu0 0.0
    %6489 = vmatpush1.msra.mxu0 0.0
    %6490 = vmatprep.subr.mxu0 0.0
    %6491 = vmatpush1.msra.mxu0 0.0
    %6492 = vmatprep.subr.mxu0 0.0
    %6493 = vmatpush1.msra.mxu0 0.0
    %6494 = vmatprep.subr.mxu0 0.0
    %6495 = vmatpush1.msra.mxu0 0.0
    %6496 = vmatprep.subr.mxu0 0.0
    %6497 = vmatpush1.msra.mxu0 0.0
    %6498 = vmatprep.subr.mxu0 0.0
    %6499 = vmatpush1.msra.mxu0 0.0
    %6500 = vmatprep.subr.mxu0 0.0
    %6501 = vmatpush1.msra.mxu0 0.0
    %6502 = vmatprep.subr.mxu0 0.0
    %6503 = vmatpush1.msra.mxu0 0.0
    %6504 = vmatprep.subr.mxu0 0.0
    %6505 = vmatpush1.msra.mxu0 0.0
    %6506 = vmatprep.subr.mxu0 0.0
    %6507 = vmatpush1.msra.mxu0 0.0
    %6508 = vmatprep.subr.mxu0 0.0
    %6509 = vmatpush1.msra.mxu0 0.0
    %6510 = vmatprep.subr.mxu0 0.0
    %6511 = vmatpush1.msra.mxu0 0.0
    %6512 = vmatprep.subr.mxu0 0.0
    %6513 = vmatpush1.msra.mxu0 0.0
    %6514 = vmatprep.subr.mxu0 0.0
    %6515 = vmatpush1.msra.mxu0 0.0
    %6516 = vmatprep.subr.mxu0 0.0
    %6517 = vmatpush1.msra.mxu0 0.0
    %6518 = vmatprep.subr.mxu0 0.0
    %6519 = vmatpush1.msra.mxu0 0.0
    %6520 = vmatprep.subr.mxu0 0.0
    %6521 = vmatpush1.msra.mxu0 0.0
    %6522 = vmatprep.subr.mxu0 0.0
    %6523 = vmatpush1.msra.mxu0 0.0
    %6524 = vmatprep.subr.mxu0 0.0
    %6525 = vmatpush1.msra.mxu0 0.0
    %6526 = vmatprep.mubr.f32.mxu0 0.0
    %6527 = vmatmul.mubr.f32.gmra.mrb[0].mxu0 %v6457
    %v6528 = vpop.f32.mrb[0].mxu0
    %v6529 = vadd.f32 0.0, %v6528
    %v6530 = vpop.f32.mrb[0].mxu0
    %6531 = vmatprep.mubr.f32.mxu0 0.0
    %6532 = vmatmul.mubr.f32.gmra.mrb[0].mxu0 %v6460
    %v6533 = vpop.f32.mrb[0].mxu0
    %v6534 = vadd.f32 0.0, %v6533
    %v6535 = vpop.f32.mrb[0].mxu0
    %6536 = vdwg.mxu0
    %6541 = vrot.lane.b32.xlu0 %v5626, 8
    %v6542 = vpop.permute.xlu0 %6541
    %6543 = vrot.lane.b32.xlu0 %v5631, 8
    %v6544 = vpop.permute.xlu0 %6543
    %6545 = vrot.lane.b32.xlu0 %v5713, 8
    %v6546 = vpop.permute.xlu0 %6545
    %6547 = vrot.lane.b32.xlu0 %v5718, 8
    %v6548 = vpop.permute.xlu0 %6547
    %6557 = vrot.lane.b32.xlu0 %v6034, 16
    %v6558 = vpop.permute.xlu0 %6557
    %6559 = vrot.lane.b32.xlu0 %v6039, 16
    %v6560 = vpop.permute.xlu0 %6559
    %6561 = vrot.lane.b32.xlu0 %v6121, 16
    %v6562 = vpop.permute.xlu0 %6561
    %6563 = vrot.lane.b32.xlu0 %v6126, 16
    %v6564 = vpop.permute.xlu0 %6563
    %6573 = vrot.lane.b32.xlu0 %v6442, 24
    %v6574 = vpop.permute.xlu0 %6573
    %6575 = vrot.lane.b32.xlu0 %v6447, 24
    %v6576 = vpop.permute.xlu0 %6575
    %6577 = vrot.lane.b32.xlu0 %v6529, 24
    %v6578 = vpop.permute.xlu0 %6577
    %6579 = vrot.lane.b32.xlu0 %v6534, 24
    %v6580 = vpop.permute.xlu0 %6579
    %v6585 = vsel %vm310, %v5218, %v6542
    %v6586 = vsel %vm310, %v5223, %v6544
    %v6587 = vsel %vm310, %v5305, %v6546
    %v6588 = vsel %vm310, %v5310, %v6548
    %v6589 = vsel %vm487, %v6585, %v6558
    %v6590 = vsel %vm487, %v6586, %v6560
    %v6591 = vsel %vm487, %v6587, %v6562
    %v6592 = vsel %vm487, %v6588, %v6564
    %v6593 = vsel %vm1974, %v6589, %v6574
    %v6594 = vsel %vm1974, %v6590, %v6576
    %v6595 = vsel %vm1974, %v6591, %v6578
    %v6596 = vsel %vm1974, %v6592, %v6580
    %v6597 = vlaneseq
    %v6598 = vshrl.u32 %v6597, 7
    %v6599 = vsub.s32 0, %v6598
    %v6600 = vrot.slane %v4763, %v6599
    %v6602 = vsel %vm45, %v6593, 0
    %v6605 = vsel %vm45, %v6594, 0
    %v6608 = vsel %vm45, %v6595, 0
    %v6611 = vsel %vm45, %v6596, 0
    %6613 = vmatprep.subr.mxu0 0.0
    %6614 = vmatpush1.msra.mxu0 %v4759
    %6615 = vmatprep.subr.mxu0 0.0
    %6616 = vmatpush1.msra.mxu0 %v4760
    %6617 = vmatprep.subr.mxu0 0.0
    %6618 = vmatpush1.msra.mxu0 %v4761
    %6619 = vmatprep.subr.mxu0 0.0
    %6620 = vmatpush1.msra.mxu0 %v4762
    %6621 = vmatprep.subr.mxu0 0.0
    %6622 = vmatpush1.msra.mxu0 0.0
    %6623 = vmatprep.subr.mxu0 0.0
    %6624 = vmatpush1.msra.mxu0 0.0
    %6625 = vmatprep.subr.mxu0 0.0
    %6626 = vmatpush1.msra.mxu0 0.0
    %6627 = vmatprep.subr.mxu0 0.0
    %6628 = vmatpush1.msra.mxu0 0.0
    %6629 = vmatprep.subr.mxu0 0.0
    %6630 = vmatpush1.msra.mxu0 0.0
    %6631 = vmatprep.subr.mxu0 0.0
    %6632 = vmatpush1.msra.mxu0 0.0
    %6633 = vmatprep.subr.mxu0 0.0
    %6634 = vmatpush1.msra.mxu0 0.0
    %6635 = vmatprep.subr.mxu0 0.0
    %6636 = vmatpush1.msra.mxu0 0.0
    %6637 = vmatprep.subr.mxu0 0.0
    %6638 = vmatpush1.msra.mxu0 0.0
    %6639 = vmatprep.subr.mxu0 0.0
    %6640 = vmatpush1.msra.mxu0 0.0
    %6641 = vmatprep.subr.mxu0 0.0
    %6642 = vmatpush1.msra.mxu0 0.0
    %6643 = vmatprep.subr.mxu0 0.0
    %6644 = vmatpush1.msra.mxu0 0.0
    %6645 = vmatprep.subr.mxu0 0.0
    %6646 = vmatpush1.msra.mxu0 0.0
    %6647 = vmatprep.subr.mxu0 0.0
    %6648 = vmatpush1.msra.mxu0 0.0
    %6649 = vmatprep.subr.mxu0 0.0
    %6650 = vmatpush1.msra.mxu0 0.0
    %6651 = vmatprep.subr.mxu0 0.0
    %6652 = vmatpush1.msra.mxu0 0.0
    %6653 = vmatprep.subr.mxu0 0.0
    %6654 = vmatpush1.msra.mxu0 0.0
    %6655 = vmatprep.subr.mxu0 0.0
    %6656 = vmatpush1.msra.mxu0 0.0
    %6657 = vmatprep.subr.mxu0 0.0
    %6658 = vmatpush1.msra.mxu0 0.0
    %6659 = vmatprep.subr.mxu0 0.0
    %6660 = vmatpush1.msra.mxu0 0.0
    %6661 = vmatprep.subr.mxu0 0.0
    %6662 = vmatpush1.msra.mxu0 0.0
    %6663 = vmatprep.subr.mxu0 0.0
    %6664 = vmatpush1.msra.mxu0 0.0
    %6665 = vmatprep.subr.mxu0 0.0
    %6666 = vmatpush1.msra.mxu0 0.0
    %6667 = vmatprep.subr.mxu0 0.0
    %6668 = vmatpush1.msra.mxu0 0.0
    %6669 = vmatprep.subr.mxu0 0.0
    %6670 = vmatpush1.msra.mxu0 0.0
    %6671 = vmatprep.subr.mxu0 0.0
    %6672 = vmatpush1.msra.mxu0 0.0
    %6673 = vmatprep.subr.mxu0 0.0
    %6674 = vmatpush1.msra.mxu0 0.0
    %6675 = vmatprep.subr.mxu0 0.0
    %6676 = vmatpush1.msra.mxu0 0.0
    %6677 = vmatprep.mubr.f32.mxu0 0.0
    %6678 = vmatmul.mubr.f32.gmra.mrb[0].mxu0 %v6602
    %v6679 = vpop.f32.mrb[0].mxu0
    %v6680 = vadd.f32 %v6600, %v6679
    %v6681 = vpop.f32.mrb[0].mxu0
    %6682 = vmatprep.mubr.f32.mxu0 0.0
    %6683 = vmatmul.mubr.f32.gmra.mrb[0].mxu0 %v6605
    %v6684 = vpop.f32.mrb[0].mxu0
    %v6685 = vadd.f32 %v6600, %v6684
    %v6686 = vpop.f32.mrb[0].mxu0
    %6687 = vmatprep.mubr.f32.mxu0 0.0
    %6688 = vmatmul.mubr.f32.gmra.mrb[0].mxu0 %v6608
    %v6689 = vpop.f32.mrb[0].mxu0
    %v6690 = vadd.f32 %v6600, %v6689
    %v6691 = vpop.f32.mrb[0].mxu0
    %6692 = vmatprep.mubr.f32.mxu0 0.0
    %6693 = vmatmul.mubr.f32.gmra.mrb[0].mxu0 %v6611
    %v6694 = vpop.f32.mrb[0].mxu0
    %v6695 = vadd.f32 %v6600, %v6694
    %v6696 = vpop.f32.mrb[0].mxu0
    %6697 = vdwg.mxu0
    %v6698 = vadd.f32 %v157, %v6680
    %v6699 = vadd.f32 %v162, %v6685
    %v6700 = vadd.f32 %v167, %v6690
    %v6701 = vadd.f32 %v172, %v6695
    %v6702 = vsel %vm45, %v6698, 0.0
    %6703 = vadd.xlane.f32.xlu0 %v6702
    %v6704 = vpop.xlane.xlu0 %6703
    %v6705 = vsel %vm45, %v6699, 0.0
    %6706 = vadd.xlane.f32.xlu0 %v6705
    %v6707 = vpop.xlane.xlu0 %6706
    %v6708 = vsel %vm45, %v6700, 0.0
    %6709 = vadd.xlane.f32.xlu0 %v6708
    %v6710 = vpop.xlane.xlu0 %6709
    %v6711 = vsel %vm45, %v6701, 0.0
    %6712 = vadd.xlane.f32.xlu0 %v6711
    %v6713 = vpop.xlane.xlu0 %6712
    %v6714 = vmul.f32 %v6704, %v2096
    %v6715 = vmul.f32 %v6707, %v2096
    %v6716 = vmul.f32 %v6710, %v2096
    %v6717 = vmul.f32 %v6713, %v2096
    %v6718 = vsub.f32 %v6698, %v6714
    %v6719 = vsub.f32 %v6699, %v6715
    %v6720 = vsub.f32 %v6700, %v6716
    %v6721 = vsub.f32 %v6701, %v6717
    %v6722 = vmul.f32 %v6718, %v6718
    %v6723 = vmul.f32 %v6719, %v6719
    %v6724 = vmul.f32 %v6720, %v6720
    %v6725 = vmul.f32 %v6721, %v6721
    %v6726 = vsel %vm45, %v6722, 0.0
    %6727 = vadd.xlane.f32.xlu0 %v6726
    %v6728 = vpop.xlane.xlu0 %6727
    %v6729 = vsel %vm45, %v6723, 0.0
    %6730 = vadd.xlane.f32.xlu0 %v6729
    %v6731 = vpop.xlane.xlu0 %6730
    %v6732 = vsel %vm45, %v6724, 0.0
    %6733 = vadd.xlane.f32.xlu0 %v6732
    %v6734 = vpop.xlane.xlu0 %6733
    %v6735 = vsel %vm45, %v6725, 0.0
    %6736 = vadd.xlane.f32.xlu0 %v6735
    %v6737 = vpop.xlane.xlu0 %6736
    %v6738 = vmul.f32 %v6728, %v2096
    %v6739 = vmul.f32 %v6731, %v2096
    %v6740 = vmul.f32 %v6734, %v2096
    %v6741 = vmul.f32 %v6737, %v2096
    %v6742 = vadd.f32 %v6738, 1e-05
    %v6743 = vadd.f32 %v6739, 1e-05
    %v6744 = vadd.f32 %v6740, 1e-05
    %v6745 = vadd.f32 %v6741, 1e-05
    %v6746 = vrsqrt.pop %v6742
    %v6747 = vrsqrt.pop %v6743
    %v6748 = vrsqrt.pop %v6744
    %v6749 = vrsqrt.pop %v6745
    %v6750 = vmul.f32 %v6718, %v6746
    %v6751 = vmul.f32 %v6719, %v6747
    %v6752 = vmul.f32 %v6720, %v6748
    %v6753 = vmul.f32 %v6721, %v6749
    %v6754 = vlaneseq
    %v6755 = vshrl.u32 %v6754, 7
    %v6756 = vsub.s32 0, %v6755
    %v6757 = vrot.slane %v4793, %v6756
    %v6758 = vmul.f32 %v6750, %v6757
    %v6759 = vmul.f32 %v6751, %v6757
    %v6760 = vmul.f32 %v6752, %v6757
    %v6761 = vmul.f32 %v6753, %v6757
    %v6762 = vlaneseq
    %v6763 = vshrl.u32 %v6762, 7
    %v6764 = vsub.s32 0, %v6763
    %v6765 = vrot.slane %v4794, %v6764
    %v6766 = vadd.f32 %v6758, %v6765
    %v6767 = vadd.f32 %v6759, %v6765
    %v6768 = vadd.f32 %v6760, %v6765
    %v6769 = vadd.f32 %v6761, %v6765
    %v6770 = vlaneseq
    %v6771 = vshrl.u32 %v6770, 7
    %v6772 = vsub.s32 0, %v6771
    %v6773 = vrot.slane %v4768, %v6772
    %v6775 = vsel %vm45, %v6766, 0
    %v6778 = vsel %vm45, %v6767, 0
    %v6781 = vsel %vm45, %v6768, 0
    %v6784 = vsel %vm45, %v6769, 0
    %6786 = vmatprep.subr.mxu0 0.0
    %6787 = vmatpush1.msra.mxu0 %v4764
    %6788 = vmatprep.subr.mxu0 0.0
    %6789 = vmatpush1.msra.mxu0 %v4765
    %6790 = vmatprep.subr.mxu0 0.0
    %6791 = vmatpush1.msra.mxu0 %v4766
    %6792 = vmatprep.subr.mxu0 0.0
    %6793 = vmatpush1.msra.mxu0 %v4767
    %6794 = vmatprep.subr.mxu0 0.0
    %6795 = vmatpush1.msra.mxu0 0.0
    %6796 = vmatprep.subr.mxu0 0.0
    %6797 = vmatpush1.msra.mxu0 0.0
    %6798 = vmatprep.subr.mxu0 0.0
    %6799 = vmatpush1.msra.mxu0 0.0
    %6800 = vmatprep.subr.mxu0 0.0
    %6801 = vmatpush1.msra.mxu0 0.0
    %6802 = vmatprep.subr.mxu0 0.0
    %6803 = vmatpush1.msra.mxu0 0.0
    %6804 = vmatprep.subr.mxu0 0.0
    %6805 = vmatpush1.msra.mxu0 0.0
    %6806 = vmatprep.subr.mxu0 0.0
    %6807 = vmatpush1.msra.mxu0 0.0
    %6808 = vmatprep.subr.mxu0 0.0
    %6809 = vmatpush1.msra.mxu0 0.0
    %6810 = vmatprep.subr.mxu0 0.0
    %6811 = vmatpush1.msra.mxu0 0.0
    %6812 = vmatprep.subr.mxu0 0.0
    %6813 = vmatpush1.msra.mxu0 0.0
    %6814 = vmatprep.subr.mxu0 0.0
    %6815 = vmatpush1.msra.mxu0 0.0
    %6816 = vmatprep.subr.mxu0 0.0
    %6817 = vmatpush1.msra.mxu0 0.0
    %6818 = vmatprep.subr.mxu0 0.0
    %6819 = vmatpush1.msra.mxu0 0.0
    %6820 = vmatprep.subr.mxu0 0.0
    %6821 = vmatpush1.msra.mxu0 0.0
    %6822 = vmatprep.subr.mxu0 0.0
    %6823 = vmatpush1.msra.mxu0 0.0
    %6824 = vmatprep.subr.mxu0 0.0
    %6825 = vmatpush1.msra.mxu0 0.0
    %6826 = vmatprep.subr.mxu0 0.0
    %6827 = vmatpush1.msra.mxu0 0.0
    %6828 = vmatprep.subr.mxu0 0.0
    %6829 = vmatpush1.msra.mxu0 0.0
    %6830 = vmatprep.subr.mxu0 0.0
    %6831 = vmatpush1.msra.mxu0 0.0
    %6832 = vmatprep.subr.mxu0 0.0
    %6833 = vmatpush1.msra.mxu0 0.0
    %6834 = vmatprep.subr.mxu0 0.0
    %6835 = vmatpush1.msra.mxu0 0.0
    %6836 = vmatprep.subr.mxu0 0.0
    %6837 = vmatpush1.msra.mxu0 0.0
    %6838 = vmatprep.subr.mxu0 0.0
    %6839 = vmatpush1.msra.mxu0 0.0
    %6840 = vmatprep.subr.mxu0 0.0
    %6841 = vmatpush1.msra.mxu0 0.0
    %6842 = vmatprep.subr.mxu0 0.0
    %6843 = vmatpush1.msra.mxu0 0.0
    %6844 = vmatprep.subr.mxu0 0.0
    %6845 = vmatpush1.msra.mxu0 0.0
    %6846 = vmatprep.subr.mxu0 0.0
    %6847 = vmatpush1.msra.mxu0 0.0
    %6848 = vmatprep.subr.mxu0 0.0
    %6849 = vmatpush1.msra.mxu0 0.0
    %6850 = vmatprep.mubr.f32.mxu0 0.0
    %6851 = vmatmul.mubr.f32.gmra.mrb[0].mxu0 %v6775
    %v6852 = vpop.f32.mrb[0].mxu0
    %v6853 = vadd.f32 %v6773, %v6852
    %v6854 = vpop.f32.mrb[0].mxu0
    %6855 = vmatprep.mubr.f32.mxu0 0.0
    %6856 = vmatmul.mubr.f32.gmra.mrb[0].mxu0 %v6778
    %v6857 = vpop.f32.mrb[0].mxu0
    %v6858 = vadd.f32 %v6773, %v6857
    %v6859 = vpop.f32.mrb[0].mxu0
    %6860 = vmatprep.mubr.f32.mxu0 0.0
    %6861 = vmatmul.mubr.f32.gmra.mrb[0].mxu0 %v6781
    %v6862 = vpop.f32.mrb[0].mxu0
    %v6863 = vadd.f32 %v6773, %v6862
    %v6864 = vpop.f32.mrb[0].mxu0
    %6865 = vmatprep.mubr.f32.mxu0 0.0
    %6866 = vmatmul.mubr.f32.gmra.mrb[0].mxu0 %v6784
    %v6867 = vpop.f32.mrb[0].mxu0
    %v6868 = vadd.f32 %v6773, %v6867
    %v6869 = vpop.f32.mrb[0].mxu0
    %6870 = vdwg.mxu0
    %v6871 = vlaneseq
    %v6872 = vshrl.u32 %v6871, 7
    %v6873 = vsub.s32 0, %v6872
    %v6874 = vrot.slane %v4773, %v6873
    %v6876 = vsel %vm45, %v4750, 0
    %v6879 = vsel %vm45, %v4751, 0
    %v6882 = vsel %vm45, %v4752, 0
    %v6885 = vsel %vm45, %v4753, 0
    %6887 = vmatprep.subr.mxu0 0.0
    %6888 = vmatpush1.msra.mxu0 %v4769
    %6889 = vmatprep.subr.mxu0 0.0
    %6890 = vmatpush1.msra.mxu0 %v4770
    %6891 = vmatprep.subr.mxu0 0.0
    %6892 = vmatpush1.msra.mxu0 %v4771
    %6893 = vmatprep.subr.mxu0 0.0
    %6894 = vmatpush1.msra.mxu0 %v4772
    %6895 = vmatprep.subr.mxu0 0.0
    %6896 = vmatpush1.msra.mxu0 0.0
    %6897 = vmatprep.subr.mxu0 0.0
    %6898 = vmatpush1.msra.mxu0 0.0
    %6899 = vmatprep.subr.mxu0 0.0
    %6900 = vmatpush1.msra.mxu0 0.0
    %6901 = vmatprep.subr.mxu0 0.0
    %6902 = vmatpush1.msra.mxu0 0.0
    %6903 = vmatprep.subr.mxu0 0.0
    %6904 = vmatpush1.msra.mxu0 0.0
    %6905 = vmatprep.subr.mxu0 0.0
    %6906 = vmatpush1.msra.mxu0 0.0
    %6907 = vmatprep.subr.mxu0 0.0
    %6908 = vmatpush1.msra.mxu0 0.0
    %6909 = vmatprep.subr.mxu0 0.0
    %6910 = vmatpush1.msra.mxu0 0.0
    %6911 = vmatprep.subr.mxu0 0.0
    %6912 = vmatpush1.msra.mxu0 0.0
    %6913 = vmatprep.subr.mxu0 0.0
    %6914 = vmatpush1.msra.mxu0 0.0
    %6915 = vmatprep.subr.mxu0 0.0
    %6916 = vmatpush1.msra.mxu0 0.0
    %6917 = vmatprep.subr.mxu0 0.0
    %6918 = vmatpush1.msra.mxu0 0.0
    %6919 = vmatprep.subr.mxu0 0.0
    %6920 = vmatpush1.msra.mxu0 0.0
    %6921 = vmatprep.subr.mxu0 0.0
    %6922 = vmatpush1.msra.mxu0 0.0
    %6923 = vmatprep.subr.mxu0 0.0
    %6924 = vmatpush1.msra.mxu0 0.0
    %6925 = vmatprep.subr.mxu0 0.0
    %6926 = vmatpush1.msra.mxu0 0.0
    %6927 = vmatprep.subr.mxu0 0.0
    %6928 = vmatpush1.msra.mxu0 0.0
    %6929 = vmatprep.subr.mxu0 0.0
    %6930 = vmatpush1.msra.mxu0 0.0
    %6931 = vmatprep.subr.mxu0 0.0
    %6932 = vmatpush1.msra.mxu0 0.0
    %6933 = vmatprep.subr.mxu0 0.0
    %6934 = vmatpush1.msra.mxu0 0.0
    %6935 = vmatprep.subr.mxu0 0.0
    %6936 = vmatpush1.msra.mxu0 0.0
    %6937 = vmatprep.subr.mxu0 0.0
    %6938 = vmatpush1.msra.mxu0 0.0
    %6939 = vmatprep.subr.mxu0 0.0
    %6940 = vmatpush1.msra.mxu0 0.0
    %6941 = vmatprep.subr.mxu0 0.0
    %6942 = vmatpush1.msra.mxu0 0.0
    %6943 = vmatprep.subr.mxu0 0.0
    %6944 = vmatpush1.msra.mxu0 0.0
    %6945 = vmatprep.subr.mxu0 0.0
    %6946 = vmatpush1.msra.mxu0 0.0
    %6947 = vmatprep.subr.mxu0 0.0
    %6948 = vmatpush1.msra.mxu0 0.0
    %6949 = vmatprep.subr.mxu0 0.0
    %6950 = vmatpush1.msra.mxu0 0.0
    %6951 = vmatprep.mubr.f32.mxu0 0.0
    %6952 = vmatmul.mubr.f32.gmra.mrb[0].mxu0 %v6876
    %v6953 = vpop.f32.mrb[0].mxu0
    %v6954 = vadd.f32 %v6874, %v6953
    %v6955 = vpop.f32.mrb[0].mxu0
    %6956 = vmatprep.mubr.f32.mxu0 0.0
    %6957 = vmatmul.mubr.f32.gmra.mrb[0].mxu0 %v6879
    %v6958 = vpop.f32.mrb[0].mxu0
    %v6959 = vadd.f32 %v6874, %v6958
    %v6960 = vpop.f32.mrb[0].mxu0
    %6961 = vmatprep.mubr.f32.mxu0 0.0
    %6962 = vmatmul.mubr.f32.gmra.mrb[0].mxu0 %v6882
    %v6963 = vpop.f32.mrb[0].mxu0
    %v6964 = vadd.f32 %v6874, %v6963
    %v6965 = vpop.f32.mrb[0].mxu0
    %6966 = vmatprep.mubr.f32.mxu0 0.0
    %6967 = vmatmul.mubr.f32.gmra.mrb[0].mxu0 %v6885
    %v6968 = vpop.f32.mrb[0].mxu0
    %v6969 = vadd.f32 %v6874, %v6968
    %v6970 = vpop.f32.mrb[0].mxu0
    %6971 = vdwg.mxu0
    %v6973 = vsel %vm310, %v6853, 0
    %v6976 = vsel %vm310, %v6858, 0
    %v6979 = vsel %vm310, %v6954, 0
    %v6982 = vsel %vm310, %v6959, 0
    %6984 = vmatprep.subr.mxu0 0.0
    %6985 = vmatpush1.xpose.msra.mxu0 %v6979
    %6986 = vmatprep.subr.mxu0 0.0
    %6987 = vmatpush1.xpose.msra.mxu0 %v6982
    %6988 = vmatprep.subr.mxu0 0.0
    %6989 = vmatpush1.xpose.msra.mxu0 0.0
    %6990 = vmatprep.subr.mxu0 0.0
    %6991 = vmatpush1.xpose.msra.mxu0 0.0
    %6992 = vmatprep.subr.mxu0 0.0
    %6993 = vmatpush1.xpose.msra.mxu0 0.0
    %6994 = vmatprep.subr.mxu0 0.0
    %6995 = vmatpush1.xpose.msra.mxu0 0.0
    %6996 = vmatprep.subr.mxu0 0.0
    %6997 = vmatpush1.xpose.msra.mxu0 0.0
    %6998 = vmatprep.subr.mxu0 0.0
    %6999 = vmatpush1.xpose.msra.mxu0 0.0
    %7000 = vmatprep.subr.mxu0 0.0
    %7001 = vmatpush1.xpose.msra.mxu0 0.0
    %7002 = vmatprep.subr.mxu0 0.0
    %7003 = vmatpush1.xpose.msra.mxu0 0.0
    %7004 = vmatprep.subr.mxu0 0.0
    %7005 = vmatpush1.xpose.msra.mxu0 0.0
    %7006 = vmatprep.subr.mxu0 0.0
    %7007 = vmatpush1.xpose.msra.mxu0 0.0
    %7008 = vmatprep.subr.mxu0 0.0
    %7009 = vmatpush1.xpose.msra.mxu0 0.0
    %7010 = vmatprep.subr.mxu0 0.0
    %7011 = vmatpush1.xpose.msra.mxu0 0.0
    %7012 = vmatprep.subr.mxu0 0.0
    %7013 = vmatpush1.xpose.msra.mxu0 0.0
    %7014 = vmatprep.subr.mxu0 0.0
    %7015 = vmatpush1.xpose.msra.mxu0 0.0
    %7016 = vmatprep.subr.mxu0 0.0
    %7017 = vmatpush1.xpose.msra.mxu0 0.0
    %7018 = vmatprep.subr.mxu0 0.0
    %7019 = vmatpush1.xpose.msra.mxu0 0.0
    %7020 = vmatprep.subr.mxu0 0.0
    %7021 = vmatpush1.xpose.msra.mxu0 0.0
    %7022 = vmatprep.subr.mxu0 0.0
    %7023 = vmatpush1.xpose.msra.mxu0 0.0
    %7024 = vmatprep.subr.mxu0 0.0
    %7025 = vmatpush1.xpose.msra.mxu0 0.0
    %7026 = vmatprep.subr.mxu0 0.0
    %7027 = vmatpush1.xpose.msra.mxu0 0.0
    %7028 = vmatprep.subr.mxu0 0.0
    %7029 = vmatpush1.xpose.msra.mxu0 0.0
    %7030 = vmatprep.subr.mxu0 0.0
    %7031 = vmatpush1.xpose.msra.mxu0 0.0
    %7032 = vmatprep.subr.mxu0 0.0
    %7033 = vmatpush1.xpose.msra.mxu0 0.0
    %7034 = vmatprep.subr.mxu0 0.0
    %7035 = vmatpush1.xpose.msra.mxu0 0.0
    %7036 = vmatprep.subr.mxu0 0.0
    %7037 = vmatpush1.xpose.msra.mxu0 0.0
    %7038 = vmatprep.subr.mxu0 0.0
    %7039 = vmatpush1.xpose.msra.mxu0 0.0
    %7040 = vmatprep.subr.mxu0 0.0
    %7041 = vmatpush1.xpose.msra.mxu0 0.0
    %7042 = vmatprep.subr.mxu0 0.0
    %7043 = vmatpush1.xpose.msra.mxu0 0.0
    %7044 = vmatprep.subr.mxu0 0.0
    %7045 = vmatpush1.xpose.msra.mxu0 0.0
    %7046 = vmatprep.subr.mxu0 0.0
    %7047 = vmatpush1.xpose.msra.mxu0 0.0
    %7048 = vmatprep.mubr.f32.mxu0 0.0
    %7049 = vmatmul.mubr.f32.gmra.mrb[0].mxu0 %v6973
    %v7050 = vpop.f32.mrb[0].mxu0
    %v7051 = vadd.f32 0.0, %v7050
    %v7052 = vpop.f32.mrb[0].mxu0
    %7053 = vmatprep.mubr.f32.mxu0 0.0
    %7054 = vmatmul.mubr.f32.gmra.mrb[0].mxu0 %v6976
    %v7055 = vpop.f32.mrb[0].mxu0
    %v7056 = vadd.f32 0.0, %v7055
    %v7057 = vpop.f32.mrb[0].mxu0
    %7058 = vdwg.mxu0
    %v7060 = vsel %vm310, %v6863, 0
    %v7063 = vsel %vm310, %v6868, 0
    %v7066 = vsel %vm310, %v6964, 0
    %v7069 = vsel %vm310, %v6969, 0
    %7071 = vmatprep.subr.mxu0 0.0
    %7072 = vmatpush1.xpose.msra.mxu0 %v7066
    %7073 = vmatprep.subr.mxu0 0.0
    %7074 = vmatpush1.xpose.msra.mxu0 %v7069
    %7075 = vmatprep.subr.mxu0 0.0
    %7076 = vmatpush1.xpose.msra.mxu0 0.0
    %7077 = vmatprep.subr.mxu0 0.0
    %7078 = vmatpush1.xpose.msra.mxu0 0.0
    %7079 = vmatprep.subr.mxu0 0.0
    %7080 = vmatpush1.xpose.msra.mxu0 0.0
    %7081 = vmatprep.subr.mxu0 0.0
    %7082 = vmatpush1.xpose.msra.mxu0 0.0
    %7083 = vmatprep.subr.mxu0 0.0
    %7084 = vmatpush1.xpose.msra.mxu0 0.0
    %7085 = vmatprep.subr.mxu0 0.0
    %7086 = vmatpush1.xpose.msra.mxu0 0.0
    %7087 = vmatprep.subr.mxu0 0.0
    %7088 = vmatpush1.xpose.msra.mxu0 0.0
    %7089 = vmatprep.subr.mxu0 0.0
    %7090 = vmatpush1.xpose.msra.mxu0 0.0
    %7091 = vmatprep.subr.mxu0 0.0
    %7092 = vmatpush1.xpose.msra.mxu0 0.0
    %7093 = vmatprep.subr.mxu0 0.0
    %7094 = vmatpush1.xpose.msra.mxu0 0.0
    %7095 = vmatprep.subr.mxu0 0.0
    %7096 = vmatpush1.xpose.msra.mxu0 0.0
    %7097 = vmatprep.subr.mxu0 0.0
    %7098 = vmatpush1.xpose.msra.mxu0 0.0
    %7099 = vmatprep.subr.mxu0 0.0
    %7100 = vmatpush1.xpose.msra.mxu0 0.0
    %7101 = vmatprep.subr.mxu0 0.0
    %7102 = vmatpush1.xpose.msra.mxu0 0.0
    %7103 = vmatprep.subr.mxu0 0.0
    %7104 = vmatpush1.xpose.msra.mxu0 0.0
    %7105 = vmatprep.subr.mxu0 0.0
    %7106 = vmatpush1.xpose.msra.mxu0 0.0
    %7107 = vmatprep.subr.mxu0 0.0
    %7108 = vmatpush1.xpose.msra.mxu0 0.0
    %7109 = vmatprep.subr.mxu0 0.0
    %7110 = vmatpush1.xpose.msra.mxu0 0.0
    %7111 = vmatprep.subr.mxu0 0.0
    %7112 = vmatpush1.xpose.msra.mxu0 0.0
    %7113 = vmatprep.subr.mxu0 0.0
    %7114 = vmatpush1.xpose.msra.mxu0 0.0
    %7115 = vmatprep.subr.mxu0 0.0
    %7116 = vmatpush1.xpose.msra.mxu0 0.0
    %7117 = vmatprep.subr.mxu0 0.0
    %7118 = vmatpush1.xpose.msra.mxu0 0.0
    %7119 = vmatprep.subr.mxu0 0.0
    %7120 = vmatpush1.xpose.msra.mxu0 0.0
    %7121 = vmatprep.subr.mxu0 0.0
    %7122 = vmatpush1.xpose.msra.mxu0 0.0
    %7123 = vmatprep.subr.mxu0 0.0
    %7124 = vmatpush1.xpose.msra.mxu0 0.0
    %7125 = vmatprep.subr.mxu0 0.0
    %7126 = vmatpush1.xpose.msra.mxu0 0.0
    %7127 = vmatprep.subr.mxu0 0.0
    %7128 = vmatpush1.xpose.msra.mxu0 0.0
    %7129 = vmatprep.subr.mxu0 0.0
    %7130 = vmatpush1.xpose.msra.mxu0 0.0
    %7131 = vmatprep.subr.mxu0 0.0
    %7132 = vmatpush1.xpose.msra.mxu0 0.0
    %7133 = vmatprep.subr.mxu0 0.0
    %7134 = vmatpush1.xpose.msra.mxu0 0.0
    %7135 = vmatprep.mubr.f32.mxu0 0.0
    %7136 = vmatmul.mubr.f32.gmra.mrb[0].mxu0 %v7060
    %v7137 = vpop.f32.mrb[0].mxu0
    %v7138 = vadd.f32 0.0, %v7137
    %v7139 = vpop.f32.mrb[0].mxu0
    %7140 = vmatprep.mubr.f32.mxu0 0.0
    %7141 = vmatmul.mubr.f32.gmra.mrb[0].mxu0 %v7063
    %v7142 = vpop.f32.mrb[0].mxu0
    %v7143 = vadd.f32 0.0, %v7142
    %v7144 = vpop.f32.mrb[0].mxu0
    %7145 = vdwg.mxu0
    %v7146 = vmul.f32 %v7051, 0.35355338
    %v7147 = vmul.f32 %v7056, 0.35355338
    %v7148 = vmul.f32 %v7138, 0.35355338
    %v7149 = vmul.f32 %v7143, 0.35355338
    %v7150 = vsel %vm487, %v7146, -inf
    %7151 = vmax.xlane.f32.xlu0 %v7150
    %v7152 = vpop.xlane.xlu0 %7151
    %v7153 = vsel %vm487, %v7147, -inf
    %7154 = vmax.xlane.f32.xlu0 %v7153
    %v7155 = vpop.xlane.xlu0 %7154
    %v7156 = vsel %vm487, %v7148, -inf
    %7157 = vmax.xlane.f32.xlu0 %v7156
    %v7158 = vpop.xlane.xlu0 %7157
    %v7159 = vsel %vm487, %v7149, -inf
    %7160 = vmax.xlane.f32.xlu0 %v7159
    %v7161 = vpop.xlane.xlu0 %7160
    %v7162 = vsub.f32 %v7146, %v7152
    %v7163 = vsub.f32 %v7147, %v7155
    %v7164 = vsub.f32 %v7148, %v7158
    %v7165 = vsub.f32 %v7149, %v7161
    %v7166 = vmul.f32 %v7162, 1.442695
    %v7167 = vpow.pop %v7166
    %v7168 = vmul.f32 %v7163, 1.442695
    %v7169 = vpow.pop %v7168
    %v7170 = vmul.f32 %v7164, 1.442695
    %v7171 = vpow.pop %v7170
    %v7172 = vmul.f32 %v7165, 1.442695
    %v7173 = vpow.pop %v7172
    %v7174 = vsel %vm487, %v7167, 0.0
    %7175 = vadd.xlane.f32.xlu0 %v7174
    %v7176 = vpop.xlane.xlu0 %7175
    %v7177 = vsel %vm487, %v7169, 0.0
    %7178 = vadd.xlane.f32.xlu0 %v7177
    %v7179 = vpop.xlane.xlu0 %7178
    %v7180 = vsel %vm487, %v7171, 0.0
    %7181 = vadd.xlane.f32.xlu0 %v7180
    %v7182 = vpop.xlane.xlu0 %7181
    %v7183 = vsel %vm487, %v7173, 0.0
    %7184 = vadd.xlane.f32.xlu0 %v7183
    %v7185 = vpop.xlane.xlu0 %7184
    %v7186 = vrcp.pop %v7176
    %v7187 = vmul.f32 %v7167, %v7186
    %v7188 = vrcp.pop %v7179
    %v7189 = vmul.f32 %v7169, %v7188
    %v7190 = vrcp.pop %v7182
    %v7191 = vmul.f32 %v7171, %v7190
    %v7192 = vrcp.pop %v7185
    %v7193 = vmul.f32 %v7173, %v7192
    %7194 = vrot.lane.b32.xlu0 %v6954, 96
    %v7195 = vpop.permute.xlu0 %7194
    %7196 = vrot.lane.b32.xlu0 %v6959, 96
    %v7197 = vpop.permute.xlu0 %7196
    %v7201 = vsel %vm487, %v7187, 0
    %v7204 = vsel %vm487, %v7189, 0
    %7206 = vmatprep.subr.mxu0 0.0
    %7207 = vmatpush1.msra.mxu0 %v7195
    %7208 = vmatprep.subr.mxu0 0.0
    %7209 = vmatpush1.msra.mxu0 %v7197
    %7210 = vmatprep.subr.mxu0 0.0
    %7211 = vmatpush1.msra.mxu0 0.0
    %7212 = vmatprep.subr.mxu0 0.0
    %7213 = vmatpush1.msra.mxu0 0.0
    %7214 = vmatprep.subr.mxu0 0.0
    %7215 = vmatpush1.msra.mxu0 0.0
    %7216 = vmatprep.subr.mxu0 0.0
    %7217 = vmatpush1.msra.mxu0 0.0
    %7218 = vmatprep.subr.mxu0 0.0
    %7219 = vmatpush1.msra.mxu0 0.0
    %7220 = vmatprep.subr.mxu0 0.0
    %7221 = vmatpush1.msra.mxu0 0.0
    %7222 = vmatprep.subr.mxu0 0.0
    %7223 = vmatpush1.msra.mxu0 0.0
    %7224 = vmatprep.subr.mxu0 0.0
    %7225 = vmatpush1.msra.mxu0 0.0
    %7226 = vmatprep.subr.mxu0 0.0
    %7227 = vmatpush1.msra.mxu0 0.0
    %7228 = vmatprep.subr.mxu0 0.0
    %7229 = vmatpush1.msra.mxu0 0.0
    %7230 = vmatprep.subr.mxu0 0.0
    %7231 = vmatpush1.msra.mxu0 0.0
    %7232 = vmatprep.subr.mxu0 0.0
    %7233 = vmatpush1.msra.mxu0 0.0
    %7234 = vmatprep.subr.mxu0 0.0
    %7235 = vmatpush1.msra.mxu0 0.0
    %7236 = vmatprep.subr.mxu0 0.0
    %7237 = vmatpush1.msra.mxu0 0.0
    %7238 = vmatprep.subr.mxu0 0.0
    %7239 = vmatpush1.msra.mxu0 0.0
    %7240 = vmatprep.subr.mxu0 0.0
    %7241 = vmatpush1.msra.mxu0 0.0
    %7242 = vmatprep.subr.mxu0 0.0
    %7243 = vmatpush1.msra.mxu0 0.0
    %7244 = vmatprep.subr.mxu0 0.0
    %7245 = vmatpush1.msra.mxu0 0.0
    %7246 = vmatprep.subr.mxu0 0.0
    %7247 = vmatpush1.msra.mxu0 0.0
    %7248 = vmatprep.subr.mxu0 0.0
    %7249 = vmatpush1.msra.mxu0 0.0
    %7250 = vmatprep.subr.mxu0 0.0
    %7251 = vmatpush1.msra.mxu0 0.0
    %7252 = vmatprep.subr.mxu0 0.0
    %7253 = vmatpush1.msra.mxu0 0.0
    %7254 = vmatprep.subr.mxu0 0.0
    %7255 = vmatpush1.msra.mxu0 0.0
    %7256 = vmatprep.subr.mxu0 0.0
    %7257 = vmatpush1.msra.mxu0 0.0
    %7258 = vmatprep.subr.mxu0 0.0
    %7259 = vmatpush1.msra.mxu0 0.0
    %7260 = vmatprep.subr.mxu0 0.0
    %7261 = vmatpush1.msra.mxu0 0.0
    %7262 = vmatprep.subr.mxu0 0.0
    %7263 = vmatpush1.msra.mxu0 0.0
    %7264 = vmatprep.subr.mxu0 0.0
    %7265 = vmatpush1.msra.mxu0 0.0
    %7266 = vmatprep.subr.mxu0 0.0
    %7267 = vmatpush1.msra.mxu0 0.0
    %7268 = vmatprep.subr.mxu0 0.0
    %7269 = vmatpush1.msra.mxu0 0.0
    %7270 = vmatprep.mubr.f32.mxu0 0.0
    %7271 = vmatmul.mubr.f32.gmra.mrb[0].mxu0 %v7201
    %v7272 = vpop.f32.mrb[0].mxu0
    %v7273 = vadd.f32 0.0, %v7272
    %v7274 = vpop.f32.mrb[0].mxu0
    %7275 = vmatprep.mubr.f32.mxu0 0.0
    %7276 = vmatmul.mubr.f32.gmra.mrb[0].mxu0 %v7204
    %v7277 = vpop.f32.mrb[0].mxu0
    %v7278 = vadd.f32 0.0, %v7277
    %v7279 = vpop.f32.mrb[0].mxu0
    %7280 = vdwg.mxu0
    %7281 = vrot.lane.b32.xlu0 %v6964, 96
    %v7282 = vpop.permute.xlu0 %7281
    %7283 = vrot.lane.b32.xlu0 %v6969, 96
    %v7284 = vpop.permute.xlu0 %7283
    %v7288 = vsel %vm487, %v7191, 0
    %v7291 = vsel %vm487, %v7193, 0
    %7293 = vmatprep.subr.mxu0 0.0
    %7294 = vmatpush1.msra.mxu0 %v7282
    %7295 = vmatprep.subr.mxu0 0.0
    %7296 = vmatpush1.msra.mxu0 %v7284
    %7297 = vmatprep.subr.mxu0 0.0
    %7298 = vmatpush1.msra.mxu0 0.0
    %7299 = vmatprep.subr.mxu0 0.0
    %7300 = vmatpush1.msra.mxu0 0.0
    %7301 = vmatprep.subr.mxu0 0.0
    %7302 = vmatpush1.msra.mxu0 0.0
    %7303 = vmatprep.subr.mxu0 0.0
    %7304 = vmatpush1.msra.mxu0 0.0
    %7305 = vmatprep.subr.mxu0 0.0
    %7306 = vmatpush1.msra.mxu0 0.0
    %7307 = vmatprep.subr.mxu0 0.0
    %7308 = vmatpush1.msra.mxu0 0.0
    %7309 = vmatprep.subr.mxu0 0.0
    %7310 = vmatpush1.msra.mxu0 0.0
    %7311 = vmatprep.subr.mxu0 0.0
    %7312 = vmatpush1.msra.mxu0 0.0
    %7313 = vmatprep.subr.mxu0 0.0
    %7314 = vmatpush1.msra.mxu0 0.0
    %7315 = vmatprep.subr.mxu0 0.0
    %7316 = vmatpush1.msra.mxu0 0.0
    %7317 = vmatprep.subr.mxu0 0.0
    %7318 = vmatpush1.msra.mxu0 0.0
    %7319 = vmatprep.subr.mxu0 0.0
    %7320 = vmatpush1.msra.mxu0 0.0
    %7321 = vmatprep.subr.mxu0 0.0
    %7322 = vmatpush1.msra.mxu0 0.0
    %7323 = vmatprep.subr.mxu0 0.0
    %7324 = vmatpush1.msra.mxu0 0.0
    %7325 = vmatprep.subr.mxu0 0.0
    %7326 = vmatpush1.msra.mxu0 0.0
    %7327 = vmatprep.subr.mxu0 0.0
    %7328 = vmatpush1.msra.mxu0 0.0
    %7329 = vmatprep.subr.mxu0 0.0
    %7330 = vmatpush1.msra.mxu0 0.0
    %7331 = vmatprep.subr.mxu0 0.0
    %7332 = vmatpush1.msra.mxu0 0.0
    %7333 = vmatprep.subr.mxu0 0.0
    %7334 = vmatpush1.msra.mxu0 0.0
    %7335 = vmatprep.subr.mxu0 0.0
    %7336 = vmatpush1.msra.mxu0 0.0
    %7337 = vmatprep.subr.mxu0 0.0
    %7338 = vmatpush1.msra.mxu0 0.0
    %7339 = vmatprep.subr.mxu0 0.0
    %7340 = vmatpush1.msra.mxu0 0.0
    %7341 = vmatprep.subr.mxu0 0.0
    %7342 = vmatpush1.msra.mxu0 0.0
    %7343 = vmatprep.subr.mxu0 0.0
    %7344 = vmatpush1.msra.mxu0 0.0
    %7345 = vmatprep.subr.mxu0 0.0
    %7346 = vmatpush1.msra.mxu0 0.0
    %7347 = vmatprep.subr.mxu0 0.0
    %7348 = vmatpush1.msra.mxu0 0.0
    %7349 = vmatprep.subr.mxu0 0.0
    %7350 = vmatpush1.msra.mxu0 0.0
    %7351 = vmatprep.subr.mxu0 0.0
    %7352 = vmatpush1.msra.mxu0 0.0
    %7353 = vmatprep.subr.mxu0 0.0
    %7354 = vmatpush1.msra.mxu0 0.0
    %7355 = vmatprep.subr.mxu0 0.0
    %7356 = vmatpush1.msra.mxu0 0.0
    %7357 = vmatprep.mubr.f32.mxu0 0.0
    %7358 = vmatmul.mubr.f32.gmra.mrb[0].mxu0 %v7288
    %v7359 = vpop.f32.mrb[0].mxu0
    %v7360 = vadd.f32 0.0, %v7359
    %v7361 = vpop.f32.mrb[0].mxu0
    %7362 = vmatprep.mubr.f32.mxu0 0.0
    %7363 = vmatmul.mubr.f32.gmra.mrb[0].mxu0 %v7291
    %v7364 = vpop.f32.mrb[0].mxu0
    %v7365 = vadd.f32 0.0, %v7364
    %v7366 = vpop.f32.mrb[0].mxu0
    %7367 = vdwg.mxu0
    %7368 = vrot.lane.b32.xlu0 %v6853, 120
    %v7369 = vpop.permute.xlu0 %7368
    %7370 = vrot.lane.b32.xlu0 %v6858, 120
    %v7371 = vpop.permute.xlu0 %7370
    %7372 = vrot.lane.b32.xlu0 %v6954, 120
    %v7373 = vpop.permute.xlu0 %7372
    %7374 = vrot.lane.b32.xlu0 %v6959, 120
    %v7375 = vpop.permute.xlu0 %7374
    %v7376 = vsel %vm310, %v7369, 0
    %v7378 = vsel %vm310, %v7371, 0
    %v7380 = vsel %vm310, %v7373, 0
    %v7382 = vsel %vm310, %v7375, 0
    %7384 = vmatprep.subr.mxu0 0.0
    %7385 = vmatpush1.xpose.msra.mxu0 %v7380
    %7386 = vmatprep.subr.mxu0 0.0
    %7387 = vmatpush1.xpose.msra.mxu0 %v7382
    %7388 = vmatprep.subr.mxu0 0.0
    %7389 = vmatpush1.xpose.msra.mxu0 0.0
    %7390 = vmatprep.subr.mxu0 0.0
    %7391 = vmatpush1.xpose.msra.mxu0 0.0
    %7392 = vmatprep.subr.mxu0 0.0
    %7393 = vmatpush1.xpose.msra.mxu0 0.0
    %7394 = vmatprep.subr.mxu0 0.0
    %7395 = vmatpush1.xpose.msra.mxu0 0.0
    %7396 = vmatprep.subr.mxu0 0.0
    %7397 = vmatpush1.xpose.msra.mxu0 0.0
    %7398 = vmatprep.subr.mxu0 0.0
    %7399 = vmatpush1.xpose.msra.mxu0 0.0
    %7400 = vmatprep.subr.mxu0 0.0
    %7401 = vmatpush1.xpose.msra.mxu0 0.0
    %7402 = vmatprep.subr.mxu0 0.0
    %7403 = vmatpush1.xpose.msra.mxu0 0.0
    %7404 = vmatprep.subr.mxu0 0.0
    %7405 = vmatpush1.xpose.msra.mxu0 0.0
    %7406 = vmatprep.subr.mxu0 0.0
    %7407 = vmatpush1.xpose.msra.mxu0 0.0
    %7408 = vmatprep.subr.mxu0 0.0
    %7409 = vmatpush1.xpose.msra.mxu0 0.0
    %7410 = vmatprep.subr.mxu0 0.0
    %7411 = vmatpush1.xpose.msra.mxu0 0.0
    %7412 = vmatprep.subr.mxu0 0.0
    %7413 = vmatpush1.xpose.msra.mxu0 0.0
    %7414 = vmatprep.subr.mxu0 0.0
    %7415 = vmatpush1.xpose.msra.mxu0 0.0
    %7416 = vmatprep.subr.mxu0 0.0
    %7417 = vmatpush1.xpose.msra.mxu0 0.0
    %7418 = vmatprep.subr.mxu0 0.0
    %7419 = vmatpush1.xpose.msra.mxu0 0.0
    %7420 = vmatprep.subr.mxu0 0.0
    %7421 = vmatpush1.xpose.msra.mxu0 0.0
    %7422 = vmatprep.subr.mxu0 0.0
    %7423 = vmatpush1.xpose.msra.mxu0 0.0
    %7424 = vmatprep.subr.mxu0 0.0
    %7425 = vmatpush1.xpose.msra.mxu0 0.0
    %7426 = vmatprep.subr.mxu0 0.0
    %7427 = vmatpush1.xpose.msra.mxu0 0.0
    %7428 = vmatprep.subr.mxu0 0.0
    %7429 = vmatpush1.xpose.msra.mxu0 0.0
    %7430 = vmatprep.subr.mxu0 0.0
    %7431 = vmatpush1.xpose.msra.mxu0 0.0
    %7432 = vmatprep.subr.mxu0 0.0
    %7433 = vmatpush1.xpose.msra.mxu0 0.0
    %7434 = vmatprep.subr.mxu0 0.0
    %7435 = vmatpush1.xpose.msra.mxu0 0.0
    %7436 = vmatprep.subr.mxu0 0.0
    %7437 = vmatpush1.xpose.msra.mxu0 0.0
    %7438 = vmatprep.subr.mxu0 0.0
    %7439 = vmatpush1.xpose.msra.mxu0 0.0
    %7440 = vmatprep.subr.mxu0 0.0
    %7441 = vmatpush1.xpose.msra.mxu0 0.0
    %7442 = vmatprep.subr.mxu0 0.0
    %7443 = vmatpush1.xpose.msra.mxu0 0.0
    %7444 = vmatprep.subr.mxu0 0.0
    %7445 = vmatpush1.xpose.msra.mxu0 0.0
    %7446 = vmatprep.subr.mxu0 0.0
    %7447 = vmatpush1.xpose.msra.mxu0 0.0
    %7448 = vmatprep.mubr.f32.mxu0 0.0
    %7449 = vmatmul.mubr.f32.gmra.mrb[0].mxu0 %v7376
    %v7450 = vpop.f32.mrb[0].mxu0
    %v7451 = vadd.f32 0.0, %v7450
    %v7452 = vpop.f32.mrb[0].mxu0
    %7453 = vmatprep.mubr.f32.mxu0 0.0
    %7454 = vmatmul.mubr.f32.gmra.mrb[0].mxu0 %v7378
    %v7455 = vpop.f32.mrb[0].mxu0
    %v7456 = vadd.f32 0.0, %v7455
    %v7457 = vpop.f32.mrb[0].mxu0
    %7458 = vdwg.mxu0
    %7459 = vrot.lane.b32.xlu0 %v6863, 120
    %v7460 = vpop.permute.xlu0 %7459
    %7461 = vrot.lane.b32.xlu0 %v6868, 120
    %v7462 = vpop.permute.xlu0 %7461
    %7463 = vrot.lane.b32.xlu0 %v6964, 120
    %v7464 = vpop.permute.xlu0 %7463
    %7465 = vrot.lane.b32.xlu0 %v6969, 120
    %v7466 = vpop.permute.xlu0 %7465
    %v7467 = vsel %vm310, %v7460, 0
    %v7469 = vsel %vm310, %v7462, 0
    %v7471 = vsel %vm310, %v7464, 0
    %v7473 = vsel %vm310, %v7466, 0
    %7475 = vmatprep.subr.mxu0 0.0
    %7476 = vmatpush1.xpose.msra.mxu0 %v7471
    %7477 = vmatprep.subr.mxu0 0.0
    %7478 = vmatpush1.xpose.msra.mxu0 %v7473
    %7479 = vmatprep.subr.mxu0 0.0
    %7480 = vmatpush1.xpose.msra.mxu0 0.0
    %7481 = vmatprep.subr.mxu0 0.0
    %7482 = vmatpush1.xpose.msra.mxu0 0.0
    %7483 = vmatprep.subr.mxu0 0.0
    %7484 = vmatpush1.xpose.msra.mxu0 0.0
    %7485 = vmatprep.subr.mxu0 0.0
    %7486 = vmatpush1.xpose.msra.mxu0 0.0
    %7487 = vmatprep.subr.mxu0 0.0
    %7488 = vmatpush1.xpose.msra.mxu0 0.0
    %7489 = vmatprep.subr.mxu0 0.0
    %7490 = vmatpush1.xpose.msra.mxu0 0.0
    %7491 = vmatprep.subr.mxu0 0.0
    %7492 = vmatpush1.xpose.msra.mxu0 0.0
    %7493 = vmatprep.subr.mxu0 0.0
    %7494 = vmatpush1.xpose.msra.mxu0 0.0
    %7495 = vmatprep.subr.mxu0 0.0
    %7496 = vmatpush1.xpose.msra.mxu0 0.0
    %7497 = vmatprep.subr.mxu0 0.0
    %7498 = vmatpush1.xpose.msra.mxu0 0.0
    %7499 = vmatprep.subr.mxu0 0.0
    %7500 = vmatpush1.xpose.msra.mxu0 0.0
    %7501 = vmatprep.subr.mxu0 0.0
    %7502 = vmatpush1.xpose.msra.mxu0 0.0
    %7503 = vmatprep.subr.mxu0 0.0
    %7504 = vmatpush1.xpose.msra.mxu0 0.0
    %7505 = vmatprep.subr.mxu0 0.0
    %7506 = vmatpush1.xpose.msra.mxu0 0.0
    %7507 = vmatprep.subr.mxu0 0.0
    %7508 = vmatpush1.xpose.msra.mxu0 0.0
    %7509 = vmatprep.subr.mxu0 0.0
    %7510 = vmatpush1.xpose.msra.mxu0 0.0
    %7511 = vmatprep.subr.mxu0 0.0
    %7512 = vmatpush1.xpose.msra.mxu0 0.0
    %7513 = vmatprep.subr.mxu0 0.0
    %7514 = vmatpush1.xpose.msra.mxu0 0.0
    %7515 = vmatprep.subr.mxu0 0.0
    %7516 = vmatpush1.xpose.msra.mxu0 0.0
    %7517 = vmatprep.subr.mxu0 0.0
    %7518 = vmatpush1.xpose.msra.mxu0 0.0
    %7519 = vmatprep.subr.mxu0 0.0
    %7520 = vmatpush1.xpose.msra.mxu0 0.0
    %7521 = vmatprep.subr.mxu0 0.0
    %7522 = vmatpush1.xpose.msra.mxu0 0.0
    %7523 = vmatprep.subr.mxu0 0.0
    %7524 = vmatpush1.xpose.msra.mxu0 0.0
    %7525 = vmatprep.subr.mxu0 0.0
    %7526 = vmatpush1.xpose.msra.mxu0 0.0
    %7527 = vmatprep.subr.mxu0 0.0
    %7528 = vmatpush1.xpose.msra.mxu0 0.0
    %7529 = vmatprep.subr.mxu0 0.0
    %7530 = vmatpush1.xpose.msra.mxu0 0.0
    %7531 = vmatprep.subr.mxu0 0.0
    %7532 = vmatpush1.xpose.msra.mxu0 0.0
    %7533 = vmatprep.subr.mxu0 0.0
    %7534 = vmatpush1.xpose.msra.mxu0 0.0
    %7535 = vmatprep.subr.mxu0 0.0
    %7536 = vmatpush1.xpose.msra.mxu0 0.0
    %7537 = vmatprep.subr.mxu0 0.0
    %7538 = vmatpush1.xpose.msra.mxu0 0.0
    %7539 = vmatprep.mubr.f32.mxu0 0.0
    %7540 = vmatmul.mubr.f32.gmra.mrb[0].mxu0 %v7467
    %v7541 = vpop.f32.mrb[0].mxu0
    %v7542 = vadd.f32 0.0, %v7541
    %v7543 = vpop.f32.mrb[0].mxu0
    %7544 = vmatprep.mubr.f32.mxu0 0.0
    %7545 = vmatmul.mubr.f32.gmra.mrb[0].mxu0 %v7469
    %v7546 = vpop.f32.mrb[0].mxu0
    %v7547 = vadd.f32 0.0, %v7546
    %v7548 = vpop.f32.mrb[0].mxu0
    %7549 = vdwg.mxu0
    %v7550 = vmul.f32 %v7451, 0.35355338
    %v7551 = vmul.f32 %v7456, 0.35355338
    %v7552 = vmul.f32 %v7542, 0.35355338
    %v7553 = vmul.f32 %v7547, 0.35355338
    %v7554 = vsel %vm487, %v7550, -inf
    %7555 = vmax.xlane.f32.xlu0 %v7554
    %v7556 = vpop.xlane.xlu0 %7555
    %v7557 = vsel %vm487, %v7551, -inf
    %7558 = vmax.xlane.f32.xlu0 %v7557
    %v7559 = vpop.xlane.xlu0 %7558
    %v7560 = vsel %vm487, %v7552, -inf
    %7561 = vmax.xlane.f32.xlu0 %v7560
    %v7562 = vpop.xlane.xlu0 %7561
    %v7563 = vsel %vm487, %v7553, -inf
    %7564 = vmax.xlane.f32.xlu0 %v7563
    %v7565 = vpop.xlane.xlu0 %7564
    %v7566 = vsub.f32 %v7550, %v7556
    %v7567 = vsub.f32 %v7551, %v7559
    %v7568 = vsub.f32 %v7552, %v7562
    %v7569 = vsub.f32 %v7553, %v7565
    %v7570 = vmul.f32 %v7566, 1.442695
    %v7571 = vpow.pop %v7570
    %v7572 = vmul.f32 %v7567, 1.442695
    %v7573 = vpow.pop %v7572
    %v7574 = vmul.f32 %v7568, 1.442695
    %v7575 = vpow.pop %v7574
    %v7576 = vmul.f32 %v7569, 1.442695
    %v7577 = vpow.pop %v7576
    %v7578 = vsel %vm487, %v7571, 0.0
    %7579 = vadd.xlane.f32.xlu0 %v7578
    %v7580 = vpop.xlane.xlu0 %7579
    %v7581 = vsel %vm487, %v7573, 0.0
    %7582 = vadd.xlane.f32.xlu0 %v7581
    %v7583 = vpop.xlane.xlu0 %7582
    %v7584 = vsel %vm487, %v7575, 0.0
    %7585 = vadd.xlane.f32.xlu0 %v7584
    %v7586 = vpop.xlane.xlu0 %7585
    %v7587 = vsel %vm487, %v7577, 0.0
    %7588 = vadd.xlane.f32.xlu0 %v7587
    %v7589 = vpop.xlane.xlu0 %7588
    %v7590 = vrcp.pop %v7580
    %v7591 = vmul.f32 %v7571, %v7590
    %v7592 = vrcp.pop %v7583
    %v7593 = vmul.f32 %v7573, %v7592
    %v7594 = vrcp.pop %v7586
    %v7595 = vmul.f32 %v7575, %v7594
    %v7596 = vrcp.pop %v7589
    %v7597 = vmul.f32 %v7577, %v7596
    %7598 = vrot.lane.b32.xlu0 %v6954, 88
    %v7599 = vpop.permute.xlu0 %7598
    %7600 = vrot.lane.b32.xlu0 %v6959, 88
    %v7601 = vpop.permute.xlu0 %7600
    %v7605 = vsel %vm487, %v7591, 0
    %v7608 = vsel %vm487, %v7593, 0
    %7610 = vmatprep.subr.mxu0 0.0
    %7611 = vmatpush1.msra.mxu0 %v7599
    %7612 = vmatprep.subr.mxu0 0.0
    %7613 = vmatpush1.msra.mxu0 %v7601
    %7614 = vmatprep.subr.mxu0 0.0
    %7615 = vmatpush1.msra.mxu0 0.0
    %7616 = vmatprep.subr.mxu0 0.0
    %7617 = vmatpush1.msra.mxu0 0.0
    %7618 = vmatprep.subr.mxu0 0.0
    %7619 = vmatpush1.msra.mxu0 0.0
    %7620 = vmatprep.subr.mxu0 0.0
    %7621 = vmatpush1.msra.mxu0 0.0
    %7622 = vmatprep.subr.mxu0 0.0
    %7623 = vmatpush1.msra.mxu0 0.0
    %7624 = vmatprep.subr.mxu0 0.0
    %7625 = vmatpush1.msra.mxu0 0.0
    %7626 = vmatprep.subr.mxu0 0.0
    %7627 = vmatpush1.msra.mxu0 0.0
    %7628 = vmatprep.subr.mxu0 0.0
    %7629 = vmatpush1.msra.mxu0 0.0
    %7630 = vmatprep.subr.mxu0 0.0
    %7631 = vmatpush1.msra.mxu0 0.0
    %7632 = vmatprep.subr.mxu0 0.0
    %7633 = vmatpush1.msra.mxu0 0.0
    %7634 = vmatprep.subr.mxu0 0.0
    %7635 = vmatpush1.msra.mxu0 0.0
    %7636 = vmatprep.subr.mxu0 0.0
    %7637 = vmatpush1.msra.mxu0 0.0
    %7638 = vmatprep.subr.mxu0 0.0
    %7639 = vmatpush1.msra.mxu0 0.0
    %7640 = vmatprep.subr.mxu0 0.0
    %7641 = vmatpush1.msra.mxu0 0.0
    %7642 = vmatprep.subr.mxu0 0.0
    %7643 = vmatpush1.msra.mxu0 0.0
    %7644 = vmatprep.subr.mxu0 0.0
    %7645 = vmatpush1.msra.mxu0 0.0
    %7646 = vmatprep.subr.mxu0 0.0
    %7647 = vmatpush1.msra.mxu0 0.0
    %7648 = vmatprep.subr.mxu0 0.0
    %7649 = vmatpush1.msra.mxu0 0.0
    %7650 = vmatprep.subr.mxu0 0.0
    %7651 = vmatpush1.msra.mxu0 0.0
    %7652 = vmatprep.subr.mxu0 0.0
    %7653 = vmatpush1.msra.mxu0 0.0
    %7654 = vmatprep.subr.mxu0 0.0
    %7655 = vmatpush1.msra.mxu0 0.0
    %7656 = vmatprep.subr.mxu0 0.0
    %7657 = vmatpush1.msra.mxu0 0.0
    %7658 = vmatprep.subr.mxu0 0.0
    %7659 = vmatpush1.msra.mxu0 0.0
    %7660 = vmatprep.subr.mxu0 0.0
    %7661 = vmatpush1.msra.mxu0 0.0
    %7662 = vmatprep.subr.mxu0 0.0
    %7663 = vmatpush1.msra.mxu0 0.0
    %7664 = vmatprep.subr.mxu0 0.0
    %7665 = vmatpush1.msra.mxu0 0.0
    %7666 = vmatprep.subr.mxu0 0.0
    %7667 = vmatpush1.msra.mxu0 0.0
    %7668 = vmatprep.subr.mxu0 0.0
    %7669 = vmatpush1.msra.mxu0 0.0
    %7670 = vmatprep.subr.mxu0 0.0
    %7671 = vmatpush1.msra.mxu0 0.0
    %7672 = vmatprep.subr.mxu0 0.0
    %7673 = vmatpush1.msra.mxu0 0.0
    %7674 = vmatprep.mubr.f32.mxu0 0.0
    %7675 = vmatmul.mubr.f32.gmra.mrb[0].mxu0 %v7605
    %v7676 = vpop.f32.mrb[0].mxu0
    %v7677 = vadd.f32 0.0, %v7676
    %v7678 = vpop.f32.mrb[0].mxu0
    %7679 = vmatprep.mubr.f32.mxu0 0.0
    %7680 = vmatmul.mubr.f32.gmra.mrb[0].mxu0 %v7608
    %v7681 = vpop.f32.mrb[0].mxu0
    %v7682 = vadd.f32 0.0, %v7681
    %v7683 = vpop.f32.mrb[0].mxu0
    %7684 = vdwg.mxu0
    %7685 = vrot.lane.b32.xlu0 %v6964, 88
    %v7686 = vpop.permute.xlu0 %7685
    %7687 = vrot.lane.b32.xlu0 %v6969, 88
    %v7688 = vpop.permute.xlu0 %7687
    %v7692 = vsel %vm487, %v7595, 0
    %v7695 = vsel %vm487, %v7597, 0
    %7697 = vmatprep.subr.mxu0 0.0
    %7698 = vmatpush1.msra.mxu0 %v7686
    %7699 = vmatprep.subr.mxu0 0.0
    %7700 = vmatpush1.msra.mxu0 %v7688
    %7701 = vmatprep.subr.mxu0 0.0
    %7702 = vmatpush1.msra.mxu0 0.0
    %7703 = vmatprep.subr.mxu0 0.0
    %7704 = vmatpush1.msra.mxu0 0.0
    %7705 = vmatprep.subr.mxu0 0.0
    %7706 = vmatpush1.msra.mxu0 0.0
    %7707 = vmatprep.subr.mxu0 0.0
    %7708 = vmatpush1.msra.mxu0 0.0
    %7709 = vmatprep.subr.mxu0 0.0
    %7710 = vmatpush1.msra.mxu0 0.0
    %7711 = vmatprep.subr.mxu0 0.0
    %7712 = vmatpush1.msra.mxu0 0.0
    %7713 = vmatprep.subr.mxu0 0.0
    %7714 = vmatpush1.msra.mxu0 0.0
    %7715 = vmatprep.subr.mxu0 0.0
    %7716 = vmatpush1.msra.mxu0 0.0
    %7717 = vmatprep.subr.mxu0 0.0
    %7718 = vmatpush1.msra.mxu0 0.0
    %7719 = vmatprep.subr.mxu0 0.0
    %7720 = vmatpush1.msra.mxu0 0.0
    %7721 = vmatprep.subr.mxu0 0.0
    %7722 = vmatpush1.msra.mxu0 0.0
    %7723 = vmatprep.subr.mxu0 0.0
    %7724 = vmatpush1.msra.mxu0 0.0
    %7725 = vmatprep.subr.mxu0 0.0
    %7726 = vmatpush1.msra.mxu0 0.0
    %7727 = vmatprep.subr.mxu0 0.0
    %7728 = vmatpush1.msra.mxu0 0.0
    %7729 = vmatprep.subr.mxu0 0.0
    %7730 = vmatpush1.msra.mxu0 0.0
    %7731 = vmatprep.subr.mxu0 0.0
    %7732 = vmatpush1.msra.mxu0 0.0
    %7733 = vmatprep.subr.mxu0 0.0
    %7734 = vmatpush1.msra.mxu0 0.0
    %7735 = vmatprep.subr.mxu0 0.0
    %7736 = vmatpush1.msra.mxu0 0.0
    %7737 = vmatprep.subr.mxu0 0.0
    %7738 = vmatpush1.msra.mxu0 0.0
    %7739 = vmatprep.subr.mxu0 0.0
    %7740 = vmatpush1.msra.mxu0 0.0
    %7741 = vmatprep.subr.mxu0 0.0
    %7742 = vmatpush1.msra.mxu0 0.0
    %7743 = vmatprep.subr.mxu0 0.0
    %7744 = vmatpush1.msra.mxu0 0.0
    %7745 = vmatprep.subr.mxu0 0.0
    %7746 = vmatpush1.msra.mxu0 0.0
    %7747 = vmatprep.subr.mxu0 0.0
    %7748 = vmatpush1.msra.mxu0 0.0
    %7749 = vmatprep.subr.mxu0 0.0
    %7750 = vmatpush1.msra.mxu0 0.0
    %7751 = vmatprep.subr.mxu0 0.0
    %7752 = vmatpush1.msra.mxu0 0.0
    %7753 = vmatprep.subr.mxu0 0.0
    %7754 = vmatpush1.msra.mxu0 0.0
    %7755 = vmatprep.subr.mxu0 0.0
    %7756 = vmatpush1.msra.mxu0 0.0
    %7757 = vmatprep.subr.mxu0 0.0
    %7758 = vmatpush1.msra.mxu0 0.0
    %7759 = vmatprep.subr.mxu0 0.0
    %7760 = vmatpush1.msra.mxu0 0.0
    %7761 = vmatprep.mubr.f32.mxu0 0.0
    %7762 = vmatmul.mubr.f32.gmra.mrb[0].mxu0 %v7692
    %v7763 = vpop.f32.mrb[0].mxu0
    %v7764 = vadd.f32 0.0, %v7763
    %v7765 = vpop.f32.mrb[0].mxu0
    %7766 = vmatprep.mubr.f32.mxu0 0.0
    %7767 = vmatmul.mubr.f32.gmra.mrb[0].mxu0 %v7695
    %v7768 = vpop.f32.mrb[0].mxu0
    %v7769 = vadd.f32 0.0, %v7768
    %v7770 = vpop.f32.mrb[0].mxu0
    %7771 = vdwg.mxu0
    %7772 = vrot.lane.b32.xlu0 %v6853, 112
    %v7773 = vpop.permute.xlu0 %7772
    %7774 = vrot.lane.b32.xlu0 %v6858, 112
    %v7775 = vpop.permute.xlu0 %7774
    %7776 = vrot.lane.b32.xlu0 %v6954, 112
    %v7777 = vpop.permute.xlu0 %7776
    %7778 = vrot.lane.b32.xlu0 %v6959, 112
    %v7779 = vpop.permute.xlu0 %7778
    %v7780 = vsel %vm310, %v7773, 0
    %v7782 = vsel %vm310, %v7775, 0
    %v7784 = vsel %vm310, %v7777, 0
    %v7786 = vsel %vm310, %v7779, 0
    %7788 = vmatprep.subr.mxu0 0.0
    %7789 = vmatpush1.xpose.msra.mxu0 %v7784
    %7790 = vmatprep.subr.mxu0 0.0
    %7791 = vmatpush1.xpose.msra.mxu0 %v7786
    %7792 = vmatprep.subr.mxu0 0.0
    %7793 = vmatpush1.xpose.msra.mxu0 0.0
    %7794 = vmatprep.subr.mxu0 0.0
    %7795 = vmatpush1.xpose.msra.mxu0 0.0
    %7796 = vmatprep.subr.mxu0 0.0
    %7797 = vmatpush1.xpose.msra.mxu0 0.0
    %7798 = vmatprep.subr.mxu0 0.0
    %7799 = vmatpush1.xpose.msra.mxu0 0.0
    %7800 = vmatprep.subr.mxu0 0.0
    %7801 = vmatpush1.xpose.msra.mxu0 0.0
    %7802 = vmatprep.subr.mxu0 0.0
    %7803 = vmatpush1.xpose.msra.mxu0 0.0
    %7804 = vmatprep.subr.mxu0 0.0
    %7805 = vmatpush1.xpose.msra.mxu0 0.0
    %7806 = vmatprep.subr.mxu0 0.0
    %7807 = vmatpush1.xpose.msra.mxu0 0.0
    %7808 = vmatprep.subr.mxu0 0.0
    %7809 = vmatpush1.xpose.msra.mxu0 0.0
    %7810 = vmatprep.subr.mxu0 0.0
    %7811 = vmatpush1.xpose.msra.mxu0 0.0
    %7812 = vmatprep.subr.mxu0 0.0
    %7813 = vmatpush1.xpose.msra.mxu0 0.0
    %7814 = vmatprep.subr.mxu0 0.0
    %7815 = vmatpush1.xpose.msra.mxu0 0.0
    %7816 = vmatprep.subr.mxu0 0.0
    %7817 = vmatpush1.xpose.msra.mxu0 0.0
    %7818 = vmatprep.subr.mxu0 0.0
    %7819 = vmatpush1.xpose.msra.mxu0 0.0
    %7820 = vmatprep.subr.mxu0 0.0
    %7821 = vmatpush1.xpose.msra.mxu0 0.0
    %7822 = vmatprep.subr.mxu0 0.0
    %7823 = vmatpush1.xpose.msra.mxu0 0.0
    %7824 = vmatprep.subr.mxu0 0.0
    %7825 = vmatpush1.xpose.msra.mxu0 0.0
    %7826 = vmatprep.subr.mxu0 0.0
    %7827 = vmatpush1.xpose.msra.mxu0 0.0
    %7828 = vmatprep.subr.mxu0 0.0
    %7829 = vmatpush1.xpose.msra.mxu0 0.0
    %7830 = vmatprep.subr.mxu0 0.0
    %7831 = vmatpush1.xpose.msra.mxu0 0.0
    %7832 = vmatprep.subr.mxu0 0.0
    %7833 = vmatpush1.xpose.msra.mxu0 0.0
    %7834 = vmatprep.subr.mxu0 0.0
    %7835 = vmatpush1.xpose.msra.mxu0 0.0
    %7836 = vmatprep.subr.mxu0 0.0
    %7837 = vmatpush1.xpose.msra.mxu0 0.0
    %7838 = vmatprep.subr.mxu0 0.0
    %7839 = vmatpush1.xpose.msra.mxu0 0.0
    %7840 = vmatprep.subr.mxu0 0.0
    %7841 = vmatpush1.xpose.msra.mxu0 0.0
    %7842 = vmatprep.subr.mxu0 0.0
    %7843 = vmatpush1.xpose.msra.mxu0 0.0
    %7844 = vmatprep.subr.mxu0 0.0
    %7845 = vmatpush1.xpose.msra.mxu0 0.0
    %7846 = vmatprep.subr.mxu0 0.0
    %7847 = vmatpush1.xpose.msra.mxu0 0.0
    %7848 = vmatprep.subr.mxu0 0.0
    %7849 = vmatpush1.xpose.msra.mxu0 0.0
    %7850 = vmatprep.subr.mxu0 0.0
    %7851 = vmatpush1.xpose.msra.mxu0 0.0
    %7852 = vmatprep.mubr.f32.mxu0 0.0
    %7853 = vmatmul.mubr.f32.gmra.mrb[0].mxu0 %v7780
    %v7854 = vpop.f32.mrb[0].mxu0
    %v7855 = vadd.f32 0.0, %v7854
    %v7856 = vpop.f32.mrb[0].mxu0
    %7857 = vmatprep.mubr.f32.mxu0 0.0
    %7858 = vmatmul.mubr.f32.gmra.mrb[0].mxu0 %v7782
    %v7859 = vpop.f32.mrb[0].mxu0
    %v7860 = vadd.f32 0.0, %v7859
    %v7861 = vpop.f32.mrb[0].mxu0
    %7862 = vdwg.mxu0
    %7863 = vrot.lane.b32.xlu0 %v6863, 112
    %v7864 = vpop.permute.xlu0 %7863
    %7865 = vrot.lane.b32.xlu0 %v6868, 112
    %v7866 = vpop.permute.xlu0 %7865
    %7867 = vrot.lane.b32.xlu0 %v6964, 112
    %v7868 = vpop.permute.xlu0 %7867
    %7869 = vrot.lane.b32.xlu0 %v6969, 112
    %v7870 = vpop.permute.xlu0 %7869
    %v7871 = vsel %vm310, %v7864, 0
    %v7873 = vsel %vm310, %v7866, 0
    %v7875 = vsel %vm310, %v7868, 0
    %v7877 = vsel %vm310, %v7870, 0
    %7879 = vmatprep.subr.mxu0 0.0
    %7880 = vmatpush1.xpose.msra.mxu0 %v7875
    %7881 = vmatprep.subr.mxu0 0.0
    %7882 = vmatpush1.xpose.msra.mxu0 %v7877
    %7883 = vmatprep.subr.mxu0 0.0
    %7884 = vmatpush1.xpose.msra.mxu0 0.0
    %7885 = vmatprep.subr.mxu0 0.0
    %7886 = vmatpush1.xpose.msra.mxu0 0.0
    %7887 = vmatprep.subr.mxu0 0.0
    %7888 = vmatpush1.xpose.msra.mxu0 0.0
    %7889 = vmatprep.subr.mxu0 0.0
    %7890 = vmatpush1.xpose.msra.mxu0 0.0
    %7891 = vmatprep.subr.mxu0 0.0
    %7892 = vmatpush1.xpose.msra.mxu0 0.0
    %7893 = vmatprep.subr.mxu0 0.0
    %7894 = vmatpush1.xpose.msra.mxu0 0.0
    %7895 = vmatprep.subr.mxu0 0.0
    %7896 = vmatpush1.xpose.msra.mxu0 0.0
    %7897 = vmatprep.subr.mxu0 0.0
    %7898 = vmatpush1.xpose.msra.mxu0 0.0
    %7899 = vmatprep.subr.mxu0 0.0
    %7900 = vmatpush1.xpose.msra.mxu0 0.0
    %7901 = vmatprep.subr.mxu0 0.0
    %7902 = vmatpush1.xpose.msra.mxu0 0.0
    %7903 = vmatprep.subr.mxu0 0.0
    %7904 = vmatpush1.xpose.msra.mxu0 0.0
    %7905 = vmatprep.subr.mxu0 0.0
    %7906 = vmatpush1.xpose.msra.mxu0 0.0
    %7907 = vmatprep.subr.mxu0 0.0
    %7908 = vmatpush1.xpose.msra.mxu0 0.0
    %7909 = vmatprep.subr.mxu0 0.0
    %7910 = vmatpush1.xpose.msra.mxu0 0.0
    %7911 = vmatprep.subr.mxu0 0.0
    %7912 = vmatpush1.xpose.msra.mxu0 0.0
    %7913 = vmatprep.subr.mxu0 0.0
    %7914 = vmatpush1.xpose.msra.mxu0 0.0
    %7915 = vmatprep.subr.mxu0 0.0
    %7916 = vmatpush1.xpose.msra.mxu0 0.0
    %7917 = vmatprep.subr.mxu0 0.0
    %7918 = vmatpush1.xpose.msra.mxu0 0.0
    %7919 = vmatprep.subr.mxu0 0.0
    %7920 = vmatpush1.xpose.msra.mxu0 0.0
    %7921 = vmatprep.subr.mxu0 0.0
    %7922 = vmatpush1.xpose.msra.mxu0 0.0
    %7923 = vmatprep.subr.mxu0 0.0
    %7924 = vmatpush1.xpose.msra.mxu0 0.0
    %7925 = vmatprep.subr.mxu0 0.0
    %7926 = vmatpush1.xpose.msra.mxu0 0.0
    %7927 = vmatprep.subr.mxu0 0.0
    %7928 = vmatpush1.xpose.msra.mxu0 0.0
    %7929 = vmatprep.subr.mxu0 0.0
    %7930 = vmatpush1.xpose.msra.mxu0 0.0
    %7931 = vmatprep.subr.mxu0 0.0
    %7932 = vmatpush1.xpose.msra.mxu0 0.0
    %7933 = vmatprep.subr.mxu0 0.0
    %7934 = vmatpush1.xpose.msra.mxu0 0.0
    %7935 = vmatprep.subr.mxu0 0.0
    %7936 = vmatpush1.xpose.msra.mxu0 0.0
    %7937 = vmatprep.subr.mxu0 0.0
    %7938 = vmatpush1.xpose.msra.mxu0 0.0
    %7939 = vmatprep.subr.mxu0 0.0
    %7940 = vmatpush1.xpose.msra.mxu0 0.0
    %7941 = vmatprep.subr.mxu0 0.0
    %7942 = vmatpush1.xpose.msra.mxu0 0.0
    %7943 = vmatprep.mubr.f32.mxu0 0.0
    %7944 = vmatmul.mubr.f32.gmra.mrb[0].mxu0 %v7871
    %v7945 = vpop.f32.mrb[0].mxu0
    %v7946 = vadd.f32 0.0, %v7945
    %v7947 = vpop.f32.mrb[0].mxu0
    %7948 = vmatprep.mubr.f32.mxu0 0.0
    %7949 = vmatmul.mubr.f32.gmra.mrb[0].mxu0 %v7873
    %v7950 = vpop.f32.mrb[0].mxu0
    %v7951 = vadd.f32 0.0, %v7950
    %v7952 = vpop.f32.mrb[0].mxu0
    %7953 = vdwg.mxu0
    %v7954 = vmul.f32 %v7855, 0.35355338
    %v7955 = vmul.f32 %v7860, 0.35355338
    %v7956 = vmul.f32 %v7946, 0.35355338
    %v7957 = vmul.f32 %v7951, 0.35355338
    %v7958 = vsel %vm487, %v7954, -inf
    %7959 = vmax.xlane.f32.xlu0 %v7958
    %v7960 = vpop.xlane.xlu0 %7959
    %v7961 = vsel %vm487, %v7955, -inf
    %7962 = vmax.xlane.f32.xlu0 %v7961
    %v7963 = vpop.xlane.xlu0 %7962
    %v7964 = vsel %vm487, %v7956, -inf
    %7965 = vmax.xlane.f32.xlu0 %v7964
    %v7966 = vpop.xlane.xlu0 %7965
    %v7967 = vsel %vm487, %v7957, -inf
    %7968 = vmax.xlane.f32.xlu0 %v7967
    %v7969 = vpop.xlane.xlu0 %7968
    %v7970 = vsub.f32 %v7954, %v7960
    %v7971 = vsub.f32 %v7955, %v7963
    %v7972 = vsub.f32 %v7956, %v7966
    %v7973 = vsub.f32 %v7957, %v7969
    %v7974 = vmul.f32 %v7970, 1.442695
    %v7975 = vpow.pop %v7974
    %v7976 = vmul.f32 %v7971, 1.442695
    %v7977 = vpow.pop %v7976
    %v7978 = vmul.f32 %v7972, 1.442695
    %v7979 = vpow.pop %v7978
    %v7980 = vmul.f32 %v7973, 1.442695
    %v7981 = vpow.pop %v7980
    %v7982 = vsel %vm487, %v7975, 0.0
    %7983 = vadd.xlane.f32.xlu0 %v7982
    %v7984 = vpop.xlane.xlu0 %7983
    %v7985 = vsel %vm487, %v7977, 0.0
    %7986 = vadd.xlane.f32.xlu0 %v7985
    %v7987 = vpop.xlane.xlu0 %7986
    %v7988 = vsel %vm487, %v7979, 0.0
    %7989 = vadd.xlane.f32.xlu0 %v7988
    %v7990 = vpop.xlane.xlu0 %7989
    %v7991 = vsel %vm487, %v7981, 0.0
    %7992 = vadd.xlane.f32.xlu0 %v7991
    %v7993 = vpop.xlane.xlu0 %7992
    %v7994 = vrcp.pop %v7984
    %v7995 = vmul.f32 %v7975, %v7994
    %v7996 = vrcp.pop %v7987
    %v7997 = vmul.f32 %v7977, %v7996
    %v7998 = vrcp.pop %v7990
    %v7999 = vmul.f32 %v7979, %v7998
    %v8000 = vrcp.pop %v7993
    %v8001 = vmul.f32 %v7981, %v8000
    %8002 = vrot.lane.b32.xlu0 %v6954, 80
    %v8003 = vpop.permute.xlu0 %8002
    %8004 = vrot.lane.b32.xlu0 %v6959, 80
    %v8005 = vpop.permute.xlu0 %8004
    %v8009 = vsel %vm487, %v7995, 0
    %v8012 = vsel %vm487, %v7997, 0
    %8014 = vmatprep.subr.mxu0 0.0
    %8015 = vmatpush1.msra.mxu0 %v8003
    %8016 = vmatprep.subr.mxu0 0.0
    %8017 = vmatpush1.msra.mxu0 %v8005
    %8018 = vmatprep.subr.mxu0 0.0
    %8019 = vmatpush1.msra.mxu0 0.0
    %8020 = vmatprep.subr.mxu0 0.0
    %8021 = vmatpush1.msra.mxu0 0.0
    %8022 = vmatprep.subr.mxu0 0.0
    %8023 = vmatpush1.msra.mxu0 0.0
    %8024 = vmatprep.subr.mxu0 0.0
    %8025 = vmatpush1.msra.mxu0 0.0
    %8026 = vmatprep.subr.mxu0 0.0
    %8027 = vmatpush1.msra.mxu0 0.0
    %8028 = vmatprep.subr.mxu0 0.0
    %8029 = vmatpush1.msra.mxu0 0.0
    %8030 = vmatprep.subr.mxu0 0.0
    %8031 = vmatpush1.msra.mxu0 0.0
    %8032 = vmatprep.subr.mxu0 0.0
    %8033 = vmatpush1.msra.mxu0 0.0
    %8034 = vmatprep.subr.mxu0 0.0
    %8035 = vmatpush1.msra.mxu0 0.0
    %8036 = vmatprep.subr.mxu0 0.0
    %8037 = vmatpush1.msra.mxu0 0.0
    %8038 = vmatprep.subr.mxu0 0.0
    %8039 = vmatpush1.msra.mxu0 0.0
    %8040 = vmatprep.subr.mxu0 0.0
    %8041 = vmatpush1.msra.mxu0 0.0
    %8042 = vmatprep.subr.mxu0 0.0
    %8043 = vmatpush1.msra.mxu0 0.0
    %8044 = vmatprep.subr.mxu0 0.0
    %8045 = vmatpush1.msra.mxu0 0.0
    %8046 = vmatprep.subr.mxu0 0.0
    %8047 = vmatpush1.msra.mxu0 0.0
    %8048 = vmatprep.subr.mxu0 0.0
    %8049 = vmatpush1.msra.mxu0 0.0
    %8050 = vmatprep.subr.mxu0 0.0
    %8051 = vmatpush1.msra.mxu0 0.0
    %8052 = vmatprep.subr.mxu0 0.0
    %8053 = vmatpush1.msra.mxu0 0.0
    %8054 = vmatprep.subr.mxu0 0.0
    %8055 = vmatpush1.msra.mxu0 0.0
    %8056 = vmatprep.subr.mxu0 0.0
    %8057 = vmatpush1.msra.mxu0 0.0
    %8058 = vmatprep.subr.mxu0 0.0
    %8059 = vmatpush1.msra.mxu0 0.0
    %8060 = vmatprep.subr.mxu0 0.0
    %8061 = vmatpush1.msra.mxu0 0.0
    %8062 = vmatprep.subr.mxu0 0.0
    %8063 = vmatpush1.msra.mxu0 0.0
    %8064 = vmatprep.subr.mxu0 0.0
    %8065 = vmatpush1.msra.mxu0 0.0
    %8066 = vmatprep.subr.mxu0 0.0
    %8067 = vmatpush1.msra.mxu0 0.0
    %8068 = vmatprep.subr.mxu0 0.0
    %8069 = vmatpush1.msra.mxu0 0.0
    %8070 = vmatprep.subr.mxu0 0.0
    %8071 = vmatpush1.msra.mxu0 0.0
    %8072 = vmatprep.subr.mxu0 0.0
    %8073 = vmatpush1.msra.mxu0 0.0
    %8074 = vmatprep.subr.mxu0 0.0
    %8075 = vmatpush1.msra.mxu0 0.0
    %8076 = vmatprep.subr.mxu0 0.0
    %8077 = vmatpush1.msra.mxu0 0.0
    %8078 = vmatprep.mubr.f32.mxu0 0.0
    %8079 = vmatmul.mubr.f32.gmra.mrb[0].mxu0 %v8009
    %v8080 = vpop.f32.mrb[0].mxu0
    %v8081 = vadd.f32 0.0, %v8080
    %v8082 = vpop.f32.mrb[0].mxu0
    %8083 = vmatprep.mubr.f32.mxu0 0.0
    %8084 = vmatmul.mubr.f32.gmra.mrb[0].mxu0 %v8012
    %v8085 = vpop.f32.mrb[0].mxu0
    %v8086 = vadd.f32 0.0, %v8085
    %v8087 = vpop.f32.mrb[0].mxu0
    %8088 = vdwg.mxu0
    %8089 = vrot.lane.b32.xlu0 %v6964, 80
    %v8090 = vpop.permute.xlu0 %8089
    %8091 = vrot.lane.b32.xlu0 %v6969, 80
    %v8092 = vpop.permute.xlu0 %8091
    %v8096 = vsel %vm487, %v7999, 0
    %v8099 = vsel %vm487, %v8001, 0
    %8101 = vmatprep.subr.mxu0 0.0
    %8102 = vmatpush1.msra.mxu0 %v8090
    %8103 = vmatprep.subr.mxu0 0.0
    %8104 = vmatpush1.msra.mxu0 %v8092
    %8105 = vmatprep.subr.mxu0 0.0
    %8106 = vmatpush1.msra.mxu0 0.0
    %8107 = vmatprep.subr.mxu0 0.0
    %8108 = vmatpush1.msra.mxu0 0.0
    %8109 = vmatprep.subr.mxu0 0.0
    %8110 = vmatpush1.msra.mxu0 0.0
    %8111 = vmatprep.subr.mxu0 0.0
    %8112 = vmatpush1.msra.mxu0 0.0
    %8113 = vmatprep.subr.mxu0 0.0
    %8114 = vmatpush1.msra.mxu0 0.0
    %8115 = vmatprep.subr.mxu0 0.0
    %8116 = vmatpush1.msra.mxu0 0.0
    %8117 = vmatprep.subr.mxu0 0.0
    %8118 = vmatpush1.msra.mxu0 0.0
    %8119 = vmatprep.subr.mxu0 0.0
    %8120 = vmatpush1.msra.mxu0 0.0
    %8121 = vmatprep.subr.mxu0 0.0
    %8122 = vmatpush1.msra.mxu0 0.0
    %8123 = vmatprep.subr.mxu0 0.0
    %8124 = vmatpush1.msra.mxu0 0.0
    %8125 = vmatprep.subr.mxu0 0.0
    %8126 = vmatpush1.msra.mxu0 0.0
    %8127 = vmatprep.subr.mxu0 0.0
    %8128 = vmatpush1.msra.mxu0 0.0
    %8129 = vmatprep.subr.mxu0 0.0
    %8130 = vmatpush1.msra.mxu0 0.0
    %8131 = vmatprep.subr.mxu0 0.0
    %8132 = vmatpush1.msra.mxu0 0.0
    %8133 = vmatprep.subr.mxu0 0.0
    %8134 = vmatpush1.msra.mxu0 0.0
    %8135 = vmatprep.subr.mxu0 0.0
    %8136 = vmatpush1.msra.mxu0 0.0
    %8137 = vmatprep.subr.mxu0 0.0
    %8138 = vmatpush1.msra.mxu0 0.0
    %8139 = vmatprep.subr.mxu0 0.0
    %8140 = vmatpush1.msra.mxu0 0.0
    %8141 = vmatprep.subr.mxu0 0.0
    %8142 = vmatpush1.msra.mxu0 0.0
    %8143 = vmatprep.subr.mxu0 0.0
    %8144 = vmatpush1.msra.mxu0 0.0
    %8145 = vmatprep.subr.mxu0 0.0
    %8146 = vmatpush1.msra.mxu0 0.0
    %8147 = vmatprep.subr.mxu0 0.0
    %8148 = vmatpush1.msra.mxu0 0.0
    %8149 = vmatprep.subr.mxu0 0.0
    %8150 = vmatpush1.msra.mxu0 0.0
    %8151 = vmatprep.subr.mxu0 0.0
    %8152 = vmatpush1.msra.mxu0 0.0
    %8153 = vmatprep.subr.mxu0 0.0
    %8154 = vmatpush1.msra.mxu0 0.0
    %8155 = vmatprep.subr.mxu0 0.0
    %8156 = vmatpush1.msra.mxu0 0.0
    %8157 = vmatprep.subr.mxu0 0.0
    %8158 = vmatpush1.msra.mxu0 0.0
    %8159 = vmatprep.subr.mxu0 0.0
    %8160 = vmatpush1.msra.mxu0 0.0
    %8161 = vmatprep.subr.mxu0 0.0
    %8162 = vmatpush1.msra.mxu0 0.0
    %8163 = vmatprep.subr.mxu0 0.0
    %8164 = vmatpush1.msra.mxu0 0.0
    %8165 = vmatprep.mubr.f32.mxu0 0.0
    %8166 = vmatmul.mubr.f32.gmra.mrb[0].mxu0 %v8096
    %v8167 = vpop.f32.mrb[0].mxu0
    %v8168 = vadd.f32 0.0, %v8167
    %v8169 = vpop.f32.mrb[0].mxu0
    %8170 = vmatprep.mubr.f32.mxu0 0.0
    %8171 = vmatmul.mubr.f32.gmra.mrb[0].mxu0 %v8099
    %v8172 = vpop.f32.mrb[0].mxu0
    %v8173 = vadd.f32 0.0, %v8172
    %v8174 = vpop.f32.mrb[0].mxu0
    %8175 = vdwg.mxu0
    %8176 = vrot.lane.b32.xlu0 %v6853, 104
    %v8177 = vpop.permute.xlu0 %8176
    %8178 = vrot.lane.b32.xlu0 %v6858, 104
    %v8179 = vpop.permute.xlu0 %8178
    %8180 = vrot.lane.b32.xlu0 %v6954, 104
    %v8181 = vpop.permute.xlu0 %8180
    %8182 = vrot.lane.b32.xlu0 %v6959, 104
    %v8183 = vpop.permute.xlu0 %8182
    %v8184 = vsel %vm310, %v8177, 0
    %v8186 = vsel %vm310, %v8179, 0
    %v8188 = vsel %vm310, %v8181, 0
    %v8190 = vsel %vm310, %v8183, 0
    %8192 = vmatprep.subr.mxu0 0.0
    %8193 = vmatpush1.xpose.msra.mxu0 %v8188
    %8194 = vmatprep.subr.mxu0 0.0
    %8195 = vmatpush1.xpose.msra.mxu0 %v8190
    %8196 = vmatprep.subr.mxu0 0.0
    %8197 = vmatpush1.xpose.msra.mxu0 0.0
    %8198 = vmatprep.subr.mxu0 0.0
    %8199 = vmatpush1.xpose.msra.mxu0 0.0
    %8200 = vmatprep.subr.mxu0 0.0
    %8201 = vmatpush1.xpose.msra.mxu0 0.0
    %8202 = vmatprep.subr.mxu0 0.0
    %8203 = vmatpush1.xpose.msra.mxu0 0.0
    %8204 = vmatprep.subr.mxu0 0.0
    %8205 = vmatpush1.xpose.msra.mxu0 0.0
    %8206 = vmatprep.subr.mxu0 0.0
    %8207 = vmatpush1.xpose.msra.mxu0 0.0
    %8208 = vmatprep.subr.mxu0 0.0
    %8209 = vmatpush1.xpose.msra.mxu0 0.0
    %8210 = vmatprep.subr.mxu0 0.0
    %8211 = vmatpush1.xpose.msra.mxu0 0.0
    %8212 = vmatprep.subr.mxu0 0.0
    %8213 = vmatpush1.xpose.msra.mxu0 0.0
    %8214 = vmatprep.subr.mxu0 0.0
    %8215 = vmatpush1.xpose.msra.mxu0 0.0
    %8216 = vmatprep.subr.mxu0 0.0
    %8217 = vmatpush1.xpose.msra.mxu0 0.0
    %8218 = vmatprep.subr.mxu0 0.0
    %8219 = vmatpush1.xpose.msra.mxu0 0.0
    %8220 = vmatprep.subr.mxu0 0.0
    %8221 = vmatpush1.xpose.msra.mxu0 0.0
    %8222 = vmatprep.subr.mxu0 0.0
    %8223 = vmatpush1.xpose.msra.mxu0 0.0
    %8224 = vmatprep.subr.mxu0 0.0
    %8225 = vmatpush1.xpose.msra.mxu0 0.0
    %8226 = vmatprep.subr.mxu0 0.0
    %8227 = vmatpush1.xpose.msra.mxu0 0.0
    %8228 = vmatprep.subr.mxu0 0.0
    %8229 = vmatpush1.xpose.msra.mxu0 0.0
    %8230 = vmatprep.subr.mxu0 0.0
    %8231 = vmatpush1.xpose.msra.mxu0 0.0
    %8232 = vmatprep.subr.mxu0 0.0
    %8233 = vmatpush1.xpose.msra.mxu0 0.0
    %8234 = vmatprep.subr.mxu0 0.0
    %8235 = vmatpush1.xpose.msra.mxu0 0.0
    %8236 = vmatprep.subr.mxu0 0.0
    %8237 = vmatpush1.xpose.msra.mxu0 0.0
    %8238 = vmatprep.subr.mxu0 0.0
    %8239 = vmatpush1.xpose.msra.mxu0 0.0
    %8240 = vmatprep.subr.mxu0 0.0
    %8241 = vmatpush1.xpose.msra.mxu0 0.0
    %8242 = vmatprep.subr.mxu0 0.0
    %8243 = vmatpush1.xpose.msra.mxu0 0.0
    %8244 = vmatprep.subr.mxu0 0.0
    %8245 = vmatpush1.xpose.msra.mxu0 0.0
    %8246 = vmatprep.subr.mxu0 0.0
    %8247 = vmatpush1.xpose.msra.mxu0 0.0
    %8248 = vmatprep.subr.mxu0 0.0
    %8249 = vmatpush1.xpose.msra.mxu0 0.0
    %8250 = vmatprep.subr.mxu0 0.0
    %8251 = vmatpush1.xpose.msra.mxu0 0.0
    %8252 = vmatprep.subr.mxu0 0.0
    %8253 = vmatpush1.xpose.msra.mxu0 0.0
    %8254 = vmatprep.subr.mxu0 0.0
    %8255 = vmatpush1.xpose.msra.mxu0 0.0
    %8256 = vmatprep.mubr.f32.mxu0 0.0
    %8257 = vmatmul.mubr.f32.gmra.mrb[0].mxu0 %v8184
    %v8258 = vpop.f32.mrb[0].mxu0
    %v8259 = vadd.f32 0.0, %v8258
    %v8260 = vpop.f32.mrb[0].mxu0
    %8261 = vmatprep.mubr.f32.mxu0 0.0
    %8262 = vmatmul.mubr.f32.gmra.mrb[0].mxu0 %v8186
    %v8263 = vpop.f32.mrb[0].mxu0
    %v8264 = vadd.f32 0.0, %v8263
    %v8265 = vpop.f32.mrb[0].mxu0
    %8266 = vdwg.mxu0
    %8267 = vrot.lane.b32.xlu0 %v6863, 104
    %v8268 = vpop.permute.xlu0 %8267
    %8269 = vrot.lane.b32.xlu0 %v6868, 104
    %v8270 = vpop.permute.xlu0 %8269
    %8271 = vrot.lane.b32.xlu0 %v6964, 104
    %v8272 = vpop.permute.xlu0 %8271
    %8273 = vrot.lane.b32.xlu0 %v6969, 104
    %v8274 = vpop.permute.xlu0 %8273
    %v8275 = vsel %vm310, %v8268, 0
    %v8277 = vsel %vm310, %v8270, 0
    %v8279 = vsel %vm310, %v8272, 0
    %v8281 = vsel %vm310, %v8274, 0
    %8283 = vmatprep.subr.mxu0 0.0
    %8284 = vmatpush1.xpose.msra.mxu0 %v8279
    %8285 = vmatprep.subr.mxu0 0.0
    %8286 = vmatpush1.xpose.msra.mxu0 %v8281
    %8287 = vmatprep.subr.mxu0 0.0
    %8288 = vmatpush1.xpose.msra.mxu0 0.0
    %8289 = vmatprep.subr.mxu0 0.0
    %8290 = vmatpush1.xpose.msra.mxu0 0.0
    %8291 = vmatprep.subr.mxu0 0.0
    %8292 = vmatpush1.xpose.msra.mxu0 0.0
    %8293 = vmatprep.subr.mxu0 0.0
    %8294 = vmatpush1.xpose.msra.mxu0 0.0
    %8295 = vmatprep.subr.mxu0 0.0
    %8296 = vmatpush1.xpose.msra.mxu0 0.0
    %8297 = vmatprep.subr.mxu0 0.0
    %8298 = vmatpush1.xpose.msra.mxu0 0.0
    %8299 = vmatprep.subr.mxu0 0.0
    %8300 = vmatpush1.xpose.msra.mxu0 0.0
    %8301 = vmatprep.subr.mxu0 0.0
    %8302 = vmatpush1.xpose.msra.mxu0 0.0
    %8303 = vmatprep.subr.mxu0 0.0
    %8304 = vmatpush1.xpose.msra.mxu0 0.0
    %8305 = vmatprep.subr.mxu0 0.0
    %8306 = vmatpush1.xpose.msra.mxu0 0.0
    %8307 = vmatprep.subr.mxu0 0.0
    %8308 = vmatpush1.xpose.msra.mxu0 0.0
    %8309 = vmatprep.subr.mxu0 0.0
    %8310 = vmatpush1.xpose.msra.mxu0 0.0
    %8311 = vmatprep.subr.mxu0 0.0
    %8312 = vmatpush1.xpose.msra.mxu0 0.0
    %8313 = vmatprep.subr.mxu0 0.0
    %8314 = vmatpush1.xpose.msra.mxu0 0.0
    %8315 = vmatprep.subr.mxu0 0.0
    %8316 = vmatpush1.xpose.msra.mxu0 0.0
    %8317 = vmatprep.subr.mxu0 0.0
    %8318 = vmatpush1.xpose.msra.mxu0 0.0
    %8319 = vmatprep.subr.mxu0 0.0
    %8320 = vmatpush1.xpose.msra.mxu0 0.0
    %8321 = vmatprep.subr.mxu0 0.0
    %8322 = vmatpush1.xpose.msra.mxu0 0.0
    %8323 = vmatprep.subr.mxu0 0.0
    %8324 = vmatpush1.xpose.msra.mxu0 0.0
    %8325 = vmatprep.subr.mxu0 0.0
    %8326 = vmatpush1.xpose.msra.mxu0 0.0
    %8327 = vmatprep.subr.mxu0 0.0
    %8328 = vmatpush1.xpose.msra.mxu0 0.0
    %8329 = vmatprep.subr.mxu0 0.0
    %8330 = vmatpush1.xpose.msra.mxu0 0.0
    %8331 = vmatprep.subr.mxu0 0.0
    %8332 = vmatpush1.xpose.msra.mxu0 0.0
    %8333 = vmatprep.subr.mxu0 0.0
    %8334 = vmatpush1.xpose.msra.mxu0 0.0
    %8335 = vmatprep.subr.mxu0 0.0
    %8336 = vmatpush1.xpose.msra.mxu0 0.0
    %8337 = vmatprep.subr.mxu0 0.0
    %8338 = vmatpush1.xpose.msra.mxu0 0.0
    %8339 = vmatprep.subr.mxu0 0.0
    %8340 = vmatpush1.xpose.msra.mxu0 0.0
    %8341 = vmatprep.subr.mxu0 0.0
    %8342 = vmatpush1.xpose.msra.mxu0 0.0
    %8343 = vmatprep.subr.mxu0 0.0
    %8344 = vmatpush1.xpose.msra.mxu0 0.0
    %8345 = vmatprep.subr.mxu0 0.0
    %8346 = vmatpush1.xpose.msra.mxu0 0.0
    %8347 = vmatprep.mubr.f32.mxu0 0.0
    %8348 = vmatmul.mubr.f32.gmra.mrb[0].mxu0 %v8275
    %v8349 = vpop.f32.mrb[0].mxu0
    %v8350 = vadd.f32 0.0, %v8349
    %v8351 = vpop.f32.mrb[0].mxu0
    %8352 = vmatprep.mubr.f32.mxu0 0.0
    %8353 = vmatmul.mubr.f32.gmra.mrb[0].mxu0 %v8277
    %v8354 = vpop.f32.mrb[0].mxu0
    %v8355 = vadd.f32 0.0, %v8354
    %v8356 = vpop.f32.mrb[0].mxu0
    %8357 = vdwg.mxu0
    %v8358 = vmul.f32 %v8259, 0.35355338
    %v8359 = vmul.f32 %v8264, 0.35355338
    %v8360 = vmul.f32 %v8350, 0.35355338
    %v8361 = vmul.f32 %v8355, 0.35355338
    %v8362 = vsel %vm487, %v8358, -inf
    %8363 = vmax.xlane.f32.xlu0 %v8362
    %v8364 = vpop.xlane.xlu0 %8363
    %v8365 = vsel %vm487, %v8359, -inf
    %8366 = vmax.xlane.f32.xlu0 %v8365
    %v8367 = vpop.xlane.xlu0 %8366
    %v8368 = vsel %vm487, %v8360, -inf
    %8369 = vmax.xlane.f32.xlu0 %v8368
    %v8370 = vpop.xlane.xlu0 %8369
    %v8371 = vsel %vm487, %v8361, -inf
    %8372 = vmax.xlane.f32.xlu0 %v8371
    %v8373 = vpop.xlane.xlu0 %8372
    %v8374 = vsub.f32 %v8358, %v8364
    %v8375 = vsub.f32 %v8359, %v8367
    %v8376 = vsub.f32 %v8360, %v8370
    %v8377 = vsub.f32 %v8361, %v8373
    %v8378 = vmul.f32 %v8374, 1.442695
    %v8379 = vpow.pop %v8378
    %v8380 = vmul.f32 %v8375, 1.442695
    %v8381 = vpow.pop %v8380
    %v8382 = vmul.f32 %v8376, 1.442695
    %v8383 = vpow.pop %v8382
    %v8384 = vmul.f32 %v8377, 1.442695
    %v8385 = vpow.pop %v8384
    %v8386 = vsel %vm487, %v8379, 0.0
    %8387 = vadd.xlane.f32.xlu0 %v8386
    %v8388 = vpop.xlane.xlu0 %8387
    %v8389 = vsel %vm487, %v8381, 0.0
    %8390 = vadd.xlane.f32.xlu0 %v8389
    %v8391 = vpop.xlane.xlu0 %8390
    %v8392 = vsel %vm487, %v8383, 0.0
    %8393 = vadd.xlane.f32.xlu0 %v8392
    %v8394 = vpop.xlane.xlu0 %8393
    %v8395 = vsel %vm487, %v8385, 0.0
    %8396 = vadd.xlane.f32.xlu0 %v8395
    %v8397 = vpop.xlane.xlu0 %8396
    %v8398 = vrcp.pop %v8388
    %v8399 = vmul.f32 %v8379, %v8398
    %v8400 = vrcp.pop %v8391
    %v8401 = vmul.f32 %v8381, %v8400
    %v8402 = vrcp.pop %v8394
    %v8403 = vmul.f32 %v8383, %v8402
    %v8404 = vrcp.pop %v8397
    %v8405 = vmul.f32 %v8385, %v8404
    %8406 = vrot.lane.b32.xlu0 %v6954, 72
    %v8407 = vpop.permute.xlu0 %8406
    %8408 = vrot.lane.b32.xlu0 %v6959, 72
    %v8409 = vpop.permute.xlu0 %8408
    %v8413 = vsel %vm487, %v8399, 0
    %v8416 = vsel %vm487, %v8401, 0
    %8418 = vmatprep.subr.mxu0 0.0
    %8419 = vmatpush1.msra.mxu0 %v8407
    %8420 = vmatprep.subr.mxu0 0.0
    %8421 = vmatpush1.msra.mxu0 %v8409
    %8422 = vmatprep.subr.mxu0 0.0
    %8423 = vmatpush1.msra.mxu0 0.0
    %8424 = vmatprep.subr.mxu0 0.0
    %8425 = vmatpush1.msra.mxu0 0.0
    %8426 = vmatprep.subr.mxu0 0.0
    %8427 = vmatpush1.msra.mxu0 0.0
    %8428 = vmatprep.subr.mxu0 0.0
    %8429 = vmatpush1.msra.mxu0 0.0
    %8430 = vmatprep.subr.mxu0 0.0
    %8431 = vmatpush1.msra.mxu0 0.0
    %8432 = vmatprep.subr.mxu0 0.0
    %8433 = vmatpush1.msra.mxu0 0.0
    %8434 = vmatprep.subr.mxu0 0.0
    %8435 = vmatpush1.msra.mxu0 0.0
    %8436 = vmatprep.subr.mxu0 0.0
    %8437 = vmatpush1.msra.mxu0 0.0
    %8438 = vmatprep.subr.mxu0 0.0
    %8439 = vmatpush1.msra.mxu0 0.0
    %8440 = vmatprep.subr.mxu0 0.0
    %8441 = vmatpush1.msra.mxu0 0.0
    %8442 = vmatprep.subr.mxu0 0.0
    %8443 = vmatpush1.msra.mxu0 0.0
    %8444 = vmatprep.subr.mxu0 0.0
    %8445 = vmatpush1.msra.mxu0 0.0
    %8446 = vmatprep.subr.mxu0 0.0
    %8447 = vmatpush1.msra.mxu0 0.0
    %8448 = vmatprep.subr.mxu0 0.0
    %8449 = vmatpush1.msra.mxu0 0.0
    %8450 = vmatprep.subr.mxu0 0.0
    %8451 = vmatpush1.msra.mxu0 0.0
    %8452 = vmatprep.subr.mxu0 0.0
    %8453 = vmatpush1.msra.mxu0 0.0
    %8454 = vmatprep.subr.mxu0 0.0
    %8455 = vmatpush1.msra.mxu0 0.0
    %8456 = vmatprep.subr.mxu0 0.0
    %8457 = vmatpush1.msra.mxu0 0.0
    %8458 = vmatprep.subr.mxu0 0.0
    %8459 = vmatpush1.msra.mxu0 0.0
    %8460 = vmatprep.subr.mxu0 0.0
    %8461 = vmatpush1.msra.mxu0 0.0
    %8462 = vmatprep.subr.mxu0 0.0
    %8463 = vmatpush1.msra.mxu0 0.0
    %8464 = vmatprep.subr.mxu0 0.0
    %8465 = vmatpush1.msra.mxu0 0.0
    %8466 = vmatprep.subr.mxu0 0.0
    %8467 = vmatpush1.msra.mxu0 0.0
    %8468 = vmatprep.subr.mxu0 0.0
    %8469 = vmatpush1.msra.mxu0 0.0
    %8470 = vmatprep.subr.mxu0 0.0
    %8471 = vmatpush1.msra.mxu0 0.0
    %8472 = vmatprep.subr.mxu0 0.0
    %8473 = vmatpush1.msra.mxu0 0.0
    %8474 = vmatprep.subr.mxu0 0.0
    %8475 = vmatpush1.msra.mxu0 0.0
    %8476 = vmatprep.subr.mxu0 0.0
    %8477 = vmatpush1.msra.mxu0 0.0
    %8478 = vmatprep.subr.mxu0 0.0
    %8479 = vmatpush1.msra.mxu0 0.0
    %8480 = vmatprep.subr.mxu0 0.0
    %8481 = vmatpush1.msra.mxu0 0.0
    %8482 = vmatprep.mubr.f32.mxu0 0.0
    %8483 = vmatmul.mubr.f32.gmra.mrb[0].mxu0 %v8413
    %v8484 = vpop.f32.mrb[0].mxu0
    %v8485 = vadd.f32 0.0, %v8484
    %v8486 = vpop.f32.mrb[0].mxu0
    %8487 = vmatprep.mubr.f32.mxu0 0.0
    %8488 = vmatmul.mubr.f32.gmra.mrb[0].mxu0 %v8416
    %v8489 = vpop.f32.mrb[0].mxu0
    %v8490 = vadd.f32 0.0, %v8489
    %v8491 = vpop.f32.mrb[0].mxu0
    %8492 = vdwg.mxu0
    %8493 = vrot.lane.b32.xlu0 %v6964, 72
    %v8494 = vpop.permute.xlu0 %8493
    %8495 = vrot.lane.b32.xlu0 %v6969, 72
    %v8496 = vpop.permute.xlu0 %8495
    %v8500 = vsel %vm487, %v8403, 0
    %v8503 = vsel %vm487, %v8405, 0
    %8505 = vmatprep.subr.mxu0 0.0
    %8506 = vmatpush1.msra.mxu0 %v8494
    %8507 = vmatprep.subr.mxu0 0.0
    %8508 = vmatpush1.msra.mxu0 %v8496
    %8509 = vmatprep.subr.mxu0 0.0
    %8510 = vmatpush1.msra.mxu0 0.0
    %8511 = vmatprep.subr.mxu0 0.0
    %8512 = vmatpush1.msra.mxu0 0.0
    %8513 = vmatprep.subr.mxu0 0.0
    %8514 = vmatpush1.msra.mxu0 0.0
    %8515 = vmatprep.subr.mxu0 0.0
    %8516 = vmatpush1.msra.mxu0 0.0
    %8517 = vmatprep.subr.mxu0 0.0
    %8518 = vmatpush1.msra.mxu0 0.0
    %8519 = vmatprep.subr.mxu0 0.0
    %8520 = vmatpush1.msra.mxu0 0.0
    %8521 = vmatprep.subr.mxu0 0.0
    %8522 = vmatpush1.msra.mxu0 0.0
    %8523 = vmatprep.subr.mxu0 0.0
    %8524 = vmatpush1.msra.mxu0 0.0
    %8525 = vmatprep.subr.mxu0 0.0
    %8526 = vmatpush1.msra.mxu0 0.0
    %8527 = vmatprep.subr.mxu0 0.0
    %8528 = vmatpush1.msra.mxu0 0.0
    %8529 = vmatprep.subr.mxu0 0.0
    %8530 = vmatpush1.msra.mxu0 0.0
    %8531 = vmatprep.subr.mxu0 0.0
    %8532 = vmatpush1.msra.mxu0 0.0
    %8533 = vmatprep.subr.mxu0 0.0
    %8534 = vmatpush1.msra.mxu0 0.0
    %8535 = vmatprep.subr.mxu0 0.0
    %8536 = vmatpush1.msra.mxu0 0.0
    %8537 = vmatprep.subr.mxu0 0.0
    %8538 = vmatpush1.msra.mxu0 0.0
    %8539 = vmatprep.subr.mxu0 0.0
    %8540 = vmatpush1.msra.mxu0 0.0
    %8541 = vmatprep.subr.mxu0 0.0
    %8542 = vmatpush1.msra.mxu0 0.0
    %8543 = vmatprep.subr.mxu0 0.0
    %8544 = vmatpush1.msra.mxu0 0.0
    %8545 = vmatprep.subr.mxu0 0.0
    %8546 = vmatpush1.msra.mxu0 0.0
    %8547 = vmatprep.subr.mxu0 0.0
    %8548 = vmatpush1.msra.mxu0 0.0
    %8549 = vmatprep.subr.mxu0 0.0
    %8550 = vmatpush1.msra.mxu0 0.0
    %8551 = vmatprep.subr.mxu0 0.0
    %8552 = vmatpush1.msra.mxu0 0.0
    %8553 = vmatprep.subr.mxu0 0.0
    %8554 = vmatpush1.msra.mxu0 0.0
    %8555 = vmatprep.subr.mxu0 0.0
    %8556 = vmatpush1.msra.mxu0 0.0
    %8557 = vmatprep.subr.mxu0 0.0
    %8558 = vmatpush1.msra.mxu0 0.0
    %8559 = vmatprep.subr.mxu0 0.0
    %8560 = vmatpush1.msra.mxu0 0.0
    %8561 = vmatprep.subr.mxu0 0.0
    %8562 = vmatpush1.msra.mxu0 0.0
    %8563 = vmatprep.subr.mxu0 0.0
    %8564 = vmatpush1.msra.mxu0 0.0
    %8565 = vmatprep.subr.mxu0 0.0
    %8566 = vmatpush1.msra.mxu0 0.0
    %8567 = vmatprep.subr.mxu0 0.0
    %8568 = vmatpush1.msra.mxu0 0.0
    %8569 = vmatprep.mubr.f32.mxu0 0.0
    %8570 = vmatmul.mubr.f32.gmra.mrb[0].mxu0 %v8500
    %v8571 = vpop.f32.mrb[0].mxu0
    %v8572 = vadd.f32 0.0, %v8571
    %v8573 = vpop.f32.mrb[0].mxu0
    %8574 = vmatprep.mubr.f32.mxu0 0.0
    %8575 = vmatmul.mubr.f32.gmra.mrb[0].mxu0 %v8503
    %v8576 = vpop.f32.mrb[0].mxu0
    %v8577 = vadd.f32 0.0, %v8576
    %v8578 = vpop.f32.mrb[0].mxu0
    %8579 = vdwg.mxu0
    %8584 = vrot.lane.b32.xlu0 %v7677, 8
    %v8585 = vpop.permute.xlu0 %8584
    %8586 = vrot.lane.b32.xlu0 %v7682, 8
    %v8587 = vpop.permute.xlu0 %8586
    %8588 = vrot.lane.b32.xlu0 %v7764, 8
    %v8589 = vpop.permute.xlu0 %8588
    %8590 = vrot.lane.b32.xlu0 %v7769, 8
    %v8591 = vpop.permute.xlu0 %8590
    %8600 = vrot.lane.b32.xlu0 %v8081, 16
    %v8601 = vpop.permute.xlu0 %8600
    %8602 = vrot.lane.b32.xlu0 %v8086, 16
    %v8603 = vpop.permute.xlu0 %8602
    %8604 = vrot.lane.b32.xlu0 %v8168, 16
    %v8605 = vpop.permute.xlu0 %8604
    %8606 = vrot.lane.b32.xlu0 %v8173, 16
    %v8607 = vpop.permute.xlu0 %8606
    %8616 = vrot.lane.b32.xlu0 %v8485, 24
    %v8617 = vpop.permute.xlu0 %8616
    %8618 = vrot.lane.b32.xlu0 %v8490, 24
    %v8619 = vpop.permute.xlu0 %8618
    %8620 = vrot.lane.b32.xlu0 %v8572, 24
    %v8621 = vpop.permute.xlu0 %8620
    %8622 = vrot.lane.b32.xlu0 %v8577, 24
    %v8623 = vpop.permute.xlu0 %8622
    %v8628 = vsel %vm310, %v7273, %v8585
    %v8629 = vsel %vm310, %v7278, %v8587
    %v8630 = vsel %vm310, %v7360, %v8589
    %v8631 = vsel %vm310, %v7365, %v8591
    %v8632 = vsel %vm487, %v8628, %v8601
    %v8633 = vsel %vm487, %v8629, %v8603
    %v8634 = vsel %vm487, %v8630, %v8605
    %v8635 = vsel %vm487, %v8631, %v8607
    %v8636 = vsel %vm1974, %v8632, %v8617
    %v8637 = vsel %vm1974, %v8633, %v8619
    %v8638 = vsel %vm1974, %v8634, %v8621
    %v8639 = vsel %vm1974, %v8635, %v8623
    %v8640 = vlaneseq
    %v8641 = vshrl.u32 %v8640, 7
    %v8642 = vsub.s32 0, %v8641
    %v8643 = vrot.slane %v4778, %v8642
    %v8645 = vsel %vm45, %v8636, 0
    %v8648 = vsel %vm45, %v8637, 0
    %v8651 = vsel %vm45, %v8638, 0
    %v8654 = vsel %vm45, %v8639, 0
    %8656 = vmatprep.subr.mxu0 0.0
    %8657 = vmatpush1.msra.mxu0 %v4774
    %8658 = vmatprep.subr.mxu0 0.0
    %8659 = vmatpush1.msra.mxu0 %v4775
    %8660 = vmatprep.subr.mxu0 0.0
    %8661 = vmatpush1.msra.mxu0 %v4776
    %8662 = vmatprep.subr.mxu0 0.0
    %8663 = vmatpush1.msra.mxu0 %v4777
    %8664 = vmatprep.subr.mxu0 0.0
    %8665 = vmatpush1.msra.mxu0 0.0
    %8666 = vmatprep.subr.mxu0 0.0
    %8667 = vmatpush1.msra.mxu0 0.0
    %8668 = vmatprep.subr.mxu0 0.0
    %8669 = vmatpush1.msra.mxu0 0.0
    %8670 = vmatprep.subr.mxu0 0.0
    %8671 = vmatpush1.msra.mxu0 0.0
    %8672 = vmatprep.subr.mxu0 0.0
    %8673 = vmatpush1.msra.mxu0 0.0
    %8674 = vmatprep.subr.mxu0 0.0
    %8675 = vmatpush1.msra.mxu0 0.0
    %8676 = vmatprep.subr.mxu0 0.0
    %8677 = vmatpush1.msra.mxu0 0.0
    %8678 = vmatprep.subr.mxu0 0.0
    %8679 = vmatpush1.msra.mxu0 0.0
    %8680 = vmatprep.subr.mxu0 0.0
    %8681 = vmatpush1.msra.mxu0 0.0
    %8682 = vmatprep.subr.mxu0 0.0
    %8683 = vmatpush1.msra.mxu0 0.0
    %8684 = vmatprep.subr.mxu0 0.0
    %8685 = vmatpush1.msra.mxu0 0.0
    %8686 = vmatprep.subr.mxu0 0.0
    %8687 = vmatpush1.msra.mxu0 0.0
    %8688 = vmatprep.subr.mxu0 0.0
    %8689 = vmatpush1.msra.mxu0 0.0
    %8690 = vmatprep.subr.mxu0 0.0
    %8691 = vmatpush1.msra.mxu0 0.0
    %8692 = vmatprep.subr.mxu0 0.0
    %8693 = vmatpush1.msra.mxu0 0.0
    %8694 = vmatprep.subr.mxu0 0.0
    %8695 = vmatpush1.msra.mxu0 0.0
    %8696 = vmatprep.subr.mxu0 0.0
    %8697 = vmatpush1.msra.mxu0 0.0
    %8698 = vmatprep.subr.mxu0 0.0
    %8699 = vmatpush1.msra.mxu0 0.0
    %8700 = vmatprep.subr.mxu0 0.0
    %8701 = vmatpush1.msra.mxu0 0.0
    %8702 = vmatprep.subr.mxu0 0.0
    %8703 = vmatpush1.msra.mxu0 0.0
    %8704 = vmatprep.subr.mxu0 0.0
    %8705 = vmatpush1.msra.mxu0 0.0
    %8706 = vmatprep.subr.mxu0 0.0
    %8707 = vmatpush1.msra.mxu0 0.0
    %8708 = vmatprep.subr.mxu0 0.0
    %8709 = vmatpush1.msra.mxu0 0.0
    %8710 = vmatprep.subr.mxu0 0.0
    %8711 = vmatpush1.msra.mxu0 0.0
    %8712 = vmatprep.subr.mxu0 0.0
    %8713 = vmatpush1.msra.mxu0 0.0
    %8714 = vmatprep.subr.mxu0 0.0
    %8715 = vmatpush1.msra.mxu0 0.0
    %8716 = vmatprep.subr.mxu0 0.0
    %8717 = vmatpush1.msra.mxu0 0.0
    %8718 = vmatprep.subr.mxu0 0.0
    %8719 = vmatpush1.msra.mxu0 0.0
    %8720 = vmatprep.mubr.f32.mxu0 0.0
    %8721 = vmatmul.mubr.f32.gmra.mrb[0].mxu0 %v8645
    %v8722 = vpop.f32.mrb[0].mxu0
    %v8723 = vadd.f32 %v8643, %v8722
    %v8724 = vpop.f32.mrb[0].mxu0
    %8725 = vmatprep.mubr.f32.mxu0 0.0
    %8726 = vmatmul.mubr.f32.gmra.mrb[0].mxu0 %v8648
    %v8727 = vpop.f32.mrb[0].mxu0
    %v8728 = vadd.f32 %v8643, %v8727
    %v8729 = vpop.f32.mrb[0].mxu0
    %8730 = vmatprep.mubr.f32.mxu0 0.0
    %8731 = vmatmul.mubr.f32.gmra.mrb[0].mxu0 %v8651
    %v8732 = vpop.f32.mrb[0].mxu0
    %v8733 = vadd.f32 %v8643, %v8732
    %v8734 = vpop.f32.mrb[0].mxu0
    %8735 = vmatprep.mubr.f32.mxu0 0.0
    %8736 = vmatmul.mubr.f32.gmra.mrb[0].mxu0 %v8654
    %v8737 = vpop.f32.mrb[0].mxu0
    %v8738 = vadd.f32 %v8643, %v8737
    %v8739 = vpop.f32.mrb[0].mxu0
    %8740 = vdwg.mxu0
    %v8741 = vadd.f32 %v6766, %v8723
    %v8742 = vadd.f32 %v6767, %v8728
    %v8743 = vadd.f32 %v6768, %v8733
    %v8744 = vadd.f32 %v6769, %v8738
    %v8745 = vsel %vm45, %v8741, 0.0
    %8746 = vadd.xlane.f32.xlu0 %v8745
    %v8747 = vpop.xlane.xlu0 %8746
    %v8748 = vsel %vm45, %v8742, 0.0
    %8749 = vadd.xlane.f32.xlu0 %v8748
    %v8750 = vpop.xlane.xlu0 %8749
    %v8751 = vsel %vm45, %v8743, 0.0
    %8752 = vadd.xlane.f32.xlu0 %v8751
    %v8753 = vpop.xlane.xlu0 %8752
    %v8754 = vsel %vm45, %v8744, 0.0
    %8755 = vadd.xlane.f32.xlu0 %v8754
    %v8756 = vpop.xlane.xlu0 %8755
    %v8757 = vmul.f32 %v8747, %v2096
    %v8758 = vmul.f32 %v8750, %v2096
    %v8759 = vmul.f32 %v8753, %v2096
    %v8760 = vmul.f32 %v8756, %v2096
    %v8761 = vsub.f32 %v8741, %v8757
    %v8762 = vsub.f32 %v8742, %v8758
    %v8763 = vsub.f32 %v8743, %v8759
    %v8764 = vsub.f32 %v8744, %v8760
    %v8765 = vmul.f32 %v8761, %v8761
    %v8766 = vmul.f32 %v8762, %v8762
    %v8767 = vmul.f32 %v8763, %v8763
    %v8768 = vmul.f32 %v8764, %v8764
    %v8769 = vsel %vm45, %v8765, 0.0
    %8770 = vadd.xlane.f32.xlu0 %v8769
    %v8771 = vpop.xlane.xlu0 %8770
    %v8772 = vsel %vm45, %v8766, 0.0
    %8773 = vadd.xlane.f32.xlu0 %v8772
    %v8774 = vpop.xlane.xlu0 %8773
    %v8775 = vsel %vm45, %v8767, 0.0
    %8776 = vadd.xlane.f32.xlu0 %v8775
    %v8777 = vpop.xlane.xlu0 %8776
    %v8778 = vsel %vm45, %v8768, 0.0
    %8779 = vadd.xlane.f32.xlu0 %v8778
    %v8780 = vpop.xlane.xlu0 %8779
    %v8781 = vmul.f32 %v8771, %v2096
    %v8782 = vmul.f32 %v8774, %v2096
    %v8783 = vmul.f32 %v8777, %v2096
    %v8784 = vmul.f32 %v8780, %v2096
    %v8785 = vadd.f32 %v8781, 1e-05
    %v8786 = vadd.f32 %v8782, 1e-05
    %v8787 = vadd.f32 %v8783, 1e-05
    %v8788 = vadd.f32 %v8784, 1e-05
    %v8789 = vrsqrt.pop %v8785
    %v8790 = vrsqrt.pop %v8786
    %v8791 = vrsqrt.pop %v8787
    %v8792 = vrsqrt.pop %v8788
    %v8793 = vmul.f32 %v8761, %v8789
    %v8794 = vmul.f32 %v8762, %v8790
    %v8795 = vmul.f32 %v8763, %v8791
    %v8796 = vmul.f32 %v8764, %v8792
    %v8797 = vlaneseq
    %v8798 = vshrl.u32 %v8797, 7
    %v8799 = vsub.s32 0, %v8798
    %v8800 = vrot.slane %v4795, %v8799
    %v8801 = vmul.f32 %v8793, %v8800
    %v8802 = vmul.f32 %v8794, %v8800
    %v8803 = vmul.f32 %v8795, %v8800
    %v8804 = vmul.f32 %v8796, %v8800
    %v8805 = vlaneseq
    %v8806 = vshrl.u32 %v8805, 7
    %v8807 = vsub.s32 0, %v8806
    %v8808 = vrot.slane %v4796, %v8807
    %v8809 = vadd.f32 %v8801, %v8808
    %v8810 = vadd.f32 %v8802, %v8808
    %v8811 = vadd.f32 %v8803, %v8808
    %v8812 = vadd.f32 %v8804, %v8808
    %v8813 = vlaneseq
    %v8814 = vshrl.u32 %v8813, 7
    %v8815 = vsub.s32 0, %v8814
    %v8816 = vrot.slane %v4783, %v8815
    %v8818 = vsel %vm45, %v8809, 0
    %v8821 = vsel %vm45, %v8810, 0
    %v8824 = vsel %vm45, %v8811, 0
    %v8827 = vsel %vm45, %v8812, 0
    %8829 = vmatprep.subr.mxu0 0.0
    %8830 = vmatpush1.msra.mxu0 %v4779
    %8831 = vmatprep.subr.mxu0 0.0
    %8832 = vmatpush1.msra.mxu0 %v4780
    %8833 = vmatprep.subr.mxu0 0.0
    %8834 = vmatpush1.msra.mxu0 %v4781
    %8835 = vmatprep.subr.mxu0 0.0
    %8836 = vmatpush1.msra.mxu0 %v4782
    %8837 = vmatprep.subr.mxu0 0.0
    %8838 = vmatpush1.msra.mxu0 0.0
    %8839 = vmatprep.subr.mxu0 0.0
    %8840 = vmatpush1.msra.mxu0 0.0
    %8841 = vmatprep.subr.mxu0 0.0
    %8842 = vmatpush1.msra.mxu0 0.0
    %8843 = vmatprep.subr.mxu0 0.0
    %8844 = vmatpush1.msra.mxu0 0.0
    %8845 = vmatprep.subr.mxu0 0.0
    %8846 = vmatpush1.msra.mxu0 0.0
    %8847 = vmatprep.subr.mxu0 0.0
    %8848 = vmatpush1.msra.mxu0 0.0
    %8849 = vmatprep.subr.mxu0 0.0
    %8850 = vmatpush1.msra.mxu0 0.0
    %8851 = vmatprep.subr.mxu0 0.0
    %8852 = vmatpush1.msra.mxu0 0.0
    %8853 = vmatprep.subr.mxu0 0.0
    %8854 = vmatpush1.msra.mxu0 0.0
    %8855 = vmatprep.subr.mxu0 0.0
    %8856 = vmatpush1.msra.mxu0 0.0
    %8857 = vmatprep.subr.mxu0 0.0
    %8858 = vmatpush1.msra.mxu0 0.0
    %8859 = vmatprep.subr.mxu0 0.0
    %8860 = vmatpush1.msra.mxu0 0.0
    %8861 = vmatprep.subr.mxu0 0.0
    %8862 = vmatpush1.msra.mxu0 0.0
    %8863 = vmatprep.subr.mxu0 0.0
    %8864 = vmatpush1.msra.mxu0 0.0
    %8865 = vmatprep.subr.mxu0 0.0
    %8866 = vmatpush1.msra.mxu0 0.0
    %8867 = vmatprep.subr.mxu0 0.0
    %8868 = vmatpush1.msra.mxu0 0.0
    %8869 = vmatprep.subr.mxu0 0.0
    %8870 = vmatpush1.msra.mxu0 0.0
    %8871 = vmatprep.subr.mxu0 0.0
    %8872 = vmatpush1.msra.mxu0 0.0
    %8873 = vmatprep.subr.mxu0 0.0
    %8874 = vmatpush1.msra.mxu0 0.0
    %8875 = vmatprep.subr.mxu0 0.0
    %8876 = vmatpush1.msra.mxu0 0.0
    %8877 = vmatprep.subr.mxu0 0.0
    %8878 = vmatpush1.msra.mxu0 0.0
    %8879 = vmatprep.subr.mxu0 0.0
    %8880 = vmatpush1.msra.mxu0 0.0
    %8881 = vmatprep.subr.mxu0 0.0
    %8882 = vmatpush1.msra.mxu0 0.0
    %8883 = vmatprep.subr.mxu0 0.0
    %8884 = vmatpush1.msra.mxu0 0.0
    %8885 = vmatprep.subr.mxu0 0.0
    %8886 = vmatpush1.msra.mxu0 0.0
    %8887 = vmatprep.subr.mxu0 0.0
    %8888 = vmatpush1.msra.mxu0 0.0
    %8889 = vmatprep.subr.mxu0 0.0
    %8890 = vmatpush1.msra.mxu0 0.0
    %8891 = vmatprep.subr.mxu0 0.0
    %8892 = vmatpush1.msra.mxu0 0.0
    %8893 = vmatprep.mubr.f32.mxu0 0.0
    %8894 = vmatmul.mubr.f32.gmra.mrb[0].mxu0 %v8818
    %v8895 = vpop.f32.mrb[0].mxu0
    %v8896 = vadd.f32 %v8816, %v8895
    %v8897 = vpop.f32.mrb[0].mxu0
    %8898 = vmatprep.mubr.f32.mxu0 0.0
    %8899 = vmatmul.mubr.f32.gmra.mrb[0].mxu0 %v8821
    %v8900 = vpop.f32.mrb[0].mxu0
    %v8901 = vadd.f32 %v8816, %v8900
    %v8902 = vpop.f32.mrb[0].mxu0
    %8903 = vmatprep.mubr.f32.mxu0 0.0
    %8904 = vmatmul.mubr.f32.gmra.mrb[0].mxu0 %v8824
    %v8905 = vpop.f32.mrb[0].mxu0
    %v8906 = vadd.f32 %v8816, %v8905
    %v8907 = vpop.f32.mrb[0].mxu0
    %8908 = vmatprep.mubr.f32.mxu0 0.0
    %8909 = vmatmul.mubr.f32.gmra.mrb[0].mxu0 %v8827
    %v8910 = vpop.f32.mrb[0].mxu0
    %v8911 = vadd.f32 %v8816, %v8910
    %v8912 = vpop.f32.mrb[0].mxu0
    %8913 = vdwg.mxu0
    %v8914 = vmax.f32 %v8896, 0.0
    %v8915 = vmax.f32 %v8901, 0.0
    %v8916 = vmax.f32 %v8906, 0.0
    %v8917 = vmax.f32 %v8911, 0.0
    %v8918 = vlaneseq
    %v8919 = vshrl.u32 %v8918, 7
    %v8920 = vsub.s32 0, %v8919
    %v8921 = vrot.slane %v4792, %v8920
    %v8923 = vsel %vm2262, %v8914, 0
    %v8926 = vsel %vm2262, %v8915, 0
    %v8929 = vsel %vm2262, %v8916, 0
    %v8932 = vsel %vm2262, %v8917, 0
    %8934 = vmatprep.subr.mxu0 0.0
    %8935 = vmatpush1.msra.mxu0 %v4784
    %8936 = vmatprep.subr.mxu0 0.0
    %8937 = vmatpush1.msra.mxu0 %v4785
    %8938 = vmatprep.subr.mxu0 0.0
    %8939 = vmatpush1.msra.mxu0 %v4786
    %8940 = vmatprep.subr.mxu0 0.0
    %8941 = vmatpush1.msra.mxu0 %v4787
    %8942 = vmatprep.subr.mxu0 0.0
    %8943 = vmatpush1.msra.mxu0 %v4788
    %8944 = vmatprep.subr.mxu0 0.0
    %8945 = vmatpush1.msra.mxu0 %v4789
    %8946 = vmatprep.subr.mxu0 0.0
    %8947 = vmatpush1.msra.mxu0 %v4790
    %8948 = vmatprep.subr.mxu0 0.0
    %8949 = vmatpush1.msra.mxu0 %v4791
    %8950 = vmatprep.subr.mxu0 0.0
    %8951 = vmatpush1.msra.mxu0 0.0
    %8952 = vmatprep.subr.mxu0 0.0
    %8953 = vmatpush1.msra.mxu0 0.0
    %8954 = vmatprep.subr.mxu0 0.0
    %8955 = vmatpush1.msra.mxu0 0.0
    %8956 = vmatprep.subr.mxu0 0.0
    %8957 = vmatpush1.msra.mxu0 0.0
    %8958 = vmatprep.subr.mxu0 0.0
    %8959 = vmatpush1.msra.mxu0 0.0
    %8960 = vmatprep.subr.mxu0 0.0
    %8961 = vmatpush1.msra.mxu0 0.0
    %8962 = vmatprep.subr.mxu0 0.0
    %8963 = vmatpush1.msra.mxu0 0.0
    %8964 = vmatprep.subr.mxu0 0.0
    %8965 = vmatpush1.msra.mxu0 0.0
    %8966 = vmatprep.subr.mxu0 0.0
    %8967 = vmatpush1.msra.mxu0 0.0
    %8968 = vmatprep.subr.mxu0 0.0
    %8969 = vmatpush1.msra.mxu0 0.0
    %8970 = vmatprep.subr.mxu0 0.0
    %8971 = vmatpush1.msra.mxu0 0.0
    %8972 = vmatprep.subr.mxu0 0.0
    %8973 = vmatpush1.msra.mxu0 0.0
    %8974 = vmatprep.subr.mxu0 0.0
    %8975 = vmatpush1.msra.mxu0 0.0
    %8976 = vmatprep.subr.mxu0 0.0
    %8977 = vmatpush1.msra.mxu0 0.0
    %8978 = vmatprep.subr.mxu0 0.0
    %8979 = vmatpush1.msra.mxu0 0.0
    %8980 = vmatprep.subr.mxu0 0.0
    %8981 = vmatpush1.msra.mxu0 0.0
    %8982 = vmatprep.subr.mxu0 0.0
    %8983 = vmatpush1.msra.mxu0 0.0
    %8984 = vmatprep.subr.mxu0 0.0
    %8985 = vmatpush1.msra.mxu0 0.0
    %8986 = vmatprep.subr.mxu0 0.0
    %8987 = vmatpush1.msra.mxu0 0.0
    %8988 = vmatprep.subr.mxu0 0.0
    %8989 = vmatpush1.msra.mxu0 0.0
    %8990 = vmatprep.subr.mxu0 0.0
    %8991 = vmatpush1.msra.mxu0 0.0
    %8992 = vmatprep.subr.mxu0 0.0
    %8993 = vmatpush1.msra.mxu0 0.0
    %8994 = vmatprep.subr.mxu0 0.0
    %8995 = vmatpush1.msra.mxu0 0.0
    %8996 = vmatprep.subr.mxu0 0.0
    %8997 = vmatpush1.msra.mxu0 0.0
    %8998 = vmatprep.mubr.f32.mxu0 0.0
    %8999 = vmatmul.mubr.f32.gmra.mrb[0].mxu0 %v8923
    %v9000 = vpop.f32.mrb[0].mxu0
    %v9001 = vadd.f32 %v8921, %v9000
    %v9002 = vpop.f32.mrb[0].mxu0
    %9003 = vmatprep.mubr.f32.mxu0 0.0
    %9004 = vmatmul.mubr.f32.gmra.mrb[0].mxu0 %v8926
    %v9005 = vpop.f32.mrb[0].mxu0
    %v9006 = vadd.f32 %v8921, %v9005
    %v9007 = vpop.f32.mrb[0].mxu0
    %9008 = vmatprep.mubr.f32.mxu0 0.0
    %9009 = vmatmul.mubr.f32.gmra.mrb[0].mxu0 %v8929
    %v9010 = vpop.f32.mrb[0].mxu0
    %v9011 = vadd.f32 %v8921, %v9010
    %v9012 = vpop.f32.mrb[0].mxu0
    %9013 = vmatprep.mubr.f32.mxu0 0.0
    %9014 = vmatmul.mubr.f32.gmra.mrb[0].mxu0 %v8932
    %v9015 = vpop.f32.mrb[0].mxu0
    %v9016 = vadd.f32 %v8921, %v9015
    %v9017 = vpop.f32.mrb[0].mxu0
    %9018 = vdwg.mxu0
    %v9019 = vadd.f32 %v8809, %v9001
    %v9020 = vadd.f32 %v8810, %v9006
    %v9021 = vadd.f32 %v8811, %v9011
    %v9022 = vadd.f32 %v8812, %v9016
    %v9023 = vsel %vm45, %v9019, 0.0
    %9024 = vadd.xlane.f32.xlu0 %v9023
    %v9025 = vpop.xlane.xlu0 %9024
    %v9026 = vsel %vm45, %v9020, 0.0
    %9027 = vadd.xlane.f32.xlu0 %v9026
    %v9028 = vpop.xlane.xlu0 %9027
    %v9029 = vsel %vm45, %v9021, 0.0
    %9030 = vadd.xlane.f32.xlu0 %v9029
    %v9031 = vpop.xlane.xlu0 %9030
    %v9032 = vsel %vm45, %v9022, 0.0
    %9033 = vadd.xlane.f32.xlu0 %v9032
    %v9034 = vpop.xlane.xlu0 %9033
    %v9035 = vmul.f32 %v9025, %v2096
    %v9036 = vmul.f32 %v9028, %v2096
    %v9037 = vmul.f32 %v9031, %v2096
    %v9038 = vmul.f32 %v9034, %v2096
    %v9039 = vsub.f32 %v9019, %v9035
    %v9040 = vsub.f32 %v9020, %v9036
    %v9041 = vsub.f32 %v9021, %v9037
    %v9042 = vsub.f32 %v9022, %v9038
    %v9043 = vmul.f32 %v9039, %v9039
    %v9044 = vmul.f32 %v9040, %v9040
    %v9045 = vmul.f32 %v9041, %v9041
    %v9046 = vmul.f32 %v9042, %v9042
    %v9047 = vsel %vm45, %v9043, 0.0
    %9048 = vadd.xlane.f32.xlu0 %v9047
    %v9049 = vpop.xlane.xlu0 %9048
    %v9050 = vsel %vm45, %v9044, 0.0
    %9051 = vadd.xlane.f32.xlu0 %v9050
    %v9052 = vpop.xlane.xlu0 %9051
    %v9053 = vsel %vm45, %v9045, 0.0
    %9054 = vadd.xlane.f32.xlu0 %v9053
    %v9055 = vpop.xlane.xlu0 %9054
    %v9056 = vsel %vm45, %v9046, 0.0
    %9057 = vadd.xlane.f32.xlu0 %v9056
    %v9058 = vpop.xlane.xlu0 %9057
    %v9059 = vmul.f32 %v9049, %v2096
    %v9060 = vmul.f32 %v9052, %v2096
    %v9061 = vmul.f32 %v9055, %v2096
    %v9062 = vmul.f32 %v9058, %v2096
    %v9063 = vadd.f32 %v9059, 1e-05
    %v9064 = vadd.f32 %v9060, 1e-05
    %v9065 = vadd.f32 %v9061, 1e-05
    %v9066 = vadd.f32 %v9062, 1e-05
    %v9067 = vrsqrt.pop %v9063
    %v9068 = vrsqrt.pop %v9064
    %v9069 = vrsqrt.pop %v9065
    %v9070 = vrsqrt.pop %v9066
    %v9071 = vmul.f32 %v9039, %v9067
    %v9072 = vmul.f32 %v9040, %v9068
    %v9073 = vmul.f32 %v9041, %v9069
    %v9074 = vmul.f32 %v9042, %v9070
    %v9075 = vlaneseq
    %v9076 = vshrl.u32 %v9075, 7
    %v9077 = vsub.s32 0, %v9076
    %v9078 = vrot.slane %v4797, %v9077
    %v9079 = vmul.f32 %v9071, %v9078
    %v9080 = vmul.f32 %v9072, %v9078
    %v9081 = vmul.f32 %v9073, %v9078
    %v9082 = vmul.f32 %v9074, %v9078
    %v9083 = vlaneseq
    %v9084 = vshrl.u32 %v9083, 7
    %v9085 = vsub.s32 0, %v9084
    %v9086 = vrot.slane %v4798, %v9085
    %v9087 = vadd.f32 %v9079, %v9086
    %v9088 = vadd.f32 %v9080, %v9086
    %v9089 = vadd.f32 %v9081, %v9086
    %v9090 = vadd.f32 %v9082, %v9086
    %v9091 = vld [vmem:[#allocation2 + $0x398] sm:$0x1]
    %v9092 = vld [vmem:[#allocation2 + $0x3a0] sm:$0x1]
    %v9093 = vsel %vm45, %v9087, 0.0
    %9094 = vadd.xlane.f32.xlu0 %v9093
    %v9095 = vpop.xlane.xlu0 %9094
    %v9096 = vsel %vm45, %v9088, 0.0
    %9097 = vadd.xlane.f32.xlu0 %v9096
    %v9098 = vpop.xlane.xlu0 %9097
    %v9099 = vsel %vm45, %v9089, 0.0
    %9100 = vadd.xlane.f32.xlu0 %v9099
    %v9101 = vpop.xlane.xlu0 %9100
    %v9102 = vsel %vm45, %v9090, 0.0
    %9103 = vadd.xlane.f32.xlu0 %v9102
    %v9104 = vpop.xlane.xlu0 %9103
    %v9105 = vmul.f32 %v9095, %v2096
    %v9106 = vmul.f32 %v9098, %v2096
    %v9107 = vmul.f32 %v9101, %v2096
    %v9108 = vmul.f32 %v9104, %v2096
    %v9109 = vsub.f32 %v9087, %v9105
    %v9110 = vsub.f32 %v9088, %v9106
    %v9111 = vsub.f32 %v9089, %v9107
    %v9112 = vsub.f32 %v9090, %v9108
    %v9113 = vmul.f32 %v9109, %v9109
    %v9114 = vmul.f32 %v9110, %v9110
    %v9115 = vmul.f32 %v9111, %v9111
    %v9116 = vmul.f32 %v9112, %v9112
    %v9117 = vsel %vm45, %v9113, 0.0
    %9118 = vadd.xlane.f32.xlu0 %v9117
    %v9119 = vpop.xlane.xlu0 %9118
    %v9120 = vsel %vm45, %v9114, 0.0
    %9121 = vadd.xlane.f32.xlu0 %v9120
    %v9122 = vpop.xlane.xlu0 %9121
    %v9123 = vsel %vm45, %v9115, 0.0
    %9124 = vadd.xlane.f32.xlu0 %v9123
    %v9125 = vpop.xlane.xlu0 %9124
    %v9126 = vsel %vm45, %v9116, 0.0
    %9127 = vadd.xlane.f32.xlu0 %v9126
    %v9128 = vpop.xlane.xlu0 %9127
    %v9129 = vmul.f32 %v9119, %v2096
    %v9130 = vmul.f32 %v9122, %v2096
    %v9131 = vmul.f32 %v9125, %v2096
    %v9132 = vmul.f32 %v9128, %v2096
    %v9133 = vadd.f32 %v9129, 1e-05
    %v9134 = vadd.f32 %v9130, 1e-05
    %v9135 = vadd.f32 %v9131, 1e-05
    %v9136 = vadd.f32 %v9132, 1e-05
    %v9137 = vrsqrt.pop %v9133
    %v9138 = vrsqrt.pop %v9134
    %v9139 = vrsqrt.pop %v9135
    %v9140 = vrsqrt.pop %v9136
    %v9141 = vmul.f32 %v9109, %v9137
    %v9142 = vmul.f32 %v9110, %v9138
    %v9143 = vmul.f32 %v9111, %v9139
    %v9144 = vmul.f32 %v9112, %v9140
    %v9145 = vlaneseq
    %v9146 = vshrl.u32 %v9145, 7
    %v9147 = vsub.s32 0, %v9146
    %v9148 = vrot.slane %v9091, %v9147
    %v9149 = vmul.f32 %v9141, %v9148
    %v9150 = vmul.f32 %v9142, %v9148
    %v9151 = vmul.f32 %v9143, %v9148
    %v9152 = vmul.f32 %v9144, %v9148
    %v9153 = vlaneseq
    %v9154 = vshrl.u32 %v9153, 7
    %v9155 = vsub.s32 0, %v9154
    %v9156 = vrot.slane %v9092, %v9155
    %v9157 = vadd.f32 %v9149, %v9156
    %v9158 = vadd.f32 %v9150, %v9156
    %v9159 = vadd.f32 %v9151, %v9156
    %v9160 = vadd.f32 %v9152, %v9156
    %v9161 = vld [vmem:[#allocation2 + $0x3a8] sm:$0xff]
    %v9162 = vld [vmem:[#allocation2 + $0x3b0] sm:$0xff]
    %v9163 = vld [vmem:[#allocation2 + $0x3b8] sm:$0xff]
    %v9164 = vld [vmem:[#allocation2 + $0x3c0] sm:$0xff]
    %v9165 = vld [vmem:[#allocation2 + $0x3c8] sm:$0x1]
    %v9166 = vlaneseq
    %v9167 = vshrl.u32 %v9166, 7
    %v9168 = vsub.s32 0, %v9167
    %v9169 = vrot.slane %v9165, %v9168
    %v9171 = vsel %vm45, %v9157, 0
    %v9174 = vsel %vm45, %v9158, 0
    %v9177 = vsel %vm45, %v9159, 0
    %v9180 = vsel %vm45, %v9160, 0
    %9182 = vmatprep.subr.mxu0 0.0
    %9183 = vmatpush1.msra.mxu0 %v9161
    %9184 = vmatprep.subr.mxu0 0.0
    %9185 = vmatpush1.msra.mxu0 %v9162
    %9186 = vmatprep.subr.mxu0 0.0
    %9187 = vmatpush1.msra.mxu0 %v9163
    %9188 = vmatprep.subr.mxu0 0.0
    %9189 = vmatpush1.msra.mxu0 %v9164
    %9190 = vmatprep.subr.mxu0 0.0
    %9191 = vmatpush1.msra.mxu0 0.0
    %9192 = vmatprep.subr.mxu0 0.0
    %9193 = vmatpush1.msra.mxu0 0.0
    %9194 = vmatprep.subr.mxu0 0.0
    %9195 = vmatpush1.msra.mxu0 0.0
    %9196 = vmatprep.subr.mxu0 0.0
    %9197 = vmatpush1.msra.mxu0 0.0
    %9198 = vmatprep.subr.mxu0 0.0
    %9199 = vmatpush1.msra.mxu0 0.0
    %9200 = vmatprep.subr.mxu0 0.0
    %9201 = vmatpush1.msra.mxu0 0.0
    %9202 = vmatprep.subr.mxu0 0.0
    %9203 = vmatpush1.msra.mxu0 0.0
    %9204 = vmatprep.subr.mxu0 0.0
    %9205 = vmatpush1.msra.mxu0 0.0
    %9206 = vmatprep.subr.mxu0 0.0
    %9207 = vmatpush1.msra.mxu0 0.0
    %9208 = vmatprep.subr.mxu0 0.0
    %9209 = vmatpush1.msra.mxu0 0.0
    %9210 = vmatprep.subr.mxu0 0.0
    %9211 = vmatpush1.msra.mxu0 0.0
    %9212 = vmatprep.subr.mxu0 0.0
    %9213 = vmatpush1.msra.mxu0 0.0
    %9214 = vmatprep.subr.mxu0 0.0
    %9215 = vmatpush1.msra.mxu0 0.0
    %9216 = vmatprep.subr.mxu0 0.0
    %9217 = vmatpush1.msra.mxu0 0.0
    %9218 = vmatprep.subr.mxu0 0.0
    %9219 = vmatpush1.msra.mxu0 0.0
    %9220 = vmatprep.subr.mxu0 0.0
    %9221 = vmatpush1.msra.mxu0 0.0
    %9222 = vmatprep.subr.mxu0 0.0
    %9223 = vmatpush1.msra.mxu0 0.0
    %9224 = vmatprep.subr.mxu0 0.0
    %9225 = vmatpush1.msra.mxu0 0.0
    %9226 = vmatprep.subr.mxu0 0.0
    %9227 = vmatpush1.msra.mxu0 0.0
    %9228 = vmatprep.subr.mxu0 0.0
    %9229 = vmatpush1.msra.mxu0 0.0
    %9230 = vmatprep.subr.mxu0 0.0
    %9231 = vmatpush1.msra.mxu0 0.0
    %9232 = vmatprep.subr.mxu0 0.0
    %9233 = vmatpush1.msra.mxu0 0.0
    %9234 = vmatprep.subr.mxu0 0.0
    %9235 = vmatpush1.msra.mxu0 0.0
    %9236 = vmatprep.subr.mxu0 0.0
    %9237 = vmatpush1.msra.mxu0 0.0
    %9238 = vmatprep.subr.mxu0 0.0
    %9239 = vmatpush1.msra.mxu0 0.0
    %9240 = vmatprep.subr.mxu0 0.0
    %9241 = vmatpush1.msra.mxu0 0.0
    %9242 = vmatprep.subr.mxu0 0.0
    %9243 = vmatpush1.msra.mxu0 0.0
    %9244 = vmatprep.subr.mxu0 0.0
    %9245 = vmatpush1.msra.mxu0 0.0
    %9246 = vmatprep.mubr.f32.mxu0 0.0
    %9247 = vmatmul.mubr.f32.gmra.mrb[0].mxu0 %v9171
    %v9248 = vpop.f32.mrb[0].mxu0
    %v9249 = vadd.f32 %v9169, %v9248
    %v9250 = vpop.f32.mrb[0].mxu0
    %9251 = vmatprep.mubr.f32.mxu0 0.0
    %9252 = vmatmul.mubr.f32.gmra.mrb[0].mxu0 %v9174
    %v9253 = vpop.f32.mrb[0].mxu0
    %v9254 = vadd.f32 %v9169, %v9253
    %v9255 = vpop.f32.mrb[0].mxu0
    %9256 = vmatprep.mubr.f32.mxu0 0.0
    %9257 = vmatmul.mubr.f32.gmra.mrb[0].mxu0 %v9177
    %v9258 = vpop.f32.mrb[0].mxu0
    %v9259 = vadd.f32 %v9169, %v9258
    %v9260 = vpop.f32.mrb[0].mxu0
    %9261 = vmatprep.mubr.f32.mxu0 0.0
    %9262 = vmatmul.mubr.f32.gmra.mrb[0].mxu0 %v9180
    %v9263 = vpop.f32.mrb[0].mxu0
    %v9264 = vadd.f32 %v9169, %v9263
    %v9265 = vpop.f32.mrb[0].mxu0
    %9266 = vdwg.mxu0
    %9267 = vst [vmem:[%s2] sm:$0xff] %v9249
    %9268 = vst [vmem:[%s2 + $0x8] sm:$0xff] %v9254
    %9269 = vst [vmem:[%s2 + $0x10] sm:$0xff] %v9259
    %9270 = vst [vmem:[%s2 + $0x18] sm:$0xff] %v9264
    // Predicated region
    $region14: #{transformer_forward.1} parent=1 // pred_check
      _
    $region15: #{transformer_forward.1} parent=1 // pred_check_branch
      %9272 = sbr.rel (0) target = $region17
    $region16: #{transformer_forward.1} parent=1 // pred_region
      _
    $region17: #{transformer_forward.1} parent=1 // pred_fallthru
      _
    // Predicated region
    $region18: #{transformer_forward.1} parent=1 // pred_check
      _
    $region19: #{transformer_forward.1} parent=1 // pred_check_branch
      %9274 = sbr.rel (0) target = $region21
    $region20: #{transformer_forward.1} parent=1 // pred_region
      _
    $region21: #{transformer_forward.1} parent=1 // pred_fallthru
      _
    %9275 = vsyncpa [#allocation3], 1

</llo_original>
